<compile_context>
chip_gen: v7x
topology: tpu7x:2x2x1
jax: 0.10.0
libtpu: 0.0.40
codegen_flags: <defaults>
</compile_context>

<pallas_src>
import functools

import numpy as np
import jax
import jax.numpy as jnp
from jax import lax
from jax.experimental import pallas as pl
from jax.experimental.pallas import tpu as pltpu


# ---------------------------------------------------------------------------
# Trace-time constant builders (numpy -> baked into the program).
# ---------------------------------------------------------------------------
def _banded_weight(w, W):
    """torch conv weight (Cout, Cin, 3, 3, 3) -> (3, 3, (W+2)*Cin, W*Cout) f32.

    For each (kd, kh) tap the kw taps are folded into a banded matrix so one
    matmul of a padded input row-slab ((W+2)*Cin contraction) produces all W
    output positions, lane layout = (w major, cout minor)."""
    Cout, Cin = w.shape[0], w.shape[1]
    sel = np.zeros((3, W + 2, W), np.float32)
    for kw in range(3):
        for wo in range(W):
            sel[kw, wo + kw, wo] = 1.0
    wt = jnp.transpose(w.astype(jnp.float32), (2, 3, 4, 1, 0))   # (kd, kh, kw, Cin, Cout)
    bw = jnp.einsum("kiw,dekco->deicwo", jnp.asarray(sel), wt)
    return bw.reshape(3, 3, (W + 2) * Cin, W * Cout)


def _layer_consts(D, H, W, Cout, pad_next):
    """0/1 helper matrices for one fused conv block.

    Returns (ones_valid, fold, rowsel, selw0, selw1, tile[, rowmask]).
    When pad_next=True the selection matrices write the pooled/normalised output
    directly into the NEXT layer's zero-padded slab layout."""
    Hp2 = H + 2
    L = D * Hp2 - 2
    Dq, Hq, Wq = D // 2, H // 2, W // 2
    Nout = W * Cout

    ones = np.zeros((1, L), np.float32)
    for m in range(L):
        if (m % Hp2) < H:
            ones[0, m] = 1.0

    fold = np.zeros((Nout, Cout), np.float32)
    for w in range(W):
        for c in range(Cout):
            fold[w * Cout + c, c] = 1.0

    if pad_next:
        HqP = Hq + 2
        Rn = (Dq + 2) * HqP
        Nn = (Wq + 2) * Cout
        row_of = lambda dq, hq: (dq + 1) * HqP + (hq + 1)
        lane_of = lambda wq, c: (wq + 1) * Cout + c
    else:
        Rn = Dq * Hq
        Nn = Wq * Cout
        row_of = lambda dq, hq: dq * Hq + hq
        lane_of = lambda wq, c: wq * Cout + c

    rowsel = np.zeros((Rn, L), np.float32)
    for dq in range(Dq):
        for hq in range(Hq):
            rowsel[row_of(dq, hq), (2 * dq) * Hp2 + 2 * hq] = 1.0

    selw0 = np.zeros((Nout, Nn), np.float32)
    selw1 = np.zeros((Nout, Nn), np.float32)
    for wq in range(Wq):
        for c in range(Cout):
            selw0[(2 * wq) * Cout + c, lane_of(wq, c)] = 1.0
            selw1[(2 * wq + 1) * Cout + c, lane_of(wq, c)] = 1.0

    tile = np.zeros((Cout, Nn), np.float32)
    for wq in range(Wq):
        for c in range(Cout):
            tile[c, lane_of(wq, c)] = 1.0

    out = [jnp.asarray(ones), jnp.asarray(fold),
           jnp.asarray(rowsel, jnp.bfloat16),
           jnp.asarray(selw0, jnp.bfloat16), jnp.asarray(selw1, jnp.bfloat16),
           jnp.asarray(tile)]
    if pad_next:
        rowmask = np.zeros((Rn, 1), np.float32)
        for dq in range(Dq):
            for hq in range(Hq):
                rowmask[row_of(dq, hq), 0] = 1.0
        out.append(jnp.asarray(rowmask))
    return tuple(out)


# ---------------------------------------------------------------------------
# In-kernel building blocks (traced inline into the single fused kernel).
# ---------------------------------------------------------------------------
def _conv_taps(xp, w_ref, D, H):
    """Conv3d(k3,p1) from a VMEM-resident padded slab via 9 chained tap matmuls."""
    Hp2 = H + 2
    L = D * Hp2 - 2
    acc = None
    for kd in range(3):
        for kh in range(3):
            t0 = kd * Hp2 + kh
            part = jnp.dot(xp[t0:t0 + L, :], w_ref[3 * kd + kh],
                           preferred_element_type=jnp.float32)
            acc = part if acc is None else acc + part
    return acc                                           # (L, W*Cout) f32


def _block_epilogue(conv, dims, ones, fold, rowsel, selw0, selw1, tile, rowmask):
    """InstanceNorm3d + LeakyReLU(0.01) + MaxPool3d(2) on one conv output slab.

    Pooling is applied to the raw conv output (norm & LeakyReLU are monotonic,
    so pool-first is exact).  When rowmask is given the output lands directly in
    the next layer's zero-padded slab layout."""
    D, H, W, Cout = dims
    Hp2 = H + 2
    inv_cnt = 1.0 / float(D * H * W)

    # --- InstanceNorm statistics (f32, over the full pre-pool tensor) -------
    s1 = jnp.dot(ones, conv, preferred_element_type=jnp.float32)
    s2 = jnp.dot(ones, conv * conv, preferred_element_type=jnp.float32)
    mean = jnp.dot(s1, fold, preferred_element_type=jnp.float32) * inv_cnt
    ex2 = jnp.dot(s2, fold, preferred_element_type=jnp.float32) * inv_cnt
    # TODO(synk): one-pass variance (E[x^2]-mean^2); acceptable in f32 for
    # unit-scale activations, a centered two-pass would be more robust.
    rstd = lax.rsqrt(jnp.maximum(ex2 - mean * mean, 0.0) + 1e-5)   # (1, Cout)
    scale = jnp.dot(rstd, tile, preferred_element_type=jnp.float32)
    shift = jnp.dot(-(mean * rstd), tile, preferred_element_type=jnp.float32)

    # --- MaxPool3d(2): D/H halves via sublane shifts + max, one row-compaction
    #     matmul; W half via two 0/1 lane-selection matmuls + max (bf16, exact).
    t = jnp.maximum(conv, jnp.concatenate([conv[1:], conv[:1]], axis=0))
    t = jnp.maximum(t, jnp.concatenate([t[Hp2:], t[:Hp2]], axis=0))
    rows = jnp.dot(rowsel, t.astype(jnp.bfloat16),
                   preferred_element_type=jnp.float32).astype(jnp.bfloat16)
    pooled = jnp.maximum(
        jnp.dot(rows, selw0, preferred_element_type=jnp.float32),
        jnp.dot(rows, selw1, preferred_element_type=jnp.float32))

    # --- InstanceNorm (affine=False) + LeakyReLU(0.01); pad rows/lanes -> 0 ---
    y = pooled * scale + shift
    y = jnp.maximum(y, 0.01 * y)
    if rowmask is not None:
        y = y * rowmask
    return y


def _fused_kernel(dims,
                  xc1_ref, tab_ref, w1_ref, w2b_ref, w3b_ref,
                  ones1_ref, fold1_ref, rsel1_ref, wa1_ref, wb1_ref, tile1_ref, rmask1_ref,
                  ones2_ref, fold2_ref, rsel2_ref, wa2_ref, wb2_ref, tile2_ref, rmask2_ref,
                  ones3_ref, fold3_ref, rsel3_ref, wa3_ref, wb3_ref, tile3_ref,
                  gfold_ref, wimg_ref, bimg_ref, w1a_ref, w1b_ref, b1_ref,
                  bns_ref, bnb_ref, w2_ref, b2_ref,
                  o_ref):
    d1, d2, d3 = dims

    # --- conv block 1: all 9 (kd,kh) taps folded -> ONE K=9*(W+2)*Cin matmul ---
    conv1 = jnp.dot(xc1_ref[0], w1_ref[...], preferred_element_type=jnp.float32)
    xp2 = _block_epilogue(conv1, d1, ones1_ref[...], fold1_ref[...],
                          rsel1_ref[...], wa1_ref[...], wb1_ref[...],
                          tile1_ref[...], rmask1_ref[...]).astype(jnp.bfloat16)

    # --- conv block 2: 9 chained tap matmuls on the VMEM-resident padded slab ---
    conv2 = _conv_taps(xp2, w2b_ref, d2[0], d2[1])
    xp3 = _block_epilogue(conv2, d2, ones2_ref[...], fold2_ref[...],
                          rsel2_ref[...], wa2_ref[...], wb2_ref[...],
                          tile2_ref[...], rmask2_ref[...]).astype(jnp.bfloat16)

    # --- conv block 3 (compact output layout, feeds the head) -----------------
    conv3 = _conv_taps(xp3, w3b_ref, d3[0], d3[1])
    y3 = _block_epilogue(conv3, d3, ones3_ref[...], fold3_ref[...],
                         rsel3_ref[...], wa3_ref[...], wb3_ref[...],
                         tile3_ref[...], None)                     # (4, 128) f32

    # --- AdaptiveAvgPool3d(1) + img_fc + fusion_fc head (eval mode) -----------
    rowsum = jnp.sum(y3, axis=0, keepdims=True)                           # (1, Wq*C3)
    gp = jnp.dot(rowsum, gfold_ref[...], preferred_element_type=jnp.float32)  # (1, C3)

    h = jnp.dot(gp, wimg_ref[...], preferred_element_type=jnp.float32) + bimg_ref[...]
    h = h * jax.nn.sigmoid(h)                                             # Swish

    z = (jnp.dot(h, w1a_ref[...], preferred_element_type=jnp.float32)
         + jnp.dot(tab_ref[0], w1b_ref[...], preferred_element_type=jnp.float32)
         + b1_ref[...])
    z = z * bns_ref[...] + bnb_ref[...]                                   # BatchNorm1d (eval)
    z = z * jax.nn.sigmoid(z)                                             # Swish
    out = jnp.sum(z * w2_ref[...], axis=1, keepdims=True) + b2_ref[...]   # Linear(128, 1)
    o_ref[0] = out


# ---------------------------------------------------------------------------
# Wrapper: one pallas_call for the whole network.
# ---------------------------------------------------------------------------
@jax.jit
def deepynet_v2_1_forward(params, x_img, x_tabular):
    x_img = x_img.astype(jnp.float32)
    x_tab = x_tabular.astype(jnp.float32)
    B, Cin, D, H, W = x_img.shape
    Tdim = x_tab.shape[1]
    C1 = params["conv1_w"].shape[0]
    C2 = params["conv2_w"].shape[0]
    C3 = params["conv3_w"].shape[0]
    D2, H2, W2 = D // 2, H // 2, W // 2
    D3, H3, W3 = D // 4, H // 4, W // 4
    dims = ((D, H, W, C1), (D2, H2, W2, C2), (D3, H3, W3, C3))

    # ---- layer-1 input: channels-last, zero pad, fold all 9 taps into K ------
    Hp2 = H + 2
    L1 = D * Hp2 - 2
    K1 = 9 * (W + 2) * Cin
    xt = jnp.transpose(x_img, (0, 2, 3, 4, 1))
    xf = jnp.pad(xt, ((0, 0), (1, 1), (1, 1), (1, 1), (0, 0)))
    xf = xf.reshape(B, (D + 2) * Hp2, (W + 2) * Cin)
    xc1 = jnp.concatenate(
        [xf[:, kd * Hp2 + kh: kd * Hp2 + kh + L1, :]
         for kd in range(3) for kh in range(3)], axis=-1).astype(jnp.bfloat16)

    # ---- banded conv weights (bias dropped: cancels inside InstanceNorm) -----
    w1f = _banded_weight(params["conv1_w"], W).reshape(K1, W * C1).astype(jnp.bfloat16)
    w2b = _banded_weight(params["conv2_w"], W2).reshape(
        9, (W2 + 2) * C1, W2 * C2).astype(jnp.bfloat16)
    w3b = _banded_weight(params["conv3_w"], W3).reshape(
        9, (W3 + 2) * C2, W3 * C3).astype(jnp.bfloat16)

    # ---- per-layer epilogue constants -----------------------------------------
    c1 = _layer_consts(D, H, W, C1, pad_next=True)
    c2 = _layer_consts(D2, H2, W2, C2, pad_next=True)
    c3 = _layer_consts(D3, H3, W3, C3, pad_next=False)

    # global average pool fold: (Wq3*C3, C3) with value 1 / (Dq3*Hq3*Wq3)
    Wq3 = W3 // 2
    gfold_np = np.zeros((Wq3 * C3, C3), np.float32)
    inv = 1.0 / float((D3 // 2) * (H3 // 2) * (W3 // 2))
    for wq in range(Wq3):
        for c in range(C3):
            gfold_np[wq * C3 + c, c] = inv
    gfold = jnp.asarray(gfold_np)

    # ---- FC head weights (eval-mode BatchNorm folded to scale/shift) ----------
    wimg = params["img_w"].T                       # (64, 64)
    bimg = params["img_b"].reshape(1, -1)
    w1 = params["f1_w"].T                          # (64 + Tdim, 128)
    w1a, w1b = w1[:C3], w1[C3:]
    b1 = params["f1_b"].reshape(1, -1)
    bn_scale = params["bn_gamma"] * lax.rsqrt(params["bn_var"] + 1e-5)
    bn_shift = params["bn_beta"] - params["bn_mean"] * bn_scale
    bns, bnb = bn_scale.reshape(1, -1), bn_shift.reshape(1, -1)
    w2 = params["f2_w"].reshape(1, -1)             # (1, 128)
    b2 = params["f2_b"].reshape(1, 1)

    tab3 = x_tab.reshape(B, 1, Tdim)

    batched = [
        (xc1, pl.BlockSpec((1, L1, K1), lambda b: (b, 0, 0))),
        (tab3, pl.BlockSpec((1, 1, Tdim), lambda b: (b, 0, 0))),
    ]
    consts = [w1f, w2b, w3b, *c1, *c2, *c3, gfold,
              wimg, bimg, w1a, w1b, b1, bns, bnb, w2, b2]
    operands = [a for a, _ in batched] + consts
    in_specs = [s for _, s in batched] + [
        pl.BlockSpec(a.shape, lambda b, n=a.ndim: (0,) * n) for a in consts]

    out = pl.pallas_call(
        functools.partial(_fused_kernel, dims),
        out_shape=jax.ShapeDtypeStruct((B, 1, 1), jnp.float32),
        grid=(B,),
        in_specs=in_specs,
        out_specs=pl.BlockSpec((1, 1, 1), lambda b: (b, 0, 0)),
        compiler_params=pltpu.CompilerParams(
            dimension_semantics=("parallel",),
            vmem_limit_bytes=32 * 1024 * 1024),
    )(*operands)
    return out.reshape(B, 1)


# ---------------------------------------------------------------------------
# Parameter construction (torch layouts; conv biases kept for parity but inert).
# ---------------------------------------------------------------------------
def init_params(key, in_channels=2, tabular_dim=17):
    ks = jax.random.split(key, 12)

    def rnd(k, fan_in, shape):
        return jax.random.normal(k, shape, jnp.float32) / jnp.sqrt(float(fan_in))

    return {
        "conv1_w": rnd(ks[0], in_channels * 27, (16, in_channels, 3, 3, 3)),
        "conv1_b": rnd(ks[1], in_channels * 27, (16,)),     # inert under InstanceNorm
        "conv2_w": rnd(ks[2], 16 * 27, (32, 16, 3, 3, 3)),
        "conv2_b": rnd(ks[3], 16 * 27, (32,)),               # inert
        "conv3_w": rnd(ks[4], 32 * 27, (64, 32, 3, 3, 3)),
        "conv3_b": rnd(ks[5], 32 * 27, (64,)),               # inert
        "img_w": rnd(ks[6], 64, (64, 64)),                    # torch (out, in)
        "img_b": rnd(ks[7], 64, (64,)),
        "f1_w": rnd(ks[8], 64 + tabular_dim, (128, 64 + tabular_dim)),
        "f1_b": rnd(ks[9], 64 + tabular_dim, (128,)),
        "bn_gamma": jnp.ones((128,), jnp.float32),
        "bn_beta": jnp.zeros((128,), jnp.float32),
        "bn_mean": jnp.zeros((128,), jnp.float32),
        "bn_var": jnp.ones((128,), jnp.float32),
        "f2_w": rnd(ks[10], 128, (1, 128)),
        "f2_b": rnd(ks[11], 128, (1,)),
    }


if __name__ == "__main__":
    key = jax.random.PRNGKey(0)
    kp, ki, kt = jax.random.split(key, 3)

    params = init_params(kp, in_channels=2, tabular_dim=17)

    B, Cin, D, H, W = 2, 2, 16, 16, 16
    x_img = jax.random.normal(ki, (B, Cin, D, H, W), jnp.float32)
    x_tab = jax.random.normal(kt, (B, 17), jnp.float32)

    out = deepynet_v2_1_forward(params, x_img, x_tab)
    out = jax.block_until_ready(out)
    assert out.shape == (B, 1) and out.dtype == jnp.float32
    assert bool(jnp.all(jnp.isfinite(out)))
    print("KERNEL_OK")
</pallas_src>

<mosaic_0001>
module attributes {stable_mosaic.version = 11 : i64} {
  func.func @_fused_kernel(%arg0: i32, %arg1: memref<1x286x324xbf16, #tpu.memory_space<vmem>>, %arg2: memref<1x1x17xf32, #tpu.memory_space<vmem>>, %arg3: memref<324x256xbf16, #tpu.memory_space<vmem>>, %arg4: memref<9x160x256xbf16, #tpu.memory_space<vmem>>, %arg5: memref<9x192x256xbf16, #tpu.memory_space<vmem>>, %arg6: memref<1x286xf32, #tpu.memory_space<vmem>>, %arg7: memref<256x16xf32, #tpu.memory_space<vmem>>, %arg8: memref<100x286xbf16, #tpu.memory_space<vmem>>, %arg9: memref<256x160xbf16, #tpu.memory_space<vmem>>, %arg10: memref<256x160xbf16, #tpu.memory_space<vmem>>, %arg11: memref<16x160xf32, #tpu.memory_space<vmem>>, %arg12: memref<100x1xf32, #tpu.memory_space<vmem>>, %arg13: memref<1x78xf32, #tpu.memory_space<vmem>>, %arg14: memref<256x32xf32, #tpu.memory_space<vmem>>, %arg15: memref<36x78xbf16, #tpu.memory_space<vmem>>, %arg16: memref<256x192xbf16, #tpu.memory_space<vmem>>, %arg17: memref<256x192xbf16, #tpu.memory_space<vmem>>, %arg18: memref<32x192xf32, #tpu.memory_space<vmem>>, %arg19: memref<36x1xf32, #tpu.memory_space<vmem>>, %arg20: memref<1x22xf32, #tpu.memory_space<vmem>>, %arg21: memref<256x64xf32, #tpu.memory_space<vmem>>, %arg22: memref<4x22xbf16, #tpu.memory_space<vmem>>, %arg23: memref<256x128xbf16, #tpu.memory_space<vmem>>, %arg24: memref<256x128xbf16, #tpu.memory_space<vmem>>, %arg25: memref<64x128xf32, #tpu.memory_space<vmem>>, %arg26: memref<128x64xf32, #tpu.memory_space<vmem>>, %arg27: memref<64x64xf32, #tpu.memory_space<vmem>>, %arg28: memref<1x64xf32, #tpu.memory_space<vmem>>, %arg29: memref<64x128xf32, #tpu.memory_space<vmem>>, %arg30: memref<17x128xf32, #tpu.memory_space<vmem>>, %arg31: memref<1x128xf32, #tpu.memory_space<vmem>>, %arg32: memref<1x128xf32, #tpu.memory_space<vmem>>, %arg33: memref<1x128xf32, #tpu.memory_space<vmem>>, %arg34: memref<1x128xf32, #tpu.memory_space<vmem>>, %arg35: memref<1x1xf32, #tpu.memory_space<vmem>>, %arg36: memref<1x1x1xf32, #tpu.memory_space<vmem>>) attributes {dimension_semantics = [#tpu.dimension_semantics<parallel>], iteration_bounds = array<i64: 2>, scalar_prefetch = 0 : i64, scratch_operands = 0 : i64, tpu.core_type = #tpu.core_type<tc>, window_params = [{transform_indices = @transform_0, window_bounds = array<i64: 1, 286, 324>}, {transform_indices = @transform_1, window_bounds = array<i64: 1, 1, 17>}, {pipeline_mode = #tpu.pipeline_mode<synchronous>, transform_indices = @transform_2, window_bounds = array<i64: 324, 256>}, {pipeline_mode = #tpu.pipeline_mode<synchronous>, transform_indices = @transform_3, window_bounds = array<i64: 9, 160, 256>}, {pipeline_mode = #tpu.pipeline_mode<synchronous>, transform_indices = @transform_4, window_bounds = array<i64: 9, 192, 256>}, {pipeline_mode = #tpu.pipeline_mode<synchronous>, transform_indices = @transform_5, window_bounds = array<i64: 1, 286>}, {pipeline_mode = #tpu.pipeline_mode<synchronous>, transform_indices = @transform_6, window_bounds = array<i64: 256, 16>}, {pipeline_mode = #tpu.pipeline_mode<synchronous>, transform_indices = @transform_7, window_bounds = array<i64: 100, 286>}, {pipeline_mode = #tpu.pipeline_mode<synchronous>, transform_indices = @transform_8, window_bounds = array<i64: 256, 160>}, {pipeline_mode = #tpu.pipeline_mode<synchronous>, transform_indices = @transform_9, window_bounds = array<i64: 256, 160>}, {pipeline_mode = #tpu.pipeline_mode<synchronous>, transform_indices = @transform_10, window_bounds = array<i64: 16, 160>}, {pipeline_mode = #tpu.pipeline_mode<synchronous>, transform_indices = @transform_11, window_bounds = array<i64: 100, 1>}, {pipeline_mode = #tpu.pipeline_mode<synchronous>, transform_indices = @transform_12, window_bounds = array<i64: 1, 78>}, {pipeline_mode = #tpu.pipeline_mode<synchronous>, transform_indices = @transform_13, window_bounds = array<i64: 256, 32>}, {pipeline_mode = #tpu.pipeline_mode<synchronous>, transform_indices = @transform_14, window_bounds = array<i64: 36, 78>}, {pipeline_mode = #tpu.pipeline_mode<synchronous>, transform_indices = @transform_15, window_bounds = array<i64: 256, 192>}, {pipeline_mode = #tpu.pipeline_mode<synchronous>, transform_indices = @transform_16, window_bounds = array<i64: 256, 192>}, {pipeline_mode = #tpu.pipeline_mode<synchronous>, transform_indices = @transform_17, window_bounds = array<i64: 32, 192>}, {pipeline_mode = #tpu.pipeline_mode<synchronous>, transform_indices = @transform_18, window_bounds = array<i64: 36, 1>}, {pipeline_mode = #tpu.pipeline_mode<synchronous>, transform_indices = @transform_19, window_bounds = array<i64: 1, 22>}, {pipeline_mode = #tpu.pipeline_mode<synchronous>, transform_indices = @transform_20, window_bounds = array<i64: 256, 64>}, {pipeline_mode = #tpu.pipeline_mode<synchronous>, transform_indices = @transform_21, window_bounds = array<i64: 4, 22>}, {pipeline_mode = #tpu.pipeline_mode<synchronous>, transform_indices = @transform_22, window_bounds = array<i64: 256, 128>}, {pipeline_mode = #tpu.pipeline_mode<synchronous>, transform_indices = @transform_23, window_bounds = array<i64: 256, 128>}, {pipeline_mode = #tpu.pipeline_mode<synchronous>, transform_indices = @transform_24, window_bounds = array<i64: 64, 128>}, {pipeline_mode = #tpu.pipeline_mode<synchronous>, transform_indices = @transform_25, window_bounds = array<i64: 128, 64>}, {pipeline_mode = #tpu.pipeline_mode<synchronous>, transform_indices = @transform_26, window_bounds = array<i64: 64, 64>}, {pipeline_mode = #tpu.pipeline_mode<synchronous>, transform_indices = @transform_27, window_bounds = array<i64: 1, 64>}, {pipeline_mode = #tpu.pipeline_mode<synchronous>, transform_indices = @transform_28, window_bounds = array<i64: 64, 128>}, {pipeline_mode = #tpu.pipeline_mode<synchronous>, transform_indices = @transform_29, window_bounds = array<i64: 17, 128>}, {pipeline_mode = #tpu.pipeline_mode<synchronous>, transform_indices = @transform_30, window_bounds = array<i64: 1, 128>}, {pipeline_mode = #tpu.pipeline_mode<synchronous>, transform_indices = @transform_31, window_bounds = array<i64: 1, 128>}, {pipeline_mode = #tpu.pipeline_mode<synchronous>, transform_indices = @transform_32, window_bounds = array<i64: 1, 128>}, {pipeline_mode = #tpu.pipeline_mode<synchronous>, transform_indices = @transform_33, window_bounds = array<i64: 1, 128>}, {pipeline_mode = #tpu.pipeline_mode<synchronous>, transform_indices = @transform_34, window_bounds = array<i64: 1, 1>}, {transform_indices = @transform_35, window_bounds = array<i64: 1, 1, 1>}]} {
    %c0 = arith.constant 0 : index
    %c0_0 = arith.constant 0 : index
    %c0_1 = arith.constant 0 : index
    %0 = vector.load %arg1[%c0, %c0_0, %c0_1] : memref<1x286x324xbf16, #tpu.memory_space<vmem>>, vector<1x286x324xbf16>
    %1 = vector.shape_cast %0 : vector<1x286x324xbf16> to vector<286x324xbf16>
    %c0_2 = arith.constant 0 : index
    %c0_3 = arith.constant 0 : index
    %2 = vector.load %arg3[%c0_2, %c0_3] : memref<324x256xbf16, #tpu.memory_space<vmem>>, vector<324x256xbf16>
    %cst = arith.constant dense<0.000000e+00> : vector<286x256xf32>
    %3 = tpu.matmul %1, %2, %cst {dimension_numbers = #tpu.dot_dimension_numbers<[1], [0], [0], [1], [0, 0, 1, 1], [], []>} : vector<286x324xbf16>, vector<324x256xbf16>, vector<286x256xf32> -> vector<286x256xf32>
    %c0_4 = arith.constant 0 : index
    %c0_5 = arith.constant 0 : index
    %4 = vector.load %arg6[%c0_4, %c0_5] : memref<1x286xf32, #tpu.memory_space<vmem>>, vector<1x286xf32>
    %c0_6 = arith.constant 0 : index
    %c0_7 = arith.constant 0 : index
    %5 = vector.load %arg7[%c0_6, %c0_7] : memref<256x16xf32, #tpu.memory_space<vmem>>, vector<256x16xf32>
    %c0_8 = arith.constant 0 : index
    %c0_9 = arith.constant 0 : index
    %6 = vector.load %arg8[%c0_8, %c0_9] : memref<100x286xbf16, #tpu.memory_space<vmem>>, vector<100x286xbf16>
    %c0_10 = arith.constant 0 : index
    %c0_11 = arith.constant 0 : index
    %7 = vector.load %arg9[%c0_10, %c0_11] : memref<256x160xbf16, #tpu.memory_space<vmem>>, vector<256x160xbf16>
    %c0_12 = arith.constant 0 : index
    %c0_13 = arith.constant 0 : index
    %8 = vector.load %arg10[%c0_12, %c0_13] : memref<256x160xbf16, #tpu.memory_space<vmem>>, vector<256x160xbf16>
    %c0_14 = arith.constant 0 : index
    %c0_15 = arith.constant 0 : index
    %9 = vector.load %arg11[%c0_14, %c0_15] : memref<16x160xf32, #tpu.memory_space<vmem>>, vector<16x160xf32>
    %c0_16 = arith.constant 0 : index
    %c0_17 = arith.constant 0 : index
    %10 = vector.load %arg12[%c0_16, %c0_17] : memref<100x1xf32, #tpu.memory_space<vmem>>, vector<100x1xf32>
    %cst_18 = arith.constant dense<0.000000e+00> : vector<1x256xf32>
    %11 = tpu.matmul %4, %3, %cst_18 {dimension_numbers = #tpu.dot_dimension_numbers<[1], [0], [0], [1], [0, 0, 1, 1], [], []>} : vector<1x286xf32>, vector<286x256xf32>, vector<1x256xf32> -> vector<1x256xf32>
    %12 = arith.mulf %3, %3 : vector<286x256xf32>
    %cst_19 = arith.constant dense<0.000000e+00> : vector<1x256xf32>
    %13 = tpu.matmul %4, %12, %cst_19 {dimension_numbers = #tpu.dot_dimension_numbers<[1], [0], [0], [1], [0, 0, 1, 1], [], []>} : vector<1x286xf32>, vector<286x256xf32>, vector<1x256xf32> -> vector<1x256xf32>
    %cst_20 = arith.constant dense<0.000000e+00> : vector<1x16xf32>
    %14 = tpu.matmul %11, %5, %cst_20 {dimension_numbers = #tpu.dot_dimension_numbers<[1], [0], [0], [1], [0, 0, 1, 1], [], []>} : vector<1x256xf32>, vector<256x16xf32>, vector<1x16xf32> -> vector<1x16xf32>
    %cst_21 = arith.constant 2.44140625E-4 : f32
    %15 = vector.broadcast %cst_21 : f32 to vector<1x16xf32>
    %16 = arith.mulf %14, %15 : vector<1x16xf32>
    %cst_22 = arith.constant dense<0.000000e+00> : vector<1x16xf32>
    %17 = tpu.matmul %13, %5, %cst_22 {dimension_numbers = #tpu.dot_dimension_numbers<[1], [0], [0], [1], [0, 0, 1, 1], [], []>} : vector<1x256xf32>, vector<256x16xf32>, vector<1x16xf32> -> vector<1x16xf32>
    %cst_23 = arith.constant 2.44140625E-4 : f32
    %18 = vector.broadcast %cst_23 : f32 to vector<1x16xf32>
    %19 = arith.mulf %17, %18 : vector<1x16xf32>
    %20 = arith.mulf %16, %16 : vector<1x16xf32>
    %21 = arith.subf %19, %20 : vector<1x16xf32>
    %cst_24 = arith.constant 0.000000e+00 : f32
    %22 = vector.broadcast %cst_24 : f32 to vector<1x16xf32>
    %23 = arith.maximumf %21, %22 : vector<1x16xf32>
    %cst_25 = arith.constant 9.99999974E-6 : f32
    %24 = vector.broadcast %cst_25 : f32 to vector<1x16xf32>
    %25 = arith.addf %23, %24 : vector<1x16xf32>
    %26 = math.rsqrt %25 : vector<1x16xf32>
    %cst_26 = arith.constant dense<0.000000e+00> : vector<1x160xf32>
    %27 = tpu.matmul %26, %9, %cst_26 {dimension_numbers = #tpu.dot_dimension_numbers<[1], [0], [0], [1], [0, 0, 1, 1], [], []>} : vector<1x16xf32>, vector<16x160xf32>, vector<1x160xf32> -> vector<1x160xf32>
    %28 = arith.mulf %16, %26 : vector<1x16xf32>
    %cst_27 = arith.constant 0.000000e+00 : f32
    %29 = vector.broadcast %cst_27 : f32 to vector<1x16xf32>
    %30 = arith.subf %29, %28 : vector<1x16xf32>
    %cst_28 = arith.constant dense<0.000000e+00> : vector<1x160xf32>
    %31 = tpu.matmul %30, %9, %cst_28 {dimension_numbers = #tpu.dot_dimension_numbers<[1], [0], [0], [1], [0, 0, 1, 1], [], []>} : vector<1x16xf32>, vector<16x160xf32>, vector<1x160xf32> -> vector<1x160xf32>
    %32 = vector.extract_strided_slice %3 {offsets = [1, 0], sizes = [285, 256], strides = [1, 1]} : vector<286x256xf32> to vector<285x256xf32>
    %33 = vector.extract_strided_slice %3 {offsets = [0, 0], sizes = [1, 256], strides = [1, 1]} : vector<286x256xf32> to vector<1x256xf32>
    %34 = tpu.concatenate %32, %33 in 0 : vector<285x256xf32>, vector<1x256xf32> -> vector<286x256xf32>
    %35 = arith.maximumf %3, %34 : vector<286x256xf32>
    %36 = vector.extract_strided_slice %35 {offsets = [18, 0], sizes = [268, 256], strides = [1, 1]} : vector<286x256xf32> to vector<268x256xf32>
    %37 = vector.extract_strided_slice %35 {offsets = [0, 0], sizes = [18, 256], strides = [1, 1]} : vector<286x256xf32> to vector<18x256xf32>
    %38 = tpu.concatenate %36, %37 in 0 : vector<268x256xf32>, vector<18x256xf32> -> vector<286x256xf32>
    %39 = arith.maximumf %35, %38 : vector<286x256xf32>
    %40 = arith.truncf %39 : vector<286x256xf32> to vector<286x256xbf16>
    %cst_29 = arith.constant dense<0.000000e+00> : vector<100x256xf32>
    %41 = tpu.matmul %6, %40, %cst_29 {dimension_numbers = #tpu.dot_dimension_numbers<[1], [0], [0], [1], [0, 0, 1, 1], [], []>} : vector<100x286xbf16>, vector<286x256xbf16>, vector<100x256xf32> -> vector<100x256xf32>
    %42 = arith.truncf %41 : vector<100x256xf32> to vector<100x256xbf16>
    %cst_30 = arith.constant dense<0.000000e+00> : vector<100x160xf32>
    %43 = tpu.matmul %42, %7, %cst_30 {dimension_numbers = #tpu.dot_dimension_numbers<[1], [0], [0], [1], [0, 0, 1, 1], [], []>} : vector<100x256xbf16>, vector<256x160xbf16>, vector<100x160xf32> -> vector<100x160xf32>
    %cst_31 = arith.constant dense<0.000000e+00> : vector<100x160xf32>
    %44 = tpu.matmul %42, %8, %cst_31 {dimension_numbers = #tpu.dot_dimension_numbers<[1], [0], [0], [1], [0, 0, 1, 1], [], []>} : vector<100x256xbf16>, vector<256x160xbf16>, vector<100x160xf32> -> vector<100x160xf32>
    %45 = arith.maximumf %43, %44 : vector<100x160xf32>
    %46 = vector.broadcast %27 : vector<1x160xf32> to vector<100x160xf32>
    %47 = arith.mulf %45, %46 : vector<100x160xf32>
    %48 = vector.broadcast %31 : vector<1x160xf32> to vector<100x160xf32>
    %49 = arith.addf %47, %48 : vector<100x160xf32>
    %cst_32 = arith.constant 0.00999999977 : f32
    %50 = vector.broadcast %cst_32 : f32 to vector<100x160xf32>
    %51 = arith.mulf %50, %49 : vector<100x160xf32>
    %52 = arith.maximumf %49, %51 : vector<100x160xf32>
    %53 = vector.broadcast %10 : vector<100x1xf32> to vector<100x160xf32>
    %54 = arith.mulf %52, %53 : vector<100x160xf32>
    %55 = arith.truncf %54 : vector<100x160xf32> to vector<100x160xbf16>
    %56 = vector.extract_strided_slice %55 {offsets = [0, 0], sizes = [78, 160], strides = [1, 1]} : vector<100x160xbf16> to vector<78x160xbf16>
    %c0_33 = arith.constant 0 : index
    %c0_34 = arith.constant 0 : index
    %c0_35 = arith.constant 0 : index
    %57 = vector.load %arg4[%c0_33, %c0_34, %c0_35] : memref<9x160x256xbf16, #tpu.memory_space<vmem>>, vector<1x160x256xbf16>
    %58 = vector.shape_cast %57 : vector<1x160x256xbf16> to vector<160x256xbf16>
    %cst_36 = arith.constant dense<0.000000e+00> : vector<78x256xf32>
    %59 = tpu.matmul %56, %58, %cst_36 {dimension_numbers = #tpu.dot_dimension_numbers<[1], [0], [0], [1], [0, 0, 1, 1], [], []>} : vector<78x160xbf16>, vector<160x256xbf16>, vector<78x256xf32> -> vector<78x256xf32>
    %60 = vector.extract_strided_slice %55 {offsets = [1, 0], sizes = [78, 160], strides = [1, 1]} : vector<100x160xbf16> to vector<78x160xbf16>
    %c1 = arith.constant 1 : index
    %c0_37 = arith.constant 0 : index
    %c0_38 = arith.constant 0 : index
    %61 = vector.load %arg4[%c1, %c0_37, %c0_38] : memref<9x160x256xbf16, #tpu.memory_space<vmem>>, vector<1x160x256xbf16>
    %62 = vector.shape_cast %61 : vector<1x160x256xbf16> to vector<160x256xbf16>
    %cst_39 = arith.constant dense<0.000000e+00> : vector<78x256xf32>
    %63 = tpu.matmul %60, %62, %cst_39 {dimension_numbers = #tpu.dot_dimension_numbers<[1], [0], [0], [1], [0, 0, 1, 1], [], []>} : vector<78x160xbf16>, vector<160x256xbf16>, vector<78x256xf32> -> vector<78x256xf32>
    %64 = arith.addf %59, %63 : vector<78x256xf32>
    %65 = vector.extract_strided_slice %55 {offsets = [2, 0], sizes = [78, 160], strides = [1, 1]} : vector<100x160xbf16> to vector<78x160xbf16>
    %c2 = arith.constant 2 : index
    %c0_40 = arith.constant 0 : index
    %c0_41 = arith.constant 0 : index
    %66 = vector.load %arg4[%c2, %c0_40, %c0_41] : memref<9x160x256xbf16, #tpu.memory_space<vmem>>, vector<1x160x256xbf16>
    %67 = vector.shape_cast %66 : vector<1x160x256xbf16> to vector<160x256xbf16>
    %cst_42 = arith.constant dense<0.000000e+00> : vector<78x256xf32>
    %68 = tpu.matmul %65, %67, %cst_42 {dimension_numbers = #tpu.dot_dimension_numbers<[1], [0], [0], [1], [0, 0, 1, 1], [], []>} : vector<78x160xbf16>, vector<160x256xbf16>, vector<78x256xf32> -> vector<78x256xf32>
    %69 = arith.addf %64, %68 : vector<78x256xf32>
    %70 = vector.extract_strided_slice %55 {offsets = [10, 0], sizes = [78, 160], strides = [1, 1]} : vector<100x160xbf16> to vector<78x160xbf16>
    %c3 = arith.constant 3 : index
    %c0_43 = arith.constant 0 : index
    %c0_44 = arith.constant 0 : index
    %71 = vector.load %arg4[%c3, %c0_43, %c0_44] : memref<9x160x256xbf16, #tpu.memory_space<vmem>>, vector<1x160x256xbf16>
    %72 = vector.shape_cast %71 : vector<1x160x256xbf16> to vector<160x256xbf16>
    %cst_45 = arith.constant dense<0.000000e+00> : vector<78x256xf32>
    %73 = tpu.matmul %70, %72, %cst_45 {dimension_numbers = #tpu.dot_dimension_numbers<[1], [0], [0], [1], [0, 0, 1, 1], [], []>} : vector<78x160xbf16>, vector<160x256xbf16>, vector<78x256xf32> -> vector<78x256xf32>
    %74 = arith.addf %69, %73 : vector<78x256xf32>
    %75 = vector.extract_strided_slice %55 {offsets = [11, 0], sizes = [78, 160], strides = [1, 1]} : vector<100x160xbf16> to vector<78x160xbf16>
    %c4 = arith.constant 4 : index
    %c0_46 = arith.constant 0 : index
    %c0_47 = arith.constant 0 : index
    %76 = vector.load %arg4[%c4, %c0_46, %c0_47] : memref<9x160x256xbf16, #tpu.memory_space<vmem>>, vector<1x160x256xbf16>
    %77 = vector.shape_cast %76 : vector<1x160x256xbf16> to vector<160x256xbf16>
    %cst_48 = arith.constant dense<0.000000e+00> : vector<78x256xf32>
    %78 = tpu.matmul %75, %77, %cst_48 {dimension_numbers = #tpu.dot_dimension_numbers<[1], [0], [0], [1], [0, 0, 1, 1], [], []>} : vector<78x160xbf16>, vector<160x256xbf16>, vector<78x256xf32> -> vector<78x256xf32>
    %79 = arith.addf %74, %78 : vector<78x256xf32>
    %80 = vector.extract_strided_slice %55 {offsets = [12, 0], sizes = [78, 160], strides = [1, 1]} : vector<100x160xbf16> to vector<78x160xbf16>
    %c5 = arith.constant 5 : index
    %c0_49 = arith.constant 0 : index
    %c0_50 = arith.constant 0 : index
    %81 = vector.load %arg4[%c5, %c0_49, %c0_50] : memref<9x160x256xbf16, #tpu.memory_space<vmem>>, vector<1x160x256xbf16>
    %82 = vector.shape_cast %81 : vector<1x160x256xbf16> to vector<160x256xbf16>
    %cst_51 = arith.constant dense<0.000000e+00> : vector<78x256xf32>
    %83 = tpu.matmul %80, %82, %cst_51 {dimension_numbers = #tpu.dot_dimension_numbers<[1], [0], [0], [1], [0, 0, 1, 1], [], []>} : vector<78x160xbf16>, vector<160x256xbf16>, vector<78x256xf32> -> vector<78x256xf32>
    %84 = arith.addf %79, %83 : vector<78x256xf32>
    %85 = vector.extract_strided_slice %55 {offsets = [20, 0], sizes = [78, 160], strides = [1, 1]} : vector<100x160xbf16> to vector<78x160xbf16>
    %c6 = arith.constant 6 : index
    %c0_52 = arith.constant 0 : index
    %c0_53 = arith.constant 0 : index
    %86 = vector.load %arg4[%c6, %c0_52, %c0_53] : memref<9x160x256xbf16, #tpu.memory_space<vmem>>, vector<1x160x256xbf16>
    %87 = vector.shape_cast %86 : vector<1x160x256xbf16> to vector<160x256xbf16>
    %cst_54 = arith.constant dense<0.000000e+00> : vector<78x256xf32>
    %88 = tpu.matmul %85, %87, %cst_54 {dimension_numbers = #tpu.dot_dimension_numbers<[1], [0], [0], [1], [0, 0, 1, 1], [], []>} : vector<78x160xbf16>, vector<160x256xbf16>, vector<78x256xf32> -> vector<78x256xf32>
    %89 = arith.addf %84, %88 : vector<78x256xf32>
    %90 = vector.extract_strided_slice %55 {offsets = [21, 0], sizes = [78, 160], strides = [1, 1]} : vector<100x160xbf16> to vector<78x160xbf16>
    %c7 = arith.constant 7 : index
    %c0_55 = arith.constant 0 : index
    %c0_56 = arith.constant 0 : index
    %91 = vector.load %arg4[%c7, %c0_55, %c0_56] : memref<9x160x256xbf16, #tpu.memory_space<vmem>>, vector<1x160x256xbf16>
    %92 = vector.shape_cast %91 : vector<1x160x256xbf16> to vector<160x256xbf16>
    %cst_57 = arith.constant dense<0.000000e+00> : vector<78x256xf32>
    %93 = tpu.matmul %90, %92, %cst_57 {dimension_numbers = #tpu.dot_dimension_numbers<[1], [0], [0], [1], [0, 0, 1, 1], [], []>} : vector<78x160xbf16>, vector<160x256xbf16>, vector<78x256xf32> -> vector<78x256xf32>
    %94 = arith.addf %89, %93 : vector<78x256xf32>
    %95 = vector.extract_strided_slice %55 {offsets = [22, 0], sizes = [78, 160], strides = [1, 1]} : vector<100x160xbf16> to vector<78x160xbf16>
    %c8 = arith.constant 8 : index
    %c0_58 = arith.constant 0 : index
    %c0_59 = arith.constant 0 : index
    %96 = vector.load %arg4[%c8, %c0_58, %c0_59] : memref<9x160x256xbf16, #tpu.memory_space<vmem>>, vector<1x160x256xbf16>
    %97 = vector.shape_cast %96 : vector<1x160x256xbf16> to vector<160x256xbf16>
    %cst_60 = arith.constant dense<0.000000e+00> : vector<78x256xf32>
    %98 = tpu.matmul %95, %97, %cst_60 {dimension_numbers = #tpu.dot_dimension_numbers<[1], [0], [0], [1], [0, 0, 1, 1], [], []>} : vector<78x160xbf16>, vector<160x256xbf16>, vector<78x256xf32> -> vector<78x256xf32>
    %99 = arith.addf %94, %98 : vector<78x256xf32>
    %c0_61 = arith.constant 0 : index
    %c0_62 = arith.constant 0 : index
    %100 = vector.load %arg13[%c0_61, %c0_62] : memref<1x78xf32, #tpu.memory_space<vmem>>, vector<1x78xf32>
    %c0_63 = arith.constant 0 : index
    %c0_64 = arith.constant 0 : index
    %101 = vector.load %arg14[%c0_63, %c0_64] : memref<256x32xf32, #tpu.memory_space<vmem>>, vector<256x32xf32>
    %c0_65 = arith.constant 0 : index
    %c0_66 = arith.constant 0 : index
    %102 = vector.load %arg15[%c0_65, %c0_66] : memref<36x78xbf16, #tpu.memory_space<vmem>>, vector<36x78xbf16>
    %c0_67 = arith.constant 0 : index
    %c0_68 = arith.constant 0 : index
    %103 = vector.load %arg16[%c0_67, %c0_68] : memref<256x192xbf16, #tpu.memory_space<vmem>>, vector<256x192xbf16>
    %c0_69 = arith.constant 0 : index
    %c0_70 = arith.constant 0 : index
    %104 = vector.load %arg17[%c0_69, %c0_70] : memref<256x192xbf16, #tpu.memory_space<vmem>>, vector<256x192xbf16>
    %c0_71 = arith.constant 0 : index
    %c0_72 = arith.constant 0 : index
    %105 = vector.load %arg18[%c0_71, %c0_72] : memref<32x192xf32, #tpu.memory_space<vmem>>, vector<32x192xf32>
    %c0_73 = arith.constant 0 : index
    %c0_74 = arith.constant 0 : index
    %106 = vector.load %arg19[%c0_73, %c0_74] : memref<36x1xf32, #tpu.memory_space<vmem>>, vector<36x1xf32>
    %cst_75 = arith.constant dense<0.000000e+00> : vector<1x256xf32>
    %107 = tpu.matmul %100, %99, %cst_75 {dimension_numbers = #tpu.dot_dimension_numbers<[1], [0], [0], [1], [0, 0, 1, 1], [], []>} : vector<1x78xf32>, vector<78x256xf32>, vector<1x256xf32> -> vector<1x256xf32>
    %108 = arith.mulf %99, %99 : vector<78x256xf32>
    %cst_76 = arith.constant dense<0.000000e+00> : vector<1x256xf32>
    %109 = tpu.matmul %100, %108, %cst_76 {dimension_numbers = #tpu.dot_dimension_numbers<[1], [0], [0], [1], [0, 0, 1, 1], [], []>} : vector<1x78xf32>, vector<78x256xf32>, vector<1x256xf32> -> vector<1x256xf32>
    %cst_77 = arith.constant dense<0.000000e+00> : vector<1x32xf32>
    %110 = tpu.matmul %107, %101, %cst_77 {dimension_numbers = #tpu.dot_dimension_numbers<[1], [0], [0], [1], [0, 0, 1, 1], [], []>} : vector<1x256xf32>, vector<256x32xf32>, vector<1x32xf32> -> vector<1x32xf32>
    %cst_78 = arith.constant 0.001953125 : f32
    %111 = vector.broadcast %cst_78 : f32 to vector<1x32xf32>
    %112 = arith.mulf %110, %111 : vector<1x32xf32>
    %cst_79 = arith.constant dense<0.000000e+00> : vector<1x32xf32>
    %113 = tpu.matmul %109, %101, %cst_79 {dimension_numbers = #tpu.dot_dimension_numbers<[1], [0], [0], [1], [0, 0, 1, 1], [], []>} : vector<1x256xf32>, vector<256x32xf32>, vector<1x32xf32> -> vector<1x32xf32>
    %cst_80 = arith.constant 0.001953125 : f32
    %114 = vector.broadcast %cst_80 : f32 to vector<1x32xf32>
    %115 = arith.mulf %113, %114 : vector<1x32xf32>
    %116 = arith.mulf %112, %112 : vector<1x32xf32>
    %117 = arith.subf %115, %116 : vector<1x32xf32>
    %cst_81 = arith.constant 0.000000e+00 : f32
    %118 = vector.broadcast %cst_81 : f32 to vector<1x32xf32>
    %119 = arith.maximumf %117, %118 : vector<1x32xf32>
    %cst_82 = arith.constant 9.99999974E-6 : f32
    %120 = vector.broadcast %cst_82 : f32 to vector<1x32xf32>
    %121 = arith.addf %119, %120 : vector<1x32xf32>
    %122 = math.rsqrt %121 : vector<1x32xf32>
    %cst_83 = arith.constant dense<0.000000e+00> : vector<1x192xf32>
    %123 = tpu.matmul %122, %105, %cst_83 {dimension_numbers = #tpu.dot_dimension_numbers<[1], [0], [0], [1], [0, 0, 1, 1], [], []>} : vector<1x32xf32>, vector<32x192xf32>, vector<1x192xf32> -> vector<1x192xf32>
    %124 = arith.mulf %112, %122 : vector<1x32xf32>
    %cst_84 = arith.constant 0.000000e+00 : f32
    %125 = vector.broadcast %cst_84 : f32 to vector<1x32xf32>
    %126 = arith.subf %125, %124 : vector<1x32xf32>
    %cst_85 = arith.constant dense<0.000000e+00> : vector<1x192xf32>
    %127 = tpu.matmul %126, %105, %cst_85 {dimension_numbers = #tpu.dot_dimension_numbers<[1], [0], [0], [1], [0, 0, 1, 1], [], []>} : vector<1x32xf32>, vector<32x192xf32>, vector<1x192xf32> -> vector<1x192xf32>
    %128 = vector.extract_strided_slice %99 {offsets = [1, 0], sizes = [77, 256], strides = [1, 1]} : vector<78x256xf32> to vector<77x256xf32>
    %129 = vector.extract_strided_slice %99 {offsets = [0, 0], sizes = [1, 256], strides = [1, 1]} : vector<78x256xf32> to vector<1x256xf32>
    %130 = tpu.concatenate %128, %129 in 0 : vector<77x256xf32>, vector<1x256xf32> -> vector<78x256xf32>
    %131 = arith.maximumf %99, %130 : vector<78x256xf32>
    %132 = vector.extract_strided_slice %131 {offsets = [10, 0], sizes = [68, 256], strides = [1, 1]} : vector<78x256xf32> to vector<68x256xf32>
    %133 = vector.extract_strided_slice %131 {offsets = [0, 0], sizes = [10, 256], strides = [1, 1]} : vector<78x256xf32> to vector<10x256xf32>
    %134 = tpu.concatenate %132, %133 in 0 : vector<68x256xf32>, vector<10x256xf32> -> vector<78x256xf32>
    %135 = arith.maximumf %131, %134 : vector<78x256xf32>
    %136 = arith.truncf %135 : vector<78x256xf32> to vector<78x256xbf16>
    %cst_86 = arith.constant dense<0.000000e+00> : vector<36x256xf32>
    %137 = tpu.matmul %102, %136, %cst_86 {dimension_numbers = #tpu.dot_dimension_numbers<[1], [0], [0], [1], [0, 0, 1, 1], [], []>} : vector<36x78xbf16>, vector<78x256xbf16>, vector<36x256xf32> -> vector<36x256xf32>
    %138 = arith.truncf %137 : vector<36x256xf32> to vector<36x256xbf16>
    %cst_87 = arith.constant dense<0.000000e+00> : vector<36x192xf32>
    %139 = tpu.matmul %138, %103, %cst_87 {dimension_numbers = #tpu.dot_dimension_numbers<[1], [0], [0], [1], [0, 0, 1, 1], [], []>} : vector<36x256xbf16>, vector<256x192xbf16>, vector<36x192xf32> -> vector<36x192xf32>
    %cst_88 = arith.constant dense<0.000000e+00> : vector<36x192xf32>
    %140 = tpu.matmul %138, %104, %cst_88 {dimension_numbers = #tpu.dot_dimension_numbers<[1], [0], [0], [1], [0, 0, 1, 1], [], []>} : vector<36x256xbf16>, vector<256x192xbf16>, vector<36x192xf32> -> vector<36x192xf32>
    %141 = arith.maximumf %139, %140 : vector<36x192xf32>
    %142 = vector.broadcast %123 : vector<1x192xf32> to vector<36x192xf32>
    %143 = arith.mulf %141, %142 : vector<36x192xf32>
    %144 = vector.broadcast %127 : vector<1x192xf32> to vector<36x192xf32>
    %145 = arith.addf %143, %144 : vector<36x192xf32>
    %cst_89 = arith.constant 0.00999999977 : f32
    %146 = vector.broadcast %cst_89 : f32 to vector<36x192xf32>
    %147 = arith.mulf %146, %145 : vector<36x192xf32>
    %148 = arith.maximumf %145, %147 : vector<36x192xf32>
    %149 = vector.broadcast %106 : vector<36x1xf32> to vector<36x192xf32>
    %150 = arith.mulf %148, %149 : vector<36x192xf32>
    %151 = arith.truncf %150 : vector<36x192xf32> to vector<36x192xbf16>
    %152 = vector.extract_strided_slice %151 {offsets = [0, 0], sizes = [22, 192], strides = [1, 1]} : vector<36x192xbf16> to vector<22x192xbf16>
    %c0_90 = arith.constant 0 : index
    %c0_91 = arith.constant 0 : index
    %c0_92 = arith.constant 0 : index
    %153 = vector.load %arg5[%c0_90, %c0_91, %c0_92] : memref<9x192x256xbf16, #tpu.memory_space<vmem>>, vector<1x192x256xbf16>
    %154 = vector.shape_cast %153 : vector<1x192x256xbf16> to vector<192x256xbf16>
    %cst_93 = arith.constant dense<0.000000e+00> : vector<22x256xf32>
    %155 = tpu.matmul %152, %154, %cst_93 {dimension_numbers = #tpu.dot_dimension_numbers<[1], [0], [0], [1], [0, 0, 1, 1], [], []>} : vector<22x192xbf16>, vector<192x256xbf16>, vector<22x256xf32> -> vector<22x256xf32>
    %156 = vector.extract_strided_slice %151 {offsets = [1, 0], sizes = [22, 192], strides = [1, 1]} : vector<36x192xbf16> to vector<22x192xbf16>
    %c1_94 = arith.constant 1 : index
    %c0_95 = arith.constant 0 : index
    %c0_96 = arith.constant 0 : index
    %157 = vector.load %arg5[%c1_94, %c0_95, %c0_96] : memref<9x192x256xbf16, #tpu.memory_space<vmem>>, vector<1x192x256xbf16>
    %158 = vector.shape_cast %157 : vector<1x192x256xbf16> to vector<192x256xbf16>
    %cst_97 = arith.constant dense<0.000000e+00> : vector<22x256xf32>
    %159 = tpu.matmul %156, %158, %cst_97 {dimension_numbers = #tpu.dot_dimension_numbers<[1], [0], [0], [1], [0, 0, 1, 1], [], []>} : vector<22x192xbf16>, vector<192x256xbf16>, vector<22x256xf32> -> vector<22x256xf32>
    %160 = arith.addf %155, %159 : vector<22x256xf32>
    %161 = vector.extract_strided_slice %151 {offsets = [2, 0], sizes = [22, 192], strides = [1, 1]} : vector<36x192xbf16> to vector<22x192xbf16>
    %c2_98 = arith.constant 2 : index
    %c0_99 = arith.constant 0 : index
    %c0_100 = arith.constant 0 : index
    %162 = vector.load %arg5[%c2_98, %c0_99, %c0_100] : memref<9x192x256xbf16, #tpu.memory_space<vmem>>, vector<1x192x256xbf16>
    %163 = vector.shape_cast %162 : vector<1x192x256xbf16> to vector<192x256xbf16>
    %cst_101 = arith.constant dense<0.000000e+00> : vector<22x256xf32>
    %164 = tpu.matmul %161, %163, %cst_101 {dimension_numbers = #tpu.dot_dimension_numbers<[1], [0], [0], [1], [0, 0, 1, 1], [], []>} : vector<22x192xbf16>, vector<192x256xbf16>, vector<22x256xf32> -> vector<22x256xf32>
    %165 = arith.addf %160, %164 : vector<22x256xf32>
    %166 = vector.extract_strided_slice %151 {offsets = [6, 0], sizes = [22, 192], strides = [1, 1]} : vector<36x192xbf16> to vector<22x192xbf16>
    %c3_102 = arith.constant 3 : index
    %c0_103 = arith.constant 0 : index
    %c0_104 = arith.constant 0 : index
    %167 = vector.load %arg5[%c3_102, %c0_103, %c0_104] : memref<9x192x256xbf16, #tpu.memory_space<vmem>>, vector<1x192x256xbf16>
    %168 = vector.shape_cast %167 : vector<1x192x256xbf16> to vector<192x256xbf16>
    %cst_105 = arith.constant dense<0.000000e+00> : vector<22x256xf32>
    %169 = tpu.matmul %166, %168, %cst_105 {dimension_numbers = #tpu.dot_dimension_numbers<[1], [0], [0], [1], [0, 0, 1, 1], [], []>} : vector<22x192xbf16>, vector<192x256xbf16>, vector<22x256xf32> -> vector<22x256xf32>
    %170 = arith.addf %165, %169 : vector<22x256xf32>
    %171 = vector.extract_strided_slice %151 {offsets = [7, 0], sizes = [22, 192], strides = [1, 1]} : vector<36x192xbf16> to vector<22x192xbf16>
    %c4_106 = arith.constant 4 : index
    %c0_107 = arith.constant 0 : index
    %c0_108 = arith.constant 0 : index
    %172 = vector.load %arg5[%c4_106, %c0_107, %c0_108] : memref<9x192x256xbf16, #tpu.memory_space<vmem>>, vector<1x192x256xbf16>
    %173 = vector.shape_cast %172 : vector<1x192x256xbf16> to vector<192x256xbf16>
    %cst_109 = arith.constant dense<0.000000e+00> : vector<22x256xf32>
    %174 = tpu.matmul %171, %173, %cst_109 {dimension_numbers = #tpu.dot_dimension_numbers<[1], [0], [0], [1], [0, 0, 1, 1], [], []>} : vector<22x192xbf16>, vector<192x256xbf16>, vector<22x256xf32> -> vector<22x256xf32>
    %175 = arith.addf %170, %174 : vector<22x256xf32>
    %176 = vector.extract_strided_slice %151 {offsets = [8, 0], sizes = [22, 192], strides = [1, 1]} : vector<36x192xbf16> to vector<22x192xbf16>
    %c5_110 = arith.constant 5 : index
    %c0_111 = arith.constant 0 : index
    %c0_112 = arith.constant 0 : index
    %177 = vector.load %arg5[%c5_110, %c0_111, %c0_112] : memref<9x192x256xbf16, #tpu.memory_space<vmem>>, vector<1x192x256xbf16>
    %178 = vector.shape_cast %177 : vector<1x192x256xbf16> to vector<192x256xbf16>
    %cst_113 = arith.constant dense<0.000000e+00> : vector<22x256xf32>
    %179 = tpu.matmul %176, %178, %cst_113 {dimension_numbers = #tpu.dot_dimension_numbers<[1], [0], [0], [1], [0, 0, 1, 1], [], []>} : vector<22x192xbf16>, vector<192x256xbf16>, vector<22x256xf32> -> vector<22x256xf32>
    %180 = arith.addf %175, %179 : vector<22x256xf32>
    %181 = vector.extract_strided_slice %151 {offsets = [12, 0], sizes = [22, 192], strides = [1, 1]} : vector<36x192xbf16> to vector<22x192xbf16>
    %c6_114 = arith.constant 6 : index
    %c0_115 = arith.constant 0 : index
    %c0_116 = arith.constant 0 : index
    %182 = vector.load %arg5[%c6_114, %c0_115, %c0_116] : memref<9x192x256xbf16, #tpu.memory_space<vmem>>, vector<1x192x256xbf16>
    %183 = vector.shape_cast %182 : vector<1x192x256xbf16> to vector<192x256xbf16>
    %cst_117 = arith.constant dense<0.000000e+00> : vector<22x256xf32>
    %184 = tpu.matmul %181, %183, %cst_117 {dimension_numbers = #tpu.dot_dimension_numbers<[1], [0], [0], [1], [0, 0, 1, 1], [], []>} : vector<22x192xbf16>, vector<192x256xbf16>, vector<22x256xf32> -> vector<22x256xf32>
    %185 = arith.addf %180, %184 : vector<22x256xf32>
    %186 = vector.extract_strided_slice %151 {offsets = [13, 0], sizes = [22, 192], strides = [1, 1]} : vector<36x192xbf16> to vector<22x192xbf16>
    %c7_118 = arith.constant 7 : index
    %c0_119 = arith.constant 0 : index
    %c0_120 = arith.constant 0 : index
    %187 = vector.load %arg5[%c7_118, %c0_119, %c0_120] : memref<9x192x256xbf16, #tpu.memory_space<vmem>>, vector<1x192x256xbf16>
    %188 = vector.shape_cast %187 : vector<1x192x256xbf16> to vector<192x256xbf16>
    %cst_121 = arith.constant dense<0.000000e+00> : vector<22x256xf32>
    %189 = tpu.matmul %186, %188, %cst_121 {dimension_numbers = #tpu.dot_dimension_numbers<[1], [0], [0], [1], [0, 0, 1, 1], [], []>} : vector<22x192xbf16>, vector<192x256xbf16>, vector<22x256xf32> -> vector<22x256xf32>
    %190 = arith.addf %185, %189 : vector<22x256xf32>
    %191 = vector.extract_strided_slice %151 {offsets = [14, 0], sizes = [22, 192], strides = [1, 1]} : vector<36x192xbf16> to vector<22x192xbf16>
    %c8_122 = arith.constant 8 : index
    %c0_123 = arith.constant 0 : index
    %c0_124 = arith.constant 0 : index
    %192 = vector.load %arg5[%c8_122, %c0_123, %c0_124] : memref<9x192x256xbf16, #tpu.memory_space<vmem>>, vector<1x192x256xbf16>
    %193 = vector.shape_cast %192 : vector<1x192x256xbf16> to vector<192x256xbf16>
    %cst_125 = arith.constant dense<0.000000e+00> : vector<22x256xf32>
    %194 = tpu.matmul %191, %193, %cst_125 {dimension_numbers = #tpu.dot_dimension_numbers<[1], [0], [0], [1], [0, 0, 1, 1], [], []>} : vector<22x192xbf16>, vector<192x256xbf16>, vector<22x256xf32> -> vector<22x256xf32>
    %195 = arith.addf %190, %194 : vector<22x256xf32>
    %c0_126 = arith.constant 0 : index
    %c0_127 = arith.constant 0 : index
    %196 = vector.load %arg20[%c0_126, %c0_127] : memref<1x22xf32, #tpu.memory_space<vmem>>, vector<1x22xf32>
    %c0_128 = arith.constant 0 : index
    %c0_129 = arith.constant 0 : index
    %197 = vector.load %arg21[%c0_128, %c0_129] : memref<256x64xf32, #tpu.memory_space<vmem>>, vector<256x64xf32>
    %c0_130 = arith.constant 0 : index
    %c0_131 = arith.constant 0 : index
    %198 = vector.load %arg22[%c0_130, %c0_131] : memref<4x22xbf16, #tpu.memory_space<vmem>>, vector<4x22xbf16>
    %c0_132 = arith.constant 0 : index
    %c0_133 = arith.constant 0 : index
    %199 = vector.load %arg23[%c0_132, %c0_133] : memref<256x128xbf16, #tpu.memory_space<vmem>>, vector<256x128xbf16>
    %c0_134 = arith.constant 0 : index
    %c0_135 = arith.constant 0 : index
    %200 = vector.load %arg24[%c0_134, %c0_135] : memref<256x128xbf16, #tpu.memory_space<vmem>>, vector<256x128xbf16>
    %c0_136 = arith.constant 0 : index
    %c0_137 = arith.constant 0 : index
    %201 = vector.load %arg25[%c0_136, %c0_137] : memref<64x128xf32, #tpu.memory_space<vmem>>, vector<64x128xf32>
    %cst_138 = arith.constant dense<0.000000e+00> : vector<1x256xf32>
    %202 = tpu.matmul %196, %195, %cst_138 {dimension_numbers = #tpu.dot_dimension_numbers<[1], [0], [0], [1], [0, 0, 1, 1], [], []>} : vector<1x22xf32>, vector<22x256xf32>, vector<1x256xf32> -> vector<1x256xf32>
    %203 = arith.mulf %195, %195 : vector<22x256xf32>
    %cst_139 = arith.constant dense<0.000000e+00> : vector<1x256xf32>
    %204 = tpu.matmul %196, %203, %cst_139 {dimension_numbers = #tpu.dot_dimension_numbers<[1], [0], [0], [1], [0, 0, 1, 1], [], []>} : vector<1x22xf32>, vector<22x256xf32>, vector<1x256xf32> -> vector<1x256xf32>
    %cst_140 = arith.constant dense<0.000000e+00> : vector<1x64xf32>
    %205 = tpu.matmul %202, %197, %cst_140 {dimension_numbers = #tpu.dot_dimension_numbers<[1], [0], [0], [1], [0, 0, 1, 1], [], []>} : vector<1x256xf32>, vector<256x64xf32>, vector<1x64xf32> -> vector<1x64xf32>
    %cst_141 = arith.constant 1.562500e-02 : f32
    %206 = vector.broadcast %cst_141 : f32 to vector<1x64xf32>
    %207 = arith.mulf %205, %206 : vector<1x64xf32>
    %cst_142 = arith.constant dense<0.000000e+00> : vector<1x64xf32>
    %208 = tpu.matmul %204, %197, %cst_142 {dimension_numbers = #tpu.dot_dimension_numbers<[1], [0], [0], [1], [0, 0, 1, 1], [], []>} : vector<1x256xf32>, vector<256x64xf32>, vector<1x64xf32> -> vector<1x64xf32>
    %cst_143 = arith.constant 1.562500e-02 : f32
    %209 = vector.broadcast %cst_143 : f32 to vector<1x64xf32>
    %210 = arith.mulf %208, %209 : vector<1x64xf32>
    %211 = arith.mulf %207, %207 : vector<1x64xf32>
    %212 = arith.subf %210, %211 : vector<1x64xf32>
    %cst_144 = arith.constant 0.000000e+00 : f32
    %213 = vector.broadcast %cst_144 : f32 to vector<1x64xf32>
    %214 = arith.maximumf %212, %213 : vector<1x64xf32>
    %cst_145 = arith.constant 9.99999974E-6 : f32
    %215 = vector.broadcast %cst_145 : f32 to vector<1x64xf32>
    %216 = arith.addf %214, %215 : vector<1x64xf32>
    %217 = math.rsqrt %216 : vector<1x64xf32>
    %cst_146 = arith.constant dense<0.000000e+00> : vector<1x128xf32>
    %218 = tpu.matmul %217, %201, %cst_146 {dimension_numbers = #tpu.dot_dimension_numbers<[1], [0], [0], [1], [0, 0, 1, 1], [], []>} : vector<1x64xf32>, vector<64x128xf32>, vector<1x128xf32> -> vector<1x128xf32>
    %219 = arith.mulf %207, %217 : vector<1x64xf32>
    %cst_147 = arith.constant 0.000000e+00 : f32
    %220 = vector.broadcast %cst_147 : f32 to vector<1x64xf32>
    %221 = arith.subf %220, %219 : vector<1x64xf32>
    %cst_148 = arith.constant dense<0.000000e+00> : vector<1x128xf32>
    %222 = tpu.matmul %221, %201, %cst_148 {dimension_numbers = #tpu.dot_dimension_numbers<[1], [0], [0], [1], [0, 0, 1, 1], [], []>} : vector<1x64xf32>, vector<64x128xf32>, vector<1x128xf32> -> vector<1x128xf32>
    %223 = vector.extract_strided_slice %195 {offsets = [1, 0], sizes = [21, 256], strides = [1, 1]} : vector<22x256xf32> to vector<21x256xf32>
    %224 = vector.extract_strided_slice %195 {offsets = [0, 0], sizes = [1, 256], strides = [1, 1]} : vector<22x256xf32> to vector<1x256xf32>
    %225 = tpu.concatenate %223, %224 in 0 : vector<21x256xf32>, vector<1x256xf32> -> vector<22x256xf32>
    %226 = arith.maximumf %195, %225 : vector<22x256xf32>
    %227 = vector.extract_strided_slice %226 {offsets = [6, 0], sizes = [16, 256], strides = [1, 1]} : vector<22x256xf32> to vector<16x256xf32>
    %228 = vector.extract_strided_slice %226 {offsets = [0, 0], sizes = [6, 256], strides = [1, 1]} : vector<22x256xf32> to vector<6x256xf32>
    %229 = tpu.concatenate %227, %228 in 0 : vector<16x256xf32>, vector<6x256xf32> -> vector<22x256xf32>
    %230 = arith.maximumf %226, %229 : vector<22x256xf32>
    %231 = arith.truncf %230 : vector<22x256xf32> to vector<22x256xbf16>
    %cst_149 = arith.constant dense<0.000000e+00> : vector<4x256xf32>
    %232 = tpu.matmul %198, %231, %cst_149 {dimension_numbers = #tpu.dot_dimension_numbers<[1], [0], [0], [1], [0, 0, 1, 1], [], []>} : vector<4x22xbf16>, vector<22x256xbf16>, vector<4x256xf32> -> vector<4x256xf32>
    %233 = arith.truncf %232 : vector<4x256xf32> to vector<4x256xbf16>
    %cst_150 = arith.constant dense<0.000000e+00> : vector<4x128xf32>
    %234 = tpu.matmul %233, %199, %cst_150 {dimension_numbers = #tpu.dot_dimension_numbers<[1], [0], [0], [1], [0, 0, 1, 1], [], []>} : vector<4x256xbf16>, vector<256x128xbf16>, vector<4x128xf32> -> vector<4x128xf32>
    %cst_151 = arith.constant dense<0.000000e+00> : vector<4x128xf32>
    %235 = tpu.matmul %233, %200, %cst_151 {dimension_numbers = #tpu.dot_dimension_numbers<[1], [0], [0], [1], [0, 0, 1, 1], [], []>} : vector<4x256xbf16>, vector<256x128xbf16>, vector<4x128xf32> -> vector<4x128xf32>
    %236 = arith.maximumf %234, %235 : vector<4x128xf32>
    %237 = vector.broadcast %218 : vector<1x128xf32> to vector<4x128xf32>
    %238 = arith.mulf %236, %237 : vector<4x128xf32>
    %239 = vector.broadcast %222 : vector<1x128xf32> to vector<4x128xf32>
    %240 = arith.addf %238, %239 : vector<4x128xf32>
    %cst_152 = arith.constant 0.00999999977 : f32
    %241 = vector.broadcast %cst_152 : f32 to vector<4x128xf32>
    %242 = arith.mulf %241, %240 : vector<4x128xf32>
    %243 = arith.maximumf %240, %242 : vector<4x128xf32>
    %cst_153 = arith.constant dense<0.000000e+00> : vector<128xf32>
    %244 = vector.multi_reduction <add>, %243, %cst_153 [0] : vector<4x128xf32> to vector<128xf32>
    %245 = vector.shape_cast %244 : vector<128xf32> to vector<1x128xf32>
    %c0_154 = arith.constant 0 : index
    %c0_155 = arith.constant 0 : index
    %246 = vector.load %arg26[%c0_154, %c0_155] : memref<128x64xf32, #tpu.memory_space<vmem>>, vector<128x64xf32>
    %cst_156 = arith.constant dense<0.000000e+00> : vector<1x64xf32>
    %247 = tpu.matmul %245, %246, %cst_156 {dimension_numbers = #tpu.dot_dimension_numbers<[1], [0], [0], [1], [0, 0, 1, 1], [], []>} : vector<1x128xf32>, vector<128x64xf32>, vector<1x64xf32> -> vector<1x64xf32>
    %c0_157 = arith.constant 0 : index
    %c0_158 = arith.constant 0 : index
    %248 = vector.load %arg27[%c0_157, %c0_158] : memref<64x64xf32, #tpu.memory_space<vmem>>, vector<64x64xf32>
    %cst_159 = arith.constant dense<0.000000e+00> : vector<1x64xf32>
    %249 = tpu.matmul %247, %248, %cst_159 {dimension_numbers = #tpu.dot_dimension_numbers<[1], [0], [0], [1], [0, 0, 1, 1], [], []>} : vector<1x64xf32>, vector<64x64xf32>, vector<1x64xf32> -> vector<1x64xf32>
    %c0_160 = arith.constant 0 : index
    %c0_161 = arith.constant 0 : index
    %250 = vector.load %arg28[%c0_160, %c0_161] : memref<1x64xf32, #tpu.memory_space<vmem>>, vector<1x64xf32>
    %251 = arith.addf %249, %250 : vector<1x64xf32>
    %252 = arith.negf %251 : vector<1x64xf32>
    %253 = math.exp %252 : vector<1x64xf32>
    %cst_162 = arith.constant 1.000000e+00 : f32
    %254 = vector.broadcast %cst_162 : f32 to vector<1x64xf32>
    %255 = arith.addf %254, %253 : vector<1x64xf32>
    %256 = arith.divf %254, %255 : vector<1x64xf32>
    %257 = arith.mulf %251, %256 : vector<1x64xf32>
    %c0_163 = arith.constant 0 : index
    %c0_164 = arith.constant 0 : index
    %258 = vector.load %arg29[%c0_163, %c0_164] : memref<64x128xf32, #tpu.memory_space<vmem>>, vector<64x128xf32>
    %cst_165 = arith.constant dense<0.000000e+00> : vector<1x128xf32>
    %259 = tpu.matmul %257, %258, %cst_165 {dimension_numbers = #tpu.dot_dimension_numbers<[1], [0], [0], [1], [0, 0, 1, 1], [], []>} : vector<1x64xf32>, vector<64x128xf32>, vector<1x128xf32> -> vector<1x128xf32>
    %c0_166 = arith.constant 0 : index
    %c0_167 = arith.constant 0 : index
    %c0_168 = arith.constant 0 : index
    %260 = vector.load %arg2[%c0_166, %c0_167, %c0_168] : memref<1x1x17xf32, #tpu.memory_space<vmem>>, vector<1x1x17xf32>
    %261 = vector.shape_cast %260 : vector<1x1x17xf32> to vector<1x17xf32>
    %c0_169 = arith.constant 0 : index
    %c0_170 = arith.constant 0 : index
    %262 = vector.load %arg30[%c0_169, %c0_170] : memref<17x128xf32, #tpu.memory_space<vmem>>, vector<17x128xf32>
    %cst_171 = arith.constant dense<0.000000e+00> : vector<1x128xf32>
    %263 = tpu.matmul %261, %262, %cst_171 {dimension_numbers = #tpu.dot_dimension_numbers<[1], [0], [0], [1], [0, 0, 1, 1], [], []>} : vector<1x17xf32>, vector<17x128xf32>, vector<1x128xf32> -> vector<1x128xf32>
    %264 = arith.addf %259, %263 : vector<1x128xf32>
    %c0_172 = arith.constant 0 : index
    %c0_173 = arith.constant 0 : index
    %265 = vector.load %arg31[%c0_172, %c0_173] : memref<1x128xf32, #tpu.memory_space<vmem>>, vector<1x128xf32>
    %266 = arith.addf %264, %265 : vector<1x128xf32>
    %c0_174 = arith.constant 0 : index
    %c0_175 = arith.constant 0 : index
    %267 = vector.load %arg32[%c0_174, %c0_175] : memref<1x128xf32, #tpu.memory_space<vmem>>, vector<1x128xf32>
    %268 = arith.mulf %266, %267 : vector<1x128xf32>
    %c0_176 = arith.constant 0 : index
    %c0_177 = arith.constant 0 : index
    %269 = vector.load %arg33[%c0_176, %c0_177] : memref<1x128xf32, #tpu.memory_space<vmem>>, vector<1x128xf32>
    %270 = arith.addf %268, %269 : vector<1x128xf32>
    %271 = arith.negf %270 : vector<1x128xf32>
    %272 = math.exp %271 : vector<1x128xf32>
    %cst_178 = arith.constant 1.000000e+00 : f32
    %273 = vector.broadcast %cst_178 : f32 to vector<1x128xf32>
    %274 = arith.addf %273, %272 : vector<1x128xf32>
    %275 = arith.divf %273, %274 : vector<1x128xf32>
    %276 = arith.mulf %270, %275 : vector<1x128xf32>
    %c0_179 = arith.constant 0 : index
    %c0_180 = arith.constant 0 : index
    %277 = vector.load %arg34[%c0_179, %c0_180] : memref<1x128xf32, #tpu.memory_space<vmem>>, vector<1x128xf32>
    %278 = arith.mulf %276, %277 : vector<1x128xf32>
    %cst_181 = arith.constant dense<0.000000e+00> : vector<1xf32>
    %279 = vector.multi_reduction <add>, %278, %cst_181 [1] : vector<1x128xf32> to vector<1xf32>
    %280 = vector.shape_cast %279 : vector<1xf32> to vector<1x1xf32>
    %c0_182 = arith.constant 0 : index
    %c0_183 = arith.constant 0 : index
    %281 = vector.load %arg35[%c0_182, %c0_183] : memref<1x1xf32, #tpu.memory_space<vmem>>, vector<1x1xf32>
    %282 = arith.addf %280, %281 : vector<1x1xf32>
    %c0_184 = arith.constant 0 : index
    %c0_185 = arith.constant 0 : index
    %c0_186 = arith.constant 0 : index
    %283 = vector.load %arg36[%c0_184, %c0_185, %c0_186] : memref<1x1x1xf32, #tpu.memory_space<vmem>>, vector<1x1x1xf32>
    %284 = vector.shape_cast %283 : vector<1x1x1xf32> to vector<1x1xf32>
    %285 = vector.shape_cast %282 : vector<1x1xf32> to vector<1x1x1xf32>
    tpu.vector_store %arg36[%c0_184, %c0_185, %c0_186], %285 {strides = array<i32>} : memref<1x1x1xf32, #tpu.memory_space<vmem>>, vector<1x1x1xf32>,
    return
  }
  func.func @transform_0(%arg0: i32) -> (i32, i32, i32) {
    %c0_i32 = arith.constant 0 : i32
    %c0_i32_0 = arith.constant 0 : i32
    %c0_i32_1 = arith.constant 0 : i32
    return %arg0, %c0_i32, %c0_i32_0 : i32, i32, i32
  }
  func.func @transform_1(%arg0: i32) -> (i32, i32, i32) {
    %c0_i32 = arith.constant 0 : i32
    %c0_i32_0 = arith.constant 0 : i32
    %c0_i32_1 = arith.constant 0 : i32
    return %arg0, %c0_i32, %c0_i32_0 : i32, i32, i32
  }
  func.func @transform_2(%arg0: i32) -> (i32, i32) {
    %c0_i32 = arith.constant 0 : i32
    %c0_i32_0 = arith.constant 0 : i32
    %c0_i32_1 = arith.constant 0 : i32
    return %c0_i32, %c0_i32_0 : i32, i32
  }
  func.func @transform_3(%arg0: i32) -> (i32, i32, i32) {
    %c0_i32 = arith.constant 0 : i32
    %c0_i32_0 = arith.constant 0 : i32
    %c0_i32_1 = arith.constant 0 : i32
    %c0_i32_2 = arith.constant 0 : i32
    return %c0_i32, %c0_i32_0, %c0_i32_1 : i32, i32, i32
  }
  func.func @transform_4(%arg0: i32) -> (i32, i32, i32) {
    %c0_i32 = arith.constant 0 : i32
    %c0_i32_0 = arith.constant 0 : i32
    %c0_i32_1 = arith.constant 0 : i32
    %c0_i32_2 = arith.constant 0 : i32
    return %c0_i32, %c0_i32_0, %c0_i32_1 : i32, i32, i32
  }
  func.func @transform_5(%arg0: i32) -> (i32, i32) {
    %c0_i32 = arith.constant 0 : i32
    %c0_i32_0 = arith.constant 0 : i32
    %c0_i32_1 = arith.constant 0 : i32
    return %c0_i32, %c0_i32_0 : i32, i32
  }
  func.func @transform_6(%arg0: i32) -> (i32, i32) {
    %c0_i32 = arith.constant 0 : i32
    %c0_i32_0 = arith.constant 0 : i32
    %c0_i32_1 = arith.constant 0 : i32
    return %c0_i32, %c0_i32_0 : i32, i32
  }
  func.func @transform_7(%arg0: i32) -> (i32, i32) {
    %c0_i32 = arith.constant 0 : i32
    %c0_i32_0 = arith.constant 0 : i32
    %c0_i32_1 = arith.constant 0 : i32
    return %c0_i32, %c0_i32_0 : i32, i32
  }
  func.func @transform_8(%arg0: i32) -> (i32, i32) {
    %c0_i32 = arith.constant 0 : i32
    %c0_i32_0 = arith.constant 0 : i32
    %c0_i32_1 = arith.constant 0 : i32
    return %c0_i32, %c0_i32_0 : i32, i32
  }
  func.func @transform_9(%arg0: i32) -> (i32, i32) {
    %c0_i32 = arith.constant 0 : i32
    %c0_i32_0 = arith.constant 0 : i32
    %c0_i32_1 = arith.constant 0 : i32
    return %c0_i32, %c0_i32_0 : i32, i32
  }
  func.func @transform_10(%arg0: i32) -> (i32, i32) {
    %c0_i32 = arith.constant 0 : i32
    %c0_i32_0 = arith.constant 0 : i32
    %c0_i32_1 = arith.constant 0 : i32
    return %c0_i32, %c0_i32_0 : i32, i32
  }
  func.func @transform_11(%arg0: i32) -> (i32, i32) {
    %c0_i32 = arith.constant 0 : i32
    %c0_i32_0 = arith.constant 0 : i32
    %c0_i32_1 = arith.constant 0 : i32
    return %c0_i32, %c0_i32_0 : i32, i32
  }
  func.func @transform_12(%arg0: i32) -> (i32, i32) {
    %c0_i32 = arith.constant 0 : i32
    %c0_i32_0 = arith.constant 0 : i32
    %c0_i32_1 = arith.constant 0 : i32
    return %c0_i32, %c0_i32_0 : i32, i32
  }
  func.func @transform_13(%arg0: i32) -> (i32, i32) {
    %c0_i32 = arith.constant 0 : i32
    %c0_i32_0 = arith.constant 0 : i32
    %c0_i32_1 = arith.constant 0 : i32
    return %c0_i32, %c0_i32_0 : i32, i32
  }
  func.func @transform_14(%arg0: i32) -> (i32, i32) {
    %c0_i32 = arith.constant 0 : i32
    %c0_i32_0 = arith.constant 0 : i32
    %c0_i32_1 = arith.constant 0 : i32
    return %c0_i32, %c0_i32_0 : i32, i32
  }
  func.func @transform_15(%arg0: i32) -> (i32, i32) {
    %c0_i32 = arith.constant 0 : i32
    %c0_i32_0 = arith.constant 0 : i32
    %c0_i32_1 = arith.constant 0 : i32
    return %c0_i32, %c0_i32_0 : i32, i32
  }
  func.func @transform_16(%arg0: i32) -> (i32, i32) {
    %c0_i32 = arith.constant 0 : i32
    %c0_i32_0 = arith.constant 0 : i32
    %c0_i32_1 = arith.constant 0 : i32
    return %c0_i32, %c0_i32_0 : i32, i32
  }
  func.func @transform_17(%arg0: i32) -> (i32, i32) {
    %c0_i32 = arith.constant 0 : i32
    %c0_i32_0 = arith.constant 0 : i32
    %c0_i32_1 = arith.constant 0 : i32
    return %c0_i32, %c0_i32_0 : i32, i32
  }
  func.func @transform_18(%arg0: i32) -> (i32, i32) {
    %c0_i32 = arith.constant 0 : i32
    %c0_i32_0 = arith.constant 0 : i32
    %c0_i32_1 = arith.constant 0 : i32
    return %c0_i32, %c0_i32_0 : i32, i32
  }
  func.func @transform_19(%arg0: i32) -> (i32, i32) {
    %c0_i32 = arith.constant 0 : i32
    %c0_i32_0 = arith.constant 0 : i32
    %c0_i32_1 = arith.constant 0 : i32
    return %c0_i32, %c0_i32_0 : i32, i32
  }
  func.func @transform_20(%arg0: i32) -> (i32, i32) {
    %c0_i32 = arith.constant 0 : i32
    %c0_i32_0 = arith.constant 0 : i32
    %c0_i32_1 = arith.constant 0 : i32
    return %c0_i32, %c0_i32_0 : i32, i32
  }
  func.func @transform_21(%arg0: i32) -> (i32, i32) {
    %c0_i32 = arith.constant 0 : i32
    %c0_i32_0 = arith.constant 0 : i32
    %c0_i32_1 = arith.constant 0 : i32
    return %c0_i32, %c0_i32_0 : i32, i32
  }
  func.func @transform_22(%arg0: i32) -> (i32, i32) {
    %c0_i32 = arith.constant 0 : i32
    %c0_i32_0 = arith.constant 0 : i32
    %c0_i32_1 = arith.constant 0 : i32
    return %c0_i32, %c0_i32_0 : i32, i32
  }
  func.func @transform_23(%arg0: i32) -> (i32, i32) {
    %c0_i32 = arith.constant 0 : i32
    %c0_i32_0 = arith.constant 0 : i32
    %c0_i32_1 = arith.constant 0 : i32
    return %c0_i32, %c0_i32_0 : i32, i32
  }
  func.func @transform_24(%arg0: i32) -> (i32, i32) {
    %c0_i32 = arith.constant 0 : i32
    %c0_i32_0 = arith.constant 0 : i32
    %c0_i32_1 = arith.constant 0 : i32
    return %c0_i32, %c0_i32_0 : i32, i32
  }
  func.func @transform_25(%arg0: i32) -> (i32, i32) {
    %c0_i32 = arith.constant 0 : i32
    %c0_i32_0 = arith.constant 0 : i32
    %c0_i32_1 = arith.constant 0 : i32
    return %c0_i32, %c0_i32_0 : i32, i32
  }
  func.func @transform_26(%arg0: i32) -> (i32, i32) {
    %c0_i32 = arith.constant 0 : i32
    %c0_i32_0 = arith.constant 0 : i32
    %c0_i32_1 = arith.constant 0 : i32
    return %c0_i32, %c0_i32_0 : i32, i32
  }
  func.func @transform_27(%arg0: i32) -> (i32, i32) {
    %c0_i32 = arith.constant 0 : i32
    %c0_i32_0 = arith.constant 0 : i32
    %c0_i32_1 = arith.constant 0 : i32
    return %c0_i32, %c0_i32_0 : i32, i32
  }
  func.func @transform_28(%arg0: i32) -> (i32, i32) {
    %c0_i32 = arith.constant 0 : i32
    %c0_i32_0 = arith.constant 0 : i32
    %c0_i32_1 = arith.constant 0 : i32
    return %c0_i32, %c0_i32_0 : i32, i32
  }
  func.func @transform_29(%arg0: i32) -> (i32, i32) {
    %c0_i32 = arith.constant 0 : i32
    %c0_i32_0 = arith.constant 0 : i32
    %c0_i32_1 = arith.constant 0 : i32
    return %c0_i32, %c0_i32_0 : i32, i32
  }
  func.func @transform_30(%arg0: i32) -> (i32, i32) {
    %c0_i32 = arith.constant 0 : i32
    %c0_i32_0 = arith.constant 0 : i32
    %c0_i32_1 = arith.constant 0 : i32
    return %c0_i32, %c0_i32_0 : i32, i32
  }
  func.func @transform_31(%arg0: i32) -> (i32, i32) {
    %c0_i32 = arith.constant 0 : i32
    %c0_i32_0 = arith.constant 0 : i32
    %c0_i32_1 = arith.constant 0 : i32
    return %c0_i32, %c0_i32_0 : i32, i32
  }
  func.func @transform_32(%arg0: i32) -> (i32, i32) {
    %c0_i32 = arith.constant 0 : i32
    %c0_i32_0 = arith.constant 0 : i32
    %c0_i32_1 = arith.constant 0 : i32
    return %c0_i32, %c0_i32_0 : i32, i32
  }
  func.func @transform_33(%arg0: i32) -> (i32, i32) {
    %c0_i32 = arith.constant 0 : i32
    %c0_i32_0 = arith.constant 0 : i32
    %c0_i32_1 = arith.constant 0 : i32
    return %c0_i32, %c0_i32_0 : i32, i32
  }
  func.func @transform_34(%arg0: i32) -> (i32, i32) {
    %c0_i32 = arith.constant 0 : i32
    %c0_i32_0 = arith.constant 0 : i32
    %c0_i32_1 = arith.constant 0 : i32
    return %c0_i32, %c0_i32_0 : i32, i32
  }
  func.func @transform_35(%arg0: i32) -> (i32, i32, i32) {
    %c0_i32 = arith.constant 0 : i32
    %c0_i32_0 = arith.constant 0 : i32
    %c0_i32_1 = arith.constant 0 : i32
    return %arg0, %c0_i32, %c0_i32_0 : i32, i32, i32
  }
}

</mosaic_0001>

<llo_original>
// kernel: deepynet_v2_1_forward.1
$region0: #{deepynet_v2_1_forward.1}
  #allocation0 [shape = 'u32[]', space=smem, size = 0x4, offset = 0x4, fixed_abs, tag = 'smem constant byte address 0x4 - core index']
  #allocation1 [shape = 'u32[144,128]{1,0:T(1,128)}', space=vmem, size = 0x12000, scoped, tag = 'internal scratch']
  #allocation2 [shape = 'f32[1,1]{1,0:T(1,128)S(1)}', space=vmem, size = 0x200, scoped, tag = 'scoped memory for deepynet_v2_1_forward.1']
  %s0 = inlined_call_operand.smem [shape: u32[36], index: -1, kind: input, shape index: {}]
  %s1 = sld [smem:[%s0]]
  %s2 = scalar_lea.smem %s0, 1
  %s3 = sld [smem:[%s2]]
  %s4 = scalar_lea.smem %s0, 2
  %s5 = sld [smem:[%s4]]
  %s6 = scalar_lea.smem %s0, 3
  %s7 = sld [smem:[%s6]]
  %s8 = scalar_lea.smem %s0, 4
  %s9 = sld [smem:[%s8]]
  %s10 = scalar_lea.smem %s0, 5
  %s11 = sld [smem:[%s10]]
  %s12 = scalar_lea.smem %s0, 6
  %s13 = sld [smem:[%s12]]
  %s14 = scalar_lea.smem %s0, 7
  %s15 = sld [smem:[%s14]]
  %s16 = scalar_lea.smem %s0, 8
  %s17 = sld [smem:[%s16]]
  %s18 = scalar_lea.smem %s0, 9
  %s19 = sld [smem:[%s18]]
  %s20 = scalar_lea.smem %s0, 10
  %s21 = sld [smem:[%s20]]
  %s22 = scalar_lea.smem %s0, 11
  %s23 = sld [smem:[%s22]]
  %s24 = scalar_lea.smem %s0, 12
  %s25 = sld [smem:[%s24]]
  %s26 = scalar_lea.smem %s0, 13
  %s27 = sld [smem:[%s26]]
  %s28 = scalar_lea.smem %s0, 14
  %s29 = sld [smem:[%s28]]
  %s30 = scalar_lea.smem %s0, 15
  %s31 = sld [smem:[%s30]]
  %s32 = scalar_lea.smem %s0, 16
  %s33 = sld [smem:[%s32]]
  %s34 = scalar_lea.smem %s0, 17
  %s35 = sld [smem:[%s34]]
  %s36 = scalar_lea.smem %s0, 18
  %s37 = sld [smem:[%s36]]
  %s38 = scalar_lea.smem %s0, 19
  %s39 = sld [smem:[%s38]]
  %s40 = scalar_lea.smem %s0, 20
  %s41 = sld [smem:[%s40]]
  %s42 = scalar_lea.smem %s0, 21
  %s43 = sld [smem:[%s42]]
  %s44 = scalar_lea.smem %s0, 22
  %s45 = sld [smem:[%s44]]
  %s46 = scalar_lea.smem %s0, 23
  %s47 = sld [smem:[%s46]]
  %s48 = scalar_lea.smem %s0, 24
  %s49 = sld [smem:[%s48]]
  %s50 = scalar_lea.smem %s0, 25
  %s51 = sld [smem:[%s50]]
  %s52 = scalar_lea.smem %s0, 26
  %s53 = sld [smem:[%s52]]
  %s54 = scalar_lea.smem %s0, 27
  %s55 = sld [smem:[%s54]]
  %s56 = scalar_lea.smem %s0, 28
  %s57 = sld [smem:[%s56]]
  %s58 = scalar_lea.smem %s0, 29
  %s59 = sld [smem:[%s58]]
  %s60 = scalar_lea.smem %s0, 30
  %s61 = sld [smem:[%s60]]
  %s62 = scalar_lea.smem %s0, 31
  %s63 = sld [smem:[%s62]]
  %s64 = scalar_lea.smem %s0, 32
  %s65 = sld [smem:[%s64]]
  %s66 = scalar_lea.smem %s0, 33
  %s67 = sld [smem:[%s66]]
  %s68 = scalar_lea.smem %s0, 34
  %s69 = sld [smem:[%s68]]
  %s70 = scalar_lea.smem %s0, 35
  %s71 = sld [smem:[%s70]]
  %s72 = sld [smem:[#allocation0]]
  $region173: #{deepynet_v2_1_forward.1} parent=0
    _
  %s74 = ssub.s32 1, %s72
  %s75 = scalar_select 0, %s74, %s72
  %v76 = vstv %s69
  %77 = vst [vmem:[#allocation2] sm:$0x1] %v76
  loop: start=0, step=1, limit=4
  $region2: #{deepynet_v2_1_forward.1} parent=0 // loop_pre_header
    _
  $region3: #{deepynet_v2_1_forward.1} parent=0 // loop_header
    %s79 = sphi 0, %s83
    %p80 = scmp.ge.s32.totalorder %s79, 4
    %s89 = sphi 0, %s91
    %s92 = sphi 0, %s89
    %s93 = sphi 0, %s92
    %s109 = sphi 0, %s93
    %s115 = sphi 0, %s117
    %s118 = sphi 0, %s115
    %s119 = sphi 0, %s118
    %s135 = sphi 0, %s119
    %s139 = sphi 0, %s139
    %s141 = sphi 0, %s139
    %s142 = sphi 0, %s141
    %s156 = sphi 0, %s142
    %s160 = sphi 0, %s160
    %s162 = sphi 0, %s160
    %s163 = sphi 0, %s162
    %s177 = sphi 0, %s163
    %s181 = sphi 0, %s181
    %s183 = sphi 0, %s181
    %s184 = sphi 0, %s183
    %s198 = sphi 0, %s184
    %s202 = sphi 0, %s202
    %s204 = sphi 0, %s202
    %s205 = sphi 0, %s204
    %s219 = sphi 0, %s205
    %s223 = sphi 0, %s223
    %s225 = sphi 0, %s223
    %s226 = sphi 0, %s225
    %s240 = sphi 0, %s226
    %s244 = sphi 0, %s244
    %s246 = sphi 0, %s244
    %s247 = sphi 0, %s246
    %s261 = sphi 0, %s247
    %s265 = sphi 0, %s265
    %s267 = sphi 0, %s265
    %s268 = sphi 0, %s267
    %s282 = sphi 0, %s268
    %s286 = sphi 0, %s286
    %s288 = sphi 0, %s286
    %s289 = sphi 0, %s288
    %s303 = sphi 0, %s289
    %s307 = sphi 0, %s307
    %s309 = sphi 0, %s307
    %s310 = sphi 0, %s309
    %s324 = sphi 0, %s310
    %s328 = sphi 0, %s328
    %s330 = sphi 0, %s328
    %s331 = sphi 0, %s330
    %s345 = sphi 0, %s331
    %s349 = sphi 0, %s349
    %s351 = sphi 0, %s349
    %s352 = sphi 0, %s351
    %s366 = sphi 0, %s352
    %s370 = sphi 0, %s370
    %s372 = sphi 0, %s370
    %s373 = sphi 0, %s372
    %s387 = sphi 0, %s373
    %s391 = sphi 0, %s391
    %s393 = sphi 0, %s391
    %s394 = sphi 0, %s393
    %s408 = sphi 0, %s394
    %s412 = sphi 0, %s412
    %s414 = sphi 0, %s412
    %s415 = sphi 0, %s414
    %s429 = sphi 0, %s415
    %s433 = sphi 0, %s433
    %s435 = sphi 0, %s433
    %s436 = sphi 0, %s435
    %s450 = sphi 0, %s436
    %s454 = sphi 0, %s454
    %s456 = sphi 0, %s454
    %s457 = sphi 0, %s456
    %s471 = sphi 0, %s457
    %s475 = sphi 0, %s475
    %s477 = sphi 0, %s475
    %s478 = sphi 0, %s477
    %s492 = sphi 0, %s478
    %s496 = sphi 0, %s496
    %s498 = sphi 0, %s496
    %s499 = sphi 0, %s498
    %s513 = sphi 0, %s499
    %s517 = sphi 0, %s517
    %s519 = sphi 0, %s517
    %s520 = sphi 0, %s519
    %s534 = sphi 0, %s520
    %s538 = sphi 0, %s538
    %s540 = sphi 0, %s538
    %s541 = sphi 0, %s540
    %s555 = sphi 0, %s541
    %s559 = sphi 0, %s559
    %s561 = sphi 0, %s559
    %s562 = sphi 0, %s561
    %s576 = sphi 0, %s562
    %s580 = sphi 0, %s580
    %s582 = sphi 0, %s580
    %s583 = sphi 0, %s582
    %s597 = sphi 0, %s583
    %s601 = sphi 0, %s601
    %s603 = sphi 0, %s601
    %s604 = sphi 0, %s603
    %s618 = sphi 0, %s604
    %s622 = sphi 0, %s622
    %s624 = sphi 0, %s622
    %s625 = sphi 0, %s624
    %s639 = sphi 0, %s625
    %s643 = sphi 0, %s643
    %s645 = sphi 0, %s643
    %s646 = sphi 0, %s645
    %s660 = sphi 0, %s646
    %s664 = sphi 0, %s664
    %s666 = sphi 0, %s664
    %s667 = sphi 0, %s666
    %s681 = sphi 0, %s667
    %s685 = sphi 0, %s685
    %s687 = sphi 0, %s685
    %s688 = sphi 0, %s687
    %s702 = sphi 0, %s688
    %s706 = sphi 0, %s706
    %s708 = sphi 0, %s706
    %s709 = sphi 0, %s708
    %s723 = sphi 0, %s709
    %s727 = sphi 0, %s727
    %s729 = sphi 0, %s727
    %s730 = sphi 0, %s729
    %s744 = sphi 0, %s730
    %s748 = sphi 0, %s748
    %s750 = sphi 0, %s748
    %s751 = sphi 0, %s750
    %s765 = sphi 0, %s751
    %s769 = sphi 0, %s769
    %s771 = sphi 0, %s769
    %s772 = sphi 0, %s771
    %s786 = sphi 0, %s772
    %s790 = sphi 0, %s790
    %s792 = sphi 0, %s790
    %s793 = sphi 0, %s792
    %s807 = sphi 0, %s793
    %s811 = sphi 0, %s811
    %s813 = sphi 0, %s811
    %s814 = sphi 0, %s813
    %s828 = sphi 0, %s814
    %s834 = sphi 0, %s836
    %s837 = sphi 0, %s834
    %s838 = sphi 0, %s837
    %s854 = sphi 0, %s838
  $region4: #{deepynet_v2_1_forward.1} parent=0 // loop_header_branch
    %82 = sbr.rel (%p80) target = $region8
  $region5: #{deepynet_v2_1_forward.1} parent=0 // loop_body
    %s84 = ssub.s32 %s79, 1
    %s85 = ssub.s32 %s79, 2
    %s86 = sadd.s32 %s79, 1
    %s87 = ssub.s32 %s79, %s86
    %p88 = scmp.eq.s32.totalorder %s87, 0
    %s90 = sadd.s32 %s89, 1
    %s91 = scalar_select %p88, %s89, %s90
    %p94 = pneg %p88
    %p95 = scmp.eq.s32.totalorder %s79, 1
    %p96 = por %p94, %p95
    %p97 = scmp.ne.s32.totalorder %s89, %s92
    %p98 = scmp.eq.s32.totalorder %s79, 0
    %p99 = por %p97, %p98
    %p100 = scmp.ne.s32.totalorder %s89, %s92
    %p101 = scmp.eq.s32.totalorder %s84, 1
    %p102 = por %p100, %p101
    %p103 = scmp.ne.s32.totalorder %s92, %s93
    %p104 = scmp.eq.s32.totalorder %s84, 0
    %p105 = por %p103, %p104
    %p106 = scmp.ne.s32.totalorder %s92, %s93
    %p107 = scmp.eq.s32.totalorder %s85, 1
    %p108 = por %p106, %p107
    %p110 = scmp.ne.s32.totalorder %s93, %s109
    %p111 = scmp.eq.s32.totalorder %s85, 0
    %p112 = por %p110, %p111
    %s113 = ssub.s32 %s79, %s86
    %p114 = scmp.eq.s32.totalorder %s113, 0
    %s116 = sadd.s32 %s115, 1
    %s117 = scalar_select %p114, %s115, %s116
    %p120 = pneg %p114
    %p121 = scmp.eq.s32.totalorder %s79, 1
    %p122 = por %p120, %p121
    %p123 = scmp.ne.s32.totalorder %s115, %s118
    %p124 = scmp.eq.s32.totalorder %s79, 0
    %p125 = por %p123, %p124
    %p126 = scmp.ne.s32.totalorder %s115, %s118
    %p127 = scmp.eq.s32.totalorder %s84, 1
    %p128 = por %p126, %p127
    %p129 = scmp.ne.s32.totalorder %s118, %s119
    %p130 = scmp.eq.s32.totalorder %s84, 0
    %p131 = por %p129, %p130
    %p132 = scmp.ne.s32.totalorder %s118, %s119
    %p133 = scmp.eq.s32.totalorder %s85, 1
    %p134 = por %p132, %p133
    %p136 = scmp.ne.s32.totalorder %s119, %s135
    %p137 = scmp.eq.s32.totalorder %s85, 0
    %p138 = por %p136, %p137
    %s140 = sadd.s32 %s139, 1
    %p143 = scmp.eq.s32.totalorder %s79, 1
    %p144 = scmp.ne.s32.totalorder %s139, %s141
    %p145 = scmp.eq.s32.totalorder %s79, 0
    %p146 = por %p144, %p145
    %p147 = scmp.ne.s32.totalorder %s139, %s141
    %p148 = scmp.eq.s32.totalorder %s84, 1
    %p149 = por %p147, %p148
    %p150 = scmp.ne.s32.totalorder %s141, %s142
    %p151 = scmp.eq.s32.totalorder %s84, 0
    %p152 = por %p150, %p151
    %p153 = scmp.ne.s32.totalorder %s141, %s142
    %p154 = scmp.eq.s32.totalorder %s85, 1
    %p155 = por %p153, %p154
    %p157 = scmp.ne.s32.totalorder %s142, %s156
    %p158 = scmp.eq.s32.totalorder %s85, 0
    %p159 = por %p157, %p158
    %s161 = sadd.s32 %s160, 1
    %p164 = scmp.eq.s32.totalorder %s79, 1
    %p165 = scmp.ne.s32.totalorder %s160, %s162
    %p166 = scmp.eq.s32.totalorder %s79, 0
    %p167 = por %p165, %p166
    %p168 = scmp.ne.s32.totalorder %s160, %s162
    %p169 = scmp.eq.s32.totalorder %s84, 1
    %p170 = por %p168, %p169
    %p171 = scmp.ne.s32.totalorder %s162, %s163
    %p172 = scmp.eq.s32.totalorder %s84, 0
    %p173 = por %p171, %p172
    %p174 = scmp.ne.s32.totalorder %s162, %s163
    %p175 = scmp.eq.s32.totalorder %s85, 1
    %p176 = por %p174, %p175
    %p178 = scmp.ne.s32.totalorder %s163, %s177
    %p179 = scmp.eq.s32.totalorder %s85, 0
    %p180 = por %p178, %p179
    %s182 = sadd.s32 %s181, 1
    %p185 = scmp.eq.s32.totalorder %s79, 1
    %p186 = scmp.ne.s32.totalorder %s181, %s183
    %p187 = scmp.eq.s32.totalorder %s79, 0
    %p188 = por %p186, %p187
    %p189 = scmp.ne.s32.totalorder %s181, %s183
    %p190 = scmp.eq.s32.totalorder %s84, 1
    %p191 = por %p189, %p190
    %p192 = scmp.ne.s32.totalorder %s183, %s184
    %p193 = scmp.eq.s32.totalorder %s84, 0
    %p194 = por %p192, %p193
    %p195 = scmp.ne.s32.totalorder %s183, %s184
    %p196 = scmp.eq.s32.totalorder %s85, 1
    %p197 = por %p195, %p196
    %p199 = scmp.ne.s32.totalorder %s184, %s198
    %p200 = scmp.eq.s32.totalorder %s85, 0
    %p201 = por %p199, %p200
    %s203 = sadd.s32 %s202, 1
    %p206 = scmp.eq.s32.totalorder %s79, 1
    %p207 = scmp.ne.s32.totalorder %s202, %s204
    %p208 = scmp.eq.s32.totalorder %s79, 0
    %p209 = por %p207, %p208
    %p210 = scmp.ne.s32.totalorder %s202, %s204
    %p211 = scmp.eq.s32.totalorder %s84, 1
    %p212 = por %p210, %p211
    %p213 = scmp.ne.s32.totalorder %s204, %s205
    %p214 = scmp.eq.s32.totalorder %s84, 0
    %p215 = por %p213, %p214
    %p216 = scmp.ne.s32.totalorder %s204, %s205
    %p217 = scmp.eq.s32.totalorder %s85, 1
    %p218 = por %p216, %p217
    %p220 = scmp.ne.s32.totalorder %s205, %s219
    %p221 = scmp.eq.s32.totalorder %s85, 0
    %p222 = por %p220, %p221
    %s224 = sadd.s32 %s223, 1
    %p227 = scmp.eq.s32.totalorder %s79, 1
    %p228 = scmp.ne.s32.totalorder %s223, %s225
    %p229 = scmp.eq.s32.totalorder %s79, 0
    %p230 = por %p228, %p229
    %p231 = scmp.ne.s32.totalorder %s223, %s225
    %p232 = scmp.eq.s32.totalorder %s84, 1
    %p233 = por %p231, %p232
    %p234 = scmp.ne.s32.totalorder %s225, %s226
    %p235 = scmp.eq.s32.totalorder %s84, 0
    %p236 = por %p234, %p235
    %p237 = scmp.ne.s32.totalorder %s225, %s226
    %p238 = scmp.eq.s32.totalorder %s85, 1
    %p239 = por %p237, %p238
    %p241 = scmp.ne.s32.totalorder %s226, %s240
    %p242 = scmp.eq.s32.totalorder %s85, 0
    %p243 = por %p241, %p242
    %s245 = sadd.s32 %s244, 1
    %p248 = scmp.eq.s32.totalorder %s79, 1
    %p249 = scmp.ne.s32.totalorder %s244, %s246
    %p250 = scmp.eq.s32.totalorder %s79, 0
    %p251 = por %p249, %p250
    %p252 = scmp.ne.s32.totalorder %s244, %s246
    %p253 = scmp.eq.s32.totalorder %s84, 1
    %p254 = por %p252, %p253
    %p255 = scmp.ne.s32.totalorder %s246, %s247
    %p256 = scmp.eq.s32.totalorder %s84, 0
    %p257 = por %p255, %p256
    %p258 = scmp.ne.s32.totalorder %s246, %s247
    %p259 = scmp.eq.s32.totalorder %s85, 1
    %p260 = por %p258, %p259
    %p262 = scmp.ne.s32.totalorder %s247, %s261
    %p263 = scmp.eq.s32.totalorder %s85, 0
    %p264 = por %p262, %p263
    %s266 = sadd.s32 %s265, 1
    %p269 = scmp.eq.s32.totalorder %s79, 1
    %p270 = scmp.ne.s32.totalorder %s265, %s267
    %p271 = scmp.eq.s32.totalorder %s79, 0
    %p272 = por %p270, %p271
    %p273 = scmp.ne.s32.totalorder %s265, %s267
    %p274 = scmp.eq.s32.totalorder %s84, 1
    %p275 = por %p273, %p274
    %p276 = scmp.ne.s32.totalorder %s267, %s268
    %p277 = scmp.eq.s32.totalorder %s84, 0
    %p278 = por %p276, %p277
    %p279 = scmp.ne.s32.totalorder %s267, %s268
    %p280 = scmp.eq.s32.totalorder %s85, 1
    %p281 = por %p279, %p280
    %p283 = scmp.ne.s32.totalorder %s268, %s282
    %p284 = scmp.eq.s32.totalorder %s85, 0
    %p285 = por %p283, %p284
    %s287 = sadd.s32 %s286, 1
    %p290 = scmp.eq.s32.totalorder %s79, 1
    %p291 = scmp.ne.s32.totalorder %s286, %s288
    %p292 = scmp.eq.s32.totalorder %s79, 0
    %p293 = por %p291, %p292
    %p294 = scmp.ne.s32.totalorder %s286, %s288
    %p295 = scmp.eq.s32.totalorder %s84, 1
    %p296 = por %p294, %p295
    %p297 = scmp.ne.s32.totalorder %s288, %s289
    %p298 = scmp.eq.s32.totalorder %s84, 0
    %p299 = por %p297, %p298
    %p300 = scmp.ne.s32.totalorder %s288, %s289
    %p301 = scmp.eq.s32.totalorder %s85, 1
    %p302 = por %p300, %p301
    %p304 = scmp.ne.s32.totalorder %s289, %s303
    %p305 = scmp.eq.s32.totalorder %s85, 0
    %p306 = por %p304, %p305
    %s308 = sadd.s32 %s307, 1
    %p311 = scmp.eq.s32.totalorder %s79, 1
    %p312 = scmp.ne.s32.totalorder %s307, %s309
    %p313 = scmp.eq.s32.totalorder %s79, 0
    %p314 = por %p312, %p313
    %p315 = scmp.ne.s32.totalorder %s307, %s309
    %p316 = scmp.eq.s32.totalorder %s84, 1
    %p317 = por %p315, %p316
    %p318 = scmp.ne.s32.totalorder %s309, %s310
    %p319 = scmp.eq.s32.totalorder %s84, 0
    %p320 = por %p318, %p319
    %p321 = scmp.ne.s32.totalorder %s309, %s310
    %p322 = scmp.eq.s32.totalorder %s85, 1
    %p323 = por %p321, %p322
    %p325 = scmp.ne.s32.totalorder %s310, %s324
    %p326 = scmp.eq.s32.totalorder %s85, 0
    %p327 = por %p325, %p326
    %s329 = sadd.s32 %s328, 1
    %p332 = scmp.eq.s32.totalorder %s79, 1
    %p333 = scmp.ne.s32.totalorder %s328, %s330
    %p334 = scmp.eq.s32.totalorder %s79, 0
    %p335 = por %p333, %p334
    %p336 = scmp.ne.s32.totalorder %s328, %s330
    %p337 = scmp.eq.s32.totalorder %s84, 1
    %p338 = por %p336, %p337
    %p339 = scmp.ne.s32.totalorder %s330, %s331
    %p340 = scmp.eq.s32.totalorder %s84, 0
    %p341 = por %p339, %p340
    %p342 = scmp.ne.s32.totalorder %s330, %s331
    %p343 = scmp.eq.s32.totalorder %s85, 1
    %p344 = por %p342, %p343
    %p346 = scmp.ne.s32.totalorder %s331, %s345
    %p347 = scmp.eq.s32.totalorder %s85, 0
    %p348 = por %p346, %p347
    %s350 = sadd.s32 %s349, 1
    %p353 = scmp.eq.s32.totalorder %s79, 1
    %p354 = scmp.ne.s32.totalorder %s349, %s351
    %p355 = scmp.eq.s32.totalorder %s79, 0
    %p356 = por %p354, %p355
    %p357 = scmp.ne.s32.totalorder %s349, %s351
    %p358 = scmp.eq.s32.totalorder %s84, 1
    %p359 = por %p357, %p358
    %p360 = scmp.ne.s32.totalorder %s351, %s352
    %p361 = scmp.eq.s32.totalorder %s84, 0
    %p362 = por %p360, %p361
    %p363 = scmp.ne.s32.totalorder %s351, %s352
    %p364 = scmp.eq.s32.totalorder %s85, 1
    %p365 = por %p363, %p364
    %p367 = scmp.ne.s32.totalorder %s352, %s366
    %p368 = scmp.eq.s32.totalorder %s85, 0
    %p369 = por %p367, %p368
    %s371 = sadd.s32 %s370, 1
    %p374 = scmp.eq.s32.totalorder %s79, 1
    %p375 = scmp.ne.s32.totalorder %s370, %s372
    %p376 = scmp.eq.s32.totalorder %s79, 0
    %p377 = por %p375, %p376
    %p378 = scmp.ne.s32.totalorder %s370, %s372
    %p379 = scmp.eq.s32.totalorder %s84, 1
    %p380 = por %p378, %p379
    %p381 = scmp.ne.s32.totalorder %s372, %s373
    %p382 = scmp.eq.s32.totalorder %s84, 0
    %p383 = por %p381, %p382
    %p384 = scmp.ne.s32.totalorder %s372, %s373
    %p385 = scmp.eq.s32.totalorder %s85, 1
    %p386 = por %p384, %p385
    %p388 = scmp.ne.s32.totalorder %s373, %s387
    %p389 = scmp.eq.s32.totalorder %s85, 0
    %p390 = por %p388, %p389
    %s392 = sadd.s32 %s391, 1
    %p395 = scmp.eq.s32.totalorder %s79, 1
    %p396 = scmp.ne.s32.totalorder %s391, %s393
    %p397 = scmp.eq.s32.totalorder %s79, 0
    %p398 = por %p396, %p397
    %p399 = scmp.ne.s32.totalorder %s391, %s393
    %p400 = scmp.eq.s32.totalorder %s84, 1
    %p401 = por %p399, %p400
    %p402 = scmp.ne.s32.totalorder %s393, %s394
    %p403 = scmp.eq.s32.totalorder %s84, 0
    %p404 = por %p402, %p403
    %p405 = scmp.ne.s32.totalorder %s393, %s394
    %p406 = scmp.eq.s32.totalorder %s85, 1
    %p407 = por %p405, %p406
    %p409 = scmp.ne.s32.totalorder %s394, %s408
    %p410 = scmp.eq.s32.totalorder %s85, 0
    %p411 = por %p409, %p410
    %s413 = sadd.s32 %s412, 1
    %p416 = scmp.eq.s32.totalorder %s79, 1
    %p417 = scmp.ne.s32.totalorder %s412, %s414
    %p418 = scmp.eq.s32.totalorder %s79, 0
    %p419 = por %p417, %p418
    %p420 = scmp.ne.s32.totalorder %s412, %s414
    %p421 = scmp.eq.s32.totalorder %s84, 1
    %p422 = por %p420, %p421
    %p423 = scmp.ne.s32.totalorder %s414, %s415
    %p424 = scmp.eq.s32.totalorder %s84, 0
    %p425 = por %p423, %p424
    %p426 = scmp.ne.s32.totalorder %s414, %s415
    %p427 = scmp.eq.s32.totalorder %s85, 1
    %p428 = por %p426, %p427
    %p430 = scmp.ne.s32.totalorder %s415, %s429
    %p431 = scmp.eq.s32.totalorder %s85, 0
    %p432 = por %p430, %p431
    %s434 = sadd.s32 %s433, 1
    %p437 = scmp.eq.s32.totalorder %s79, 1
    %p438 = scmp.ne.s32.totalorder %s433, %s435
    %p439 = scmp.eq.s32.totalorder %s79, 0
    %p440 = por %p438, %p439
    %p441 = scmp.ne.s32.totalorder %s433, %s435
    %p442 = scmp.eq.s32.totalorder %s84, 1
    %p443 = por %p441, %p442
    %p444 = scmp.ne.s32.totalorder %s435, %s436
    %p445 = scmp.eq.s32.totalorder %s84, 0
    %p446 = por %p444, %p445
    %p447 = scmp.ne.s32.totalorder %s435, %s436
    %p448 = scmp.eq.s32.totalorder %s85, 1
    %p449 = por %p447, %p448
    %p451 = scmp.ne.s32.totalorder %s436, %s450
    %p452 = scmp.eq.s32.totalorder %s85, 0
    %p453 = por %p451, %p452
    %s455 = sadd.s32 %s454, 1
    %p458 = scmp.eq.s32.totalorder %s79, 1
    %p459 = scmp.ne.s32.totalorder %s454, %s456
    %p460 = scmp.eq.s32.totalorder %s79, 0
    %p461 = por %p459, %p460
    %p462 = scmp.ne.s32.totalorder %s454, %s456
    %p463 = scmp.eq.s32.totalorder %s84, 1
    %p464 = por %p462, %p463
    %p465 = scmp.ne.s32.totalorder %s456, %s457
    %p466 = scmp.eq.s32.totalorder %s84, 0
    %p467 = por %p465, %p466
    %p468 = scmp.ne.s32.totalorder %s456, %s457
    %p469 = scmp.eq.s32.totalorder %s85, 1
    %p470 = por %p468, %p469
    %p472 = scmp.ne.s32.totalorder %s457, %s471
    %p473 = scmp.eq.s32.totalorder %s85, 0
    %p474 = por %p472, %p473
    %s476 = sadd.s32 %s475, 1
    %p479 = scmp.eq.s32.totalorder %s79, 1
    %p480 = scmp.ne.s32.totalorder %s475, %s477
    %p481 = scmp.eq.s32.totalorder %s79, 0
    %p482 = por %p480, %p481
    %p483 = scmp.ne.s32.totalorder %s475, %s477
    %p484 = scmp.eq.s32.totalorder %s84, 1
    %p485 = por %p483, %p484
    %p486 = scmp.ne.s32.totalorder %s477, %s478
    %p487 = scmp.eq.s32.totalorder %s84, 0
    %p488 = por %p486, %p487
    %p489 = scmp.ne.s32.totalorder %s477, %s478
    %p490 = scmp.eq.s32.totalorder %s85, 1
    %p491 = por %p489, %p490
    %p493 = scmp.ne.s32.totalorder %s478, %s492
    %p494 = scmp.eq.s32.totalorder %s85, 0
    %p495 = por %p493, %p494
    %s497 = sadd.s32 %s496, 1
    %p500 = scmp.eq.s32.totalorder %s79, 1
    %p501 = scmp.ne.s32.totalorder %s496, %s498
    %p502 = scmp.eq.s32.totalorder %s79, 0
    %p503 = por %p501, %p502
    %p504 = scmp.ne.s32.totalorder %s496, %s498
    %p505 = scmp.eq.s32.totalorder %s84, 1
    %p506 = por %p504, %p505
    %p507 = scmp.ne.s32.totalorder %s498, %s499
    %p508 = scmp.eq.s32.totalorder %s84, 0
    %p509 = por %p507, %p508
    %p510 = scmp.ne.s32.totalorder %s498, %s499
    %p511 = scmp.eq.s32.totalorder %s85, 1
    %p512 = por %p510, %p511
    %p514 = scmp.ne.s32.totalorder %s499, %s513
    %p515 = scmp.eq.s32.totalorder %s85, 0
    %p516 = por %p514, %p515
    %s518 = sadd.s32 %s517, 1
    %p521 = scmp.eq.s32.totalorder %s79, 1
    %p522 = scmp.ne.s32.totalorder %s517, %s519
    %p523 = scmp.eq.s32.totalorder %s79, 0
    %p524 = por %p522, %p523
    %p525 = scmp.ne.s32.totalorder %s517, %s519
    %p526 = scmp.eq.s32.totalorder %s84, 1
    %p527 = por %p525, %p526
    %p528 = scmp.ne.s32.totalorder %s519, %s520
    %p529 = scmp.eq.s32.totalorder %s84, 0
    %p530 = por %p528, %p529
    %p531 = scmp.ne.s32.totalorder %s519, %s520
    %p532 = scmp.eq.s32.totalorder %s85, 1
    %p533 = por %p531, %p532
    %p535 = scmp.ne.s32.totalorder %s520, %s534
    %p536 = scmp.eq.s32.totalorder %s85, 0
    %p537 = por %p535, %p536
    %s539 = sadd.s32 %s538, 1
    %p542 = scmp.eq.s32.totalorder %s79, 1
    %p543 = scmp.ne.s32.totalorder %s538, %s540
    %p544 = scmp.eq.s32.totalorder %s79, 0
    %p545 = por %p543, %p544
    %p546 = scmp.ne.s32.totalorder %s538, %s540
    %p547 = scmp.eq.s32.totalorder %s84, 1
    %p548 = por %p546, %p547
    %p549 = scmp.ne.s32.totalorder %s540, %s541
    %p550 = scmp.eq.s32.totalorder %s84, 0
    %p551 = por %p549, %p550
    %p552 = scmp.ne.s32.totalorder %s540, %s541
    %p553 = scmp.eq.s32.totalorder %s85, 1
    %p554 = por %p552, %p553
    %p556 = scmp.ne.s32.totalorder %s541, %s555
    %p557 = scmp.eq.s32.totalorder %s85, 0
    %p558 = por %p556, %p557
    %s560 = sadd.s32 %s559, 1
    %p563 = scmp.eq.s32.totalorder %s79, 1
    %p564 = scmp.ne.s32.totalorder %s559, %s561
    %p565 = scmp.eq.s32.totalorder %s79, 0
    %p566 = por %p564, %p565
    %p567 = scmp.ne.s32.totalorder %s559, %s561
    %p568 = scmp.eq.s32.totalorder %s84, 1
    %p569 = por %p567, %p568
    %p570 = scmp.ne.s32.totalorder %s561, %s562
    %p571 = scmp.eq.s32.totalorder %s84, 0
    %p572 = por %p570, %p571
    %p573 = scmp.ne.s32.totalorder %s561, %s562
    %p574 = scmp.eq.s32.totalorder %s85, 1
    %p575 = por %p573, %p574
    %p577 = scmp.ne.s32.totalorder %s562, %s576
    %p578 = scmp.eq.s32.totalorder %s85, 0
    %p579 = por %p577, %p578
    %s581 = sadd.s32 %s580, 1
    %p584 = scmp.eq.s32.totalorder %s79, 1
    %p585 = scmp.ne.s32.totalorder %s580, %s582
    %p586 = scmp.eq.s32.totalorder %s79, 0
    %p587 = por %p585, %p586
    %p588 = scmp.ne.s32.totalorder %s580, %s582
    %p589 = scmp.eq.s32.totalorder %s84, 1
    %p590 = por %p588, %p589
    %p591 = scmp.ne.s32.totalorder %s582, %s583
    %p592 = scmp.eq.s32.totalorder %s84, 0
    %p593 = por %p591, %p592
    %p594 = scmp.ne.s32.totalorder %s582, %s583
    %p595 = scmp.eq.s32.totalorder %s85, 1
    %p596 = por %p594, %p595
    %p598 = scmp.ne.s32.totalorder %s583, %s597
    %p599 = scmp.eq.s32.totalorder %s85, 0
    %p600 = por %p598, %p599
    %s602 = sadd.s32 %s601, 1
    %p605 = scmp.eq.s32.totalorder %s79, 1
    %p606 = scmp.ne.s32.totalorder %s601, %s603
    %p607 = scmp.eq.s32.totalorder %s79, 0
    %p608 = por %p606, %p607
    %p609 = scmp.ne.s32.totalorder %s601, %s603
    %p610 = scmp.eq.s32.totalorder %s84, 1
    %p611 = por %p609, %p610
    %p612 = scmp.ne.s32.totalorder %s603, %s604
    %p613 = scmp.eq.s32.totalorder %s84, 0
    %p614 = por %p612, %p613
    %p615 = scmp.ne.s32.totalorder %s603, %s604
    %p616 = scmp.eq.s32.totalorder %s85, 1
    %p617 = por %p615, %p616
    %p619 = scmp.ne.s32.totalorder %s604, %s618
    %p620 = scmp.eq.s32.totalorder %s85, 0
    %p621 = por %p619, %p620
    %s623 = sadd.s32 %s622, 1
    %p626 = scmp.eq.s32.totalorder %s79, 1
    %p627 = scmp.ne.s32.totalorder %s622, %s624
    %p628 = scmp.eq.s32.totalorder %s79, 0
    %p629 = por %p627, %p628
    %p630 = scmp.ne.s32.totalorder %s622, %s624
    %p631 = scmp.eq.s32.totalorder %s84, 1
    %p632 = por %p630, %p631
    %p633 = scmp.ne.s32.totalorder %s624, %s625
    %p634 = scmp.eq.s32.totalorder %s84, 0
    %p635 = por %p633, %p634
    %p636 = scmp.ne.s32.totalorder %s624, %s625
    %p637 = scmp.eq.s32.totalorder %s85, 1
    %p638 = por %p636, %p637
    %p640 = scmp.ne.s32.totalorder %s625, %s639
    %p641 = scmp.eq.s32.totalorder %s85, 0
    %p642 = por %p640, %p641
    %s644 = sadd.s32 %s643, 1
    %p647 = scmp.eq.s32.totalorder %s79, 1
    %p648 = scmp.ne.s32.totalorder %s643, %s645
    %p649 = scmp.eq.s32.totalorder %s79, 0
    %p650 = por %p648, %p649
    %p651 = scmp.ne.s32.totalorder %s643, %s645
    %p652 = scmp.eq.s32.totalorder %s84, 1
    %p653 = por %p651, %p652
    %p654 = scmp.ne.s32.totalorder %s645, %s646
    %p655 = scmp.eq.s32.totalorder %s84, 0
    %p656 = por %p654, %p655
    %p657 = scmp.ne.s32.totalorder %s645, %s646
    %p658 = scmp.eq.s32.totalorder %s85, 1
    %p659 = por %p657, %p658
    %p661 = scmp.ne.s32.totalorder %s646, %s660
    %p662 = scmp.eq.s32.totalorder %s85, 0
    %p663 = por %p661, %p662
    %s665 = sadd.s32 %s664, 1
    %p668 = scmp.eq.s32.totalorder %s79, 1
    %p669 = scmp.ne.s32.totalorder %s664, %s666
    %p670 = scmp.eq.s32.totalorder %s79, 0
    %p671 = por %p669, %p670
    %p672 = scmp.ne.s32.totalorder %s664, %s666
    %p673 = scmp.eq.s32.totalorder %s84, 1
    %p674 = por %p672, %p673
    %p675 = scmp.ne.s32.totalorder %s666, %s667
    %p676 = scmp.eq.s32.totalorder %s84, 0
    %p677 = por %p675, %p676
    %p678 = scmp.ne.s32.totalorder %s666, %s667
    %p679 = scmp.eq.s32.totalorder %s85, 1
    %p680 = por %p678, %p679
    %p682 = scmp.ne.s32.totalorder %s667, %s681
    %p683 = scmp.eq.s32.totalorder %s85, 0
    %p684 = por %p682, %p683
    %s686 = sadd.s32 %s685, 1
    %p689 = scmp.eq.s32.totalorder %s79, 1
    %p690 = scmp.ne.s32.totalorder %s685, %s687
    %p691 = scmp.eq.s32.totalorder %s79, 0
    %p692 = por %p690, %p691
    %p693 = scmp.ne.s32.totalorder %s685, %s687
    %p694 = scmp.eq.s32.totalorder %s84, 1
    %p695 = por %p693, %p694
    %p696 = scmp.ne.s32.totalorder %s687, %s688
    %p697 = scmp.eq.s32.totalorder %s84, 0
    %p698 = por %p696, %p697
    %p699 = scmp.ne.s32.totalorder %s687, %s688
    %p700 = scmp.eq.s32.totalorder %s85, 1
    %p701 = por %p699, %p700
    %p703 = scmp.ne.s32.totalorder %s688, %s702
    %p704 = scmp.eq.s32.totalorder %s85, 0
    %p705 = por %p703, %p704
    %s707 = sadd.s32 %s706, 1
    %p710 = scmp.eq.s32.totalorder %s79, 1
    %p711 = scmp.ne.s32.totalorder %s706, %s708
    %p712 = scmp.eq.s32.totalorder %s79, 0
    %p713 = por %p711, %p712
    %p714 = scmp.ne.s32.totalorder %s706, %s708
    %p715 = scmp.eq.s32.totalorder %s84, 1
    %p716 = por %p714, %p715
    %p717 = scmp.ne.s32.totalorder %s708, %s709
    %p718 = scmp.eq.s32.totalorder %s84, 0
    %p719 = por %p717, %p718
    %p720 = scmp.ne.s32.totalorder %s708, %s709
    %p721 = scmp.eq.s32.totalorder %s85, 1
    %p722 = por %p720, %p721
    %p724 = scmp.ne.s32.totalorder %s709, %s723
    %p725 = scmp.eq.s32.totalorder %s85, 0
    %p726 = por %p724, %p725
    %s728 = sadd.s32 %s727, 1
    %p731 = scmp.eq.s32.totalorder %s79, 1
    %p732 = scmp.ne.s32.totalorder %s727, %s729
    %p733 = scmp.eq.s32.totalorder %s79, 0
    %p734 = por %p732, %p733
    %p735 = scmp.ne.s32.totalorder %s727, %s729
    %p736 = scmp.eq.s32.totalorder %s84, 1
    %p737 = por %p735, %p736
    %p738 = scmp.ne.s32.totalorder %s729, %s730
    %p739 = scmp.eq.s32.totalorder %s84, 0
    %p740 = por %p738, %p739
    %p741 = scmp.ne.s32.totalorder %s729, %s730
    %p742 = scmp.eq.s32.totalorder %s85, 1
    %p743 = por %p741, %p742
    %p745 = scmp.ne.s32.totalorder %s730, %s744
    %p746 = scmp.eq.s32.totalorder %s85, 0
    %p747 = por %p745, %p746
    %s749 = sadd.s32 %s748, 1
    %p752 = scmp.eq.s32.totalorder %s79, 1
    %p753 = scmp.ne.s32.totalorder %s748, %s750
    %p754 = scmp.eq.s32.totalorder %s79, 0
    %p755 = por %p753, %p754
    %p756 = scmp.ne.s32.totalorder %s748, %s750
    %p757 = scmp.eq.s32.totalorder %s84, 1
    %p758 = por %p756, %p757
    %p759 = scmp.ne.s32.totalorder %s750, %s751
    %p760 = scmp.eq.s32.totalorder %s84, 0
    %p761 = por %p759, %p760
    %p762 = scmp.ne.s32.totalorder %s750, %s751
    %p763 = scmp.eq.s32.totalorder %s85, 1
    %p764 = por %p762, %p763
    %p766 = scmp.ne.s32.totalorder %s751, %s765
    %p767 = scmp.eq.s32.totalorder %s85, 0
    %p768 = por %p766, %p767
    %s770 = sadd.s32 %s769, 1
    %p773 = scmp.eq.s32.totalorder %s79, 1
    %p774 = scmp.ne.s32.totalorder %s769, %s771
    %p775 = scmp.eq.s32.totalorder %s79, 0
    %p776 = por %p774, %p775
    %p777 = scmp.ne.s32.totalorder %s769, %s771
    %p778 = scmp.eq.s32.totalorder %s84, 1
    %p779 = por %p777, %p778
    %p780 = scmp.ne.s32.totalorder %s771, %s772
    %p781 = scmp.eq.s32.totalorder %s84, 0
    %p782 = por %p780, %p781
    %p783 = scmp.ne.s32.totalorder %s771, %s772
    %p784 = scmp.eq.s32.totalorder %s85, 1
    %p785 = por %p783, %p784
    %p787 = scmp.ne.s32.totalorder %s772, %s786
    %p788 = scmp.eq.s32.totalorder %s85, 0
    %p789 = por %p787, %p788
    %s791 = sadd.s32 %s790, 1
    %p794 = scmp.eq.s32.totalorder %s79, 1
    %p795 = scmp.ne.s32.totalorder %s790, %s792
    %p796 = scmp.eq.s32.totalorder %s79, 0
    %p797 = por %p795, %p796
    %p798 = scmp.ne.s32.totalorder %s790, %s792
    %p799 = scmp.eq.s32.totalorder %s84, 1
    %p800 = por %p798, %p799
    %p801 = scmp.ne.s32.totalorder %s792, %s793
    %p802 = scmp.eq.s32.totalorder %s84, 0
    %p803 = por %p801, %p802
    %p804 = scmp.ne.s32.totalorder %s792, %s793
    %p805 = scmp.eq.s32.totalorder %s85, 1
    %p806 = por %p804, %p805
    %p808 = scmp.ne.s32.totalorder %s793, %s807
    %p809 = scmp.eq.s32.totalorder %s85, 0
    %p810 = por %p808, %p809
    %s812 = sadd.s32 %s811, 1
    %p815 = scmp.eq.s32.totalorder %s79, 1
    %p816 = scmp.ne.s32.totalorder %s811, %s813
    %p817 = scmp.eq.s32.totalorder %s79, 0
    %p818 = por %p816, %p817
    %p819 = scmp.ne.s32.totalorder %s811, %s813
    %p820 = scmp.eq.s32.totalorder %s84, 1
    %p821 = por %p819, %p820
    %p822 = scmp.ne.s32.totalorder %s813, %s814
    %p823 = scmp.eq.s32.totalorder %s84, 0
    %p824 = por %p822, %p823
    %p825 = scmp.ne.s32.totalorder %s813, %s814
    %p826 = scmp.eq.s32.totalorder %s85, 1
    %p827 = por %p825, %p826
    %p829 = scmp.ne.s32.totalorder %s814, %s828
    %p830 = scmp.eq.s32.totalorder %s85, 0
    %p831 = por %p829, %p830
    %s832 = ssub.s32 %s79, %s86
    %p833 = scmp.eq.s32.totalorder %s832, 0
    %s835 = sadd.s32 %s834, 1
    %s836 = scalar_select %p833, %s834, %s835
    %p839 = pneg %p833
    %p840 = scmp.eq.s32.totalorder %s79, 1
    %p841 = por %p839, %p840
    %p842 = scmp.ne.s32.totalorder %s834, %s837
    %p843 = scmp.eq.s32.totalorder %s79, 0
    %p844 = por %p842, %p843
    %p845 = scmp.ne.s32.totalorder %s834, %s837
    %p846 = scmp.eq.s32.totalorder %s84, 1
    %p847 = por %p845, %p846
    %p848 = scmp.ne.s32.totalorder %s837, %s838
    %p849 = scmp.eq.s32.totalorder %s84, 0
    %p850 = por %p848, %p849
    %p851 = scmp.ne.s32.totalorder %s837, %s838
    %p852 = scmp.eq.s32.totalorder %s85, 1
    %p853 = por %p851, %p852
    %p855 = scmp.ne.s32.totalorder %s838, %s854
    %p856 = scmp.eq.s32.totalorder %s85, 0
    %p857 = por %p855, %p856
    %p858 = scmp.le.s32.totalorder 1, %s79
    %p859 = scmp.lt.s32.totalorder %s79, 3
    %p860 = pnand %p858, %p859
    %p861 = pneg %p860
    // Predicated region
    $region9: #{deepynet_v2_1_forward.1} parent=5 // pred_check
      _
    $region10: #{deepynet_v2_1_forward.1} parent=5 // pred_check_branch
      %863 = sbr.rel (%p860) target = $region12
    $region11: #{deepynet_v2_1_forward.1} parent=5 // pred_region
      %s864 = ssub.s32 %s79, 1
      // Predicated region
      $region13: #{deepynet_v2_1_forward.1} parent=11 // pred_check
        %p865 = pneg %p152
      $region14: #{deepynet_v2_1_forward.1} parent=11 // pred_check_branch
        %867 = sbr.rel (%p865) target = $region16
      $region15: #{deepynet_v2_1_forward.1} parent=11 // pred_region
        _
      $region16: #{deepynet_v2_1_forward.1} parent=11 // pred_fallthru
        _
      // Predicated region
      $region17: #{deepynet_v2_1_forward.1} parent=11 // pred_check
        %p868 = pneg %p173
      $region18: #{deepynet_v2_1_forward.1} parent=11 // pred_check_branch
        %870 = sbr.rel (%p868) target = $region20
      $region19: #{deepynet_v2_1_forward.1} parent=11 // pred_region
        _
      $region20: #{deepynet_v2_1_forward.1} parent=11 // pred_fallthru
        _
      // Predicated region
      $region21: #{deepynet_v2_1_forward.1} parent=11 // pred_check
        %p871 = pneg %p194
      $region22: #{deepynet_v2_1_forward.1} parent=11 // pred_check_branch
        %873 = sbr.rel (%p871) target = $region24
      $region23: #{deepynet_v2_1_forward.1} parent=11 // pred_region
        _
      $region24: #{deepynet_v2_1_forward.1} parent=11 // pred_fallthru
        _
      // Predicated region
      $region25: #{deepynet_v2_1_forward.1} parent=11 // pred_check
        %p874 = pneg %p215
      $region26: #{deepynet_v2_1_forward.1} parent=11 // pred_check_branch
        %876 = sbr.rel (%p874) target = $region28
      $region27: #{deepynet_v2_1_forward.1} parent=11 // pred_region
        _
      $region28: #{deepynet_v2_1_forward.1} parent=11 // pred_fallthru
        _
      // Predicated region
      $region29: #{deepynet_v2_1_forward.1} parent=11 // pred_check
        %p877 = pneg %p236
      $region30: #{deepynet_v2_1_forward.1} parent=11 // pred_check_branch
        %879 = sbr.rel (%p877) target = $region32
      $region31: #{deepynet_v2_1_forward.1} parent=11 // pred_region
        _
      $region32: #{deepynet_v2_1_forward.1} parent=11 // pred_fallthru
        _
      // Predicated region
      $region33: #{deepynet_v2_1_forward.1} parent=11 // pred_check
        %p880 = pneg %p257
      $region34: #{deepynet_v2_1_forward.1} parent=11 // pred_check_branch
        %882 = sbr.rel (%p880) target = $region36
      $region35: #{deepynet_v2_1_forward.1} parent=11 // pred_region
        _
      $region36: #{deepynet_v2_1_forward.1} parent=11 // pred_fallthru
        _
      // Predicated region
      $region37: #{deepynet_v2_1_forward.1} parent=11 // pred_check
        %p883 = pneg %p278
      $region38: #{deepynet_v2_1_forward.1} parent=11 // pred_check_branch
        %885 = sbr.rel (%p883) target = $region40
      $region39: #{deepynet_v2_1_forward.1} parent=11 // pred_region
        _
      $region40: #{deepynet_v2_1_forward.1} parent=11 // pred_fallthru
        _
      // Predicated region
      $region41: #{deepynet_v2_1_forward.1} parent=11 // pred_check
        %p886 = pneg %p299
      $region42: #{deepynet_v2_1_forward.1} parent=11 // pred_check_branch
        %888 = sbr.rel (%p886) target = $region44
      $region43: #{deepynet_v2_1_forward.1} parent=11 // pred_region
        _
      $region44: #{deepynet_v2_1_forward.1} parent=11 // pred_fallthru
        _
      // Predicated region
      $region45: #{deepynet_v2_1_forward.1} parent=11 // pred_check
        %p889 = pneg %p320
      $region46: #{deepynet_v2_1_forward.1} parent=11 // pred_check_branch
        %891 = sbr.rel (%p889) target = $region48
      $region47: #{deepynet_v2_1_forward.1} parent=11 // pred_region
        _
      $region48: #{deepynet_v2_1_forward.1} parent=11 // pred_fallthru
        _
      // Predicated region
      $region49: #{deepynet_v2_1_forward.1} parent=11 // pred_check
        %p892 = pneg %p341
      $region50: #{deepynet_v2_1_forward.1} parent=11 // pred_check_branch
        %894 = sbr.rel (%p892) target = $region52
      $region51: #{deepynet_v2_1_forward.1} parent=11 // pred_region
        _
      $region52: #{deepynet_v2_1_forward.1} parent=11 // pred_fallthru
        _
      // Predicated region
      $region53: #{deepynet_v2_1_forward.1} parent=11 // pred_check
        %p895 = pneg %p362
      $region54: #{deepynet_v2_1_forward.1} parent=11 // pred_check_branch
        %897 = sbr.rel (%p895) target = $region56
      $region55: #{deepynet_v2_1_forward.1} parent=11 // pred_region
        _
      $region56: #{deepynet_v2_1_forward.1} parent=11 // pred_fallthru
        _
      // Predicated region
      $region57: #{deepynet_v2_1_forward.1} parent=11 // pred_check
        %p898 = pneg %p383
      $region58: #{deepynet_v2_1_forward.1} parent=11 // pred_check_branch
        %900 = sbr.rel (%p898) target = $region60
      $region59: #{deepynet_v2_1_forward.1} parent=11 // pred_region
        _
      $region60: #{deepynet_v2_1_forward.1} parent=11 // pred_fallthru
        _
      // Predicated region
      $region61: #{deepynet_v2_1_forward.1} parent=11 // pred_check
        %p901 = pneg %p404
      $region62: #{deepynet_v2_1_forward.1} parent=11 // pred_check_branch
        %903 = sbr.rel (%p901) target = $region64
      $region63: #{deepynet_v2_1_forward.1} parent=11 // pred_region
        _
      $region64: #{deepynet_v2_1_forward.1} parent=11 // pred_fallthru
        _
      // Predicated region
      $region65: #{deepynet_v2_1_forward.1} parent=11 // pred_check
        %p904 = pneg %p425
      $region66: #{deepynet_v2_1_forward.1} parent=11 // pred_check_branch
        %906 = sbr.rel (%p904) target = $region68
      $region67: #{deepynet_v2_1_forward.1} parent=11 // pred_region
        _
      $region68: #{deepynet_v2_1_forward.1} parent=11 // pred_fallthru
        _
      // Predicated region
      $region69: #{deepynet_v2_1_forward.1} parent=11 // pred_check
        %p907 = pneg %p446
      $region70: #{deepynet_v2_1_forward.1} parent=11 // pred_check_branch
        %909 = sbr.rel (%p907) target = $region72
      $region71: #{deepynet_v2_1_forward.1} parent=11 // pred_region
        _
      $region72: #{deepynet_v2_1_forward.1} parent=11 // pred_fallthru
        _
      // Predicated region
      $region73: #{deepynet_v2_1_forward.1} parent=11 // pred_check
        %p910 = pneg %p467
      $region74: #{deepynet_v2_1_forward.1} parent=11 // pred_check_branch
        %912 = sbr.rel (%p910) target = $region76
      $region75: #{deepynet_v2_1_forward.1} parent=11 // pred_region
        _
      $region76: #{deepynet_v2_1_forward.1} parent=11 // pred_fallthru
        _
      // Predicated region
      $region77: #{deepynet_v2_1_forward.1} parent=11 // pred_check
        %p913 = pneg %p488
      $region78: #{deepynet_v2_1_forward.1} parent=11 // pred_check_branch
        %915 = sbr.rel (%p913) target = $region80
      $region79: #{deepynet_v2_1_forward.1} parent=11 // pred_region
        _
      $region80: #{deepynet_v2_1_forward.1} parent=11 // pred_fallthru
        _
      // Predicated region
      $region81: #{deepynet_v2_1_forward.1} parent=11 // pred_check
        %p916 = pneg %p509
      $region82: #{deepynet_v2_1_forward.1} parent=11 // pred_check_branch
        %918 = sbr.rel (%p916) target = $region84
      $region83: #{deepynet_v2_1_forward.1} parent=11 // pred_region
        _
      $region84: #{deepynet_v2_1_forward.1} parent=11 // pred_fallthru
        _
      // Predicated region
      $region85: #{deepynet_v2_1_forward.1} parent=11 // pred_check
        %p919 = pneg %p530
      $region86: #{deepynet_v2_1_forward.1} parent=11 // pred_check_branch
        %921 = sbr.rel (%p919) target = $region88
      $region87: #{deepynet_v2_1_forward.1} parent=11 // pred_region
        _
      $region88: #{deepynet_v2_1_forward.1} parent=11 // pred_fallthru
        _
      // Predicated region
      $region89: #{deepynet_v2_1_forward.1} parent=11 // pred_check
        %p922 = pneg %p551
      $region90: #{deepynet_v2_1_forward.1} parent=11 // pred_check_branch
        %924 = sbr.rel (%p922) target = $region92
      $region91: #{deepynet_v2_1_forward.1} parent=11 // pred_region
        _
      $region92: #{deepynet_v2_1_forward.1} parent=11 // pred_fallthru
        _
      // Predicated region
      $region93: #{deepynet_v2_1_forward.1} parent=11 // pred_check
        %p925 = pneg %p572
      $region94: #{deepynet_v2_1_forward.1} parent=11 // pred_check_branch
        %927 = sbr.rel (%p925) target = $region96
      $region95: #{deepynet_v2_1_forward.1} parent=11 // pred_region
        _
      $region96: #{deepynet_v2_1_forward.1} parent=11 // pred_fallthru
        _
      // Predicated region
      $region97: #{deepynet_v2_1_forward.1} parent=11 // pred_check
        %p928 = pneg %p593
      $region98: #{deepynet_v2_1_forward.1} parent=11 // pred_check_branch
        %930 = sbr.rel (%p928) target = $region100
      $region99: #{deepynet_v2_1_forward.1} parent=11 // pred_region
        _
      $region100: #{deepynet_v2_1_forward.1} parent=11 // pred_fallthru
        _
      // Predicated region
      $region101: #{deepynet_v2_1_forward.1} parent=11 // pred_check
        %p931 = pneg %p614
      $region102: #{deepynet_v2_1_forward.1} parent=11 // pred_check_branch
        %933 = sbr.rel (%p931) target = $region104
      $region103: #{deepynet_v2_1_forward.1} parent=11 // pred_region
        _
      $region104: #{deepynet_v2_1_forward.1} parent=11 // pred_fallthru
        _
      // Predicated region
      $region105: #{deepynet_v2_1_forward.1} parent=11 // pred_check
        %p934 = pneg %p635
      $region106: #{deepynet_v2_1_forward.1} parent=11 // pred_check_branch
        %936 = sbr.rel (%p934) target = $region108
      $region107: #{deepynet_v2_1_forward.1} parent=11 // pred_region
        _
      $region108: #{deepynet_v2_1_forward.1} parent=11 // pred_fallthru
        _
      // Predicated region
      $region109: #{deepynet_v2_1_forward.1} parent=11 // pred_check
        %p937 = pneg %p656
      $region110: #{deepynet_v2_1_forward.1} parent=11 // pred_check_branch
        %939 = sbr.rel (%p937) target = $region112
      $region111: #{deepynet_v2_1_forward.1} parent=11 // pred_region
        _
      $region112: #{deepynet_v2_1_forward.1} parent=11 // pred_fallthru
        _
      // Predicated region
      $region113: #{deepynet_v2_1_forward.1} parent=11 // pred_check
        %p940 = pneg %p677
      $region114: #{deepynet_v2_1_forward.1} parent=11 // pred_check_branch
        %942 = sbr.rel (%p940) target = $region116
      $region115: #{deepynet_v2_1_forward.1} parent=11 // pred_region
        _
      $region116: #{deepynet_v2_1_forward.1} parent=11 // pred_fallthru
        _
      // Predicated region
      $region117: #{deepynet_v2_1_forward.1} parent=11 // pred_check
        %p943 = pneg %p698
      $region118: #{deepynet_v2_1_forward.1} parent=11 // pred_check_branch
        %945 = sbr.rel (%p943) target = $region120
      $region119: #{deepynet_v2_1_forward.1} parent=11 // pred_region
        _
      $region120: #{deepynet_v2_1_forward.1} parent=11 // pred_fallthru
        _
      // Predicated region
      $region121: #{deepynet_v2_1_forward.1} parent=11 // pred_check
        %p946 = pneg %p719
      $region122: #{deepynet_v2_1_forward.1} parent=11 // pred_check_branch
        %948 = sbr.rel (%p946) target = $region124
      $region123: #{deepynet_v2_1_forward.1} parent=11 // pred_region
        _
      $region124: #{deepynet_v2_1_forward.1} parent=11 // pred_fallthru
        _
      // Predicated region
      $region125: #{deepynet_v2_1_forward.1} parent=11 // pred_check
        %p949 = pneg %p740
      $region126: #{deepynet_v2_1_forward.1} parent=11 // pred_check_branch
        %951 = sbr.rel (%p949) target = $region128
      $region127: #{deepynet_v2_1_forward.1} parent=11 // pred_region
        _
      $region128: #{deepynet_v2_1_forward.1} parent=11 // pred_fallthru
        _
      // Predicated region
      $region129: #{deepynet_v2_1_forward.1} parent=11 // pred_check
        %p952 = pneg %p761
      $region130: #{deepynet_v2_1_forward.1} parent=11 // pred_check_branch
        %954 = sbr.rel (%p952) target = $region132
      $region131: #{deepynet_v2_1_forward.1} parent=11 // pred_region
        _
      $region132: #{deepynet_v2_1_forward.1} parent=11 // pred_fallthru
        _
      // Predicated region
      $region133: #{deepynet_v2_1_forward.1} parent=11 // pred_check
        %p955 = pneg %p782
      $region134: #{deepynet_v2_1_forward.1} parent=11 // pred_check_branch
        %957 = sbr.rel (%p955) target = $region136
      $region135: #{deepynet_v2_1_forward.1} parent=11 // pred_region
        _
      $region136: #{deepynet_v2_1_forward.1} parent=11 // pred_fallthru
        _
      // Predicated region
      $region137: #{deepynet_v2_1_forward.1} parent=11 // pred_check
        %p958 = pneg %p803
      $region138: #{deepynet_v2_1_forward.1} parent=11 // pred_check_branch
        %960 = sbr.rel (%p958) target = $region140
      $region139: #{deepynet_v2_1_forward.1} parent=11 // pred_region
        _
      $region140: #{deepynet_v2_1_forward.1} parent=11 // pred_fallthru
        _
      // Predicated region
      $region141: #{deepynet_v2_1_forward.1} parent=11 // pred_check
        %p961 = pneg %p824
      $region142: #{deepynet_v2_1_forward.1} parent=11 // pred_check_branch
        %963 = sbr.rel (%p961) target = $region144
      $region143: #{deepynet_v2_1_forward.1} parent=11 // pred_region
        _
      $region144: #{deepynet_v2_1_forward.1} parent=11 // pred_fallthru
        _
    $region12: #{deepynet_v2_1_forward.1} parent=5 // pred_fallthru
      _
    %p964 = scmp.lt.s32.totalorder %s79, 2
    // Predicated region
    $region145: #{deepynet_v2_1_forward.1} parent=5 // pred_check
      %p965 = pneg %p964
    $region146: #{deepynet_v2_1_forward.1} parent=5 // pred_check_branch
      %967 = sbr.rel (%p965) target = $region148
    $region147: #{deepynet_v2_1_forward.1} parent=5 // pred_region
      // Predicated region
      $region149: #{deepynet_v2_1_forward.1} parent=147 // pred_check
        %p968 = pneg %p99
      $region150: #{deepynet_v2_1_forward.1} parent=147 // pred_check_branch
        %970 = sbr.rel (%p968) target = $region152
      $region151: #{deepynet_v2_1_forward.1} parent=147 // pred_region
        %p971 = scmp.lt.s32.totalorder %s79, 1
        %s972 = scalar_select %p971, %s79, 1
        %s973 = smul.addr %s972, 108
        %s974 = smul.addr %s973, 4
        %s975 = scalar_lea.vmem %s1, %s974
      $region152: #{deepynet_v2_1_forward.1} parent=147 // pred_fallthru
        _
      // Predicated region
      $region153: #{deepynet_v2_1_forward.1} parent=147 // pred_check
        %p976 = pneg %p125
      $region154: #{deepynet_v2_1_forward.1} parent=147 // pred_check_branch
        %978 = sbr.rel (%p976) target = $region156
      $region155: #{deepynet_v2_1_forward.1} parent=147 // pred_region
        %p979 = scmp.lt.s32.totalorder %s79, 1
        %s980 = scalar_select %p979, %s79, 1
        %s981 = scalar_lea.vmem %s3, %s980
      $region156: #{deepynet_v2_1_forward.1} parent=147 // pred_fallthru
        _
    $region148: #{deepynet_v2_1_forward.1} parent=5 // pred_fallthru
      _
    %p982 = scmp.le.s32.totalorder 1, %s79
    %p983 = scmp.lt.s32.totalorder %s79, 3
    %p984 = pnand %p982, %p983
    %p985 = pneg %p984
    // Predicated region
    $region157: #{deepynet_v2_1_forward.1} parent=5 // pred_check
      _
    $region158: #{deepynet_v2_1_forward.1} parent=5 // pred_check_branch
      %987 = sbr.rel (%p984) target = $region160
    $region159: #{deepynet_v2_1_forward.1} parent=5 // pred_region
      %s988 = ssub.s32 %s79, 1
      %p989 = scmp.lt.s32.totalorder %s84, 1
      %s990 = scalar_select %p989, %s84, 1
      %s991 = smul.addr %s990, 108
      %s992 = smul.addr %s991, 4
      %s993 = scalar_lea.vmem %s1, %s992
      %p994 = pneg %p105
      %p995 = pneg %p102
      %p996 = scmp.lt.s32.totalorder %s84, 1
      %s997 = scalar_select %p996, %s84, 1
      %s998 = scalar_lea.vmem %s3, %s997
      %p999 = pneg %p131
      %p1000 = pneg %p128
      %p1001 = pneg %p152
      %p1002 = pneg %p149
      %p1003 = pneg %p173
      %p1004 = pneg %p170
      %p1005 = pneg %p194
      %p1006 = pneg %p191
      %p1007 = pneg %p215
      %p1008 = pneg %p212
      %p1009 = pneg %p236
      %p1010 = pneg %p233
      %p1011 = pneg %p257
      %p1012 = pneg %p254
      %p1013 = pneg %p278
      %p1014 = pneg %p275
      %p1015 = pneg %p299
      %p1016 = pneg %p296
      %p1017 = pneg %p320
      %p1018 = pneg %p317
      %p1019 = pneg %p341
      %p1020 = pneg %p338
      %p1021 = pneg %p362
      %p1022 = pneg %p359
      %p1023 = pneg %p383
      %p1024 = pneg %p380
      %p1025 = pneg %p404
      %p1026 = pneg %p401
      %p1027 = pneg %p425
      %p1028 = pneg %p422
      %p1029 = pneg %p446
      %p1030 = pneg %p443
      %p1031 = pneg %p467
      %p1032 = pneg %p464
      %p1033 = pneg %p488
      %p1034 = pneg %p485
      %p1035 = pneg %p509
      %p1036 = pneg %p506
      %p1037 = pneg %p530
      %p1038 = pneg %p527
      %p1039 = pneg %p551
      %p1040 = pneg %p548
      %p1041 = pneg %p572
      %p1042 = pneg %p569
      %p1043 = pneg %p593
      %p1044 = pneg %p590
      %p1045 = pneg %p614
      %p1046 = pneg %p611
      %p1047 = pneg %p635
      %p1048 = pneg %p632
      %p1049 = pneg %p656
      %p1050 = pneg %p653
      %p1051 = pneg %p677
      %p1052 = pneg %p674
      %p1053 = pneg %p698
      %p1054 = pneg %p695
      %p1055 = pneg %p719
      %p1056 = pneg %p716
      %p1057 = pneg %p740
      %p1058 = pneg %p737
      %p1059 = pneg %p761
      %p1060 = pneg %p758
      %p1061 = pneg %p782
      %p1062 = pneg %p779
      %p1063 = pneg %p803
      %p1064 = pneg %p800
      %p1065 = pneg %p824
      %p1066 = pneg %p821
      %p1067 = pneg %p850
      %p1068 = pneg %p847
      %p1069 = scmp.lt.s32.totalorder %s84, 1
      %s1070 = scalar_select %p1069, %s84, 1
      %s1071 = scalar_lea.vmem %s71, %s1070
      %p1072 = scmp.lt.s32.totalorder %s84, 1
      %s1073 = scalar_select %p1072, %s84, 1
      %s1074 = smul.addr %s1073, 108
      %s1075 = smul.addr %s1074, 4
      %s1076 = scalar_lea.vmem %s1, %s1075
      %p1077 = scmp.lt.s32.totalorder %s84, 1
      %s1078 = scalar_select %p1077, %s84, 1
      %s1079 = scalar_lea.vmem %s3, %s1078
      %p1080 = scmp.lt.s32.totalorder %s84, 1
      %s1081 = scalar_select %p1080, %s84, 1
      %s1082 = scalar_lea.vmem %s71, %s1081
      %v1084 = vld [vmem:[%s1076] sm:$0xff]
      %v1085 = vld [vmem:[%s1076 + $0x8] sm:$0xf]
      %v1086 = vld [vmem:[%s1076 + $0xc] sm:$0xff]
      %v1087 = vld [vmem:[%s1076 + $0x14] sm:$0xf]
      %v1088 = vld [vmem:[%s1076 + $0x18] sm:$0xff]
      %v1089 = vld [vmem:[%s1076 + $0x20] sm:$0xf]
      %v1090 = vld [vmem:[%s1076 + $0x24] sm:$0xff]
      %v1091 = vld [vmem:[%s1076 + $0x2c] sm:$0xf]
      %v1092 = vld [vmem:[%s1076 + $0x30] sm:$0xff]
      %v1093 = vld [vmem:[%s1076 + $0x38] sm:$0xf]
      %v1094 = vld [vmem:[%s1076 + $0x3c] sm:$0xff]
      %v1095 = vld [vmem:[%s1076 + $0x44] sm:$0xf]
      %v1096 = vld [vmem:[%s1076 + $0x48] sm:$0xff]
      %v1097 = vld [vmem:[%s1076 + $0x50] sm:$0xf]
      %v1098 = vld [vmem:[%s1076 + $0x54] sm:$0xff]
      %v1099 = vld [vmem:[%s1076 + $0x5c] sm:$0xf]
      %v1100 = vld [vmem:[%s1076 + $0x60] sm:$0xff]
      %v1101 = vld [vmem:[%s1076 + $0x68] sm:$0xf]
      %v1102 = vld [vmem:[%s1076 + $0x6c] sm:$0xff]
      %v1103 = vld [vmem:[%s1076 + $0x74] sm:$0xf]
      %v1104 = vld [vmem:[%s1076 + $0x78] sm:$0xff]
      %v1105 = vld [vmem:[%s1076 + $0x80] sm:$0xf]
      %v1106 = vld [vmem:[%s1076 + $0x84] sm:$0xff]
      %v1107 = vld [vmem:[%s1076 + $0x8c] sm:$0xf]
      %v1108 = vld [vmem:[%s1076 + $0x90] sm:$0xff]
      %v1109 = vld [vmem:[%s1076 + $0x98] sm:$0xf]
      %v1110 = vld [vmem:[%s1076 + $0x9c] sm:$0xff]
      %v1111 = vld [vmem:[%s1076 + $0xa4] sm:$0xf]
      %v1112 = vld [vmem:[%s1076 + $0xa8] sm:$0xff]
      %v1113 = vld [vmem:[%s1076 + $0xb0] sm:$0xf]
      %v1114 = vld [vmem:[%s1076 + $0xb4] sm:$0xff]
      %v1115 = vld [vmem:[%s1076 + $0xbc] sm:$0xf]
      %v1116 = vld [vmem:[%s1076 + $0xc0] sm:$0xff]
      %v1117 = vld [vmem:[%s1076 + $0xc8] sm:$0xf]
      %v1118 = vld [vmem:[%s1076 + $0xcc] sm:$0xff]
      %v1119 = vld [vmem:[%s1076 + $0xd4] sm:$0xf]
      %v1120 = vld [vmem:[%s1076 + $0xd8] sm:$0xff]
      %v1121 = vld [vmem:[%s1076 + $0xe0] sm:$0xf]
      %v1122 = vld [vmem:[%s1076 + $0xe4] sm:$0xff]
      %v1123 = vld [vmem:[%s1076 + $0xec] sm:$0xf]
      %v1124 = vld [vmem:[%s1076 + $0xf0] sm:$0xff]
      %v1125 = vld [vmem:[%s1076 + $0xf8] sm:$0xf]
      %v1126 = vld [vmem:[%s1076 + $0xfc] sm:$0xff]
      %v1127 = vld [vmem:[%s1076 + $0x104] sm:$0xf]
      %v1128 = vld [vmem:[%s1076 + $0x108] sm:$0xff]
      %v1129 = vld [vmem:[%s1076 + $0x110] sm:$0xf]
      %v1130 = vld [vmem:[%s1076 + $0x114] sm:$0xff]
      %v1131 = vld [vmem:[%s1076 + $0x11c] sm:$0xf]
      %v1132 = vld [vmem:[%s1076 + $0x120] sm:$0xff]
      %v1133 = vld [vmem:[%s1076 + $0x128] sm:$0xf]
      %v1134 = vld [vmem:[%s1076 + $0x12c] sm:$0xff]
      %v1135 = vld [vmem:[%s1076 + $0x134] sm:$0xf]
      %v1136 = vld [vmem:[%s1076 + $0x138] sm:$0xff]
      %v1137 = vld [vmem:[%s1076 + $0x140] sm:$0xf]
      %v1138 = vld [vmem:[%s1076 + $0x144] sm:$0xff]
      %v1139 = vld [vmem:[%s1076 + $0x14c] sm:$0xf]
      %v1140 = vld [vmem:[%s1076 + $0x150] sm:$0xff]
      %v1141 = vld [vmem:[%s1076 + $0x158] sm:$0xf]
      %v1142 = vld [vmem:[%s1076 + $0x15c] sm:$0xff]
      %v1143 = vld [vmem:[%s1076 + $0x164] sm:$0xf]
      %v1144 = vld [vmem:[%s1076 + $0x168] sm:$0xff]
      %v1145 = vld [vmem:[%s1076 + $0x170] sm:$0xf]
      %v1146 = vld [vmem:[%s1076 + $0x174] sm:$0xff]
      %v1147 = vld [vmem:[%s1076 + $0x17c] sm:$0xf]
      %v1148 = vld [vmem:[%s1076 + $0x180] sm:$0xff]
      %v1149 = vld [vmem:[%s1076 + $0x188] sm:$0xf]
      %v1150 = vld [vmem:[%s1076 + $0x18c] sm:$0xff]
      %v1151 = vld [vmem:[%s1076 + $0x194] sm:$0xf]
      %v1152 = vld [vmem:[%s1076 + $0x198] sm:$0xff]
      %v1153 = vld [vmem:[%s1076 + $0x1a0] sm:$0xf]
      %v1154 = vld [vmem:[%s1076 + $0x1a4] sm:$0x77]
      %v1155 = vld [vmem:[%s1076 + $0x1ac] sm:$0x7]
      %v1156 = vld [vmem:[%s5] sm:$0xff]
      %v1157 = vld [vmem:[%s5 + $0x8] sm:$0xff]
      %v1158 = vld [vmem:[%s5 + $0x10] sm:$0xff]
      %v1159 = vld [vmem:[%s5 + $0x18] sm:$0xff]
      %v1160 = vld [vmem:[%s5 + $0x20] sm:$0xff]
      %v1161 = vld [vmem:[%s5 + $0x28] sm:$0xff]
      %v1162 = vld [vmem:[%s5 + $0x30] sm:$0xff]
      %v1163 = vld [vmem:[%s5 + $0x38] sm:$0xff]
      %v1164 = vld [vmem:[%s5 + $0x40] sm:$0xff]
      %v1165 = vld [vmem:[%s5 + $0x48] sm:$0xff]
      %v1166 = vld [vmem:[%s5 + $0x50] sm:$0xff]
      %v1167 = vld [vmem:[%s5 + $0x58] sm:$0xff]
      %v1168 = vld [vmem:[%s5 + $0x60] sm:$0xff]
      %v1169 = vld [vmem:[%s5 + $0x68] sm:$0xff]
      %v1170 = vld [vmem:[%s5 + $0x70] sm:$0xff]
      %v1171 = vld [vmem:[%s5 + $0x78] sm:$0xff]
      %v1172 = vld [vmem:[%s5 + $0x80] sm:$0xff]
      %v1173 = vld [vmem:[%s5 + $0x88] sm:$0xff]
      %v1174 = vld [vmem:[%s5 + $0x90] sm:$0xff]
      %v1175 = vld [vmem:[%s5 + $0x98] sm:$0xff]
      %v1176 = vld [vmem:[%s5 + $0xa0] sm:$0xff]
      %v1177 = vld [vmem:[%s5 + $0xa8] sm:$0xff]
      %v1178 = vld [vmem:[%s5 + $0xb0] sm:$0xff]
      %v1179 = vld [vmem:[%s5 + $0xb8] sm:$0xff]
      %v1180 = vld [vmem:[%s5 + $0xc0] sm:$0xff]
      %v1181 = vld [vmem:[%s5 + $0xc8] sm:$0xff]
      %v1182 = vld [vmem:[%s5 + $0xd0] sm:$0xff]
      %v1183 = vld [vmem:[%s5 + $0xd8] sm:$0xff]
      %v1184 = vld [vmem:[%s5 + $0xe0] sm:$0xff]
      %v1185 = vld [vmem:[%s5 + $0xe8] sm:$0xff]
      %v1186 = vld [vmem:[%s5 + $0xf0] sm:$0xff]
      %v1187 = vld [vmem:[%s5 + $0xf8] sm:$0xff]
      %v1188 = vld [vmem:[%s5 + $0x100] sm:$0xff]
      %v1189 = vld [vmem:[%s5 + $0x108] sm:$0xff]
      %v1190 = vld [vmem:[%s5 + $0x110] sm:$0xff]
      %v1191 = vld [vmem:[%s5 + $0x118] sm:$0xff]
      %v1192 = vld [vmem:[%s5 + $0x120] sm:$0xff]
      %v1193 = vld [vmem:[%s5 + $0x128] sm:$0xff]
      %v1194 = vld [vmem:[%s5 + $0x130] sm:$0xff]
      %v1195 = vld [vmem:[%s5 + $0x138] sm:$0xff]
      %v1196 = vld [vmem:[%s5 + $0x140] sm:$0x33]
      %v1269 = vunpack.c.l.b16 %v1084
      %v1270 = vunpack.c.h.b16 %v1084
      %v1271 = vunpack.c.l.b16 %v1085
      %v1272 = vunpack.c.l.b16 %v1086
      %v1273 = vunpack.c.h.b16 %v1086
      %v1274 = vunpack.c.l.b16 %v1087
      %v1275 = vunpack.c.l.b16 %v1088
      %v1276 = vunpack.c.h.b16 %v1088
      %v1277 = vunpack.c.l.b16 %v1089
      %v1278 = vunpack.c.l.b16 %v1090
      %v1279 = vunpack.c.h.b16 %v1090
      %v1280 = vunpack.c.l.b16 %v1091
      %v1281 = vunpack.c.l.b16 %v1092
      %v1282 = vunpack.c.h.b16 %v1092
      %v1283 = vunpack.c.l.b16 %v1093
      %v1284 = vunpack.c.l.b16 %v1094
      %v1285 = vunpack.c.h.b16 %v1094
      %v1286 = vunpack.c.l.b16 %v1095
      %v1287 = vunpack.c.l.b16 %v1096
      %v1288 = vunpack.c.h.b16 %v1096
      %v1289 = vunpack.c.l.b16 %v1097
      %v1290 = vunpack.c.l.b16 %v1098
      %v1291 = vunpack.c.h.b16 %v1098
      %v1292 = vunpack.c.l.b16 %v1099
      %v1293 = vunpack.c.l.b16 %v1100
      %v1294 = vunpack.c.h.b16 %v1100
      %v1295 = vunpack.c.l.b16 %v1101
      %v1296 = vunpack.c.l.b16 %v1102
      %v1297 = vunpack.c.h.b16 %v1102
      %v1298 = vunpack.c.l.b16 %v1103
      %v1299 = vunpack.c.l.b16 %v1104
      %v1300 = vunpack.c.h.b16 %v1104
      %v1301 = vunpack.c.l.b16 %v1105
      %v1302 = vunpack.c.l.b16 %v1106
      %v1303 = vunpack.c.h.b16 %v1106
      %v1304 = vunpack.c.l.b16 %v1107
      %v1305 = vunpack.c.l.b16 %v1108
      %v1306 = vunpack.c.h.b16 %v1108
      %v1307 = vunpack.c.l.b16 %v1109
      %v1308 = vunpack.c.l.b16 %v1110
      %v1309 = vunpack.c.h.b16 %v1110
      %v1310 = vunpack.c.l.b16 %v1111
      %v1311 = vunpack.c.l.b16 %v1112
      %v1312 = vunpack.c.h.b16 %v1112
      %v1313 = vunpack.c.l.b16 %v1113
      %v1314 = vunpack.c.l.b16 %v1114
      %v1315 = vunpack.c.h.b16 %v1114
      %v1316 = vunpack.c.l.b16 %v1115
      %v1317 = vunpack.c.l.b16 %v1116
      %v1318 = vunpack.c.h.b16 %v1116
      %v1319 = vunpack.c.l.b16 %v1117
      %v1320 = vunpack.c.l.b16 %v1118
      %v1321 = vunpack.c.h.b16 %v1118
      %v1322 = vunpack.c.l.b16 %v1119
      %v1323 = vunpack.c.l.b16 %v1120
      %v1324 = vunpack.c.h.b16 %v1120
      %v1325 = vunpack.c.l.b16 %v1121
      %v1326 = vunpack.c.l.b16 %v1122
      %v1327 = vunpack.c.h.b16 %v1122
      %v1328 = vunpack.c.l.b16 %v1123
      %v1329 = vunpack.c.l.b16 %v1124
      %v1330 = vunpack.c.h.b16 %v1124
      %v1331 = vunpack.c.l.b16 %v1125
      %v1332 = vunpack.c.l.b16 %v1126
      %v1333 = vunpack.c.h.b16 %v1126
      %v1334 = vunpack.c.l.b16 %v1127
      %v1335 = vunpack.c.l.b16 %v1128
      %v1336 = vunpack.c.h.b16 %v1128
      %v1337 = vunpack.c.l.b16 %v1129
      %v1338 = vunpack.c.l.b16 %v1130
      %v1339 = vunpack.c.h.b16 %v1130
      %v1340 = vunpack.c.l.b16 %v1131
      %v1341 = vunpack.c.l.b16 %v1132
      %v1342 = vunpack.c.h.b16 %v1132
      %v1343 = vunpack.c.l.b16 %v1133
      %v1344 = vunpack.c.l.b16 %v1134
      %v1345 = vunpack.c.h.b16 %v1134
      %v1346 = vunpack.c.l.b16 %v1135
      %v1347 = vunpack.c.l.b16 %v1136
      %v1348 = vunpack.c.h.b16 %v1136
      %v1349 = vunpack.c.l.b16 %v1137
      %v1350 = vunpack.c.l.b16 %v1138
      %v1351 = vunpack.c.h.b16 %v1138
      %v1352 = vunpack.c.l.b16 %v1139
      %v1353 = vunpack.c.l.b16 %v1140
      %v1354 = vunpack.c.h.b16 %v1140
      %v1355 = vunpack.c.l.b16 %v1141
      %v1356 = vunpack.c.l.b16 %v1142
      %v1357 = vunpack.c.h.b16 %v1142
      %v1358 = vunpack.c.l.b16 %v1143
      %v1359 = vunpack.c.l.b16 %v1144
      %v1360 = vunpack.c.h.b16 %v1144
      %v1361 = vunpack.c.l.b16 %v1145
      %v1362 = vunpack.c.l.b16 %v1146
      %v1363 = vunpack.c.h.b16 %v1146
      %v1364 = vunpack.c.l.b16 %v1147
      %v1365 = vunpack.c.l.b16 %v1148
      %v1366 = vunpack.c.h.b16 %v1148
      %v1367 = vunpack.c.l.b16 %v1149
      %v1368 = vunpack.c.l.b16 %v1150
      %v1369 = vunpack.c.h.b16 %v1150
      %v1370 = vunpack.c.l.b16 %v1151
      %v1371 = vunpack.c.l.b16 %v1152
      %v1372 = vunpack.c.h.b16 %v1152
      %v1373 = vunpack.c.l.b16 %v1153
      %v1374 = vunpack.c.l.b16 %v1154
      %v1375 = vunpack.c.h.b16 %v1154
      %v1376 = vunpack.c.l.b16 %v1155
      %v1377 = vpack.c.b16 %v1272, %v1269
      %v1378 = vpack.c.b16 %v1273, %v1270
      %v1379 = vpack.c.b16 %v1274, %v1271
      %v1380 = vpack.c.b16 %v1278, %v1275
      %v1381 = vpack.c.b16 %v1279, %v1276
      %v1382 = vpack.c.b16 %v1280, %v1277
      %v1383 = vpack.c.b16 %v1284, %v1281
      %v1384 = vpack.c.b16 %v1285, %v1282
      %v1385 = vpack.c.b16 %v1286, %v1283
      %v1386 = vpack.c.b16 %v1290, %v1287
      %v1387 = vpack.c.b16 %v1291, %v1288
      %v1388 = vpack.c.b16 %v1292, %v1289
      %v1389 = vpack.c.b16 %v1296, %v1293
      %v1390 = vpack.c.b16 %v1297, %v1294
      %v1391 = vpack.c.b16 %v1298, %v1295
      %v1392 = vpack.c.b16 %v1302, %v1299
      %v1393 = vpack.c.b16 %v1303, %v1300
      %v1394 = vpack.c.b16 %v1304, %v1301
      %v1395 = vpack.c.b16 %v1308, %v1305
      %v1396 = vpack.c.b16 %v1309, %v1306
      %v1397 = vpack.c.b16 %v1310, %v1307
      %v1398 = vpack.c.b16 %v1314, %v1311
      %v1399 = vpack.c.b16 %v1315, %v1312
      %v1400 = vpack.c.b16 %v1316, %v1313
      %v1401 = vpack.c.b16 %v1320, %v1317
      %v1402 = vpack.c.b16 %v1321, %v1318
      %v1403 = vpack.c.b16 %v1322, %v1319
      %v1404 = vpack.c.b16 %v1326, %v1323
      %v1405 = vpack.c.b16 %v1327, %v1324
      %v1406 = vpack.c.b16 %v1328, %v1325
      %v1407 = vpack.c.b16 %v1332, %v1329
      %v1408 = vpack.c.b16 %v1333, %v1330
      %v1409 = vpack.c.b16 %v1334, %v1331
      %v1410 = vpack.c.b16 %v1338, %v1335
      %v1411 = vpack.c.b16 %v1339, %v1336
      %v1412 = vpack.c.b16 %v1340, %v1337
      %v1413 = vpack.c.b16 %v1344, %v1341
      %v1414 = vpack.c.b16 %v1345, %v1342
      %v1415 = vpack.c.b16 %v1346, %v1343
      %v1416 = vpack.c.b16 %v1350, %v1347
      %v1417 = vpack.c.b16 %v1351, %v1348
      %v1418 = vpack.c.b16 %v1352, %v1349
      %v1419 = vpack.c.b16 %v1356, %v1353
      %v1420 = vpack.c.b16 %v1357, %v1354
      %v1421 = vpack.c.b16 %v1358, %v1355
      %v1422 = vpack.c.b16 %v1362, %v1359
      %v1423 = vpack.c.b16 %v1363, %v1360
      %v1424 = vpack.c.b16 %v1364, %v1361
      %v1425 = vpack.c.b16 %v1368, %v1365
      %v1426 = vpack.c.b16 %v1369, %v1366
      %v1427 = vpack.c.b16 %v1370, %v1367
      %v1428 = vpack.c.b16 %v1374, %v1371
      %v1429 = vpack.c.b16 %v1375, %v1372
      %v1430 = vpack.c.b16 %v1376, %v1373
      %v1508 = vunpack.c.l.b16 %v1156
      %v1509 = vunpack.c.h.b16 %v1156
      %v1510 = vunpack.c.l.b16 %v1157
      %v1511 = vunpack.c.h.b16 %v1157
      %v1512 = vunpack.c.l.b16 %v1158
      %v1513 = vunpack.c.h.b16 %v1158
      %v1514 = vunpack.c.l.b16 %v1159
      %v1515 = vunpack.c.h.b16 %v1159
      %v1516 = vunpack.c.l.b16 %v1160
      %v1517 = vunpack.c.h.b16 %v1160
      %v1518 = vunpack.c.l.b16 %v1161
      %v1519 = vunpack.c.h.b16 %v1161
      %v1520 = vunpack.c.l.b16 %v1162
      %v1521 = vunpack.c.h.b16 %v1162
      %v1522 = vunpack.c.l.b16 %v1163
      %v1523 = vunpack.c.h.b16 %v1163
      %v1524 = vunpack.c.l.b16 %v1164
      %v1525 = vunpack.c.h.b16 %v1164
      %v1526 = vunpack.c.l.b16 %v1165
      %v1527 = vunpack.c.h.b16 %v1165
      %v1528 = vunpack.c.l.b16 %v1166
      %v1529 = vunpack.c.h.b16 %v1166
      %v1530 = vunpack.c.l.b16 %v1167
      %v1531 = vunpack.c.h.b16 %v1167
      %v1532 = vunpack.c.l.b16 %v1168
      %v1533 = vunpack.c.h.b16 %v1168
      %v1534 = vunpack.c.l.b16 %v1169
      %v1535 = vunpack.c.h.b16 %v1169
      %v1536 = vunpack.c.l.b16 %v1170
      %v1537 = vunpack.c.h.b16 %v1170
      %v1538 = vunpack.c.l.b16 %v1171
      %v1539 = vunpack.c.h.b16 %v1171
      %v1540 = vunpack.c.l.b16 %v1172
      %v1541 = vunpack.c.h.b16 %v1172
      %v1542 = vunpack.c.l.b16 %v1173
      %v1543 = vunpack.c.h.b16 %v1173
      %v1544 = vunpack.c.l.b16 %v1174
      %v1545 = vunpack.c.h.b16 %v1174
      %v1546 = vunpack.c.l.b16 %v1175
      %v1547 = vunpack.c.h.b16 %v1175
      %v1548 = vunpack.c.l.b16 %v1176
      %v1549 = vunpack.c.h.b16 %v1176
      %v1550 = vunpack.c.l.b16 %v1177
      %v1551 = vunpack.c.h.b16 %v1177
      %v1552 = vunpack.c.l.b16 %v1178
      %v1553 = vunpack.c.h.b16 %v1178
      %v1554 = vunpack.c.l.b16 %v1179
      %v1555 = vunpack.c.h.b16 %v1179
      %v1556 = vunpack.c.l.b16 %v1180
      %v1557 = vunpack.c.h.b16 %v1180
      %v1558 = vunpack.c.l.b16 %v1181
      %v1559 = vunpack.c.h.b16 %v1181
      %v1560 = vunpack.c.l.b16 %v1182
      %v1561 = vunpack.c.h.b16 %v1182
      %v1562 = vunpack.c.l.b16 %v1183
      %v1563 = vunpack.c.h.b16 %v1183
      %v1564 = vunpack.c.l.b16 %v1184
      %v1565 = vunpack.c.h.b16 %v1184
      %v1566 = vunpack.c.l.b16 %v1185
      %v1567 = vunpack.c.h.b16 %v1185
      %v1568 = vunpack.c.l.b16 %v1186
      %v1569 = vunpack.c.h.b16 %v1186
      %v1570 = vunpack.c.l.b16 %v1187
      %v1571 = vunpack.c.h.b16 %v1187
      %v1572 = vunpack.c.l.b16 %v1188
      %v1573 = vunpack.c.h.b16 %v1188
      %v1574 = vunpack.c.l.b16 %v1189
      %v1575 = vunpack.c.h.b16 %v1189
      %v1576 = vunpack.c.l.b16 %v1190
      %v1577 = vunpack.c.h.b16 %v1190
      %v1578 = vunpack.c.l.b16 %v1191
      %v1579 = vunpack.c.h.b16 %v1191
      %v1580 = vunpack.c.l.b16 %v1192
      %v1581 = vunpack.c.h.b16 %v1192
      %v1582 = vunpack.c.l.b16 %v1193
      %v1583 = vunpack.c.h.b16 %v1193
      %v1584 = vunpack.c.l.b16 %v1194
      %v1585 = vunpack.c.h.b16 %v1194
      %v1586 = vunpack.c.l.b16 %v1195
      %v1587 = vunpack.c.h.b16 %v1195
      %v1588 = vunpack.c.l.b16 %v1196
      %v1589 = vunpack.c.h.b16 %v1196
      %v1590 = vpack.c.b16 %v1510, %v1508
      %v1591 = vpack.c.b16 %v1511, %v1509
      %v1592 = vpack.c.b16 %v1514, %v1512
      %v1593 = vpack.c.b16 %v1515, %v1513
      %v1594 = vpack.c.b16 %v1518, %v1516
      %v1595 = vpack.c.b16 %v1519, %v1517
      %v1596 = vpack.c.b16 %v1522, %v1520
      %v1597 = vpack.c.b16 %v1523, %v1521
      %v1598 = vpack.c.b16 %v1526, %v1524
      %v1599 = vpack.c.b16 %v1527, %v1525
      %v1600 = vpack.c.b16 %v1530, %v1528
      %v1601 = vpack.c.b16 %v1531, %v1529
      %v1602 = vpack.c.b16 %v1534, %v1532
      %v1603 = vpack.c.b16 %v1535, %v1533
      %v1604 = vpack.c.b16 %v1538, %v1536
      %v1605 = vpack.c.b16 %v1539, %v1537
      %v1606 = vpack.c.b16 %v1542, %v1540
      %v1607 = vpack.c.b16 %v1543, %v1541
      %v1608 = vpack.c.b16 %v1546, %v1544
      %v1609 = vpack.c.b16 %v1547, %v1545
      %v1610 = vpack.c.b16 %v1550, %v1548
      %v1611 = vpack.c.b16 %v1551, %v1549
      %v1612 = vpack.c.b16 %v1554, %v1552
      %v1613 = vpack.c.b16 %v1555, %v1553
      %v1614 = vpack.c.b16 %v1558, %v1556
      %v1615 = vpack.c.b16 %v1559, %v1557
      %v1616 = vpack.c.b16 %v1562, %v1560
      %v1617 = vpack.c.b16 %v1563, %v1561
      %v1618 = vpack.c.b16 %v1566, %v1564
      %v1619 = vpack.c.b16 %v1567, %v1565
      %v1620 = vpack.c.b16 %v1570, %v1568
      %v1621 = vpack.c.b16 %v1571, %v1569
      %v1622 = vpack.c.b16 %v1574, %v1572
      %v1623 = vpack.c.b16 %v1575, %v1573
      %v1624 = vpack.c.b16 %v1578, %v1576
      %v1625 = vpack.c.b16 %v1579, %v1577
      %v1626 = vpack.c.b16 %v1582, %v1580
      %v1627 = vpack.c.b16 %v1583, %v1581
      %v1628 = vpack.c.b16 %v1586, %v1584
      %v1629 = vpack.c.b16 %v1587, %v1585
      %v1630 = vpack.c.b16 %v1588, %v1588
      %v1631 = vpack.c.b16 %v1589, %v1589
      %vm1672 = vcmask 556032
      %v1674 = vsel %vm1672, %v1379, 0
      %v1677 = vsel %vm1672, %v1382, 0
      %v1680 = vsel %vm1672, %v1385, 0
      %v1683 = vsel %vm1672, %v1388, 0
      %v1686 = vsel %vm1672, %v1391, 0
      %v1689 = vsel %vm1672, %v1394, 0
      %v1692 = vsel %vm1672, %v1397, 0
      %v1695 = vsel %vm1672, %v1400, 0
      %v1698 = vsel %vm1672, %v1403, 0
      %v1701 = vsel %vm1672, %v1406, 0
      %v1704 = vsel %vm1672, %v1409, 0
      %v1707 = vsel %vm1672, %v1412, 0
      %v1710 = vsel %vm1672, %v1415, 0
      %v1713 = vsel %vm1672, %v1418, 0
      %v1716 = vsel %vm1672, %v1421, 0
      %v1719 = vsel %vm1672, %v1424, 0
      %v1722 = vsel %vm1672, %v1427, 0
      %v1725 = vsel %vm1672, %v1430, 0
      %vm1727 = vcmask 1041408
      %v1729 = vsel %vm1727, %v1630, 0
      %v1732 = vsel %vm1727, %v1631, 0
      %1734 = vmatprep.subr.bf16.mxu0 %v1591
      %1735 = vmatpush1.bf16.msra.mxu0 %v1590
      %1736 = vmatprep.subr.bf16.mxu0 %v1593
      %1737 = vmatpush1.bf16.msra.mxu0 %v1592
      %1738 = vmatprep.subr.bf16.mxu0 %v1595
      %1739 = vmatpush1.bf16.msra.mxu0 %v1594
      %1740 = vmatprep.subr.bf16.mxu0 %v1597
      %1741 = vmatpush1.bf16.msra.mxu0 %v1596
      %1742 = vmatprep.subr.bf16.mxu0 %v1599
      %1743 = vmatpush1.bf16.msra.mxu0 %v1598
      %1744 = vmatprep.subr.bf16.mxu0 %v1601
      %1745 = vmatpush1.bf16.msra.mxu0 %v1600
      %1746 = vmatprep.subr.bf16.mxu0 %v1603
      %1747 = vmatpush1.bf16.msra.mxu0 %v1602
      %1748 = vmatprep.subr.bf16.mxu0 %v1605
      %1749 = vmatpush1.bf16.msra.mxu0 %v1604
      %1750 = vmatprep.subr.bf16.mxu0 %v1607
      %1751 = vmatpush1.bf16.msra.mxu0 %v1606
      %1752 = vmatprep.subr.bf16.mxu0 %v1609
      %1753 = vmatpush1.bf16.msra.mxu0 %v1608
      %1754 = vmatprep.subr.bf16.mxu0 %v1611
      %1755 = vmatpush1.bf16.msra.mxu0 %v1610
      %1756 = vmatprep.subr.bf16.mxu0 %v1613
      %1757 = vmatpush1.bf16.msra.mxu0 %v1612
      %1758 = vmatprep.subr.bf16.mxu0 %v1615
      %1759 = vmatpush1.bf16.msra.mxu0 %v1614
      %1760 = vmatprep.subr.bf16.mxu0 %v1617
      %1761 = vmatpush1.bf16.msra.mxu0 %v1616
      %1762 = vmatprep.subr.bf16.mxu0 %v1619
      %1763 = vmatpush1.bf16.msra.mxu0 %v1618
      %1764 = vmatprep.subr.bf16.mxu0 %v1621
      %1765 = vmatpush1.bf16.msra.mxu0 %v1620
      %1766 = vmatprep.mubr.bf16.mxu0 %v1378
      %1767 = vmatmul.mubr.bf16.gmra.mrb[0].mxu0 %v1377
      %v1768 = vpop.f32.mrb[0].mxu0
      %v1769 = vadd.f32 0.0, %v1768
      %v1770 = vpop.f32.mrb[0].mxu0
      %v1771 = vadd.f32 0.0, %v1770
      %v1772 = vpop.f32.mrb[0].mxu0
      %v1773 = vadd.f32 0.0, %v1772
      %v1774 = vpop.f32.mrb[0].mxu0
      %v1775 = vadd.f32 0.0, %v1774
      %1776 = vmatprep.mubr.bf16.mxu0 %v1381
      %1777 = vmatmul.mubr.bf16.gmra.mrb[0].mxu0 %v1380
      %v1778 = vpop.f32.mrb[0].mxu0
      %v1779 = vadd.f32 0.0, %v1778
      %v1780 = vpop.f32.mrb[0].mxu0
      %v1781 = vadd.f32 0.0, %v1780
      %v1782 = vpop.f32.mrb[0].mxu0
      %v1783 = vadd.f32 0.0, %v1782
      %v1784 = vpop.f32.mrb[0].mxu0
      %v1785 = vadd.f32 0.0, %v1784
      %1786 = vmatprep.mubr.bf16.mxu0 %v1384
      %1787 = vmatmul.mubr.bf16.gmra.mrb[0].mxu0 %v1383
      %v1788 = vpop.f32.mrb[0].mxu0
      %v1789 = vadd.f32 0.0, %v1788
      %v1790 = vpop.f32.mrb[0].mxu0
      %v1791 = vadd.f32 0.0, %v1790
      %v1792 = vpop.f32.mrb[0].mxu0
      %v1793 = vadd.f32 0.0, %v1792
      %v1794 = vpop.f32.mrb[0].mxu0
      %v1795 = vadd.f32 0.0, %v1794
      %1796 = vmatprep.mubr.bf16.mxu0 %v1387
      %1797 = vmatmul.mubr.bf16.gmra.mrb[0].mxu0 %v1386
      %v1798 = vpop.f32.mrb[0].mxu0
      %v1799 = vadd.f32 0.0, %v1798
      %v1800 = vpop.f32.mrb[0].mxu0
      %v1801 = vadd.f32 0.0, %v1800
      %v1802 = vpop.f32.mrb[0].mxu0
      %v1803 = vadd.f32 0.0, %v1802
      %v1804 = vpop.f32.mrb[0].mxu0
      %v1805 = vadd.f32 0.0, %v1804
      %1806 = vmatprep.mubr.bf16.mxu0 %v1390
      %1807 = vmatmul.mubr.bf16.gmra.mrb[0].mxu0 %v1389
      %v1808 = vpop.f32.mrb[0].mxu0
      %v1809 = vadd.f32 0.0, %v1808
      %v1810 = vpop.f32.mrb[0].mxu0
      %v1811 = vadd.f32 0.0, %v1810
      %v1812 = vpop.f32.mrb[0].mxu0
      %v1813 = vadd.f32 0.0, %v1812
      %v1814 = vpop.f32.mrb[0].mxu0
      %v1815 = vadd.f32 0.0, %v1814
      %1816 = vmatprep.mubr.bf16.mxu0 %v1393
      %1817 = vmatmul.mubr.bf16.gmra.mrb[0].mxu0 %v1392
      %v1818 = vpop.f32.mrb[0].mxu0
      %v1819 = vadd.f32 0.0, %v1818
      %v1820 = vpop.f32.mrb[0].mxu0
      %v1821 = vadd.f32 0.0, %v1820
      %v1822 = vpop.f32.mrb[0].mxu0
      %v1823 = vadd.f32 0.0, %v1822
      %v1824 = vpop.f32.mrb[0].mxu0
      %v1825 = vadd.f32 0.0, %v1824
      %1826 = vmatprep.mubr.bf16.mxu0 %v1396
      %1827 = vmatmul.mubr.bf16.gmra.mrb[0].mxu0 %v1395
      %v1828 = vpop.f32.mrb[0].mxu0
      %v1829 = vadd.f32 0.0, %v1828
      %v1830 = vpop.f32.mrb[0].mxu0
      %v1831 = vadd.f32 0.0, %v1830
      %v1832 = vpop.f32.mrb[0].mxu0
      %v1833 = vadd.f32 0.0, %v1832
      %v1834 = vpop.f32.mrb[0].mxu0
      %v1835 = vadd.f32 0.0, %v1834
      %1836 = vmatprep.mubr.bf16.mxu0 %v1399
      %1837 = vmatmul.mubr.bf16.gmra.mrb[0].mxu0 %v1398
      %v1838 = vpop.f32.mrb[0].mxu0
      %v1839 = vadd.f32 0.0, %v1838
      %v1840 = vpop.f32.mrb[0].mxu0
      %v1841 = vadd.f32 0.0, %v1840
      %v1842 = vpop.f32.mrb[0].mxu0
      %v1843 = vadd.f32 0.0, %v1842
      %v1844 = vpop.f32.mrb[0].mxu0
      %v1845 = vadd.f32 0.0, %v1844
      %1846 = vmatprep.mubr.bf16.mxu0 %v1402
      %1847 = vmatmul.mubr.bf16.gmra.mrb[0].mxu0 %v1401
      %v1848 = vpop.f32.mrb[0].mxu0
      %v1849 = vadd.f32 0.0, %v1848
      %v1850 = vpop.f32.mrb[0].mxu0
      %v1851 = vadd.f32 0.0, %v1850
      %v1852 = vpop.f32.mrb[0].mxu0
      %v1853 = vadd.f32 0.0, %v1852
      %v1854 = vpop.f32.mrb[0].mxu0
      %v1855 = vadd.f32 0.0, %v1854
      %1856 = vmatprep.mubr.bf16.mxu0 %v1405
      %1857 = vmatmul.mubr.bf16.gmra.mrb[0].mxu0 %v1404
      %v1858 = vpop.f32.mrb[0].mxu0
      %v1859 = vadd.f32 0.0, %v1858
      %v1860 = vpop.f32.mrb[0].mxu0
      %v1861 = vadd.f32 0.0, %v1860
      %v1862 = vpop.f32.mrb[0].mxu0
      %v1863 = vadd.f32 0.0, %v1862
      %v1864 = vpop.f32.mrb[0].mxu0
      %v1865 = vadd.f32 0.0, %v1864
      %1866 = vmatprep.mubr.bf16.mxu0 %v1408
      %1867 = vmatmul.mubr.bf16.gmra.mrb[0].mxu0 %v1407
      %v1868 = vpop.f32.mrb[0].mxu0
      %v1869 = vadd.f32 0.0, %v1868
      %v1870 = vpop.f32.mrb[0].mxu0
      %v1871 = vadd.f32 0.0, %v1870
      %v1872 = vpop.f32.mrb[0].mxu0
      %v1873 = vadd.f32 0.0, %v1872
      %v1874 = vpop.f32.mrb[0].mxu0
      %v1875 = vadd.f32 0.0, %v1874
      %1876 = vmatprep.mubr.bf16.mxu0 %v1411
      %1877 = vmatmul.mubr.bf16.gmra.mrb[0].mxu0 %v1410
      %v1878 = vpop.f32.mrb[0].mxu0
      %v1879 = vadd.f32 0.0, %v1878
      %v1880 = vpop.f32.mrb[0].mxu0
      %v1881 = vadd.f32 0.0, %v1880
      %v1882 = vpop.f32.mrb[0].mxu0
      %v1883 = vadd.f32 0.0, %v1882
      %v1884 = vpop.f32.mrb[0].mxu0
      %v1885 = vadd.f32 0.0, %v1884
      %1886 = vmatprep.mubr.bf16.mxu0 %v1414
      %1887 = vmatmul.mubr.bf16.gmra.mrb[0].mxu0 %v1413
      %v1888 = vpop.f32.mrb[0].mxu0
      %v1889 = vadd.f32 0.0, %v1888
      %v1890 = vpop.f32.mrb[0].mxu0
      %v1891 = vadd.f32 0.0, %v1890
      %v1892 = vpop.f32.mrb[0].mxu0
      %v1893 = vadd.f32 0.0, %v1892
      %v1894 = vpop.f32.mrb[0].mxu0
      %v1895 = vadd.f32 0.0, %v1894
      %1896 = vmatprep.mubr.bf16.mxu0 %v1417
      %1897 = vmatmul.mubr.bf16.gmra.mrb[0].mxu0 %v1416
      %v1898 = vpop.f32.mrb[0].mxu0
      %v1899 = vadd.f32 0.0, %v1898
      %v1900 = vpop.f32.mrb[0].mxu0
      %v1901 = vadd.f32 0.0, %v1900
      %v1902 = vpop.f32.mrb[0].mxu0
      %v1903 = vadd.f32 0.0, %v1902
      %v1904 = vpop.f32.mrb[0].mxu0
      %v1905 = vadd.f32 0.0, %v1904
      %1906 = vmatprep.mubr.bf16.mxu0 %v1420
      %1907 = vmatmul.mubr.bf16.gmra.mrb[0].mxu0 %v1419
      %v1908 = vpop.f32.mrb[0].mxu0
      %v1909 = vadd.f32 0.0, %v1908
      %v1910 = vpop.f32.mrb[0].mxu0
      %v1911 = vadd.f32 0.0, %v1910
      %v1912 = vpop.f32.mrb[0].mxu0
      %v1913 = vadd.f32 0.0, %v1912
      %v1914 = vpop.f32.mrb[0].mxu0
      %v1915 = vadd.f32 0.0, %v1914
      %1916 = vmatprep.mubr.bf16.mxu0 %v1423
      %1917 = vmatmul.mubr.bf16.gmra.mrb[0].mxu0 %v1422
      %v1918 = vpop.f32.mrb[0].mxu0
      %v1919 = vadd.f32 0.0, %v1918
      %v1920 = vpop.f32.mrb[0].mxu0
      %v1921 = vadd.f32 0.0, %v1920
      %v1922 = vpop.f32.mrb[0].mxu0
      %v1923 = vadd.f32 0.0, %v1922
      %v1924 = vpop.f32.mrb[0].mxu0
      %v1925 = vadd.f32 0.0, %v1924
      %1926 = vmatprep.mubr.bf16.mxu0 %v1426
      %1927 = vmatmul.mubr.bf16.gmra.mrb[0].mxu0 %v1425
      %v1928 = vpop.f32.mrb[0].mxu0
      %v1929 = vadd.f32 0.0, %v1928
      %v1930 = vpop.f32.mrb[0].mxu0
      %v1931 = vadd.f32 0.0, %v1930
      %v1932 = vpop.f32.mrb[0].mxu0
      %v1933 = vadd.f32 0.0, %v1932
      %v1934 = vpop.f32.mrb[0].mxu0
      %v1935 = vadd.f32 0.0, %v1934
      %1936 = vmatprep.mubr.bf16.mxu0 %v1429
      %1937 = vmatmul.mubr.bf16.gmra.mrb[0].mxu0 %v1428
      %v1938 = vpop.f32.mrb[0].mxu0
      %v1939 = vadd.f32 0.0, %v1938
      %v1940 = vpop.f32.mrb[0].mxu0
      %v1941 = vadd.f32 0.0, %v1940
      %v1942 = vpop.f32.mrb[0].mxu0
      %v1943 = vadd.f32 0.0, %v1942
      %v1944 = vpop.f32.mrb[0].mxu0
      %v1945 = vadd.f32 0.0, %v1944
      %1946 = vdwg.mxu0
      %1947 = vmatprep.subr.bf16.mxu0 %v1623
      %1948 = vmatpush1.bf16.msra.mxu0 %v1622
      %1949 = vmatprep.subr.bf16.mxu0 %v1625
      %1950 = vmatpush1.bf16.msra.mxu0 %v1624
      %1951 = vmatprep.subr.bf16.mxu0 %v1627
      %1952 = vmatpush1.bf16.msra.mxu0 %v1626
      %1953 = vmatprep.subr.bf16.mxu0 %v1629
      %1954 = vmatpush1.bf16.msra.mxu0 %v1628
      %1955 = vmatprep.subr.bf16.mxu0 %v1732
      %1956 = vmatpush1.bf16.msra.mxu0 %v1729
      %1957 = vmatprep.subr.bf16.mxu0 0
      %1958 = vmatpush1.bf16.msra.mxu0 0
      %1959 = vmatprep.subr.bf16.mxu0 0
      %1960 = vmatpush1.bf16.msra.mxu0 0
      %1961 = vmatprep.subr.bf16.mxu0 0
      %1962 = vmatpush1.bf16.msra.mxu0 0
      %1963 = vmatprep.subr.bf16.mxu0 0
      %1964 = vmatpush1.bf16.msra.mxu0 0
      %1965 = vmatprep.subr.bf16.mxu0 0
      %1966 = vmatpush1.bf16.msra.mxu0 0
      %1967 = vmatprep.subr.bf16.mxu0 0
      %1968 = vmatpush1.bf16.msra.mxu0 0
      %1969 = vmatprep.subr.bf16.mxu0 0
      %1970 = vmatpush1.bf16.msra.mxu0 0
      %1971 = vmatprep.subr.bf16.mxu0 0
      %1972 = vmatpush1.bf16.msra.mxu0 0
      %1973 = vmatprep.subr.bf16.mxu0 0
      %1974 = vmatpush1.bf16.msra.mxu0 0
      %1975 = vmatprep.subr.bf16.mxu0 0
      %1976 = vmatpush1.bf16.msra.mxu0 0
      %1977 = vmatprep.subr.bf16.mxu0 0
      %1978 = vmatpush1.bf16.msra.mxu0 0
      %1979 = vmatprep.mubr.bf16.mxu0 0
      %1980 = vmatmul.mubr.bf16.gmra.mrb[0].mxu0 %v1674
      %v1981 = vpop.f32.mrb[0].mxu0
      %v1982 = vadd.f32 %v1769, %v1981
      %v1983 = vpop.f32.mrb[0].mxu0
      %v1984 = vadd.f32 %v1771, %v1983
      %v1985 = vpop.f32.mrb[0].mxu0
      %v1986 = vadd.f32 %v1773, %v1985
      %v1987 = vpop.f32.mrb[0].mxu0
      %v1988 = vadd.f32 %v1775, %v1987
      %1989 = vmatprep.mubr.bf16.mxu0 0
      %1990 = vmatmul.mubr.bf16.gmra.mrb[0].mxu0 %v1677
      %v1991 = vpop.f32.mrb[0].mxu0
      %v1992 = vadd.f32 %v1779, %v1991
      %v1993 = vpop.f32.mrb[0].mxu0
      %v1994 = vadd.f32 %v1781, %v1993
      %v1995 = vpop.f32.mrb[0].mxu0
      %v1996 = vadd.f32 %v1783, %v1995
      %v1997 = vpop.f32.mrb[0].mxu0
      %v1998 = vadd.f32 %v1785, %v1997
      %1999 = vmatprep.mubr.bf16.mxu0 0
      %2000 = vmatmul.mubr.bf16.gmra.mrb[0].mxu0 %v1680
      %v2001 = vpop.f32.mrb[0].mxu0
      %v2002 = vadd.f32 %v1789, %v2001
      %v2003 = vpop.f32.mrb[0].mxu0
      %v2004 = vadd.f32 %v1791, %v2003
      %v2005 = vpop.f32.mrb[0].mxu0
      %v2006 = vadd.f32 %v1793, %v2005
      %v2007 = vpop.f32.mrb[0].mxu0
      %v2008 = vadd.f32 %v1795, %v2007
      %2009 = vmatprep.mubr.bf16.mxu0 0
      %2010 = vmatmul.mubr.bf16.gmra.mrb[0].mxu0 %v1683
      %v2011 = vpop.f32.mrb[0].mxu0
      %v2012 = vadd.f32 %v1799, %v2011
      %v2013 = vpop.f32.mrb[0].mxu0
      %v2014 = vadd.f32 %v1801, %v2013
      %v2015 = vpop.f32.mrb[0].mxu0
      %v2016 = vadd.f32 %v1803, %v2015
      %v2017 = vpop.f32.mrb[0].mxu0
      %v2018 = vadd.f32 %v1805, %v2017
      %2019 = vmatprep.mubr.bf16.mxu0 0
      %2020 = vmatmul.mubr.bf16.gmra.mrb[0].mxu0 %v1686
      %v2021 = vpop.f32.mrb[0].mxu0
      %v2022 = vadd.f32 %v1809, %v2021
      %v2023 = vpop.f32.mrb[0].mxu0
      %v2024 = vadd.f32 %v1811, %v2023
      %v2025 = vpop.f32.mrb[0].mxu0
      %v2026 = vadd.f32 %v1813, %v2025
      %v2027 = vpop.f32.mrb[0].mxu0
      %v2028 = vadd.f32 %v1815, %v2027
      %2029 = vmatprep.mubr.bf16.mxu0 0
      %2030 = vmatmul.mubr.bf16.gmra.mrb[0].mxu0 %v1689
      %v2031 = vpop.f32.mrb[0].mxu0
      %v2032 = vadd.f32 %v1819, %v2031
      %v2033 = vpop.f32.mrb[0].mxu0
      %v2034 = vadd.f32 %v1821, %v2033
      %v2035 = vpop.f32.mrb[0].mxu0
      %v2036 = vadd.f32 %v1823, %v2035
      %v2037 = vpop.f32.mrb[0].mxu0
      %v2038 = vadd.f32 %v1825, %v2037
      %2039 = vmatprep.mubr.bf16.mxu0 0
      %2040 = vmatmul.mubr.bf16.gmra.mrb[0].mxu0 %v1692
      %v2041 = vpop.f32.mrb[0].mxu0
      %v2042 = vadd.f32 %v1829, %v2041
      %v2043 = vpop.f32.mrb[0].mxu0
      %v2044 = vadd.f32 %v1831, %v2043
      %v2045 = vpop.f32.mrb[0].mxu0
      %v2046 = vadd.f32 %v1833, %v2045
      %v2047 = vpop.f32.mrb[0].mxu0
      %v2048 = vadd.f32 %v1835, %v2047
      %2049 = vmatprep.mubr.bf16.mxu0 0
      %2050 = vmatmul.mubr.bf16.gmra.mrb[0].mxu0 %v1695
      %v2051 = vpop.f32.mrb[0].mxu0
      %v2052 = vadd.f32 %v1839, %v2051
      %v2053 = vpop.f32.mrb[0].mxu0
      %v2054 = vadd.f32 %v1841, %v2053
      %v2055 = vpop.f32.mrb[0].mxu0
      %v2056 = vadd.f32 %v1843, %v2055
      %v2057 = vpop.f32.mrb[0].mxu0
      %v2058 = vadd.f32 %v1845, %v2057
      %2059 = vmatprep.mubr.bf16.mxu0 0
      %2060 = vmatmul.mubr.bf16.gmra.mrb[0].mxu0 %v1698
      %v2061 = vpop.f32.mrb[0].mxu0
      %v2062 = vadd.f32 %v1849, %v2061
      %v2063 = vpop.f32.mrb[0].mxu0
      %v2064 = vadd.f32 %v1851, %v2063
      %v2065 = vpop.f32.mrb[0].mxu0
      %v2066 = vadd.f32 %v1853, %v2065
      %v2067 = vpop.f32.mrb[0].mxu0
      %v2068 = vadd.f32 %v1855, %v2067
      %2069 = vmatprep.mubr.bf16.mxu0 0
      %2070 = vmatmul.mubr.bf16.gmra.mrb[0].mxu0 %v1701
      %v2071 = vpop.f32.mrb[0].mxu0
      %v2072 = vadd.f32 %v1859, %v2071
      %v2073 = vpop.f32.mrb[0].mxu0
      %v2074 = vadd.f32 %v1861, %v2073
      %v2075 = vpop.f32.mrb[0].mxu0
      %v2076 = vadd.f32 %v1863, %v2075
      %v2077 = vpop.f32.mrb[0].mxu0
      %v2078 = vadd.f32 %v1865, %v2077
      %2079 = vmatprep.mubr.bf16.mxu0 0
      %2080 = vmatmul.mubr.bf16.gmra.mrb[0].mxu0 %v1704
      %v2081 = vpop.f32.mrb[0].mxu0
      %v2082 = vadd.f32 %v1869, %v2081
      %v2083 = vpop.f32.mrb[0].mxu0
      %v2084 = vadd.f32 %v1871, %v2083
      %v2085 = vpop.f32.mrb[0].mxu0
      %v2086 = vadd.f32 %v1873, %v2085
      %v2087 = vpop.f32.mrb[0].mxu0
      %v2088 = vadd.f32 %v1875, %v2087
      %2089 = vmatprep.mubr.bf16.mxu0 0
      %2090 = vmatmul.mubr.bf16.gmra.mrb[0].mxu0 %v1707
      %v2091 = vpop.f32.mrb[0].mxu0
      %v2092 = vadd.f32 %v1879, %v2091
      %v2093 = vpop.f32.mrb[0].mxu0
      %v2094 = vadd.f32 %v1881, %v2093
      %v2095 = vpop.f32.mrb[0].mxu0
      %v2096 = vadd.f32 %v1883, %v2095
      %v2097 = vpop.f32.mrb[0].mxu0
      %v2098 = vadd.f32 %v1885, %v2097
      %2099 = vmatprep.mubr.bf16.mxu0 0
      %2100 = vmatmul.mubr.bf16.gmra.mrb[0].mxu0 %v1710
      %v2101 = vpop.f32.mrb[0].mxu0
      %v2102 = vadd.f32 %v1889, %v2101
      %v2103 = vpop.f32.mrb[0].mxu0
      %v2104 = vadd.f32 %v1891, %v2103
      %v2105 = vpop.f32.mrb[0].mxu0
      %v2106 = vadd.f32 %v1893, %v2105
      %v2107 = vpop.f32.mrb[0].mxu0
      %v2108 = vadd.f32 %v1895, %v2107
      %2109 = vmatprep.mubr.bf16.mxu0 0
      %2110 = vmatmul.mubr.bf16.gmra.mrb[0].mxu0 %v1713
      %v2111 = vpop.f32.mrb[0].mxu0
      %v2112 = vadd.f32 %v1899, %v2111
      %v2113 = vpop.f32.mrb[0].mxu0
      %v2114 = vadd.f32 %v1901, %v2113
      %v2115 = vpop.f32.mrb[0].mxu0
      %v2116 = vadd.f32 %v1903, %v2115
      %v2117 = vpop.f32.mrb[0].mxu0
      %v2118 = vadd.f32 %v1905, %v2117
      %2119 = vmatprep.mubr.bf16.mxu0 0
      %2120 = vmatmul.mubr.bf16.gmra.mrb[0].mxu0 %v1716
      %v2121 = vpop.f32.mrb[0].mxu0
      %v2122 = vadd.f32 %v1909, %v2121
      %v2123 = vpop.f32.mrb[0].mxu0
      %v2124 = vadd.f32 %v1911, %v2123
      %v2125 = vpop.f32.mrb[0].mxu0
      %v2126 = vadd.f32 %v1913, %v2125
      %v2127 = vpop.f32.mrb[0].mxu0
      %v2128 = vadd.f32 %v1915, %v2127
      %2129 = vmatprep.mubr.bf16.mxu0 0
      %2130 = vmatmul.mubr.bf16.gmra.mrb[0].mxu0 %v1719
      %v2131 = vpop.f32.mrb[0].mxu0
      %v2132 = vadd.f32 %v1919, %v2131
      %v2133 = vpop.f32.mrb[0].mxu0
      %v2134 = vadd.f32 %v1921, %v2133
      %v2135 = vpop.f32.mrb[0].mxu0
      %v2136 = vadd.f32 %v1923, %v2135
      %v2137 = vpop.f32.mrb[0].mxu0
      %v2138 = vadd.f32 %v1925, %v2137
      %2139 = vmatprep.mubr.bf16.mxu0 0
      %2140 = vmatmul.mubr.bf16.gmra.mrb[0].mxu0 %v1722
      %v2141 = vpop.f32.mrb[0].mxu0
      %v2142 = vadd.f32 %v1929, %v2141
      %v2143 = vpop.f32.mrb[0].mxu0
      %v2144 = vadd.f32 %v1931, %v2143
      %v2145 = vpop.f32.mrb[0].mxu0
      %v2146 = vadd.f32 %v1933, %v2145
      %v2147 = vpop.f32.mrb[0].mxu0
      %v2148 = vadd.f32 %v1935, %v2147
      %2149 = vmatprep.mubr.bf16.mxu0 0
      %2150 = vmatmul.mubr.bf16.gmra.mrb[0].mxu0 %v1725
      %v2151 = vpop.f32.mrb[0].mxu0
      %v2152 = vadd.f32 %v1939, %v2151
      %v2153 = vpop.f32.mrb[0].mxu0
      %v2154 = vadd.f32 %v1941, %v2153
      %v2155 = vpop.f32.mrb[0].mxu0
      %v2156 = vadd.f32 %v1943, %v2155
      %v2157 = vpop.f32.mrb[0].mxu0
      %v2158 = vadd.f32 %v1945, %v2157
      %2159 = vdwg.mxu0
      %v2160 = vld [vmem:[%s11] sm:$0x7]
      %v2161 = vld [vmem:[%s13] sm:$0xff]
      %v2162 = vld [vmem:[%s13 + $0x8] sm:$0xff]
      %v2163 = vld [vmem:[%s13 + $0x10] sm:$0xff]
      %v2164 = vld [vmem:[%s13 + $0x18] sm:$0xff]
      %v2165 = vld [vmem:[%s13 + $0x20] sm:$0xff]
      %v2166 = vld [vmem:[%s13 + $0x28] sm:$0xff]
      %v2167 = vld [vmem:[%s13 + $0x30] sm:$0xff]
      %v2168 = vld [vmem:[%s13 + $0x38] sm:$0xff]
      %v2169 = vld [vmem:[%s13 + $0x40] sm:$0xff]
      %v2170 = vld [vmem:[%s13 + $0x48] sm:$0xff]
      %v2171 = vld [vmem:[%s13 + $0x50] sm:$0xff]
      %v2172 = vld [vmem:[%s13 + $0x58] sm:$0xff]
      %v2173 = vld [vmem:[%s13 + $0x60] sm:$0xff]
      %v2174 = vld [vmem:[%s13 + $0x68] sm:$0xff]
      %v2175 = vld [vmem:[%s13 + $0x70] sm:$0xff]
      %v2176 = vld [vmem:[%s13 + $0x78] sm:$0xff]
      %v2177 = vld [vmem:[%s13 + $0x80] sm:$0xff]
      %v2178 = vld [vmem:[%s13 + $0x88] sm:$0xff]
      %v2179 = vld [vmem:[%s13 + $0x90] sm:$0xff]
      %v2180 = vld [vmem:[%s13 + $0x98] sm:$0xff]
      %v2181 = vld [vmem:[%s13 + $0xa0] sm:$0xff]
      %v2182 = vld [vmem:[%s13 + $0xa8] sm:$0xff]
      %v2183 = vld [vmem:[%s13 + $0xb0] sm:$0xff]
      %v2184 = vld [vmem:[%s13 + $0xb8] sm:$0xff]
      %v2185 = vld [vmem:[%s13 + $0xc0] sm:$0xff]
      %v2186 = vld [vmem:[%s13 + $0xc8] sm:$0xff]
      %v2187 = vld [vmem:[%s13 + $0xd0] sm:$0xff]
      %v2188 = vld [vmem:[%s13 + $0xd8] sm:$0xff]
      %v2189 = vld [vmem:[%s13 + $0xe0] sm:$0xff]
      %v2190 = vld [vmem:[%s13 + $0xe8] sm:$0xff]
      %v2191 = vld [vmem:[%s13 + $0xf0] sm:$0xff]
      %v2192 = vld [vmem:[%s13 + $0xf8] sm:$0xff]
      %v2193 = vld [vmem:[%s15] sm:$0xff]
      %v2194 = vld [vmem:[%s15 + $0x8] sm:$0xf]
      %v2195 = vld [vmem:[%s15 + $0xc] sm:$0xff]
      %v2196 = vld [vmem:[%s15 + $0x14] sm:$0xf]
      %v2197 = vld [vmem:[%s15 + $0x18] sm:$0xff]
      %v2198 = vld [vmem:[%s15 + $0x20] sm:$0xf]
      %v2199 = vld [vmem:[%s15 + $0x24] sm:$0xff]
      %v2200 = vld [vmem:[%s15 + $0x2c] sm:$0xf]
      %v2201 = vld [vmem:[%s15 + $0x30] sm:$0xff]
      %v2202 = vld [vmem:[%s15 + $0x38] sm:$0xf]
      %v2203 = vld [vmem:[%s15 + $0x3c] sm:$0xff]
      %v2204 = vld [vmem:[%s15 + $0x44] sm:$0xf]
      %v2205 = vld [vmem:[%s15 + $0x48] sm:$0xff]
      %v2206 = vld [vmem:[%s15 + $0x50] sm:$0xf]
      %v2207 = vld [vmem:[%s15 + $0x54] sm:$0xff]
      %v2208 = vld [vmem:[%s15 + $0x5c] sm:$0xf]
      %v2209 = vld [vmem:[%s15 + $0x60] sm:$0xff]
      %v2210 = vld [vmem:[%s15 + $0x68] sm:$0xf]
      %v2211 = vld [vmem:[%s15 + $0x6c] sm:$0xff]
      %v2212 = vld [vmem:[%s15 + $0x74] sm:$0xf]
      %v2213 = vld [vmem:[%s15 + $0x78] sm:$0xff]
      %v2214 = vld [vmem:[%s15 + $0x80] sm:$0xf]
      %v2215 = vld [vmem:[%s15 + $0x84] sm:$0xff]
      %v2216 = vld [vmem:[%s15 + $0x8c] sm:$0xf]
      %v2217 = vld [vmem:[%s15 + $0x90] sm:$0x33]
      %v2218 = vld [vmem:[%s15 + $0x98] sm:$0x3]
      %v2219 = vld [vmem:[%s17] sm:$0xff]
      %v2220 = vld [vmem:[%s17 + $0x8] sm:$0xff]
      %v2221 = vld [vmem:[%s17 + $0x10] sm:$0xff]
      %v2222 = vld [vmem:[%s17 + $0x18] sm:$0xff]
      %v2223 = vld [vmem:[%s17 + $0x20] sm:$0xff]
      %v2224 = vld [vmem:[%s17 + $0x28] sm:$0xff]
      %v2225 = vld [vmem:[%s17 + $0x30] sm:$0xff]
      %v2226 = vld [vmem:[%s17 + $0x38] sm:$0xff]
      %v2227 = vld [vmem:[%s17 + $0x40] sm:$0xff]
      %v2228 = vld [vmem:[%s17 + $0x48] sm:$0xff]
      %v2229 = vld [vmem:[%s17 + $0x50] sm:$0xff]
      %v2230 = vld [vmem:[%s17 + $0x58] sm:$0xff]
      %v2231 = vld [vmem:[%s17 + $0x60] sm:$0xff]
      %v2232 = vld [vmem:[%s17 + $0x68] sm:$0xff]
      %v2233 = vld [vmem:[%s17 + $0x70] sm:$0xff]
      %v2234 = vld [vmem:[%s17 + $0x78] sm:$0xff]
      %v2235 = vld [vmem:[%s17 + $0x80] sm:$0xff]
      %v2236 = vld [vmem:[%s17 + $0x88] sm:$0xff]
      %v2237 = vld [vmem:[%s17 + $0x90] sm:$0xff]
      %v2238 = vld [vmem:[%s17 + $0x98] sm:$0xff]
      %v2239 = vld [vmem:[%s17 + $0xa0] sm:$0xff]
      %v2240 = vld [vmem:[%s17 + $0xa8] sm:$0xff]
      %v2241 = vld [vmem:[%s17 + $0xb0] sm:$0xff]
      %v2242 = vld [vmem:[%s17 + $0xb8] sm:$0xff]
      %v2243 = vld [vmem:[%s17 + $0xc0] sm:$0xff]
      %v2244 = vld [vmem:[%s17 + $0xc8] sm:$0xff]
      %v2245 = vld [vmem:[%s17 + $0xd0] sm:$0xff]
      %v2246 = vld [vmem:[%s17 + $0xd8] sm:$0xff]
      %v2247 = vld [vmem:[%s17 + $0xe0] sm:$0xff]
      %v2248 = vld [vmem:[%s17 + $0xe8] sm:$0xff]
      %v2249 = vld [vmem:[%s17 + $0xf0] sm:$0xff]
      %v2250 = vld [vmem:[%s17 + $0xf8] sm:$0xff]
      %v2251 = vld [vmem:[%s19] sm:$0xff]
      %v2252 = vld [vmem:[%s19 + $0x8] sm:$0xff]
      %v2253 = vld [vmem:[%s19 + $0x10] sm:$0xff]
      %v2254 = vld [vmem:[%s19 + $0x18] sm:$0xff]
      %v2255 = vld [vmem:[%s19 + $0x20] sm:$0xff]
      %v2256 = vld [vmem:[%s19 + $0x28] sm:$0xff]
      %v2257 = vld [vmem:[%s19 + $0x30] sm:$0xff]
      %v2258 = vld [vmem:[%s19 + $0x38] sm:$0xff]
      %v2259 = vld [vmem:[%s19 + $0x40] sm:$0xff]
      %v2260 = vld [vmem:[%s19 + $0x48] sm:$0xff]
      %v2261 = vld [vmem:[%s19 + $0x50] sm:$0xff]
      %v2262 = vld [vmem:[%s19 + $0x58] sm:$0xff]
      %v2263 = vld [vmem:[%s19 + $0x60] sm:$0xff]
      %v2264 = vld [vmem:[%s19 + $0x68] sm:$0xff]
      %v2265 = vld [vmem:[%s19 + $0x70] sm:$0xff]
      %v2266 = vld [vmem:[%s19 + $0x78] sm:$0xff]
      %v2267 = vld [vmem:[%s19 + $0x80] sm:$0xff]
      %v2268 = vld [vmem:[%s19 + $0x88] sm:$0xff]
      %v2269 = vld [vmem:[%s19 + $0x90] sm:$0xff]
      %v2270 = vld [vmem:[%s19 + $0x98] sm:$0xff]
      %v2271 = vld [vmem:[%s19 + $0xa0] sm:$0xff]
      %v2272 = vld [vmem:[%s19 + $0xa8] sm:$0xff]
      %v2273 = vld [vmem:[%s19 + $0xb0] sm:$0xff]
      %v2274 = vld [vmem:[%s19 + $0xb8] sm:$0xff]
      %v2275 = vld [vmem:[%s19 + $0xc0] sm:$0xff]
      %v2276 = vld [vmem:[%s19 + $0xc8] sm:$0xff]
      %v2277 = vld [vmem:[%s19 + $0xd0] sm:$0xff]
      %v2278 = vld [vmem:[%s19 + $0xd8] sm:$0xff]
      %v2279 = vld [vmem:[%s19 + $0xe0] sm:$0xff]
      %v2280 = vld [vmem:[%s19 + $0xe8] sm:$0xff]
      %v2281 = vld [vmem:[%s19 + $0xf0] sm:$0xff]
      %v2282 = vld [vmem:[%s19 + $0xf8] sm:$0xff]
      %v2283 = vld [vmem:[%s21] sm:$0xff]
      %v2284 = vld [vmem:[%s21 + $0x8] sm:$0xff]
      %v2285 = vld [vmem:[%s21 + $0x10] sm:$0xff]
      %v2286 = vld [vmem:[%s21 + $0x18] sm:$0xff]
      %v2287 = vld [vmem:[%s23] sm:$0xff]
      %v2288 = vld [vmem:[%s23 + $0x8] sm:$0xff]
      %v2289 = vld [vmem:[%s23 + $0x10] sm:$0xff]
      %v2290 = vld [vmem:[%s23 + $0x18] sm:$0xff]
      %v2291 = vld [vmem:[%s23 + $0x20] sm:$0xff]
      %v2292 = vld [vmem:[%s23 + $0x28] sm:$0xff]
      %v2293 = vld [vmem:[%s23 + $0x30] sm:$0xff]
      %v2294 = vld [vmem:[%s23 + $0x38] sm:$0xff]
      %v2295 = vld [vmem:[%s23 + $0x40] sm:$0xff]
      %v2296 = vld [vmem:[%s23 + $0x48] sm:$0xff]
      %v2297 = vld [vmem:[%s23 + $0x50] sm:$0xff]
      %v2298 = vld [vmem:[%s23 + $0x58] sm:$0xff]
      %v2299 = vld [vmem:[%s23 + $0x60] sm:$0xf]
      %v2301 = vlaneseq
      %v2302 = vshrl.u32 %v2301, 7
      %v2303 = vsub.s32 0, %v2302
      %v2304 = vrot.slane %v2160, %v2303
      %v2305 = vlaneseq
      %v2306 = vshrl.u32 %v2305, 7
      %v2307 = vsub.s32 1, %v2306
      %v2308 = vrot.slane %v2160, %v2307
      %v2309 = vlaneseq
      %v2310 = vshrl.u32 %v2309, 7
      %v2311 = vsub.s32 2, %v2310
      %v2312 = vrot.slane %v2160, %v2311
      %vm2315 = vcmask 244736
      %v2316 = vsel %vm2315, %v2312, 0
      %vm2318 = vcmask 1045504
      %v2320 = vsel %vm2318, %v2156, 0
      %v2323 = vsel %vm2318, %v2158, 0
      %2325 = vmatprep.subr.mxu0 %v1984
      %2326 = vmatpush1.msra.mxu0 %v1982
      %2327 = vmatprep.subr.mxu0 %v1988
      %2328 = vmatpush1.msra.mxu0 %v1986
      %2329 = vmatprep.subr.mxu0 %v1994
      %2330 = vmatpush1.msra.mxu0 %v1992
      %2331 = vmatprep.subr.mxu0 %v1998
      %2332 = vmatpush1.msra.mxu0 %v1996
      %2333 = vmatprep.subr.mxu0 %v2004
      %2334 = vmatpush1.msra.mxu0 %v2002
      %2335 = vmatprep.subr.mxu0 %v2008
      %2336 = vmatpush1.msra.mxu0 %v2006
      %2337 = vmatprep.subr.mxu0 %v2014
      %2338 = vmatpush1.msra.mxu0 %v2012
      %2339 = vmatprep.subr.mxu0 %v2018
      %2340 = vmatpush1.msra.mxu0 %v2016
      %2341 = vmatprep.subr.mxu0 %v2024
      %2342 = vmatpush1.msra.mxu0 %v2022
      %2343 = vmatprep.subr.mxu0 %v2028
      %2344 = vmatpush1.msra.mxu0 %v2026
      %2345 = vmatprep.subr.mxu0 %v2034
      %2346 = vmatpush1.msra.mxu0 %v2032
      %2347 = vmatprep.subr.mxu0 %v2038
      %2348 = vmatpush1.msra.mxu0 %v2036
      %2349 = vmatprep.subr.mxu0 %v2044
      %2350 = vmatpush1.msra.mxu0 %v2042
      %2351 = vmatprep.subr.mxu0 %v2048
      %2352 = vmatpush1.msra.mxu0 %v2046
      %2353 = vmatprep.subr.mxu0 %v2054
      %2354 = vmatpush1.msra.mxu0 %v2052
      %2355 = vmatprep.subr.mxu0 %v2058
      %2356 = vmatpush1.msra.mxu0 %v2056
      %2357 = vmatprep.subr.mxu0 %v2064
      %2358 = vmatpush1.msra.mxu0 %v2062
      %2359 = vmatprep.subr.mxu0 %v2068
      %2360 = vmatpush1.msra.mxu0 %v2066
      %2361 = vmatprep.subr.mxu0 %v2074
      %2362 = vmatpush1.msra.mxu0 %v2072
      %2363 = vmatprep.subr.mxu0 %v2078
      %2364 = vmatpush1.msra.mxu0 %v2076
      %2365 = vmatprep.subr.mxu0 %v2084
      %2366 = vmatpush1.msra.mxu0 %v2082
      %2367 = vmatprep.subr.mxu0 %v2088
      %2368 = vmatpush1.msra.mxu0 %v2086
      %2369 = vmatprep.subr.mxu0 %v2094
      %2370 = vmatpush1.msra.mxu0 %v2092
      %2371 = vmatprep.subr.mxu0 %v2098
      %2372 = vmatpush1.msra.mxu0 %v2096
      %2373 = vmatprep.subr.mxu0 %v2104
      %2374 = vmatpush1.msra.mxu0 %v2102
      %2375 = vmatprep.subr.mxu0 %v2108
      %2376 = vmatpush1.msra.mxu0 %v2106
      %2377 = vmatprep.subr.mxu0 %v2114
      %2378 = vmatpush1.msra.mxu0 %v2112
      %2379 = vmatprep.subr.mxu0 %v2118
      %2380 = vmatpush1.msra.mxu0 %v2116
      %2381 = vmatprep.subr.mxu0 %v2124
      %2382 = vmatpush1.msra.mxu0 %v2122
      %2383 = vmatprep.subr.mxu0 %v2128
      %2384 = vmatpush1.msra.mxu0 %v2126
      %2385 = vmatprep.subr.mxu0 %v2134
      %2386 = vmatpush1.msra.mxu0 %v2132
      %2387 = vmatprep.subr.mxu0 %v2138
      %2388 = vmatpush1.msra.mxu0 %v2136
      %2389 = vmatprep.mubr.f32.mxu0 %v2308
      %2390 = vmatmul.mubr.f32.gmra.mrb[0].mxu0 %v2304
      %v2391 = vpop.f32.mrb[0].mxu0
      %v2392 = vadd.f32 0.0, %v2391
      %v2393 = vpop.f32.mrb[0].mxu0
      %v2394 = vadd.f32 0.0, %v2393
      %2395 = vdwg.mxu0
      %2396 = vmatprep.subr.mxu0 %v2144
      %2397 = vmatpush1.msra.mxu0 %v2142
      %2398 = vmatprep.subr.mxu0 %v2148
      %2399 = vmatpush1.msra.mxu0 %v2146
      %2400 = vmatprep.subr.mxu0 %v2154
      %2401 = vmatpush1.msra.mxu0 %v2152
      %2402 = vmatprep.subr.mxu0 %v2323
      %2403 = vmatpush1.msra.mxu0 %v2320
      %2404 = vmatprep.subr.mxu0 0.0
      %2405 = vmatpush1.msra.mxu0 0.0
      %2406 = vmatprep.subr.mxu0 0.0
      %2407 = vmatpush1.msra.mxu0 0.0
      %2408 = vmatprep.subr.mxu0 0.0
      %2409 = vmatpush1.msra.mxu0 0.0
      %2410 = vmatprep.subr.mxu0 0.0
      %2411 = vmatpush1.msra.mxu0 0.0
      %2412 = vmatprep.subr.mxu0 0.0
      %2413 = vmatpush1.msra.mxu0 0.0
      %2414 = vmatprep.subr.mxu0 0.0
      %2415 = vmatpush1.msra.mxu0 0.0
      %2416 = vmatprep.subr.mxu0 0.0
      %2417 = vmatpush1.msra.mxu0 0.0
      %2418 = vmatprep.subr.mxu0 0.0
      %2419 = vmatpush1.msra.mxu0 0.0
      %2420 = vmatprep.subr.mxu0 0.0
      %2421 = vmatpush1.msra.mxu0 0.0
      %2422 = vmatprep.subr.mxu0 0.0
      %2423 = vmatpush1.msra.mxu0 0.0
      %2424 = vmatprep.subr.mxu0 0.0
      %2425 = vmatpush1.msra.mxu0 0.0
      %2426 = vmatprep.subr.mxu0 0.0
      %2427 = vmatpush1.msra.mxu0 0.0
      %2428 = vmatprep.subr.mxu0 0.0
      %2429 = vmatpush1.msra.mxu0 0.0
      %2430 = vmatprep.subr.mxu0 0.0
      %2431 = vmatpush1.msra.mxu0 0.0
      %2432 = vmatprep.subr.mxu0 0.0
      %2433 = vmatpush1.msra.mxu0 0.0
      %2434 = vmatprep.subr.mxu0 0.0
      %2435 = vmatpush1.msra.mxu0 0.0
      %2436 = vmatprep.subr.mxu0 0.0
      %2437 = vmatpush1.msra.mxu0 0.0
      %2438 = vmatprep.subr.mxu0 0.0
      %2439 = vmatpush1.msra.mxu0 0.0
      %2440 = vmatprep.subr.mxu0 0.0
      %2441 = vmatpush1.msra.mxu0 0.0
      %2442 = vmatprep.subr.mxu0 0.0
      %2443 = vmatpush1.msra.mxu0 0.0
      %2444 = vmatprep.subr.mxu0 0.0
      %2445 = vmatpush1.msra.mxu0 0.0
      %2446 = vmatprep.subr.mxu0 0.0
      %2447 = vmatpush1.msra.mxu0 0.0
      %2448 = vmatprep.subr.mxu0 0.0
      %2449 = vmatpush1.msra.mxu0 0.0
      %2450 = vmatprep.subr.mxu0 0.0
      %2451 = vmatpush1.msra.mxu0 0.0
      %2452 = vmatprep.subr.mxu0 0.0
      %2453 = vmatpush1.msra.mxu0 0.0
      %2454 = vmatprep.subr.mxu0 0.0
      %2455 = vmatpush1.msra.mxu0 0.0
      %2456 = vmatprep.subr.mxu0 0.0
      %2457 = vmatpush1.msra.mxu0 0.0
      %2458 = vmatprep.subr.mxu0 0.0
      %2459 = vmatpush1.msra.mxu0 0.0
      %2460 = vmatprep.mubr.f32.mxu0 0.0
      %2461 = vmatmul.mubr.f32.gmra.mrb[0].mxu0 %v2316
      %v2462 = vpop.f32.mrb[0].mxu0
      %v2463 = vadd.f32 %v2392, %v2462
      %v2464 = vpop.f32.mrb[0].mxu0
      %v2465 = vadd.f32 %v2394, %v2464
      %2466 = vdwg.mxu0
      %v2467 = vmul.f32 %v1982, %v1982
      %v2468 = vmul.f32 %v1984, %v1984
      %v2469 = vmul.f32 %v1986, %v1986
      %v2470 = vmul.f32 %v1988, %v1988
      %v2471 = vmul.f32 %v1992, %v1992
      %v2472 = vmul.f32 %v1994, %v1994
      %v2473 = vmul.f32 %v1996, %v1996
      %v2474 = vmul.f32 %v1998, %v1998
      %v2475 = vmul.f32 %v2002, %v2002
      %v2476 = vmul.f32 %v2004, %v2004
      %v2477 = vmul.f32 %v2006, %v2006
      %v2478 = vmul.f32 %v2008, %v2008
      %v2479 = vmul.f32 %v2012, %v2012
      %v2480 = vmul.f32 %v2014, %v2014
      %v2481 = vmul.f32 %v2016, %v2016
      %v2482 = vmul.f32 %v2018, %v2018
      %v2483 = vmul.f32 %v2022, %v2022
      %v2484 = vmul.f32 %v2024, %v2024
      %v2485 = vmul.f32 %v2026, %v2026
      %v2486 = vmul.f32 %v2028, %v2028
      %v2487 = vmul.f32 %v2032, %v2032
      %v2488 = vmul.f32 %v2034, %v2034
      %v2489 = vmul.f32 %v2036, %v2036
      %v2490 = vmul.f32 %v2038, %v2038
      %v2491 = vmul.f32 %v2042, %v2042
      %v2492 = vmul.f32 %v2044, %v2044
      %v2493 = vmul.f32 %v2046, %v2046
      %v2494 = vmul.f32 %v2048, %v2048
      %v2495 = vmul.f32 %v2052, %v2052
      %v2496 = vmul.f32 %v2054, %v2054
      %v2497 = vmul.f32 %v2056, %v2056
      %v2498 = vmul.f32 %v2058, %v2058
      %v2499 = vmul.f32 %v2062, %v2062
      %v2500 = vmul.f32 %v2064, %v2064
      %v2501 = vmul.f32 %v2066, %v2066
      %v2502 = vmul.f32 %v2068, %v2068
      %v2503 = vmul.f32 %v2072, %v2072
      %v2504 = vmul.f32 %v2074, %v2074
      %v2505 = vmul.f32 %v2076, %v2076
      %v2506 = vmul.f32 %v2078, %v2078
      %v2507 = vmul.f32 %v2082, %v2082
      %v2508 = vmul.f32 %v2084, %v2084
      %v2509 = vmul.f32 %v2086, %v2086
      %v2510 = vmul.f32 %v2088, %v2088
      %v2511 = vmul.f32 %v2092, %v2092
      %v2512 = vmul.f32 %v2094, %v2094
      %v2513 = vmul.f32 %v2096, %v2096
      %v2514 = vmul.f32 %v2098, %v2098
      %v2515 = vmul.f32 %v2102, %v2102
      %v2516 = vmul.f32 %v2104, %v2104
      %v2517 = vmul.f32 %v2106, %v2106
      %v2518 = vmul.f32 %v2108, %v2108
      %v2519 = vmul.f32 %v2112, %v2112
      %v2520 = vmul.f32 %v2114, %v2114
      %v2521 = vmul.f32 %v2116, %v2116
      %v2522 = vmul.f32 %v2118, %v2118
      %v2523 = vmul.f32 %v2122, %v2122
      %v2524 = vmul.f32 %v2124, %v2124
      %v2525 = vmul.f32 %v2126, %v2126
      %v2526 = vmul.f32 %v2128, %v2128
      %v2527 = vmul.f32 %v2132, %v2132
      %v2528 = vmul.f32 %v2134, %v2134
      %v2529 = vmul.f32 %v2136, %v2136
      %v2530 = vmul.f32 %v2138, %v2138
      %v2531 = vmul.f32 %v2142, %v2142
      %v2532 = vmul.f32 %v2144, %v2144
      %v2533 = vmul.f32 %v2146, %v2146
      %v2534 = vmul.f32 %v2148, %v2148
      %v2535 = vmul.f32 %v2152, %v2152
      %v2536 = vmul.f32 %v2154, %v2154
      %v2537 = vmul.f32 %v2156, %v2156
      %v2538 = vmul.f32 %v2158, %v2158
      %v2540 = vsel %vm2318, %v2537, 0
      %v2543 = vsel %vm2318, %v2538, 0
      %2545 = vmatprep.subr.mxu0 %v2468
      %2546 = vmatpush1.msra.mxu0 %v2467
      %2547 = vmatprep.subr.mxu0 %v2470
      %2548 = vmatpush1.msra.mxu0 %v2469
      %2549 = vmatprep.subr.mxu0 %v2472
      %2550 = vmatpush1.msra.mxu0 %v2471
      %2551 = vmatprep.subr.mxu0 %v2474
      %2552 = vmatpush1.msra.mxu0 %v2473
      %2553 = vmatprep.subr.mxu0 %v2476
      %2554 = vmatpush1.msra.mxu0 %v2475
      %2555 = vmatprep.subr.mxu0 %v2478
      %2556 = vmatpush1.msra.mxu0 %v2477
      %2557 = vmatprep.subr.mxu0 %v2480
      %2558 = vmatpush1.msra.mxu0 %v2479
      %2559 = vmatprep.subr.mxu0 %v2482
      %2560 = vmatpush1.msra.mxu0 %v2481
      %2561 = vmatprep.subr.mxu0 %v2484
      %2562 = vmatpush1.msra.mxu0 %v2483
      %2563 = vmatprep.subr.mxu0 %v2486
      %2564 = vmatpush1.msra.mxu0 %v2485
      %2565 = vmatprep.subr.mxu0 %v2488
      %2566 = vmatpush1.msra.mxu0 %v2487
      %2567 = vmatprep.subr.mxu0 %v2490
      %2568 = vmatpush1.msra.mxu0 %v2489
      %2569 = vmatprep.subr.mxu0 %v2492
      %2570 = vmatpush1.msra.mxu0 %v2491
      %2571 = vmatprep.subr.mxu0 %v2494
      %2572 = vmatpush1.msra.mxu0 %v2493
      %2573 = vmatprep.subr.mxu0 %v2496
      %2574 = vmatpush1.msra.mxu0 %v2495
      %2575 = vmatprep.subr.mxu0 %v2498
      %2576 = vmatpush1.msra.mxu0 %v2497
      %2577 = vmatprep.subr.mxu0 %v2500
      %2578 = vmatpush1.msra.mxu0 %v2499
      %2579 = vmatprep.subr.mxu0 %v2502
      %2580 = vmatpush1.msra.mxu0 %v2501
      %2581 = vmatprep.subr.mxu0 %v2504
      %2582 = vmatpush1.msra.mxu0 %v2503
      %2583 = vmatprep.subr.mxu0 %v2506
      %2584 = vmatpush1.msra.mxu0 %v2505
      %2585 = vmatprep.subr.mxu0 %v2508
      %2586 = vmatpush1.msra.mxu0 %v2507
      %2587 = vmatprep.subr.mxu0 %v2510
      %2588 = vmatpush1.msra.mxu0 %v2509
      %2589 = vmatprep.subr.mxu0 %v2512
      %2590 = vmatpush1.msra.mxu0 %v2511
      %2591 = vmatprep.subr.mxu0 %v2514
      %2592 = vmatpush1.msra.mxu0 %v2513
      %2593 = vmatprep.subr.mxu0 %v2516
      %2594 = vmatpush1.msra.mxu0 %v2515
      %2595 = vmatprep.subr.mxu0 %v2518
      %2596 = vmatpush1.msra.mxu0 %v2517
      %2597 = vmatprep.subr.mxu0 %v2520
      %2598 = vmatpush1.msra.mxu0 %v2519
      %2599 = vmatprep.subr.mxu0 %v2522
      %2600 = vmatpush1.msra.mxu0 %v2521
      %2601 = vmatprep.subr.mxu0 %v2524
      %2602 = vmatpush1.msra.mxu0 %v2523
      %2603 = vmatprep.subr.mxu0 %v2526
      %2604 = vmatpush1.msra.mxu0 %v2525
      %2605 = vmatprep.subr.mxu0 %v2528
      %2606 = vmatpush1.msra.mxu0 %v2527
      %2607 = vmatprep.subr.mxu0 %v2530
      %2608 = vmatpush1.msra.mxu0 %v2529
      %2609 = vmatprep.mubr.f32.mxu0 %v2308
      %2610 = vmatmul.mubr.f32.gmra.mrb[0].mxu0 %v2304
      %v2611 = vpop.f32.mrb[0].mxu0
      %v2612 = vadd.f32 0.0, %v2611
      %v2613 = vpop.f32.mrb[0].mxu0
      %v2614 = vadd.f32 0.0, %v2613
      %2615 = vdwg.mxu0
      %2616 = vmatprep.subr.mxu0 %v2532
      %2617 = vmatpush1.msra.mxu0 %v2531
      %2618 = vmatprep.subr.mxu0 %v2534
      %2619 = vmatpush1.msra.mxu0 %v2533
      %2620 = vmatprep.subr.mxu0 %v2536
      %2621 = vmatpush1.msra.mxu0 %v2535
      %2622 = vmatprep.subr.mxu0 %v2543
      %2623 = vmatpush1.msra.mxu0 %v2540
      %2624 = vmatprep.subr.mxu0 0.0
      %2625 = vmatpush1.msra.mxu0 0.0
      %2626 = vmatprep.subr.mxu0 0.0
      %2627 = vmatpush1.msra.mxu0 0.0
      %2628 = vmatprep.subr.mxu0 0.0
      %2629 = vmatpush1.msra.mxu0 0.0
      %2630 = vmatprep.subr.mxu0 0.0
      %2631 = vmatpush1.msra.mxu0 0.0
      %2632 = vmatprep.subr.mxu0 0.0
      %2633 = vmatpush1.msra.mxu0 0.0
      %2634 = vmatprep.subr.mxu0 0.0
      %2635 = vmatpush1.msra.mxu0 0.0
      %2636 = vmatprep.subr.mxu0 0.0
      %2637 = vmatpush1.msra.mxu0 0.0
      %2638 = vmatprep.subr.mxu0 0.0
      %2639 = vmatpush1.msra.mxu0 0.0
      %2640 = vmatprep.subr.mxu0 0.0
      %2641 = vmatpush1.msra.mxu0 0.0
      %2642 = vmatprep.subr.mxu0 0.0
      %2643 = vmatpush1.msra.mxu0 0.0
      %2644 = vmatprep.subr.mxu0 0.0
      %2645 = vmatpush1.msra.mxu0 0.0
      %2646 = vmatprep.subr.mxu0 0.0
      %2647 = vmatpush1.msra.mxu0 0.0
      %2648 = vmatprep.subr.mxu0 0.0
      %2649 = vmatpush1.msra.mxu0 0.0
      %2650 = vmatprep.subr.mxu0 0.0
      %2651 = vmatpush1.msra.mxu0 0.0
      %2652 = vmatprep.subr.mxu0 0.0
      %2653 = vmatpush1.msra.mxu0 0.0
      %2654 = vmatprep.subr.mxu0 0.0
      %2655 = vmatpush1.msra.mxu0 0.0
      %2656 = vmatprep.subr.mxu0 0.0
      %2657 = vmatpush1.msra.mxu0 0.0
      %2658 = vmatprep.subr.mxu0 0.0
      %2659 = vmatpush1.msra.mxu0 0.0
      %2660 = vmatprep.subr.mxu0 0.0
      %2661 = vmatpush1.msra.mxu0 0.0
      %2662 = vmatprep.subr.mxu0 0.0
      %2663 = vmatpush1.msra.mxu0 0.0
      %2664 = vmatprep.subr.mxu0 0.0
      %2665 = vmatpush1.msra.mxu0 0.0
      %2666 = vmatprep.subr.mxu0 0.0
      %2667 = vmatpush1.msra.mxu0 0.0
      %2668 = vmatprep.subr.mxu0 0.0
      %2669 = vmatpush1.msra.mxu0 0.0
      %2670 = vmatprep.subr.mxu0 0.0
      %2671 = vmatpush1.msra.mxu0 0.0
      %2672 = vmatprep.subr.mxu0 0.0
      %2673 = vmatpush1.msra.mxu0 0.0
      %2674 = vmatprep.subr.mxu0 0.0
      %2675 = vmatpush1.msra.mxu0 0.0
      %2676 = vmatprep.subr.mxu0 0.0
      %2677 = vmatpush1.msra.mxu0 0.0
      %2678 = vmatprep.subr.mxu0 0.0
      %2679 = vmatpush1.msra.mxu0 0.0
      %2680 = vmatprep.mubr.f32.mxu0 0.0
      %2681 = vmatmul.mubr.f32.gmra.mrb[0].mxu0 %v2316
      %v2682 = vpop.f32.mrb[0].mxu0
      %v2683 = vadd.f32 %v2612, %v2682
      %v2684 = vpop.f32.mrb[0].mxu0
      %v2685 = vadd.f32 %v2614, %v2684
      %2686 = vdwg.mxu0
      %2687 = vmatprep.subr.mxu0 0.0
      %2688 = vmatpush1.msra.mxu0 %v2161
      %2689 = vmatprep.subr.mxu0 0.0
      %2690 = vmatpush1.msra.mxu0 %v2162
      %2691 = vmatprep.subr.mxu0 0.0
      %2692 = vmatpush1.msra.mxu0 %v2163
      %2693 = vmatprep.subr.mxu0 0.0
      %2694 = vmatpush1.msra.mxu0 %v2164
      %2695 = vmatprep.subr.mxu0 0.0
      %2696 = vmatpush1.msra.mxu0 %v2165
      %2697 = vmatprep.subr.mxu0 0.0
      %2698 = vmatpush1.msra.mxu0 %v2166
      %2699 = vmatprep.subr.mxu0 0.0
      %2700 = vmatpush1.msra.mxu0 %v2167
      %2701 = vmatprep.subr.mxu0 0.0
      %2702 = vmatpush1.msra.mxu0 %v2168
      %2703 = vmatprep.subr.mxu0 0.0
      %2704 = vmatpush1.msra.mxu0 %v2169
      %2705 = vmatprep.subr.mxu0 0.0
      %2706 = vmatpush1.msra.mxu0 %v2170
      %2707 = vmatprep.subr.mxu0 0.0
      %2708 = vmatpush1.msra.mxu0 %v2171
      %2709 = vmatprep.subr.mxu0 0.0
      %2710 = vmatpush1.msra.mxu0 %v2172
      %2711 = vmatprep.subr.mxu0 0.0
      %2712 = vmatpush1.msra.mxu0 %v2173
      %2713 = vmatprep.subr.mxu0 0.0
      %2714 = vmatpush1.msra.mxu0 %v2174
      %2715 = vmatprep.subr.mxu0 0.0
      %2716 = vmatpush1.msra.mxu0 %v2175
      %2717 = vmatprep.subr.mxu0 0.0
      %2718 = vmatpush1.msra.mxu0 %v2176
      %2719 = vmatprep.subr.mxu0 0.0
      %2720 = vmatpush1.msra.mxu0 %v2177
      %2721 = vmatprep.subr.mxu0 0.0
      %2722 = vmatpush1.msra.mxu0 %v2178
      %2723 = vmatprep.subr.mxu0 0.0
      %2724 = vmatpush1.msra.mxu0 %v2179
      %2725 = vmatprep.subr.mxu0 0.0
      %2726 = vmatpush1.msra.mxu0 %v2180
      %2727 = vmatprep.subr.mxu0 0.0
      %2728 = vmatpush1.msra.mxu0 %v2181
      %2729 = vmatprep.subr.mxu0 0.0
      %2730 = vmatpush1.msra.mxu0 %v2182
      %2731 = vmatprep.subr.mxu0 0.0
      %2732 = vmatpush1.msra.mxu0 %v2183
      %2733 = vmatprep.subr.mxu0 0.0
      %2734 = vmatpush1.msra.mxu0 %v2184
      %2735 = vmatprep.subr.mxu0 0.0
      %2736 = vmatpush1.msra.mxu0 %v2185
      %2737 = vmatprep.subr.mxu0 0.0
      %2738 = vmatpush1.msra.mxu0 %v2186
      %2739 = vmatprep.subr.mxu0 0.0
      %2740 = vmatpush1.msra.mxu0 %v2187
      %2741 = vmatprep.subr.mxu0 0.0
      %2742 = vmatpush1.msra.mxu0 %v2188
      %2743 = vmatprep.subr.mxu0 0.0
      %2744 = vmatpush1.msra.mxu0 %v2189
      %2745 = vmatprep.subr.mxu0 0.0
      %2746 = vmatpush1.msra.mxu0 %v2190
      %2747 = vmatprep.subr.mxu0 0.0
      %2748 = vmatpush1.msra.mxu0 %v2191
      %2749 = vmatprep.subr.mxu0 0.0
      %2750 = vmatpush1.msra.mxu0 %v2192
      %2751 = vmatprep.mubr.f32.mxu0 %v2465
      %2752 = vmatmul.mubr.f32.gmra.mrb[0].mxu0 %v2463
      %v2753 = vpop.f32.mrb[0].mxu0
      %v2754 = vadd.f32 0.0, %v2753
      %v2755 = vpop.f32.mrb[0].mxu0
      %2756 = vdwg.mxu0
      %v2757 = vmul.f32 %v2754, 0.00024414063
      %2758 = vmatprep.subr.mxu0 0.0
      %2759 = vmatpush1.msra.mxu0 %v2161
      %2760 = vmatprep.subr.mxu0 0.0
      %2761 = vmatpush1.msra.mxu0 %v2162
      %2762 = vmatprep.subr.mxu0 0.0
      %2763 = vmatpush1.msra.mxu0 %v2163
      %2764 = vmatprep.subr.mxu0 0.0
      %2765 = vmatpush1.msra.mxu0 %v2164
      %2766 = vmatprep.subr.mxu0 0.0
      %2767 = vmatpush1.msra.mxu0 %v2165
      %2768 = vmatprep.subr.mxu0 0.0
      %2769 = vmatpush1.msra.mxu0 %v2166
      %2770 = vmatprep.subr.mxu0 0.0
      %2771 = vmatpush1.msra.mxu0 %v2167
      %2772 = vmatprep.subr.mxu0 0.0
      %2773 = vmatpush1.msra.mxu0 %v2168
      %2774 = vmatprep.subr.mxu0 0.0
      %2775 = vmatpush1.msra.mxu0 %v2169
      %2776 = vmatprep.subr.mxu0 0.0
      %2777 = vmatpush1.msra.mxu0 %v2170
      %2778 = vmatprep.subr.mxu0 0.0
      %2779 = vmatpush1.msra.mxu0 %v2171
      %2780 = vmatprep.subr.mxu0 0.0
      %2781 = vmatpush1.msra.mxu0 %v2172
      %2782 = vmatprep.subr.mxu0 0.0
      %2783 = vmatpush1.msra.mxu0 %v2173
      %2784 = vmatprep.subr.mxu0 0.0
      %2785 = vmatpush1.msra.mxu0 %v2174
      %2786 = vmatprep.subr.mxu0 0.0
      %2787 = vmatpush1.msra.mxu0 %v2175
      %2788 = vmatprep.subr.mxu0 0.0
      %2789 = vmatpush1.msra.mxu0 %v2176
      %2790 = vmatprep.subr.mxu0 0.0
      %2791 = vmatpush1.msra.mxu0 %v2177
      %2792 = vmatprep.subr.mxu0 0.0
      %2793 = vmatpush1.msra.mxu0 %v2178
      %2794 = vmatprep.subr.mxu0 0.0
      %2795 = vmatpush1.msra.mxu0 %v2179
      %2796 = vmatprep.subr.mxu0 0.0
      %2797 = vmatpush1.msra.mxu0 %v2180
      %2798 = vmatprep.subr.mxu0 0.0
      %2799 = vmatpush1.msra.mxu0 %v2181
      %2800 = vmatprep.subr.mxu0 0.0
      %2801 = vmatpush1.msra.mxu0 %v2182
      %2802 = vmatprep.subr.mxu0 0.0
      %2803 = vmatpush1.msra.mxu0 %v2183
      %2804 = vmatprep.subr.mxu0 0.0
      %2805 = vmatpush1.msra.mxu0 %v2184
      %2806 = vmatprep.subr.mxu0 0.0
      %2807 = vmatpush1.msra.mxu0 %v2185
      %2808 = vmatprep.subr.mxu0 0.0
      %2809 = vmatpush1.msra.mxu0 %v2186
      %2810 = vmatprep.subr.mxu0 0.0
      %2811 = vmatpush1.msra.mxu0 %v2187
      %2812 = vmatprep.subr.mxu0 0.0
      %2813 = vmatpush1.msra.mxu0 %v2188
      %2814 = vmatprep.subr.mxu0 0.0
      %2815 = vmatpush1.msra.mxu0 %v2189
      %2816 = vmatprep.subr.mxu0 0.0
      %2817 = vmatpush1.msra.mxu0 %v2190
      %2818 = vmatprep.subr.mxu0 0.0
      %2819 = vmatpush1.msra.mxu0 %v2191
      %2820 = vmatprep.subr.mxu0 0.0
      %2821 = vmatpush1.msra.mxu0 %v2192
      %2822 = vmatprep.mubr.f32.mxu0 %v2685
      %2823 = vmatmul.mubr.f32.gmra.mrb[0].mxu0 %v2683
      %v2824 = vpop.f32.mrb[0].mxu0
      %v2825 = vadd.f32 0.0, %v2824
      %v2826 = vpop.f32.mrb[0].mxu0
      %2827 = vdwg.mxu0
      %v2828 = vmul.f32 %v2825, 0.00024414063
      %v2829 = vmul.f32 %v2757, %v2757
      %v2830 = vsub.f32 %v2828, %v2829
      %v2831 = vmax.f32 %v2830, 0.0
      %v2832 = vadd.f32 %v2831, 1e-05
      %v2833 = vrsqrt.pop %v2832
      %vm2834 = vcmask 130048
      %v2836 = vsel %vm2834, %v2833, 0
      %2838 = vmatprep.subr.mxu0 %v2284
      %2839 = vmatpush1.msra.mxu0 %v2283
      %2840 = vmatprep.subr.mxu0 %v2286
      %2841 = vmatpush1.msra.mxu0 %v2285
      %2842 = vmatprep.subr.mxu0 0.0
      %2843 = vmatpush1.msra.mxu0 0.0
      %2844 = vmatprep.subr.mxu0 0.0
      %2845 = vmatpush1.msra.mxu0 0.0
      %2846 = vmatprep.subr.mxu0 0.0
      %2847 = vmatpush1.msra.mxu0 0.0
      %2848 = vmatprep.subr.mxu0 0.0
      %2849 = vmatpush1.msra.mxu0 0.0
      %2850 = vmatprep.subr.mxu0 0.0
      %2851 = vmatpush1.msra.mxu0 0.0
      %2852 = vmatprep.subr.mxu0 0.0
      %2853 = vmatpush1.msra.mxu0 0.0
      %2854 = vmatprep.subr.mxu0 0.0
      %2855 = vmatpush1.msra.mxu0 0.0
      %2856 = vmatprep.subr.mxu0 0.0
      %2857 = vmatpush1.msra.mxu0 0.0
      %2858 = vmatprep.subr.mxu0 0.0
      %2859 = vmatpush1.msra.mxu0 0.0
      %2860 = vmatprep.subr.mxu0 0.0
      %2861 = vmatpush1.msra.mxu0 0.0
      %2862 = vmatprep.subr.mxu0 0.0
      %2863 = vmatpush1.msra.mxu0 0.0
      %2864 = vmatprep.subr.mxu0 0.0
      %2865 = vmatpush1.msra.mxu0 0.0
      %2866 = vmatprep.subr.mxu0 0.0
      %2867 = vmatpush1.msra.mxu0 0.0
      %2868 = vmatprep.subr.mxu0 0.0
      %2869 = vmatpush1.msra.mxu0 0.0
      %2870 = vmatprep.subr.mxu0 0.0
      %2871 = vmatpush1.msra.mxu0 0.0
      %2872 = vmatprep.subr.mxu0 0.0
      %2873 = vmatpush1.msra.mxu0 0.0
      %2874 = vmatprep.subr.mxu0 0.0
      %2875 = vmatpush1.msra.mxu0 0.0
      %2876 = vmatprep.subr.mxu0 0.0
      %2877 = vmatpush1.msra.mxu0 0.0
      %2878 = vmatprep.subr.mxu0 0.0
      %2879 = vmatpush1.msra.mxu0 0.0
      %2880 = vmatprep.subr.mxu0 0.0
      %2881 = vmatpush1.msra.mxu0 0.0
      %2882 = vmatprep.subr.mxu0 0.0
      %2883 = vmatpush1.msra.mxu0 0.0
      %2884 = vmatprep.subr.mxu0 0.0
      %2885 = vmatpush1.msra.mxu0 0.0
      %2886 = vmatprep.subr.mxu0 0.0
      %2887 = vmatpush1.msra.mxu0 0.0
      %2888 = vmatprep.subr.mxu0 0.0
      %2889 = vmatpush1.msra.mxu0 0.0
      %2890 = vmatprep.subr.mxu0 0.0
      %2891 = vmatpush1.msra.mxu0 0.0
      %2892 = vmatprep.subr.mxu0 0.0
      %2893 = vmatpush1.msra.mxu0 0.0
      %2894 = vmatprep.subr.mxu0 0.0
      %2895 = vmatpush1.msra.mxu0 0.0
      %2896 = vmatprep.subr.mxu0 0.0
      %2897 = vmatpush1.msra.mxu0 0.0
      %2898 = vmatprep.subr.mxu0 0.0
      %2899 = vmatpush1.msra.mxu0 0.0
      %2900 = vmatprep.subr.mxu0 0.0
      %2901 = vmatpush1.msra.mxu0 0.0
      %2902 = vmatprep.mubr.f32.mxu0 0.0
      %2903 = vmatmul.mubr.f32.gmra.mrb[0].mxu0 %v2836
      %v2904 = vpop.f32.mrb[0].mxu0
      %v2905 = vadd.f32 0.0, %v2904
      %v2906 = vpop.f32.mrb[0].mxu0
      %v2907 = vadd.f32 0.0, %v2906
      %2908 = vdwg.mxu0
      %v2909 = vmul.f32 %v2757, %v2833
      %v2910 = vsub.f32 0.0, %v2909
      %v2912 = vsel %vm2834, %v2910, 0
      %2914 = vmatprep.subr.mxu0 %v2284
      %2915 = vmatpush1.msra.mxu0 %v2283
      %2916 = vmatprep.subr.mxu0 %v2286
      %2917 = vmatpush1.msra.mxu0 %v2285
      %2918 = vmatprep.subr.mxu0 0.0
      %2919 = vmatpush1.msra.mxu0 0.0
      %2920 = vmatprep.subr.mxu0 0.0
      %2921 = vmatpush1.msra.mxu0 0.0
      %2922 = vmatprep.subr.mxu0 0.0
      %2923 = vmatpush1.msra.mxu0 0.0
      %2924 = vmatprep.subr.mxu0 0.0
      %2925 = vmatpush1.msra.mxu0 0.0
      %2926 = vmatprep.subr.mxu0 0.0
      %2927 = vmatpush1.msra.mxu0 0.0
      %2928 = vmatprep.subr.mxu0 0.0
      %2929 = vmatpush1.msra.mxu0 0.0
      %2930 = vmatprep.subr.mxu0 0.0
      %2931 = vmatpush1.msra.mxu0 0.0
      %2932 = vmatprep.subr.mxu0 0.0
      %2933 = vmatpush1.msra.mxu0 0.0
      %2934 = vmatprep.subr.mxu0 0.0
      %2935 = vmatpush1.msra.mxu0 0.0
      %2936 = vmatprep.subr.mxu0 0.0
      %2937 = vmatpush1.msra.mxu0 0.0
      %2938 = vmatprep.subr.mxu0 0.0
      %2939 = vmatpush1.msra.mxu0 0.0
      %2940 = vmatprep.subr.mxu0 0.0
      %2941 = vmatpush1.msra.mxu0 0.0
      %2942 = vmatprep.subr.mxu0 0.0
      %2943 = vmatpush1.msra.mxu0 0.0
      %2944 = vmatprep.subr.mxu0 0.0
      %2945 = vmatpush1.msra.mxu0 0.0
      %2946 = vmatprep.subr.mxu0 0.0
      %2947 = vmatpush1.msra.mxu0 0.0
      %2948 = vmatprep.subr.mxu0 0.0
      %2949 = vmatpush1.msra.mxu0 0.0
      %2950 = vmatprep.subr.mxu0 0.0
      %2951 = vmatpush1.msra.mxu0 0.0
      %2952 = vmatprep.subr.mxu0 0.0
      %2953 = vmatpush1.msra.mxu0 0.0
      %2954 = vmatprep.subr.mxu0 0.0
      %2955 = vmatpush1.msra.mxu0 0.0
      %2956 = vmatprep.subr.mxu0 0.0
      %2957 = vmatpush1.msra.mxu0 0.0
      %2958 = vmatprep.subr.mxu0 0.0
      %2959 = vmatpush1.msra.mxu0 0.0
      %2960 = vmatprep.subr.mxu0 0.0
      %2961 = vmatpush1.msra.mxu0 0.0
      %2962 = vmatprep.subr.mxu0 0.0
      %2963 = vmatpush1.msra.mxu0 0.0
      %2964 = vmatprep.subr.mxu0 0.0
      %2965 = vmatpush1.msra.mxu0 0.0
      %2966 = vmatprep.subr.mxu0 0.0
      %2967 = vmatpush1.msra.mxu0 0.0
      %2968 = vmatprep.subr.mxu0 0.0
      %2969 = vmatpush1.msra.mxu0 0.0
      %2970 = vmatprep.subr.mxu0 0.0
      %2971 = vmatpush1.msra.mxu0 0.0
      %2972 = vmatprep.subr.mxu0 0.0
      %2973 = vmatpush1.msra.mxu0 0.0
      %2974 = vmatprep.subr.mxu0 0.0
      %2975 = vmatpush1.msra.mxu0 0.0
      %2976 = vmatprep.subr.mxu0 0.0
      %2977 = vmatpush1.msra.mxu0 0.0
      %2978 = vmatprep.mubr.f32.mxu0 0.0
      %2979 = vmatmul.mubr.f32.gmra.mrb[0].mxu0 %v2912
      %v2980 = vpop.f32.mrb[0].mxu0
      %v2981 = vadd.f32 0.0, %v2980
      %v2982 = vpop.f32.mrb[0].mxu0
      %v2983 = vadd.f32 0.0, %v2982
      %2984 = vdwg.mxu0
      %vm3055 = vcmask 1046528
      %v3056 = vrot.slane %v1982, 1
      %v3057 = vrot.slane %v1986, 1
      %v3058 = vsel %vm3055, %v3056, %v3057
      %v3059 = vrot.slane %v1984, 1
      %v3060 = vrot.slane %v1988, 1
      %v3061 = vsel %vm3055, %v3059, %v3060
      %v3062 = vrot.slane %v1992, 1
      %v3063 = vsel %vm3055, %v3057, %v3062
      %v3064 = vrot.slane %v1994, 1
      %v3065 = vsel %vm3055, %v3060, %v3064
      %v3066 = vrot.slane %v1996, 1
      %v3067 = vsel %vm3055, %v3062, %v3066
      %v3068 = vrot.slane %v1998, 1
      %v3069 = vsel %vm3055, %v3064, %v3068
      %v3070 = vrot.slane %v2002, 1
      %v3071 = vsel %vm3055, %v3066, %v3070
      %v3072 = vrot.slane %v2004, 1
      %v3073 = vsel %vm3055, %v3068, %v3072
      %v3074 = vrot.slane %v2006, 1
      %v3075 = vsel %vm3055, %v3070, %v3074
      %v3076 = vrot.slane %v2008, 1
      %v3077 = vsel %vm3055, %v3072, %v3076
      %v3078 = vrot.slane %v2012, 1
      %v3079 = vsel %vm3055, %v3074, %v3078
      %v3080 = vrot.slane %v2014, 1
      %v3081 = vsel %vm3055, %v3076, %v3080
      %v3082 = vrot.slane %v2016, 1
      %v3083 = vsel %vm3055, %v3078, %v3082
      %v3084 = vrot.slane %v2018, 1
      %v3085 = vsel %vm3055, %v3080, %v3084
      %v3086 = vrot.slane %v2022, 1
      %v3087 = vsel %vm3055, %v3082, %v3086
      %v3088 = vrot.slane %v2024, 1
      %v3089 = vsel %vm3055, %v3084, %v3088
      %v3090 = vrot.slane %v2026, 1
      %v3091 = vsel %vm3055, %v3086, %v3090
      %v3092 = vrot.slane %v2028, 1
      %v3093 = vsel %vm3055, %v3088, %v3092
      %v3094 = vrot.slane %v2032, 1
      %v3095 = vsel %vm3055, %v3090, %v3094
      %v3096 = vrot.slane %v2034, 1
      %v3097 = vsel %vm3055, %v3092, %v3096
      %v3098 = vrot.slane %v2036, 1
      %v3099 = vsel %vm3055, %v3094, %v3098
      %v3100 = vrot.slane %v2038, 1
      %v3101 = vsel %vm3055, %v3096, %v3100
      %v3102 = vrot.slane %v2042, 1
      %v3103 = vsel %vm3055, %v3098, %v3102
      %v3104 = vrot.slane %v2044, 1
      %v3105 = vsel %vm3055, %v3100, %v3104
      %v3106 = vrot.slane %v2046, 1
      %v3107 = vsel %vm3055, %v3102, %v3106
      %v3108 = vrot.slane %v2048, 1
      %v3109 = vsel %vm3055, %v3104, %v3108
      %v3110 = vrot.slane %v2052, 1
      %v3111 = vsel %vm3055, %v3106, %v3110
      %v3112 = vrot.slane %v2054, 1
      %v3113 = vsel %vm3055, %v3108, %v3112
      %v3114 = vrot.slane %v2056, 1
      %v3115 = vsel %vm3055, %v3110, %v3114
      %v3116 = vrot.slane %v2058, 1
      %v3117 = vsel %vm3055, %v3112, %v3116
      %v3118 = vrot.slane %v2062, 1
      %v3119 = vsel %vm3055, %v3114, %v3118
      %v3120 = vrot.slane %v2064, 1
      %v3121 = vsel %vm3055, %v3116, %v3120
      %v3122 = vrot.slane %v2066, 1
      %v3123 = vsel %vm3055, %v3118, %v3122
      %v3124 = vrot.slane %v2068, 1
      %v3125 = vsel %vm3055, %v3120, %v3124
      %v3126 = vrot.slane %v2072, 1
      %v3127 = vsel %vm3055, %v3122, %v3126
      %v3128 = vrot.slane %v2074, 1
      %v3129 = vsel %vm3055, %v3124, %v3128
      %v3130 = vrot.slane %v2076, 1
      %v3131 = vsel %vm3055, %v3126, %v3130
      %v3132 = vrot.slane %v2078, 1
      %v3133 = vsel %vm3055, %v3128, %v3132
      %v3134 = vrot.slane %v2082, 1
      %v3135 = vsel %vm3055, %v3130, %v3134
      %v3136 = vrot.slane %v2084, 1
      %v3137 = vsel %vm3055, %v3132, %v3136
      %v3138 = vrot.slane %v2086, 1
      %v3139 = vsel %vm3055, %v3134, %v3138
      %v3140 = vrot.slane %v2088, 1
      %v3141 = vsel %vm3055, %v3136, %v3140
      %v3142 = vrot.slane %v2092, 1
      %v3143 = vsel %vm3055, %v3138, %v3142
      %v3144 = vrot.slane %v2094, 1
      %v3145 = vsel %vm3055, %v3140, %v3144
      %v3146 = vrot.slane %v2096, 1
      %v3147 = vsel %vm3055, %v3142, %v3146
      %v3148 = vrot.slane %v2098, 1
      %v3149 = vsel %vm3055, %v3144, %v3148
      %v3150 = vrot.slane %v2102, 1
      %v3151 = vsel %vm3055, %v3146, %v3150
      %v3152 = vrot.slane %v2104, 1
      %v3153 = vsel %vm3055, %v3148, %v3152
      %v3154 = vrot.slane %v2106, 1
      %v3155 = vsel %vm3055, %v3150, %v3154
      %v3156 = vrot.slane %v2108, 1
      %v3157 = vsel %vm3055, %v3152, %v3156
      %v3158 = vrot.slane %v2112, 1
      %v3159 = vsel %vm3055, %v3154, %v3158
      %v3160 = vrot.slane %v2114, 1
      %v3161 = vsel %vm3055, %v3156, %v3160
      %v3162 = vrot.slane %v2116, 1
      %v3163 = vsel %vm3055, %v3158, %v3162
      %v3164 = vrot.slane %v2118, 1
      %v3165 = vsel %vm3055, %v3160, %v3164
      %v3166 = vrot.slane %v2122, 1
      %v3167 = vsel %vm3055, %v3162, %v3166
      %v3168 = vrot.slane %v2124, 1
      %v3169 = vsel %vm3055, %v3164, %v3168
      %v3170 = vrot.slane %v2126, 1
      %v3171 = vsel %vm3055, %v3166, %v3170
      %v3172 = vrot.slane %v2128, 1
      %v3173 = vsel %vm3055, %v3168, %v3172
      %v3174 = vrot.slane %v2132, 1
      %v3175 = vsel %vm3055, %v3170, %v3174
      %v3176 = vrot.slane %v2134, 1
      %v3177 = vsel %vm3055, %v3172, %v3176
      %v3178 = vrot.slane %v2136, 1
      %v3179 = vsel %vm3055, %v3174, %v3178
      %v3180 = vrot.slane %v2138, 1
      %v3181 = vsel %vm3055, %v3176, %v3180
      %v3182 = vrot.slane %v2142, 1
      %v3183 = vsel %vm3055, %v3178, %v3182
      %v3184 = vrot.slane %v2144, 1
      %v3185 = vsel %vm3055, %v3180, %v3184
      %v3186 = vrot.slane %v2146, 1
      %v3187 = vsel %vm3055, %v3182, %v3186
      %v3188 = vrot.slane %v2148, 1
      %v3189 = vsel %vm3055, %v3184, %v3188
      %v3190 = vrot.slane %v2152, 1
      %v3191 = vsel %vm3055, %v3186, %v3190
      %v3192 = vrot.slane %v2154, 1
      %v3193 = vsel %vm3055, %v3188, %v3192
      %v3194 = vrot.slane %v2156, 1
      %v3195 = vsel %vm3055, %v3190, %v3194
      %v3196 = vrot.slane %v2158, 1
      %v3197 = vsel %vm3055, %v3192, %v3196
      %v3270 = vrot.slane %v1982, 3
      %v3271 = vrot.slane %v1984, 3
      %vm3274 = vcmask 1044480
      %v3275 = vsel %vm3274, %v3194, %v3270
      %v3276 = vsel %vm3274, %v3196, %v3271
      %v3277 = vmax.f32 %v1982, %v3058
      %v3278 = vmax.f32 %v1984, %v3061
      %v3279 = vmax.f32 %v1986, %v3063
      %v3280 = vmax.f32 %v1988, %v3065
      %v3281 = vmax.f32 %v1992, %v3067
      %v3282 = vmax.f32 %v1994, %v3069
      %v3283 = vmax.f32 %v1996, %v3071
      %v3284 = vmax.f32 %v1998, %v3073
      %v3285 = vmax.f32 %v2002, %v3075
      %v3286 = vmax.f32 %v2004, %v3077
      %v3287 = vmax.f32 %v2006, %v3079
      %v3288 = vmax.f32 %v2008, %v3081
      %v3289 = vmax.f32 %v2012, %v3083
      %v3290 = vmax.f32 %v2014, %v3085
      %v3291 = vmax.f32 %v2016, %v3087
      %v3292 = vmax.f32 %v2018, %v3089
      %v3293 = vmax.f32 %v2022, %v3091
      %v3294 = vmax.f32 %v2024, %v3093
      %v3295 = vmax.f32 %v2026, %v3095
      %v3296 = vmax.f32 %v2028, %v3097
      %v3297 = vmax.f32 %v2032, %v3099
      %v3298 = vmax.f32 %v2034, %v3101
      %v3299 = vmax.f32 %v2036, %v3103
      %v3300 = vmax.f32 %v2038, %v3105
      %v3301 = vmax.f32 %v2042, %v3107
      %v3302 = vmax.f32 %v2044, %v3109
      %v3303 = vmax.f32 %v2046, %v3111
      %v3304 = vmax.f32 %v2048, %v3113
      %v3305 = vmax.f32 %v2052, %v3115
      %v3306 = vmax.f32 %v2054, %v3117
      %v3307 = vmax.f32 %v2056, %v3119
      %v3308 = vmax.f32 %v2058, %v3121
      %v3309 = vmax.f32 %v2062, %v3123
      %v3310 = vmax.f32 %v2064, %v3125
      %v3311 = vmax.f32 %v2066, %v3127
      %v3312 = vmax.f32 %v2068, %v3129
      %v3313 = vmax.f32 %v2072, %v3131
      %v3314 = vmax.f32 %v2074, %v3133
      %v3315 = vmax.f32 %v2076, %v3135
      %v3316 = vmax.f32 %v2078, %v3137
      %v3317 = vmax.f32 %v2082, %v3139
      %v3318 = vmax.f32 %v2084, %v3141
      %v3319 = vmax.f32 %v2086, %v3143
      %v3320 = vmax.f32 %v2088, %v3145
      %v3321 = vmax.f32 %v2092, %v3147
      %v3322 = vmax.f32 %v2094, %v3149
      %v3323 = vmax.f32 %v2096, %v3151
      %v3324 = vmax.f32 %v2098, %v3153
      %v3325 = vmax.f32 %v2102, %v3155
      %v3326 = vmax.f32 %v2104, %v3157
      %v3327 = vmax.f32 %v2106, %v3159
      %v3328 = vmax.f32 %v2108, %v3161
      %v3329 = vmax.f32 %v2112, %v3163
      %v3330 = vmax.f32 %v2114, %v3165
      %v3331 = vmax.f32 %v2116, %v3167
      %v3332 = vmax.f32 %v2118, %v3169
      %v3333 = vmax.f32 %v2122, %v3171
      %v3334 = vmax.f32 %v2124, %v3173
      %v3335 = vmax.f32 %v2126, %v3175
      %v3336 = vmax.f32 %v2128, %v3177
      %v3337 = vmax.f32 %v2132, %v3179
      %v3338 = vmax.f32 %v2134, %v3181
      %v3339 = vmax.f32 %v2136, %v3183
      %v3340 = vmax.f32 %v2138, %v3185
      %v3341 = vmax.f32 %v2142, %v3187
      %v3342 = vmax.f32 %v2144, %v3189
      %v3343 = vmax.f32 %v2146, %v3191
      %v3344 = vmax.f32 %v2148, %v3193
      %v3345 = vmax.f32 %v2152, %v3195
      %v3346 = vmax.f32 %v2154, %v3197
      %v3347 = vmax.f32 %v2156, %v3275
      %v3348 = vmax.f32 %v2158, %v3276
      %v3417 = vrot.slane %v3281, 2
      %v3418 = vrot.slane %v3283, 2
      %v3419 = vsel %vm2318, %v3417, %v3418
      %v3420 = vrot.slane %v3282, 2
      %v3421 = vrot.slane %v3284, 2
      %v3422 = vsel %vm2318, %v3420, %v3421
      %v3423 = vrot.slane %v3285, 2
      %v3424 = vsel %vm2318, %v3418, %v3423
      %v3425 = vrot.slane %v3286, 2
      %v3426 = vsel %vm2318, %v3421, %v3425
      %v3427 = vrot.slane %v3287, 2
      %v3428 = vsel %vm2318, %v3423, %v3427
      %v3429 = vrot.slane %v3288, 2
      %v3430 = vsel %vm2318, %v3425, %v3429
      %v3431 = vrot.slane %v3289, 2
      %v3432 = vsel %vm2318, %v3427, %v3431
      %v3433 = vrot.slane %v3290, 2
      %v3434 = vsel %vm2318, %v3429, %v3433
      %v3435 = vrot.slane %v3291, 2
      %v3436 = vsel %vm2318, %v3431, %v3435
      %v3437 = vrot.slane %v3292, 2
      %v3438 = vsel %vm2318, %v3433, %v3437
      %v3439 = vrot.slane %v3293, 2
      %v3440 = vsel %vm2318, %v3435, %v3439
      %v3441 = vrot.slane %v3294, 2
      %v3442 = vsel %vm2318, %v3437, %v3441
      %v3443 = vrot.slane %v3295, 2
      %v3444 = vsel %vm2318, %v3439, %v3443
      %v3445 = vrot.slane %v3296, 2
      %v3446 = vsel %vm2318, %v3441, %v3445
      %v3447 = vrot.slane %v3297, 2
      %v3448 = vsel %vm2318, %v3443, %v3447
      %v3449 = vrot.slane %v3298, 2
      %v3450 = vsel %vm2318, %v3445, %v3449
      %v3451 = vrot.slane %v3299, 2
      %v3452 = vsel %vm2318, %v3447, %v3451
      %v3453 = vrot.slane %v3300, 2
      %v3454 = vsel %vm2318, %v3449, %v3453
      %v3455 = vrot.slane %v3301, 2
      %v3456 = vsel %vm2318, %v3451, %v3455
      %v3457 = vrot.slane %v3302, 2
      %v3458 = vsel %vm2318, %v3453, %v3457
      %v3459 = vrot.slane %v3303, 2
      %v3460 = vsel %vm2318, %v3455, %v3459
      %v3461 = vrot.slane %v3304, 2
      %v3462 = vsel %vm2318, %v3457, %v3461
      %v3463 = vrot.slane %v3305, 2
      %v3464 = vsel %vm2318, %v3459, %v3463
      %v3465 = vrot.slane %v3306, 2
      %v3466 = vsel %vm2318, %v3461, %v3465
      %v3467 = vrot.slane %v3307, 2
      %v3468 = vsel %vm2318, %v3463, %v3467
      %v3469 = vrot.slane %v3308, 2
      %v3470 = vsel %vm2318, %v3465, %v3469
      %v3471 = vrot.slane %v3309, 2
      %v3472 = vsel %vm2318, %v3467, %v3471
      %v3473 = vrot.slane %v3310, 2
      %v3474 = vsel %vm2318, %v3469, %v3473
      %v3475 = vrot.slane %v3311, 2
      %v3476 = vsel %vm2318, %v3471, %v3475
      %v3477 = vrot.slane %v3312, 2
      %v3478 = vsel %vm2318, %v3473, %v3477
      %v3479 = vrot.slane %v3313, 2
      %v3480 = vsel %vm2318, %v3475, %v3479
      %v3481 = vrot.slane %v3314, 2
      %v3482 = vsel %vm2318, %v3477, %v3481
      %v3483 = vrot.slane %v3315, 2
      %v3484 = vsel %vm2318, %v3479, %v3483
      %v3485 = vrot.slane %v3316, 2
      %v3486 = vsel %vm2318, %v3481, %v3485
      %v3487 = vrot.slane %v3317, 2
      %v3488 = vsel %vm2318, %v3483, %v3487
      %v3489 = vrot.slane %v3318, 2
      %v3490 = vsel %vm2318, %v3485, %v3489
      %v3491 = vrot.slane %v3319, 2
      %v3492 = vsel %vm2318, %v3487, %v3491
      %v3493 = vrot.slane %v3320, 2
      %v3494 = vsel %vm2318, %v3489, %v3493
      %v3495 = vrot.slane %v3321, 2
      %v3496 = vsel %vm2318, %v3491, %v3495
      %v3497 = vrot.slane %v3322, 2
      %v3498 = vsel %vm2318, %v3493, %v3497
      %v3499 = vrot.slane %v3323, 2
      %v3500 = vsel %vm2318, %v3495, %v3499
      %v3501 = vrot.slane %v3324, 2
      %v3502 = vsel %vm2318, %v3497, %v3501
      %v3503 = vrot.slane %v3325, 2
      %v3504 = vsel %vm2318, %v3499, %v3503
      %v3505 = vrot.slane %v3326, 2
      %v3506 = vsel %vm2318, %v3501, %v3505
      %v3507 = vrot.slane %v3327, 2
      %v3508 = vsel %vm2318, %v3503, %v3507
      %v3509 = vrot.slane %v3328, 2
      %v3510 = vsel %vm2318, %v3505, %v3509
      %v3511 = vrot.slane %v3329, 2
      %v3512 = vsel %vm2318, %v3507, %v3511
      %v3513 = vrot.slane %v3330, 2
      %v3514 = vsel %vm2318, %v3509, %v3513
      %v3515 = vrot.slane %v3331, 2
      %v3516 = vsel %vm2318, %v3511, %v3515
      %v3517 = vrot.slane %v3332, 2
      %v3518 = vsel %vm2318, %v3513, %v3517
      %v3519 = vrot.slane %v3333, 2
      %v3520 = vsel %vm2318, %v3515, %v3519
      %v3521 = vrot.slane %v3334, 2
      %v3522 = vsel %vm2318, %v3517, %v3521
      %v3523 = vrot.slane %v3335, 2
      %v3524 = vsel %vm2318, %v3519, %v3523
      %v3525 = vrot.slane %v3336, 2
      %v3526 = vsel %vm2318, %v3521, %v3525
      %v3527 = vrot.slane %v3337, 2
      %v3528 = vsel %vm2318, %v3523, %v3527
      %v3529 = vrot.slane %v3338, 2
      %v3530 = vsel %vm2318, %v3525, %v3529
      %v3531 = vrot.slane %v3339, 2
      %v3532 = vsel %vm2318, %v3527, %v3531
      %v3533 = vrot.slane %v3340, 2
      %v3534 = vsel %vm2318, %v3529, %v3533
      %v3535 = vrot.slane %v3341, 2
      %v3536 = vsel %vm2318, %v3531, %v3535
      %v3537 = vrot.slane %v3342, 2
      %v3538 = vsel %vm2318, %v3533, %v3537
      %v3539 = vrot.slane %v3343, 2
      %v3540 = vsel %vm2318, %v3535, %v3539
      %v3541 = vrot.slane %v3344, 2
      %v3542 = vsel %vm2318, %v3537, %v3541
      %v3543 = vrot.slane %v3345, 2
      %v3544 = vsel %vm2318, %v3539, %v3543
      %v3545 = vrot.slane %v3346, 2
      %v3546 = vsel %vm2318, %v3541, %v3545
      %v3547 = vrot.slane %v3347, 2
      %v3548 = vsel %vm2318, %v3543, %v3547
      %v3549 = vrot.slane %v3348, 2
      %v3550 = vsel %vm2318, %v3545, %v3549
      %vm3623 = vcmask 1043456
      %v3624 = vrot.slane %v3277, 4
      %v3625 = vrot.slane %v3278, 4
      %v3626 = vrot.slane %v3279, 4
      %v3627 = vsel %vm3623, %v3624, %v3626
      %v3628 = vrot.slane %v3280, 4
      %v3629 = vsel %vm3623, %v3625, %v3628
      %v3630 = vrot.slane %v3281, 4
      %v3631 = vsel %vm3623, %v3626, %v3630
      %v3632 = vrot.slane %v3282, 4
      %v3633 = vsel %vm3623, %v3628, %v3632
      %v3640 = vsel %vm3623, %v3547, %v3624
      %v3641 = vsel %vm3623, %v3549, %v3625
      %v3642 = vmax.f32 %v3277, %v3419
      %v3643 = vmax.f32 %v3278, %v3422
      %v3644 = vmax.f32 %v3279, %v3424
      %v3645 = vmax.f32 %v3280, %v3426
      %v3646 = vmax.f32 %v3281, %v3428
      %v3647 = vmax.f32 %v3282, %v3430
      %v3648 = vmax.f32 %v3283, %v3432
      %v3649 = vmax.f32 %v3284, %v3434
      %v3650 = vmax.f32 %v3285, %v3436
      %v3651 = vmax.f32 %v3286, %v3438
      %v3652 = vmax.f32 %v3287, %v3440
      %v3653 = vmax.f32 %v3288, %v3442
      %v3654 = vmax.f32 %v3289, %v3444
      %v3655 = vmax.f32 %v3290, %v3446
      %v3656 = vmax.f32 %v3291, %v3448
      %v3657 = vmax.f32 %v3292, %v3450
      %v3658 = vmax.f32 %v3293, %v3452
      %v3659 = vmax.f32 %v3294, %v3454
      %v3660 = vmax.f32 %v3295, %v3456
      %v3661 = vmax.f32 %v3296, %v3458
      %v3662 = vmax.f32 %v3297, %v3460
      %v3663 = vmax.f32 %v3298, %v3462
      %v3664 = vmax.f32 %v3299, %v3464
      %v3665 = vmax.f32 %v3300, %v3466
      %v3666 = vmax.f32 %v3301, %v3468
      %v3667 = vmax.f32 %v3302, %v3470
      %v3668 = vmax.f32 %v3303, %v3472
      %v3669 = vmax.f32 %v3304, %v3474
      %v3670 = vmax.f32 %v3305, %v3476
      %v3671 = vmax.f32 %v3306, %v3478
      %v3672 = vmax.f32 %v3307, %v3480
      %v3673 = vmax.f32 %v3308, %v3482
      %v3674 = vmax.f32 %v3309, %v3484
      %v3675 = vmax.f32 %v3310, %v3486
      %v3676 = vmax.f32 %v3311, %v3488
      %v3677 = vmax.f32 %v3312, %v3490
      %v3678 = vmax.f32 %v3313, %v3492
      %v3679 = vmax.f32 %v3314, %v3494
      %v3680 = vmax.f32 %v3315, %v3496
      %v3681 = vmax.f32 %v3316, %v3498
      %v3682 = vmax.f32 %v3317, %v3500
      %v3683 = vmax.f32 %v3318, %v3502
      %v3684 = vmax.f32 %v3319, %v3504
      %v3685 = vmax.f32 %v3320, %v3506
      %v3686 = vmax.f32 %v3321, %v3508
      %v3687 = vmax.f32 %v3322, %v3510
      %v3688 = vmax.f32 %v3323, %v3512
      %v3689 = vmax.f32 %v3324, %v3514
      %v3690 = vmax.f32 %v3325, %v3516
      %v3691 = vmax.f32 %v3326, %v3518
      %v3692 = vmax.f32 %v3327, %v3520
      %v3693 = vmax.f32 %v3328, %v3522
      %v3694 = vmax.f32 %v3329, %v3524
      %v3695 = vmax.f32 %v3330, %v3526
      %v3696 = vmax.f32 %v3331, %v3528
      %v3697 = vmax.f32 %v3332, %v3530
      %v3698 = vmax.f32 %v3333, %v3532
      %v3699 = vmax.f32 %v3334, %v3534
      %v3700 = vmax.f32 %v3335, %v3536
      %v3701 = vmax.f32 %v3336, %v3538
      %v3702 = vmax.f32 %v3337, %v3540
      %v3703 = vmax.f32 %v3338, %v3542
      %v3704 = vmax.f32 %v3339, %v3544
      %v3705 = vmax.f32 %v3340, %v3546
      %v3706 = vmax.f32 %v3341, %v3548
      %v3707 = vmax.f32 %v3342, %v3550
      %v3708 = vmax.f32 %v3343, %v3640
      %v3709 = vmax.f32 %v3344, %v3641
      %v3710 = vmax.f32 %v3345, %v3627
      %v3711 = vmax.f32 %v3346, %v3629
      %v3712 = vmax.f32 %v3347, %v3631
      %v3713 = vmax.f32 %v3348, %v3633
      %v3714 = vpack.c.bf16 %v3644, %v3642
      %v3715 = vpack.c.bf16 %v3645, %v3643
      %v3716 = vpack.c.bf16 %v3648, %v3646
      %v3717 = vpack.c.bf16 %v3649, %v3647
      %v3718 = vpack.c.bf16 %v3652, %v3650
      %v3719 = vpack.c.bf16 %v3653, %v3651
      %v3720 = vpack.c.bf16 %v3656, %v3654
      %v3721 = vpack.c.bf16 %v3657, %v3655
      %v3722 = vpack.c.bf16 %v3660, %v3658
      %v3723 = vpack.c.bf16 %v3661, %v3659
      %v3724 = vpack.c.bf16 %v3664, %v3662
      %v3725 = vpack.c.bf16 %v3665, %v3663
      %v3726 = vpack.c.bf16 %v3668, %v3666
      %v3727 = vpack.c.bf16 %v3669, %v3667
      %v3728 = vpack.c.bf16 %v3672, %v3670
      %v3729 = vpack.c.bf16 %v3673, %v3671
      %v3730 = vpack.c.bf16 %v3676, %v3674
      %v3731 = vpack.c.bf16 %v3677, %v3675
      %v3732 = vpack.c.bf16 %v3680, %v3678
      %v3733 = vpack.c.bf16 %v3681, %v3679
      %v3734 = vpack.c.bf16 %v3684, %v3682
      %v3735 = vpack.c.bf16 %v3685, %v3683
      %v3736 = vpack.c.bf16 %v3688, %v3686
      %v3737 = vpack.c.bf16 %v3689, %v3687
      %v3738 = vpack.c.bf16 %v3692, %v3690
      %v3739 = vpack.c.bf16 %v3693, %v3691
      %v3740 = vpack.c.bf16 %v3696, %v3694
      %v3741 = vpack.c.bf16 %v3697, %v3695
      %v3742 = vpack.c.bf16 %v3700, %v3698
      %v3743 = vpack.c.bf16 %v3701, %v3699
      %v3744 = vpack.c.bf16 %v3704, %v3702
      %v3745 = vpack.c.bf16 %v3705, %v3703
      %v3746 = vpack.c.bf16 %v3708, %v3706
      %v3747 = vpack.c.bf16 %v3709, %v3707
      %v3748 = vpack.c.bf16 %v3712, %v3710
      %v3749 = vpack.c.bf16 %v3713, %v3711
      %v3776 = vunpack.c.l.b16 %v2193
      %v3777 = vunpack.c.h.b16 %v2193
      %v3778 = vunpack.c.l.b16 %v2194
      %v3779 = vunpack.c.l.b16 %v2195
      %v3780 = vunpack.c.h.b16 %v2195
      %v3781 = vunpack.c.l.b16 %v2196
      %v3782 = vunpack.c.l.b16 %v2197
      %v3783 = vunpack.c.h.b16 %v2197
      %v3784 = vunpack.c.l.b16 %v2198
      %v3785 = vunpack.c.l.b16 %v2199
      %v3786 = vunpack.c.h.b16 %v2199
      %v3787 = vunpack.c.l.b16 %v2200
      %v3788 = vunpack.c.l.b16 %v2201
      %v3789 = vunpack.c.h.b16 %v2201
      %v3790 = vunpack.c.l.b16 %v2202
      %v3791 = vunpack.c.l.b16 %v2203
      %v3792 = vunpack.c.h.b16 %v2203
      %v3793 = vunpack.c.l.b16 %v2204
      %v3794 = vunpack.c.l.b16 %v2205
      %v3795 = vunpack.c.h.b16 %v2205
      %v3796 = vunpack.c.l.b16 %v2206
      %v3797 = vunpack.c.l.b16 %v2207
      %v3798 = vunpack.c.h.b16 %v2207
      %v3799 = vunpack.c.l.b16 %v2208
      %v3800 = vunpack.c.l.b16 %v2209
      %v3801 = vunpack.c.h.b16 %v2209
      %v3802 = vunpack.c.l.b16 %v2210
      %v3803 = vunpack.c.l.b16 %v2211
      %v3804 = vunpack.c.h.b16 %v2211
      %v3805 = vunpack.c.l.b16 %v2212
      %v3806 = vunpack.c.l.b16 %v2213
      %v3807 = vunpack.c.h.b16 %v2213
      %v3808 = vunpack.c.l.b16 %v2214
      %v3809 = vunpack.c.l.b16 %v2215
      %v3810 = vunpack.c.h.b16 %v2215
      %v3811 = vunpack.c.l.b16 %v2216
      %v3812 = vunpack.c.l.b16 %v2217
      %v3813 = vunpack.c.h.b16 %v2217
      %v3814 = vunpack.c.l.b16 %v2218
      %v3815 = vpack.c.b16 %v3779, %v3776
      %v3816 = vpack.c.b16 %v3780, %v3777
      %v3817 = vpack.c.b16 %v3781, %v3778
      %v3818 = vpack.c.b16 %v3785, %v3782
      %v3819 = vpack.c.b16 %v3786, %v3783
      %v3820 = vpack.c.b16 %v3787, %v3784
      %v3821 = vpack.c.b16 %v3791, %v3788
      %v3822 = vpack.c.b16 %v3792, %v3789
      %v3823 = vpack.c.b16 %v3793, %v3790
      %v3824 = vpack.c.b16 %v3797, %v3794
      %v3825 = vpack.c.b16 %v3798, %v3795
      %v3826 = vpack.c.b16 %v3799, %v3796
      %v3827 = vpack.c.b16 %v3803, %v3800
      %v3828 = vpack.c.b16 %v3804, %v3801
      %v3829 = vpack.c.b16 %v3805, %v3802
      %v3830 = vpack.c.b16 %v3809, %v3806
      %v3831 = vpack.c.b16 %v3810, %v3807
      %v3832 = vpack.c.b16 %v3811, %v3808
      %v3833 = vpack.c.b16 %v3812, %v3812
      %v3834 = vpack.c.b16 %v3813, %v3813
      %v3835 = vpack.c.b16 %v3814, %v3814
      %v3851 = vsel %vm2315, %v3817, 0
      %v3854 = vsel %vm2315, %v3820, 0
      %v3857 = vsel %vm2315, %v3823, 0
      %v3860 = vsel %vm2315, %v3826, 0
      %v3863 = vsel %vm2315, %v3829, 0
      %v3866 = vsel %vm2315, %v3832, 0
      %v3869 = vsel %vm2315, %v3835, 0
      %v3872 = vsel %vm3055, %v3748, 0
      %v3875 = vsel %vm3055, %v3749, 0
      %3877 = vmatprep.subr.bf16.mxu0 %v3715
      %3878 = vmatpush1.bf16.msra.mxu0 %v3714
      %3879 = vmatprep.subr.bf16.mxu0 %v3717
      %3880 = vmatpush1.bf16.msra.mxu0 %v3716
      %3881 = vmatprep.subr.bf16.mxu0 %v3719
      %3882 = vmatpush1.bf16.msra.mxu0 %v3718
      %3883 = vmatprep.subr.bf16.mxu0 %v3721
      %3884 = vmatpush1.bf16.msra.mxu0 %v3720
      %3885 = vmatprep.subr.bf16.mxu0 %v3723
      %3886 = vmatpush1.bf16.msra.mxu0 %v3722
      %3887 = vmatprep.subr.bf16.mxu0 %v3725
      %3888 = vmatpush1.bf16.msra.mxu0 %v3724
      %3889 = vmatprep.subr.bf16.mxu0 %v3727
      %3890 = vmatpush1.bf16.msra.mxu0 %v3726
      %3891 = vmatprep.subr.bf16.mxu0 %v3729
      %3892 = vmatpush1.bf16.msra.mxu0 %v3728
      %3893 = vmatprep.subr.bf16.mxu0 %v3731
      %3894 = vmatpush1.bf16.msra.mxu0 %v3730
      %3895 = vmatprep.subr.bf16.mxu0 %v3733
      %3896 = vmatpush1.bf16.msra.mxu0 %v3732
      %3897 = vmatprep.subr.bf16.mxu0 %v3735
      %3898 = vmatpush1.bf16.msra.mxu0 %v3734
      %3899 = vmatprep.subr.bf16.mxu0 %v3737
      %3900 = vmatpush1.bf16.msra.mxu0 %v3736
      %3901 = vmatprep.subr.bf16.mxu0 %v3739
      %3902 = vmatpush1.bf16.msra.mxu0 %v3738
      %3903 = vmatprep.subr.bf16.mxu0 %v3741
      %3904 = vmatpush1.bf16.msra.mxu0 %v3740
      %3905 = vmatprep.subr.bf16.mxu0 %v3743
      %3906 = vmatpush1.bf16.msra.mxu0 %v3742
      %3907 = vmatprep.subr.bf16.mxu0 %v3745
      %3908 = vmatpush1.bf16.msra.mxu0 %v3744
      %3909 = vmatprep.mubr.bf16.mxu0 %v3816
      %3910 = vmatmul.mubr.bf16.gmra.mrb[0].mxu0 %v3815
      %v3911 = vpop.f32.mrb[0].mxu0
      %v3912 = vadd.f32 0.0, %v3911
      %v3913 = vpop.f32.mrb[0].mxu0
      %v3914 = vadd.f32 0.0, %v3913
      %v3915 = vpop.f32.mrb[0].mxu0
      %v3916 = vadd.f32 0.0, %v3915
      %v3917 = vpop.f32.mrb[0].mxu0
      %v3918 = vadd.f32 0.0, %v3917
      %3919 = vmatprep.mubr.bf16.mxu0 %v3819
      %3920 = vmatmul.mubr.bf16.gmra.mrb[0].mxu0 %v3818
      %v3921 = vpop.f32.mrb[0].mxu0
      %v3922 = vadd.f32 0.0, %v3921
      %v3923 = vpop.f32.mrb[0].mxu0
      %v3924 = vadd.f32 0.0, %v3923
      %v3925 = vpop.f32.mrb[0].mxu0
      %v3926 = vadd.f32 0.0, %v3925
      %v3927 = vpop.f32.mrb[0].mxu0
      %v3928 = vadd.f32 0.0, %v3927
      %3929 = vmatprep.mubr.bf16.mxu0 %v3822
      %3930 = vmatmul.mubr.bf16.gmra.mrb[0].mxu0 %v3821
      %v3931 = vpop.f32.mrb[0].mxu0
      %v3932 = vadd.f32 0.0, %v3931
      %v3933 = vpop.f32.mrb[0].mxu0
      %v3934 = vadd.f32 0.0, %v3933
      %v3935 = vpop.f32.mrb[0].mxu0
      %v3936 = vadd.f32 0.0, %v3935
      %v3937 = vpop.f32.mrb[0].mxu0
      %v3938 = vadd.f32 0.0, %v3937
      %3939 = vmatprep.mubr.bf16.mxu0 %v3825
      %3940 = vmatmul.mubr.bf16.gmra.mrb[0].mxu0 %v3824
      %v3941 = vpop.f32.mrb[0].mxu0
      %v3942 = vadd.f32 0.0, %v3941
      %v3943 = vpop.f32.mrb[0].mxu0
      %v3944 = vadd.f32 0.0, %v3943
      %v3945 = vpop.f32.mrb[0].mxu0
      %v3946 = vadd.f32 0.0, %v3945
      %v3947 = vpop.f32.mrb[0].mxu0
      %v3948 = vadd.f32 0.0, %v3947
      %3949 = vmatprep.mubr.bf16.mxu0 %v3828
      %3950 = vmatmul.mubr.bf16.gmra.mrb[0].mxu0 %v3827
      %v3951 = vpop.f32.mrb[0].mxu0
      %v3952 = vadd.f32 0.0, %v3951
      %v3953 = vpop.f32.mrb[0].mxu0
      %v3954 = vadd.f32 0.0, %v3953
      %v3955 = vpop.f32.mrb[0].mxu0
      %v3956 = vadd.f32 0.0, %v3955
      %v3957 = vpop.f32.mrb[0].mxu0
      %v3958 = vadd.f32 0.0, %v3957
      %3959 = vmatprep.mubr.bf16.mxu0 %v3831
      %3960 = vmatmul.mubr.bf16.gmra.mrb[0].mxu0 %v3830
      %v3961 = vpop.f32.mrb[0].mxu0
      %v3962 = vadd.f32 0.0, %v3961
      %v3963 = vpop.f32.mrb[0].mxu0
      %v3964 = vadd.f32 0.0, %v3963
      %v3965 = vpop.f32.mrb[0].mxu0
      %v3966 = vadd.f32 0.0, %v3965
      %v3967 = vpop.f32.mrb[0].mxu0
      %v3968 = vadd.f32 0.0, %v3967
      %3969 = vmatprep.mubr.bf16.mxu0 %v3834
      %3970 = vmatmul.mubr.bf16.gmra.mrb[0].mxu0 %v3833
      %v3971 = vpop.f32.mrb[0].mxu0
      %v3972 = vadd.f32 0.0, %v3971
      %v3973 = vpop.f32.mrb[0].mxu0
      %v3974 = vadd.f32 0.0, %v3973
      %v3975 = vpop.f32.mrb[0].mxu0
      %v3976 = vpop.f32.mrb[0].mxu0
      %3977 = vdwg.mxu0
      %3978 = vmatprep.subr.bf16.mxu0 %v3747
      %3979 = vmatpush1.bf16.msra.mxu0 %v3746
      %3980 = vmatprep.subr.bf16.mxu0 %v3875
      %3981 = vmatpush1.bf16.msra.mxu0 %v3872
      %3982 = vmatprep.subr.bf16.mxu0 0
      %3983 = vmatpush1.bf16.msra.mxu0 0
      %3984 = vmatprep.subr.bf16.mxu0 0
      %3985 = vmatpush1.bf16.msra.mxu0 0
      %3986 = vmatprep.subr.bf16.mxu0 0
      %3987 = vmatpush1.bf16.msra.mxu0 0
      %3988 = vmatprep.subr.bf16.mxu0 0
      %3989 = vmatpush1.bf16.msra.mxu0 0
      %3990 = vmatprep.subr.bf16.mxu0 0
      %3991 = vmatpush1.bf16.msra.mxu0 0
      %3992 = vmatprep.subr.bf16.mxu0 0
      %3993 = vmatpush1.bf16.msra.mxu0 0
      %3994 = vmatprep.subr.bf16.mxu0 0
      %3995 = vmatpush1.bf16.msra.mxu0 0
      %3996 = vmatprep.subr.bf16.mxu0 0
      %3997 = vmatpush1.bf16.msra.mxu0 0
      %3998 = vmatprep.subr.bf16.mxu0 0
      %3999 = vmatpush1.bf16.msra.mxu0 0
      %4000 = vmatprep.subr.bf16.mxu0 0
      %4001 = vmatpush1.bf16.msra.mxu0 0
      %4002 = vmatprep.subr.bf16.mxu0 0
      %4003 = vmatpush1.bf16.msra.mxu0 0
      %4004 = vmatprep.subr.bf16.mxu0 0
      %4005 = vmatpush1.bf16.msra.mxu0 0
      %4006 = vmatprep.subr.bf16.mxu0 0
      %4007 = vmatpush1.bf16.msra.mxu0 0
      %4008 = vmatprep.subr.bf16.mxu0 0
      %4009 = vmatpush1.bf16.msra.mxu0 0
      %4010 = vmatprep.mubr.bf16.mxu0 0
      %4011 = vmatmul.mubr.bf16.gmra.mrb[0].mxu0 %v3851
      %v4012 = vpop.f32.mrb[0].mxu0
      %v4013 = vadd.f32 %v3912, %v4012
      %v4014 = vpop.f32.mrb[0].mxu0
      %v4015 = vadd.f32 %v3914, %v4014
      %v4016 = vpop.f32.mrb[0].mxu0
      %v4017 = vadd.f32 %v3916, %v4016
      %v4018 = vpop.f32.mrb[0].mxu0
      %v4019 = vadd.f32 %v3918, %v4018
      %4020 = vmatprep.mubr.bf16.mxu0 0
      %4021 = vmatmul.mubr.bf16.gmra.mrb[0].mxu0 %v3854
      %v4022 = vpop.f32.mrb[0].mxu0
      %v4023 = vadd.f32 %v3922, %v4022
      %v4024 = vpop.f32.mrb[0].mxu0
      %v4025 = vadd.f32 %v3924, %v4024
      %v4026 = vpop.f32.mrb[0].mxu0
      %v4027 = vadd.f32 %v3926, %v4026
      %v4028 = vpop.f32.mrb[0].mxu0
      %v4029 = vadd.f32 %v3928, %v4028
      %4030 = vmatprep.mubr.bf16.mxu0 0
      %4031 = vmatmul.mubr.bf16.gmra.mrb[0].mxu0 %v3857
      %v4032 = vpop.f32.mrb[0].mxu0
      %v4033 = vadd.f32 %v3932, %v4032
      %v4034 = vpop.f32.mrb[0].mxu0
      %v4035 = vadd.f32 %v3934, %v4034
      %v4036 = vpop.f32.mrb[0].mxu0
      %v4037 = vadd.f32 %v3936, %v4036
      %v4038 = vpop.f32.mrb[0].mxu0
      %v4039 = vadd.f32 %v3938, %v4038
      %4040 = vmatprep.mubr.bf16.mxu0 0
      %4041 = vmatmul.mubr.bf16.gmra.mrb[0].mxu0 %v3860
      %v4042 = vpop.f32.mrb[0].mxu0
      %v4043 = vadd.f32 %v3942, %v4042
      %v4044 = vpop.f32.mrb[0].mxu0
      %v4045 = vadd.f32 %v3944, %v4044
      %v4046 = vpop.f32.mrb[0].mxu0
      %v4047 = vadd.f32 %v3946, %v4046
      %v4048 = vpop.f32.mrb[0].mxu0
      %v4049 = vadd.f32 %v3948, %v4048
      %4050 = vmatprep.mubr.bf16.mxu0 0
      %4051 = vmatmul.mubr.bf16.gmra.mrb[0].mxu0 %v3863
      %v4052 = vpop.f32.mrb[0].mxu0
      %v4053 = vadd.f32 %v3952, %v4052
      %v4054 = vpop.f32.mrb[0].mxu0
      %v4055 = vadd.f32 %v3954, %v4054
      %v4056 = vpop.f32.mrb[0].mxu0
      %v4057 = vadd.f32 %v3956, %v4056
      %v4058 = vpop.f32.mrb[0].mxu0
      %v4059 = vadd.f32 %v3958, %v4058
      %4060 = vmatprep.mubr.bf16.mxu0 0
      %4061 = vmatmul.mubr.bf16.gmra.mrb[0].mxu0 %v3866
      %v4062 = vpop.f32.mrb[0].mxu0
      %v4063 = vadd.f32 %v3962, %v4062
      %v4064 = vpop.f32.mrb[0].mxu0
      %v4065 = vadd.f32 %v3964, %v4064
      %v4066 = vpop.f32.mrb[0].mxu0
      %v4067 = vadd.f32 %v3966, %v4066
      %v4068 = vpop.f32.mrb[0].mxu0
      %v4069 = vadd.f32 %v3968, %v4068
      %4070 = vmatprep.mubr.bf16.mxu0 0
      %4071 = vmatmul.mubr.bf16.gmra.mrb[0].mxu0 %v3869
      %v4072 = vpop.f32.mrb[0].mxu0
      %v4073 = vadd.f32 %v3972, %v4072
      %v4074 = vpop.f32.mrb[0].mxu0
      %v4075 = vadd.f32 %v3974, %v4074
      %v4076 = vpop.f32.mrb[0].mxu0
      %v4077 = vpop.f32.mrb[0].mxu0
      %4078 = vdwg.mxu0
      %v4079 = vpack.c.bf16 %v4017, %v4013
      %v4080 = vpack.c.bf16 %v4019, %v4015
      %v4081 = vpack.c.bf16 %v4027, %v4023
      %v4082 = vpack.c.bf16 %v4029, %v4025
      %v4083 = vpack.c.bf16 %v4037, %v4033
      %v4084 = vpack.c.bf16 %v4039, %v4035
      %v4085 = vpack.c.bf16 %v4047, %v4043
      %v4086 = vpack.c.bf16 %v4049, %v4045
      %v4087 = vpack.c.bf16 %v4057, %v4053
      %v4088 = vpack.c.bf16 %v4059, %v4055
      %v4089 = vpack.c.bf16 %v4067, %v4063
      %v4090 = vpack.c.bf16 %v4069, %v4065
      %v4091 = vpack.c.bf16 %v4073, %v4073
      %v4092 = vpack.c.bf16 %v4075, %v4075
      %v4125 = vunpack.c.l.b16 %v2219
      %v4126 = vunpack.c.h.b16 %v2219
      %v4127 = vunpack.c.l.b16 %v2220
      %v4128 = vunpack.c.h.b16 %v2220
      %v4129 = vunpack.c.l.b16 %v2221
      %v4130 = vunpack.c.h.b16 %v2221
      %v4131 = vunpack.c.l.b16 %v2222
      %v4132 = vunpack.c.h.b16 %v2222
      %v4133 = vunpack.c.l.b16 %v2223
      %v4134 = vunpack.c.h.b16 %v2223
      %v4135 = vunpack.c.l.b16 %v2224
      %v4136 = vunpack.c.h.b16 %v2224
      %v4137 = vunpack.c.l.b16 %v2225
      %v4138 = vunpack.c.h.b16 %v2225
      %v4139 = vunpack.c.l.b16 %v2226
      %v4140 = vunpack.c.h.b16 %v2226
      %v4141 = vunpack.c.l.b16 %v2227
      %v4142 = vunpack.c.h.b16 %v2227
      %v4143 = vunpack.c.l.b16 %v2228
      %v4144 = vunpack.c.h.b16 %v2228
      %v4145 = vunpack.c.l.b16 %v2229
      %v4146 = vunpack.c.h.b16 %v2229
      %v4147 = vunpack.c.l.b16 %v2230
      %v4148 = vunpack.c.h.b16 %v2230
      %v4149 = vunpack.c.l.b16 %v2231
      %v4150 = vunpack.c.h.b16 %v2231
      %v4151 = vunpack.c.l.b16 %v2232
      %v4152 = vunpack.c.h.b16 %v2232
      %v4153 = vunpack.c.l.b16 %v2233
      %v4154 = vunpack.c.h.b16 %v2233
      %v4155 = vunpack.c.l.b16 %v2234
      %v4156 = vunpack.c.h.b16 %v2234
      %v4157 = vunpack.c.l.b16 %v2235
      %v4158 = vunpack.c.h.b16 %v2235
      %v4159 = vunpack.c.l.b16 %v2236
      %v4160 = vunpack.c.h.b16 %v2236
      %v4161 = vunpack.c.l.b16 %v2237
      %v4162 = vunpack.c.h.b16 %v2237
      %v4163 = vunpack.c.l.b16 %v2238
      %v4164 = vunpack.c.h.b16 %v2238
      %v4165 = vunpack.c.l.b16 %v2239
      %v4166 = vunpack.c.h.b16 %v2239
      %v4167 = vunpack.c.l.b16 %v2240
      %v4168 = vunpack.c.h.b16 %v2240
      %v4169 = vunpack.c.l.b16 %v2241
      %v4170 = vunpack.c.h.b16 %v2241
      %v4171 = vunpack.c.l.b16 %v2242
      %v4172 = vunpack.c.h.b16 %v2242
      %v4173 = vunpack.c.l.b16 %v2243
      %v4174 = vunpack.c.h.b16 %v2243
      %v4175 = vunpack.c.l.b16 %v2244
      %v4176 = vunpack.c.h.b16 %v2244
      %v4177 = vunpack.c.l.b16 %v2245
      %v4178 = vunpack.c.h.b16 %v2245
      %v4179 = vunpack.c.l.b16 %v2246
      %v4180 = vunpack.c.h.b16 %v2246
      %v4181 = vunpack.c.l.b16 %v2247
      %v4182 = vunpack.c.h.b16 %v2247
      %v4183 = vunpack.c.l.b16 %v2248
      %v4184 = vunpack.c.h.b16 %v2248
      %v4185 = vunpack.c.l.b16 %v2249
      %v4186 = vunpack.c.h.b16 %v2249
      %v4187 = vunpack.c.l.b16 %v2250
      %v4188 = vunpack.c.h.b16 %v2250
      %v4189 = vpack.c.b16 %v4127, %v4125
      %v4190 = vpack.c.b16 %v4128, %v4126
      %v4191 = vpack.c.b16 %v4131, %v4129
      %v4192 = vpack.c.b16 %v4132, %v4130
      %v4193 = vpack.c.b16 %v4135, %v4133
      %v4194 = vpack.c.b16 %v4136, %v4134
      %v4195 = vpack.c.b16 %v4139, %v4137
      %v4196 = vpack.c.b16 %v4140, %v4138
      %v4197 = vpack.c.b16 %v4143, %v4141
      %v4198 = vpack.c.b16 %v4144, %v4142
      %v4199 = vpack.c.b16 %v4147, %v4145
      %v4200 = vpack.c.b16 %v4148, %v4146
      %v4201 = vpack.c.b16 %v4151, %v4149
      %v4202 = vpack.c.b16 %v4152, %v4150
      %v4203 = vpack.c.b16 %v4155, %v4153
      %v4204 = vpack.c.b16 %v4156, %v4154
      %v4205 = vpack.c.b16 %v4159, %v4157
      %v4206 = vpack.c.b16 %v4160, %v4158
      %v4207 = vpack.c.b16 %v4163, %v4161
      %v4208 = vpack.c.b16 %v4164, %v4162
      %v4209 = vpack.c.b16 %v4167, %v4165
      %v4210 = vpack.c.b16 %v4168, %v4166
      %v4211 = vpack.c.b16 %v4171, %v4169
      %v4212 = vpack.c.b16 %v4172, %v4170
      %v4213 = vpack.c.b16 %v4175, %v4173
      %v4214 = vpack.c.b16 %v4176, %v4174
      %v4215 = vpack.c.b16 %v4179, %v4177
      %v4216 = vpack.c.b16 %v4180, %v4178
      %v4217 = vpack.c.b16 %v4183, %v4181
      %v4218 = vpack.c.b16 %v4184, %v4182
      %v4219 = vpack.c.b16 %v4187, %v4185
      %v4220 = vpack.c.b16 %v4188, %v4186
      %4253 = vmatprep.subr.bf16.mxu0 %v4190
      %4254 = vmatpush1.bf16.msra.mxu0 %v4189
      %4255 = vmatprep.subr.bf16.mxu0 %v4192
      %4256 = vmatpush1.bf16.msra.mxu0 %v4191
      %4257 = vmatprep.subr.bf16.mxu0 %v4194
      %4258 = vmatpush1.bf16.msra.mxu0 %v4193
      %4259 = vmatprep.subr.bf16.mxu0 %v4196
      %4260 = vmatpush1.bf16.msra.mxu0 %v4195
      %4261 = vmatprep.subr.bf16.mxu0 %v4198
      %4262 = vmatpush1.bf16.msra.mxu0 %v4197
      %4263 = vmatprep.subr.bf16.mxu0 %v4200
      %4264 = vmatpush1.bf16.msra.mxu0 %v4199
      %4265 = vmatprep.subr.bf16.mxu0 %v4202
      %4266 = vmatpush1.bf16.msra.mxu0 %v4201
      %4267 = vmatprep.subr.bf16.mxu0 %v4204
      %4268 = vmatpush1.bf16.msra.mxu0 %v4203
      %4269 = vmatprep.subr.bf16.mxu0 %v4206
      %4270 = vmatpush1.bf16.msra.mxu0 %v4205
      %4271 = vmatprep.subr.bf16.mxu0 %v4208
      %4272 = vmatpush1.bf16.msra.mxu0 %v4207
      %4273 = vmatprep.subr.bf16.mxu0 %v4210
      %4274 = vmatpush1.bf16.msra.mxu0 %v4209
      %4275 = vmatprep.subr.bf16.mxu0 %v4212
      %4276 = vmatpush1.bf16.msra.mxu0 %v4211
      %4277 = vmatprep.subr.bf16.mxu0 %v4214
      %4278 = vmatpush1.bf16.msra.mxu0 %v4213
      %4279 = vmatprep.subr.bf16.mxu0 %v4216
      %4280 = vmatpush1.bf16.msra.mxu0 %v4215
      %4281 = vmatprep.subr.bf16.mxu0 %v4218
      %4282 = vmatpush1.bf16.msra.mxu0 %v4217
      %4283 = vmatprep.subr.bf16.mxu0 %v4220
      %4284 = vmatpush1.bf16.msra.mxu0 %v4219
      %4285 = vmatprep.mubr.bf16.mxu0 %v4080
      %4286 = vmatmul.mubr.bf16.gmra.mrb[0].mxu0 %v4079
      %v4287 = vpop.f32.mrb[0].mxu0
      %v4288 = vadd.f32 0.0, %v4287
      %v4289 = vpop.f32.mrb[0].mxu0
      %v4290 = vadd.f32 0.0, %v4289
      %v4291 = vpop.f32.mrb[0].mxu0
      %v4292 = vadd.f32 0.0, %v4291
      %v4293 = vpop.f32.mrb[0].mxu0
      %v4294 = vadd.f32 0.0, %v4293
      %4295 = vmatprep.mubr.bf16.mxu0 %v4082
      %4296 = vmatmul.mubr.bf16.gmra.mrb[0].mxu0 %v4081
      %v4297 = vpop.f32.mrb[0].mxu0
      %v4298 = vadd.f32 0.0, %v4297
      %v4299 = vpop.f32.mrb[0].mxu0
      %v4300 = vadd.f32 0.0, %v4299
      %v4301 = vpop.f32.mrb[0].mxu0
      %v4302 = vadd.f32 0.0, %v4301
      %v4303 = vpop.f32.mrb[0].mxu0
      %v4304 = vadd.f32 0.0, %v4303
      %4305 = vmatprep.mubr.bf16.mxu0 %v4084
      %4306 = vmatmul.mubr.bf16.gmra.mrb[0].mxu0 %v4083
      %v4307 = vpop.f32.mrb[0].mxu0
      %v4308 = vadd.f32 0.0, %v4307
      %v4309 = vpop.f32.mrb[0].mxu0
      %v4310 = vadd.f32 0.0, %v4309
      %v4311 = vpop.f32.mrb[0].mxu0
      %v4312 = vadd.f32 0.0, %v4311
      %v4313 = vpop.f32.mrb[0].mxu0
      %v4314 = vadd.f32 0.0, %v4313
      %4315 = vmatprep.mubr.bf16.mxu0 %v4086
      %4316 = vmatmul.mubr.bf16.gmra.mrb[0].mxu0 %v4085
      %v4317 = vpop.f32.mrb[0].mxu0
      %v4318 = vadd.f32 0.0, %v4317
      %v4319 = vpop.f32.mrb[0].mxu0
      %v4320 = vadd.f32 0.0, %v4319
      %v4321 = vpop.f32.mrb[0].mxu0
      %v4322 = vadd.f32 0.0, %v4321
      %v4323 = vpop.f32.mrb[0].mxu0
      %v4324 = vadd.f32 0.0, %v4323
      %4325 = vmatprep.mubr.bf16.mxu0 %v4088
      %4326 = vmatmul.mubr.bf16.gmra.mrb[0].mxu0 %v4087
      %v4327 = vpop.f32.mrb[0].mxu0
      %v4328 = vadd.f32 0.0, %v4327
      %v4329 = vpop.f32.mrb[0].mxu0
      %v4330 = vadd.f32 0.0, %v4329
      %v4331 = vpop.f32.mrb[0].mxu0
      %v4332 = vadd.f32 0.0, %v4331
      %v4333 = vpop.f32.mrb[0].mxu0
      %v4334 = vadd.f32 0.0, %v4333
      %4335 = vmatprep.mubr.bf16.mxu0 %v4090
      %4336 = vmatmul.mubr.bf16.gmra.mrb[0].mxu0 %v4089
      %v4337 = vpop.f32.mrb[0].mxu0
      %v4338 = vadd.f32 0.0, %v4337
      %v4339 = vpop.f32.mrb[0].mxu0
      %v4340 = vadd.f32 0.0, %v4339
      %v4341 = vpop.f32.mrb[0].mxu0
      %v4342 = vadd.f32 0.0, %v4341
      %v4343 = vpop.f32.mrb[0].mxu0
      %v4344 = vadd.f32 0.0, %v4343
      %4345 = vmatprep.mubr.bf16.mxu0 %v4092
      %4346 = vmatmul.mubr.bf16.gmra.mrb[0].mxu0 %v4091
      %v4347 = vpop.f32.mrb[0].mxu0
      %v4348 = vadd.f32 0.0, %v4347
      %v4349 = vpop.f32.mrb[0].mxu0
      %v4350 = vadd.f32 0.0, %v4349
      %v4351 = vpop.f32.mrb[0].mxu0
      %v4352 = vpop.f32.mrb[0].mxu0
      %4353 = vdwg.mxu0
      %v4386 = vunpack.c.l.b16 %v2251
      %v4387 = vunpack.c.h.b16 %v2251
      %v4388 = vunpack.c.l.b16 %v2252
      %v4389 = vunpack.c.h.b16 %v2252
      %v4390 = vunpack.c.l.b16 %v2253
      %v4391 = vunpack.c.h.b16 %v2253
      %v4392 = vunpack.c.l.b16 %v2254
      %v4393 = vunpack.c.h.b16 %v2254
      %v4394 = vunpack.c.l.b16 %v2255
      %v4395 = vunpack.c.h.b16 %v2255
      %v4396 = vunpack.c.l.b16 %v2256
      %v4397 = vunpack.c.h.b16 %v2256
      %v4398 = vunpack.c.l.b16 %v2257
      %v4399 = vunpack.c.h.b16 %v2257
      %v4400 = vunpack.c.l.b16 %v2258
      %v4401 = vunpack.c.h.b16 %v2258
      %v4402 = vunpack.c.l.b16 %v2259
      %v4403 = vunpack.c.h.b16 %v2259
      %v4404 = vunpack.c.l.b16 %v2260
      %v4405 = vunpack.c.h.b16 %v2260
      %v4406 = vunpack.c.l.b16 %v2261
      %v4407 = vunpack.c.h.b16 %v2261
      %v4408 = vunpack.c.l.b16 %v2262
      %v4409 = vunpack.c.h.b16 %v2262
      %v4410 = vunpack.c.l.b16 %v2263
      %v4411 = vunpack.c.h.b16 %v2263
      %v4412 = vunpack.c.l.b16 %v2264
      %v4413 = vunpack.c.h.b16 %v2264
      %v4414 = vunpack.c.l.b16 %v2265
      %v4415 = vunpack.c.h.b16 %v2265
      %v4416 = vunpack.c.l.b16 %v2266
      %v4417 = vunpack.c.h.b16 %v2266
      %v4418 = vunpack.c.l.b16 %v2267
      %v4419 = vunpack.c.h.b16 %v2267
      %v4420 = vunpack.c.l.b16 %v2268
      %v4421 = vunpack.c.h.b16 %v2268
      %v4422 = vunpack.c.l.b16 %v2269
      %v4423 = vunpack.c.h.b16 %v2269
      %v4424 = vunpack.c.l.b16 %v2270
      %v4425 = vunpack.c.h.b16 %v2270
      %v4426 = vunpack.c.l.b16 %v2271
      %v4427 = vunpack.c.h.b16 %v2271
      %v4428 = vunpack.c.l.b16 %v2272
      %v4429 = vunpack.c.h.b16 %v2272
      %v4430 = vunpack.c.l.b16 %v2273
      %v4431 = vunpack.c.h.b16 %v2273
      %v4432 = vunpack.c.l.b16 %v2274
      %v4433 = vunpack.c.h.b16 %v2274
      %v4434 = vunpack.c.l.b16 %v2275
      %v4435 = vunpack.c.h.b16 %v2275
      %v4436 = vunpack.c.l.b16 %v2276
      %v4437 = vunpack.c.h.b16 %v2276
      %v4438 = vunpack.c.l.b16 %v2277
      %v4439 = vunpack.c.h.b16 %v2277
      %v4440 = vunpack.c.l.b16 %v2278
      %v4441 = vunpack.c.h.b16 %v2278
      %v4442 = vunpack.c.l.b16 %v2279
      %v4443 = vunpack.c.h.b16 %v2279
      %v4444 = vunpack.c.l.b16 %v2280
      %v4445 = vunpack.c.h.b16 %v2280
      %v4446 = vunpack.c.l.b16 %v2281
      %v4447 = vunpack.c.h.b16 %v2281
      %v4448 = vunpack.c.l.b16 %v2282
      %v4449 = vunpack.c.h.b16 %v2282
      %v4450 = vpack.c.b16 %v4388, %v4386
      %v4451 = vpack.c.b16 %v4389, %v4387
      %v4452 = vpack.c.b16 %v4392, %v4390
      %v4453 = vpack.c.b16 %v4393, %v4391
      %v4454 = vpack.c.b16 %v4396, %v4394
      %v4455 = vpack.c.b16 %v4397, %v4395
      %v4456 = vpack.c.b16 %v4400, %v4398
      %v4457 = vpack.c.b16 %v4401, %v4399
      %v4458 = vpack.c.b16 %v4404, %v4402
      %v4459 = vpack.c.b16 %v4405, %v4403
      %v4460 = vpack.c.b16 %v4408, %v4406
      %v4461 = vpack.c.b16 %v4409, %v4407
      %v4462 = vpack.c.b16 %v4412, %v4410
      %v4463 = vpack.c.b16 %v4413, %v4411
      %v4464 = vpack.c.b16 %v4416, %v4414
      %v4465 = vpack.c.b16 %v4417, %v4415
      %v4466 = vpack.c.b16 %v4420, %v4418
      %v4467 = vpack.c.b16 %v4421, %v4419
      %v4468 = vpack.c.b16 %v4424, %v4422
      %v4469 = vpack.c.b16 %v4425, %v4423
      %v4470 = vpack.c.b16 %v4428, %v4426
      %v4471 = vpack.c.b16 %v4429, %v4427
      %v4472 = vpack.c.b16 %v4432, %v4430
      %v4473 = vpack.c.b16 %v4433, %v4431
      %v4474 = vpack.c.b16 %v4436, %v4434
      %v4475 = vpack.c.b16 %v4437, %v4435
      %v4476 = vpack.c.b16 %v4440, %v4438
      %v4477 = vpack.c.b16 %v4441, %v4439
      %v4478 = vpack.c.b16 %v4444, %v4442
      %v4479 = vpack.c.b16 %v4445, %v4443
      %v4480 = vpack.c.b16 %v4448, %v4446
      %v4481 = vpack.c.b16 %v4449, %v4447
      %4514 = vmatprep.subr.bf16.mxu0 %v4451
      %4515 = vmatpush1.bf16.msra.mxu0 %v4450
      %4516 = vmatprep.subr.bf16.mxu0 %v4453
      %4517 = vmatpush1.bf16.msra.mxu0 %v4452
      %4518 = vmatprep.subr.bf16.mxu0 %v4455
      %4519 = vmatpush1.bf16.msra.mxu0 %v4454
      %4520 = vmatprep.subr.bf16.mxu0 %v4457
      %4521 = vmatpush1.bf16.msra.mxu0 %v4456
      %4522 = vmatprep.subr.bf16.mxu0 %v4459
      %4523 = vmatpush1.bf16.msra.mxu0 %v4458
      %4524 = vmatprep.subr.bf16.mxu0 %v4461
      %4525 = vmatpush1.bf16.msra.mxu0 %v4460
      %4526 = vmatprep.subr.bf16.mxu0 %v4463
      %4527 = vmatpush1.bf16.msra.mxu0 %v4462
      %4528 = vmatprep.subr.bf16.mxu0 %v4465
      %4529 = vmatpush1.bf16.msra.mxu0 %v4464
      %4530 = vmatprep.subr.bf16.mxu0 %v4467
      %4531 = vmatpush1.bf16.msra.mxu0 %v4466
      %4532 = vmatprep.subr.bf16.mxu0 %v4469
      %4533 = vmatpush1.bf16.msra.mxu0 %v4468
      %4534 = vmatprep.subr.bf16.mxu0 %v4471
      %4535 = vmatpush1.bf16.msra.mxu0 %v4470
      %4536 = vmatprep.subr.bf16.mxu0 %v4473
      %4537 = vmatpush1.bf16.msra.mxu0 %v4472
      %4538 = vmatprep.subr.bf16.mxu0 %v4475
      %4539 = vmatpush1.bf16.msra.mxu0 %v4474
      %4540 = vmatprep.subr.bf16.mxu0 %v4477
      %4541 = vmatpush1.bf16.msra.mxu0 %v4476
      %4542 = vmatprep.subr.bf16.mxu0 %v4479
      %4543 = vmatpush1.bf16.msra.mxu0 %v4478
      %4544 = vmatprep.subr.bf16.mxu0 %v4481
      %4545 = vmatpush1.bf16.msra.mxu0 %v4480
      %4546 = vmatprep.mubr.bf16.mxu0 %v4080
      %4547 = vmatmul.mubr.bf16.gmra.mrb[0].mxu0 %v4079
      %v4548 = vpop.f32.mrb[0].mxu0
      %v4549 = vadd.f32 0.0, %v4548
      %v4550 = vpop.f32.mrb[0].mxu0
      %v4551 = vadd.f32 0.0, %v4550
      %v4552 = vpop.f32.mrb[0].mxu0
      %v4553 = vadd.f32 0.0, %v4552
      %v4554 = vpop.f32.mrb[0].mxu0
      %v4555 = vadd.f32 0.0, %v4554
      %4556 = vmatprep.mubr.bf16.mxu0 %v4082
      %4557 = vmatmul.mubr.bf16.gmra.mrb[0].mxu0 %v4081
      %v4558 = vpop.f32.mrb[0].mxu0
      %v4559 = vadd.f32 0.0, %v4558
      %v4560 = vpop.f32.mrb[0].mxu0
      %v4561 = vadd.f32 0.0, %v4560
      %v4562 = vpop.f32.mrb[0].mxu0
      %v4563 = vadd.f32 0.0, %v4562
      %v4564 = vpop.f32.mrb[0].mxu0
      %v4565 = vadd.f32 0.0, %v4564
      %4566 = vmatprep.mubr.bf16.mxu0 %v4084
      %4567 = vmatmul.mubr.bf16.gmra.mrb[0].mxu0 %v4083
      %v4568 = vpop.f32.mrb[0].mxu0
      %v4569 = vadd.f32 0.0, %v4568
      %v4570 = vpop.f32.mrb[0].mxu0
      %v4571 = vadd.f32 0.0, %v4570
      %v4572 = vpop.f32.mrb[0].mxu0
      %v4573 = vadd.f32 0.0, %v4572
      %v4574 = vpop.f32.mrb[0].mxu0
      %v4575 = vadd.f32 0.0, %v4574
      %4576 = vmatprep.mubr.bf16.mxu0 %v4086
      %4577 = vmatmul.mubr.bf16.gmra.mrb[0].mxu0 %v4085
      %v4578 = vpop.f32.mrb[0].mxu0
      %v4579 = vadd.f32 0.0, %v4578
      %v4580 = vpop.f32.mrb[0].mxu0
      %v4581 = vadd.f32 0.0, %v4580
      %v4582 = vpop.f32.mrb[0].mxu0
      %v4583 = vadd.f32 0.0, %v4582
      %v4584 = vpop.f32.mrb[0].mxu0
      %v4585 = vadd.f32 0.0, %v4584
      %4586 = vmatprep.mubr.bf16.mxu0 %v4088
      %4587 = vmatmul.mubr.bf16.gmra.mrb[0].mxu0 %v4087
      %v4588 = vpop.f32.mrb[0].mxu0
      %v4589 = vadd.f32 0.0, %v4588
      %v4590 = vpop.f32.mrb[0].mxu0
      %v4591 = vadd.f32 0.0, %v4590
      %v4592 = vpop.f32.mrb[0].mxu0
      %v4593 = vadd.f32 0.0, %v4592
      %v4594 = vpop.f32.mrb[0].mxu0
      %v4595 = vadd.f32 0.0, %v4594
      %4596 = vmatprep.mubr.bf16.mxu0 %v4090
      %4597 = vmatmul.mubr.bf16.gmra.mrb[0].mxu0 %v4089
      %v4598 = vpop.f32.mrb[0].mxu0
      %v4599 = vadd.f32 0.0, %v4598
      %v4600 = vpop.f32.mrb[0].mxu0
      %v4601 = vadd.f32 0.0, %v4600
      %v4602 = vpop.f32.mrb[0].mxu0
      %v4603 = vadd.f32 0.0, %v4602
      %v4604 = vpop.f32.mrb[0].mxu0
      %v4605 = vadd.f32 0.0, %v4604
      %4606 = vmatprep.mubr.bf16.mxu0 %v4092
      %4607 = vmatmul.mubr.bf16.gmra.mrb[0].mxu0 %v4091
      %v4608 = vpop.f32.mrb[0].mxu0
      %v4609 = vadd.f32 0.0, %v4608
      %v4610 = vpop.f32.mrb[0].mxu0
      %v4611 = vadd.f32 0.0, %v4610
      %v4612 = vpop.f32.mrb[0].mxu0
      %v4613 = vpop.f32.mrb[0].mxu0
      %4614 = vdwg.mxu0
      %v4615 = vmax.f32 %v4288, %v4549
      %v4616 = vmax.f32 %v4290, %v4551
      %v4617 = vmax.f32 %v4292, %v4553
      %v4618 = vmax.f32 %v4294, %v4555
      %v4619 = vmax.f32 %v4298, %v4559
      %v4620 = vmax.f32 %v4300, %v4561
      %v4621 = vmax.f32 %v4302, %v4563
      %v4622 = vmax.f32 %v4304, %v4565
      %v4623 = vmax.f32 %v4308, %v4569
      %v4624 = vmax.f32 %v4310, %v4571
      %v4625 = vmax.f32 %v4312, %v4573
      %v4626 = vmax.f32 %v4314, %v4575
      %v4627 = vmax.f32 %v4318, %v4579
      %v4628 = vmax.f32 %v4320, %v4581
      %v4629 = vmax.f32 %v4322, %v4583
      %v4630 = vmax.f32 %v4324, %v4585
      %v4631 = vmax.f32 %v4328, %v4589
      %v4632 = vmax.f32 %v4330, %v4591
      %v4633 = vmax.f32 %v4332, %v4593
      %v4634 = vmax.f32 %v4334, %v4595
      %v4635 = vmax.f32 %v4338, %v4599
      %v4636 = vmax.f32 %v4340, %v4601
      %v4637 = vmax.f32 %v4342, %v4603
      %v4638 = vmax.f32 %v4344, %v4605
      %v4639 = vmax.f32 %v4348, %v4609
      %v4640 = vmax.f32 %v4350, %v4611
      %v4641 = vlaneseq
      %v4642 = vshrl.u32 %v4641, 7
      %v4643 = vsub.s32 0, %v4642
      %v4644 = vrot.slane %v2905, %v4643
      %v4645 = vlaneseq
      %v4646 = vshrl.u32 %v4645, 7
      %v4647 = vsub.s32 0, %v4646
      %v4648 = vrot.slane %v2907, %v4647
      %v4649 = vmul.f32 %v4615, %v4644
      %v4650 = vmul.f32 %v4616, %v4648
      %v4651 = vmul.f32 %v4617, %v4644
      %v4652 = vmul.f32 %v4618, %v4648
      %v4653 = vmul.f32 %v4619, %v4644
      %v4654 = vmul.f32 %v4620, %v4648
      %v4655 = vmul.f32 %v4621, %v4644
      %v4656 = vmul.f32 %v4622, %v4648
      %v4657 = vmul.f32 %v4623, %v4644
      %v4658 = vmul.f32 %v4624, %v4648
      %v4659 = vmul.f32 %v4625, %v4644
      %v4660 = vmul.f32 %v4626, %v4648
      %v4661 = vmul.f32 %v4627, %v4644
      %v4662 = vmul.f32 %v4628, %v4648
      %v4663 = vmul.f32 %v4629, %v4644
      %v4664 = vmul.f32 %v4630, %v4648
      %v4665 = vmul.f32 %v4631, %v4644
      %v4666 = vmul.f32 %v4632, %v4648
      %v4667 = vmul.f32 %v4633, %v4644
      %v4668 = vmul.f32 %v4634, %v4648
      %v4669 = vmul.f32 %v4635, %v4644
      %v4670 = vmul.f32 %v4636, %v4648
      %v4671 = vmul.f32 %v4637, %v4644
      %v4672 = vmul.f32 %v4638, %v4648
      %v4673 = vmul.f32 %v4639, %v4644
      %v4674 = vmul.f32 %v4640, %v4648
      %v4675 = vlaneseq
      %v4676 = vshrl.u32 %v4675, 7
      %v4677 = vsub.s32 0, %v4676
      %v4678 = vrot.slane %v2981, %v4677
      %v4679 = vlaneseq
      %v4680 = vshrl.u32 %v4679, 7
      %v4681 = vsub.s32 0, %v4680
      %v4682 = vrot.slane %v2983, %v4681
      %v4683 = vadd.f32 %v4649, %v4678
      %v4684 = vadd.f32 %v4650, %v4682
      %v4685 = vadd.f32 %v4651, %v4678
      %v4686 = vadd.f32 %v4652, %v4682
      %v4687 = vadd.f32 %v4653, %v4678
      %v4688 = vadd.f32 %v4654, %v4682
      %v4689 = vadd.f32 %v4655, %v4678
      %v4690 = vadd.f32 %v4656, %v4682
      %v4691 = vadd.f32 %v4657, %v4678
      %v4692 = vadd.f32 %v4658, %v4682
      %v4693 = vadd.f32 %v4659, %v4678
      %v4694 = vadd.f32 %v4660, %v4682
      %v4695 = vadd.f32 %v4661, %v4678
      %v4696 = vadd.f32 %v4662, %v4682
      %v4697 = vadd.f32 %v4663, %v4678
      %v4698 = vadd.f32 %v4664, %v4682
      %v4699 = vadd.f32 %v4665, %v4678
      %v4700 = vadd.f32 %v4666, %v4682
      %v4701 = vadd.f32 %v4667, %v4678
      %v4702 = vadd.f32 %v4668, %v4682
      %v4703 = vadd.f32 %v4669, %v4678
      %v4704 = vadd.f32 %v4670, %v4682
      %v4705 = vadd.f32 %v4671, %v4678
      %v4706 = vadd.f32 %v4672, %v4682
      %v4707 = vadd.f32 %v4673, %v4678
      %v4708 = vadd.f32 %v4674, %v4682
      %v4709 = vmul.f32 %v4683, 0.01
      %v4710 = vmul.f32 %v4684, 0.01
      %v4711 = vmul.f32 %v4685, 0.01
      %v4712 = vmul.f32 %v4686, 0.01
      %v4713 = vmul.f32 %v4687, 0.01
      %v4714 = vmul.f32 %v4688, 0.01
      %v4715 = vmul.f32 %v4689, 0.01
      %v4716 = vmul.f32 %v4690, 0.01
      %v4717 = vmul.f32 %v4691, 0.01
      %v4718 = vmul.f32 %v4692, 0.01
      %v4719 = vmul.f32 %v4693, 0.01
      %v4720 = vmul.f32 %v4694, 0.01
      %v4721 = vmul.f32 %v4695, 0.01
      %v4722 = vmul.f32 %v4696, 0.01
      %v4723 = vmul.f32 %v4697, 0.01
      %v4724 = vmul.f32 %v4698, 0.01
      %v4725 = vmul.f32 %v4699, 0.01
      %v4726 = vmul.f32 %v4700, 0.01
      %v4727 = vmul.f32 %v4701, 0.01
      %v4728 = vmul.f32 %v4702, 0.01
      %v4729 = vmul.f32 %v4703, 0.01
      %v4730 = vmul.f32 %v4704, 0.01
      %v4731 = vmul.f32 %v4705, 0.01
      %v4732 = vmul.f32 %v4706, 0.01
      %v4733 = vmul.f32 %v4707, 0.01
      %v4734 = vmul.f32 %v4708, 0.01
      %v4735 = vmax.f32 %v4683, %v4709
      %v4736 = vmax.f32 %v4684, %v4710
      %v4737 = vmax.f32 %v4685, %v4711
      %v4738 = vmax.f32 %v4686, %v4712
      %v4739 = vmax.f32 %v4687, %v4713
      %v4740 = vmax.f32 %v4688, %v4714
      %v4741 = vmax.f32 %v4689, %v4715
      %v4742 = vmax.f32 %v4690, %v4716
      %v4743 = vmax.f32 %v4691, %v4717
      %v4744 = vmax.f32 %v4692, %v4718
      %v4745 = vmax.f32 %v4693, %v4719
      %v4746 = vmax.f32 %v4694, %v4720
      %v4747 = vmax.f32 %v4695, %v4721
      %v4748 = vmax.f32 %v4696, %v4722
      %v4749 = vmax.f32 %v4697, %v4723
      %v4750 = vmax.f32 %v4698, %v4724
      %v4751 = vmax.f32 %v4699, %v4725
      %v4752 = vmax.f32 %v4700, %v4726
      %v4753 = vmax.f32 %v4701, %v4727
      %v4754 = vmax.f32 %v4702, %v4728
      %v4755 = vmax.f32 %v4703, %v4729
      %v4756 = vmax.f32 %v4704, %v4730
      %v4757 = vmax.f32 %v4705, %v4731
      %v4758 = vmax.f32 %v4706, %v4732
      %v4759 = vmax.f32 %v4707, %v4733
      %v4760 = vmax.f32 %v4708, %v4734
      %4762 = vset.pattern.permute.xlu0 0
      %4763 = vperm.xlu0 %4762, %v2287
      %v4764 = vpop.permute.xlu0 %4763
      %4767 = vset.pattern.permute.xlu0 0
      %4768 = vperm.xlu0 %4767, %v2288
      %v4769 = vpop.permute.xlu0 %4768
      %4772 = vset.pattern.permute.xlu0 0
      %4773 = vperm.xlu0 %4772, %v2289
      %v4774 = vpop.permute.xlu0 %4773
      %4777 = vset.pattern.permute.xlu0 0
      %4778 = vperm.xlu0 %4777, %v2290
      %v4779 = vpop.permute.xlu0 %4778
      %4782 = vset.pattern.permute.xlu0 0
      %4783 = vperm.xlu0 %4782, %v2291
      %v4784 = vpop.permute.xlu0 %4783
      %4787 = vset.pattern.permute.xlu0 0
      %4788 = vperm.xlu0 %4787, %v2292
      %v4789 = vpop.permute.xlu0 %4788
      %4792 = vset.pattern.permute.xlu0 0
      %4793 = vperm.xlu0 %4792, %v2293
      %v4794 = vpop.permute.xlu0 %4793
      %4797 = vset.pattern.permute.xlu0 0
      %4798 = vperm.xlu0 %4797, %v2294
      %v4799 = vpop.permute.xlu0 %4798
      %4802 = vset.pattern.permute.xlu0 0
      %4803 = vperm.xlu0 %4802, %v2295
      %v4804 = vpop.permute.xlu0 %4803
      %4807 = vset.pattern.permute.xlu0 0
      %4808 = vperm.xlu0 %4807, %v2296
      %v4809 = vpop.permute.xlu0 %4808
      %4812 = vset.pattern.permute.xlu0 0
      %4813 = vperm.xlu0 %4812, %v2297
      %v4814 = vpop.permute.xlu0 %4813
      %4817 = vset.pattern.permute.xlu0 0
      %4818 = vperm.xlu0 %4817, %v2298
      %v4819 = vpop.permute.xlu0 %4818
      %4822 = vset.pattern.permute.xlu0 0
      %4823 = vperm.xlu0 %4822, %v2299
      %v4824 = vpop.permute.xlu0 %4823
      %v4826 = vmul.f32 %v4735, %v4764
      %v4827 = vmul.f32 %v4736, %v4764
      %v4828 = vmul.f32 %v4737, %v4769
      %v4829 = vmul.f32 %v4738, %v4769
      %v4830 = vmul.f32 %v4739, %v4774
      %v4831 = vmul.f32 %v4740, %v4774
      %v4832 = vmul.f32 %v4741, %v4779
      %v4833 = vmul.f32 %v4742, %v4779
      %v4834 = vmul.f32 %v4743, %v4784
      %v4835 = vmul.f32 %v4744, %v4784
      %v4836 = vmul.f32 %v4745, %v4789
      %v4837 = vmul.f32 %v4746, %v4789
      %v4838 = vmul.f32 %v4747, %v4794
      %v4839 = vmul.f32 %v4748, %v4794
      %v4840 = vmul.f32 %v4749, %v4799
      %v4841 = vmul.f32 %v4750, %v4799
      %v4842 = vmul.f32 %v4751, %v4804
      %v4843 = vmul.f32 %v4752, %v4804
      %v4844 = vmul.f32 %v4753, %v4809
      %v4845 = vmul.f32 %v4754, %v4809
      %v4846 = vmul.f32 %v4755, %v4814
      %v4847 = vmul.f32 %v4756, %v4814
      %v4848 = vmul.f32 %v4757, %v4819
      %v4849 = vmul.f32 %v4758, %v4819
      %v4850 = vmul.f32 %v4759, %v4824
      %v4851 = vmul.f32 %v4760, %v4824
      %v4852 = vpack.c.bf16 %v4828, %v4826
      %v4853 = vpack.c.bf16 %v4829, %v4827
      %v4854 = vpack.c.bf16 %v4832, %v4830
      %v4855 = vpack.c.bf16 %v4833, %v4831
      %v4856 = vpack.c.bf16 %v4836, %v4834
      %v4857 = vpack.c.bf16 %v4837, %v4835
      %v4858 = vpack.c.bf16 %v4840, %v4838
      %v4859 = vpack.c.bf16 %v4841, %v4839
      %v4860 = vpack.c.bf16 %v4844, %v4842
      %v4861 = vpack.c.bf16 %v4845, %v4843
      %v4862 = vpack.c.bf16 %v4848, %v4846
      %v4863 = vpack.c.bf16 %v4849, %v4847
      %v4864 = vpack.c.bf16 %v4850, %v4850
      %v4865 = vpack.c.bf16 %v4851, %v4851
      %v4866 = vld [vmem:[%s7] sm:$0xff]
      %v4867 = vld [vmem:[%s7 + $0x8] sm:$0xff]
      %v4868 = vld [vmem:[%s7 + $0x10] sm:$0xff]
      %v4869 = vld [vmem:[%s7 + $0x18] sm:$0xff]
      %v4870 = vld [vmem:[%s7 + $0x20] sm:$0xff]
      %v4871 = vld [vmem:[%s7 + $0x28] sm:$0xff]
      %v4872 = vld [vmem:[%s7 + $0x30] sm:$0xff]
      %v4873 = vld [vmem:[%s7 + $0x38] sm:$0xff]
      %v4874 = vld [vmem:[%s7 + $0x40] sm:$0xff]
      %v4875 = vld [vmem:[%s7 + $0x48] sm:$0xff]
      %v4876 = vld [vmem:[%s7 + $0x50] sm:$0xff]
      %v4877 = vld [vmem:[%s7 + $0x58] sm:$0xff]
      %v4878 = vld [vmem:[%s7 + $0x60] sm:$0xff]
      %v4879 = vld [vmem:[%s7 + $0x68] sm:$0xff]
      %v4880 = vld [vmem:[%s7 + $0x70] sm:$0xff]
      %v4881 = vld [vmem:[%s7 + $0x78] sm:$0xff]
      %v4882 = vld [vmem:[%s7 + $0x80] sm:$0xff]
      %v4883 = vld [vmem:[%s7 + $0x88] sm:$0xff]
      %v4884 = vld [vmem:[%s7 + $0x90] sm:$0xff]
      %v4885 = vld [vmem:[%s7 + $0x98] sm:$0xff]
      %s4886 = scalar_lea.vmem %s7, 160
      %v4887 = vld [vmem:[%s4886] sm:$0xff]
      %v4888 = vld [vmem:[%s4886 + $0x8] sm:$0xff]
      %v4889 = vld [vmem:[%s4886 + $0x10] sm:$0xff]
      %v4890 = vld [vmem:[%s4886 + $0x18] sm:$0xff]
      %v4891 = vld [vmem:[%s4886 + $0x20] sm:$0xff]
      %v4892 = vld [vmem:[%s4886 + $0x28] sm:$0xff]
      %v4893 = vld [vmem:[%s4886 + $0x30] sm:$0xff]
      %v4894 = vld [vmem:[%s4886 + $0x38] sm:$0xff]
      %v4895 = vld [vmem:[%s4886 + $0x40] sm:$0xff]
      %v4896 = vld [vmem:[%s4886 + $0x48] sm:$0xff]
      %v4897 = vld [vmem:[%s4886 + $0x50] sm:$0xff]
      %v4898 = vld [vmem:[%s4886 + $0x58] sm:$0xff]
      %v4899 = vld [vmem:[%s4886 + $0x60] sm:$0xff]
      %v4900 = vld [vmem:[%s4886 + $0x68] sm:$0xff]
      %v4901 = vld [vmem:[%s4886 + $0x70] sm:$0xff]
      %v4902 = vld [vmem:[%s4886 + $0x78] sm:$0xff]
      %v4903 = vld [vmem:[%s4886 + $0x80] sm:$0xff]
      %v4904 = vld [vmem:[%s4886 + $0x88] sm:$0xff]
      %v4905 = vld [vmem:[%s4886 + $0x90] sm:$0xff]
      %v4906 = vld [vmem:[%s4886 + $0x98] sm:$0xff]
      %vm4907 = vsmask.f32 7424
      %v4909 = vshrl.u32 %v4852, 16
      %v4911 = vshll.u32 %v4852, 16
      %v4913 = vrot.slane %v4911, 1
      %v4914 = vor.u32 %v4909, %v4913
      %v4916 = vshll.u32 %v4854, 16
      %v4918 = vrot.slane %v4916, 1
      %v4919 = vsel %vm4907, %v4914, %v4918
      %v4921 = vshrl.u32 %v4853, 16
      %v4923 = vshll.u32 %v4853, 16
      %v4925 = vrot.slane %v4923, 1
      %v4926 = vor.u32 %v4921, %v4925
      %v4928 = vshll.u32 %v4855, 16
      %v4930 = vrot.slane %v4928, 1
      %v4931 = vsel %vm4907, %v4926, %v4930
      %v4932 = vshrl.u32 %v4854, 16
      %v4934 = vor.u32 %v4932, %v4918
      %v4936 = vshll.u32 %v4856, 16
      %v4938 = vrot.slane %v4936, 1
      %v4939 = vsel %vm4907, %v4934, %v4938
      %v4940 = vshrl.u32 %v4855, 16
      %v4942 = vor.u32 %v4940, %v4930
      %v4944 = vshll.u32 %v4857, 16
      %v4946 = vrot.slane %v4944, 1
      %v4947 = vsel %vm4907, %v4942, %v4946
      %v4948 = vshrl.u32 %v4856, 16
      %v4950 = vor.u32 %v4948, %v4938
      %v4952 = vshll.u32 %v4858, 16
      %v4954 = vrot.slane %v4952, 1
      %v4955 = vsel %vm4907, %v4950, %v4954
      %v4956 = vshrl.u32 %v4857, 16
      %v4958 = vor.u32 %v4956, %v4946
      %v4960 = vshll.u32 %v4859, 16
      %v4962 = vrot.slane %v4960, 1
      %v4963 = vsel %vm4907, %v4958, %v4962
      %v4964 = vshrl.u32 %v4858, 16
      %v4966 = vor.u32 %v4964, %v4954
      %v4968 = vshll.u32 %v4860, 16
      %v4970 = vrot.slane %v4968, 1
      %v4971 = vsel %vm4907, %v4966, %v4970
      %v4972 = vshrl.u32 %v4859, 16
      %v4974 = vor.u32 %v4972, %v4962
      %v4976 = vshll.u32 %v4861, 16
      %v4978 = vrot.slane %v4976, 1
      %v4979 = vsel %vm4907, %v4974, %v4978
      %v4980 = vshrl.u32 %v4860, 16
      %v4982 = vor.u32 %v4980, %v4970
      %v4983 = vshrl.u32 %v4861, 16
      %v4985 = vor.u32 %v4983, %v4978
      %v5011 = vunpack.c.l.b16 %v4887
      %v5012 = vunpack.c.h.b16 %v4887
      %v5013 = vunpack.c.l.b16 %v4888
      %v5014 = vunpack.c.h.b16 %v4888
      %v5015 = vunpack.c.l.b16 %v4889
      %v5016 = vunpack.c.h.b16 %v4889
      %v5017 = vunpack.c.l.b16 %v4890
      %v5018 = vunpack.c.h.b16 %v4890
      %v5019 = vunpack.c.l.b16 %v4891
      %v5020 = vunpack.c.h.b16 %v4891
      %v5021 = vunpack.c.l.b16 %v4892
      %v5022 = vunpack.c.h.b16 %v4892
      %v5023 = vunpack.c.l.b16 %v4893
      %v5024 = vunpack.c.h.b16 %v4893
      %v5025 = vunpack.c.l.b16 %v4894
      %v5026 = vunpack.c.h.b16 %v4894
      %v5027 = vunpack.c.l.b16 %v4895
      %v5028 = vunpack.c.h.b16 %v4895
      %v5029 = vunpack.c.l.b16 %v4896
      %v5030 = vunpack.c.h.b16 %v4896
      %v5031 = vunpack.c.l.b16 %v4897
      %v5032 = vunpack.c.h.b16 %v4897
      %v5033 = vunpack.c.l.b16 %v4898
      %v5034 = vunpack.c.h.b16 %v4898
      %v5035 = vunpack.c.l.b16 %v4899
      %v5036 = vunpack.c.h.b16 %v4899
      %v5037 = vunpack.c.l.b16 %v4900
      %v5038 = vunpack.c.h.b16 %v4900
      %v5039 = vunpack.c.l.b16 %v4901
      %v5040 = vunpack.c.h.b16 %v4901
      %v5041 = vunpack.c.l.b16 %v4902
      %v5042 = vunpack.c.h.b16 %v4902
      %v5043 = vunpack.c.l.b16 %v4903
      %v5044 = vunpack.c.h.b16 %v4903
      %v5045 = vunpack.c.l.b16 %v4904
      %v5046 = vunpack.c.h.b16 %v4904
      %v5047 = vunpack.c.l.b16 %v4905
      %v5048 = vunpack.c.h.b16 %v4905
      %v5049 = vunpack.c.l.b16 %v4906
      %v5050 = vunpack.c.h.b16 %v4906
      %v5051 = vpack.c.b16 %v5013, %v5011
      %v5052 = vpack.c.b16 %v5014, %v5012
      %v5053 = vpack.c.b16 %v5017, %v5015
      %v5054 = vpack.c.b16 %v5018, %v5016
      %v5055 = vpack.c.b16 %v5021, %v5019
      %v5056 = vpack.c.b16 %v5022, %v5020
      %v5057 = vpack.c.b16 %v5025, %v5023
      %v5058 = vpack.c.b16 %v5026, %v5024
      %v5059 = vpack.c.b16 %v5029, %v5027
      %v5060 = vpack.c.b16 %v5030, %v5028
      %v5061 = vpack.c.b16 %v5033, %v5031
      %v5062 = vpack.c.b16 %v5034, %v5032
      %v5063 = vpack.c.b16 %v5037, %v5035
      %v5064 = vpack.c.b16 %v5038, %v5036
      %v5065 = vpack.c.b16 %v5041, %v5039
      %v5066 = vpack.c.b16 %v5042, %v5040
      %v5067 = vpack.c.b16 %v5045, %v5043
      %v5068 = vpack.c.b16 %v5046, %v5044
      %v5069 = vpack.c.b16 %v5049, %v5047
      %v5070 = vpack.c.b16 %v5050, %v5048
      %vm5091 = vcmask 261120
      %v5093 = vsel %vm5091, %v4931, 0
      %v5096 = vsel %vm5091, %v4947, 0
      %v5099 = vsel %vm5091, %v4963, 0
      %v5102 = vsel %vm5091, %v4979, 0
      %v5105 = vsel %vm5091, %v4985, 0
      %5107 = vmatprep.subr.bf16.mxu0 %v5052
      %5108 = vmatpush1.bf16.msra.mxu0 %v5051
      %5109 = vmatprep.subr.bf16.mxu0 %v5054
      %5110 = vmatpush1.bf16.msra.mxu0 %v5053
      %5111 = vmatprep.subr.bf16.mxu0 %v5056
      %5112 = vmatpush1.bf16.msra.mxu0 %v5055
      %5113 = vmatprep.subr.bf16.mxu0 %v5058
      %5114 = vmatpush1.bf16.msra.mxu0 %v5057
      %5115 = vmatprep.subr.bf16.mxu0 %v5060
      %5116 = vmatpush1.bf16.msra.mxu0 %v5059
      %5117 = vmatprep.subr.bf16.mxu0 %v5062
      %5118 = vmatpush1.bf16.msra.mxu0 %v5061
      %5119 = vmatprep.subr.bf16.mxu0 %v5064
      %5120 = vmatpush1.bf16.msra.mxu0 %v5063
      %5121 = vmatprep.subr.bf16.mxu0 %v5066
      %5122 = vmatpush1.bf16.msra.mxu0 %v5065
      %5123 = vmatprep.subr.bf16.mxu0 %v5068
      %5124 = vmatpush1.bf16.msra.mxu0 %v5067
      %5125 = vmatprep.subr.bf16.mxu0 %v5070
      %5126 = vmatpush1.bf16.msra.mxu0 %v5069
      %5127 = vmatprep.subr.bf16.mxu0 0
      %5128 = vmatpush1.bf16.msra.mxu0 0
      %5129 = vmatprep.subr.bf16.mxu0 0
      %5130 = vmatpush1.bf16.msra.mxu0 0
      %5131 = vmatprep.subr.bf16.mxu0 0
      %5132 = vmatpush1.bf16.msra.mxu0 0
      %5133 = vmatprep.subr.bf16.mxu0 0
      %5134 = vmatpush1.bf16.msra.mxu0 0
      %5135 = vmatprep.subr.bf16.mxu0 0
      %5136 = vmatpush1.bf16.msra.mxu0 0
      %5137 = vmatprep.subr.bf16.mxu0 0
      %5138 = vmatpush1.bf16.msra.mxu0 0
      %5139 = vmatprep.mubr.bf16.mxu0 %v5093
      %5140 = vmatmul.mubr.bf16.gmra.mrb[0].mxu0 %v4919
      %v5141 = vpop.f32.mrb[0].mxu0
      %v5142 = vadd.f32 0.0, %v5141
      %v5143 = vpop.f32.mrb[0].mxu0
      %v5144 = vadd.f32 0.0, %v5143
      %v5145 = vpop.f32.mrb[0].mxu0
      %v5146 = vadd.f32 0.0, %v5145
      %v5147 = vpop.f32.mrb[0].mxu0
      %v5148 = vadd.f32 0.0, %v5147
      %5149 = vmatprep.mubr.bf16.mxu0 %v5096
      %5150 = vmatmul.mubr.bf16.gmra.mrb[0].mxu0 %v4939
      %v5151 = vpop.f32.mrb[0].mxu0
      %v5152 = vadd.f32 0.0, %v5151
      %v5153 = vpop.f32.mrb[0].mxu0
      %v5154 = vadd.f32 0.0, %v5153
      %v5155 = vpop.f32.mrb[0].mxu0
      %v5156 = vadd.f32 0.0, %v5155
      %v5157 = vpop.f32.mrb[0].mxu0
      %v5158 = vadd.f32 0.0, %v5157
      %5159 = vmatprep.mubr.bf16.mxu0 %v5099
      %5160 = vmatmul.mubr.bf16.gmra.mrb[0].mxu0 %v4955
      %v5161 = vpop.f32.mrb[0].mxu0
      %v5162 = vadd.f32 0.0, %v5161
      %v5163 = vpop.f32.mrb[0].mxu0
      %v5164 = vadd.f32 0.0, %v5163
      %v5165 = vpop.f32.mrb[0].mxu0
      %v5166 = vadd.f32 0.0, %v5165
      %v5167 = vpop.f32.mrb[0].mxu0
      %v5168 = vadd.f32 0.0, %v5167
      %5169 = vmatprep.mubr.bf16.mxu0 %v5102
      %5170 = vmatmul.mubr.bf16.gmra.mrb[0].mxu0 %v4971
      %v5171 = vpop.f32.mrb[0].mxu0
      %v5172 = vadd.f32 0.0, %v5171
      %v5173 = vpop.f32.mrb[0].mxu0
      %v5174 = vadd.f32 0.0, %v5173
      %v5175 = vpop.f32.mrb[0].mxu0
      %v5176 = vadd.f32 0.0, %v5175
      %v5177 = vpop.f32.mrb[0].mxu0
      %v5178 = vadd.f32 0.0, %v5177
      %5179 = vmatprep.mubr.bf16.mxu0 %v5105
      %5180 = vmatmul.mubr.bf16.gmra.mrb[0].mxu0 %v4982
      %v5181 = vpop.f32.mrb[0].mxu0
      %v5182 = vadd.f32 0.0, %v5181
      %v5183 = vpop.f32.mrb[0].mxu0
      %v5184 = vadd.f32 0.0, %v5183
      %v5185 = vpop.f32.mrb[0].mxu0
      %v5186 = vadd.f32 0.0, %v5185
      %v5187 = vpop.f32.mrb[0].mxu0
      %v5188 = vadd.f32 0.0, %v5187
      %5189 = vdwg.mxu0
      %v5210 = vunpack.c.l.b16 %v4866
      %v5211 = vunpack.c.h.b16 %v4866
      %v5212 = vunpack.c.l.b16 %v4867
      %v5213 = vunpack.c.h.b16 %v4867
      %v5214 = vunpack.c.l.b16 %v4868
      %v5215 = vunpack.c.h.b16 %v4868
      %v5216 = vunpack.c.l.b16 %v4869
      %v5217 = vunpack.c.h.b16 %v4869
      %v5218 = vunpack.c.l.b16 %v4870
      %v5219 = vunpack.c.h.b16 %v4870
      %v5220 = vunpack.c.l.b16 %v4871
      %v5221 = vunpack.c.h.b16 %v4871
      %v5222 = vunpack.c.l.b16 %v4872
      %v5223 = vunpack.c.h.b16 %v4872
      %v5224 = vunpack.c.l.b16 %v4873
      %v5225 = vunpack.c.h.b16 %v4873
      %v5226 = vunpack.c.l.b16 %v4874
      %v5227 = vunpack.c.h.b16 %v4874
      %v5228 = vunpack.c.l.b16 %v4875
      %v5229 = vunpack.c.h.b16 %v4875
      %v5230 = vunpack.c.l.b16 %v4876
      %v5231 = vunpack.c.h.b16 %v4876
      %v5232 = vunpack.c.l.b16 %v4877
      %v5233 = vunpack.c.h.b16 %v4877
      %v5234 = vunpack.c.l.b16 %v4878
      %v5235 = vunpack.c.h.b16 %v4878
      %v5236 = vunpack.c.l.b16 %v4879
      %v5237 = vunpack.c.h.b16 %v4879
      %v5238 = vunpack.c.l.b16 %v4880
      %v5239 = vunpack.c.h.b16 %v4880
      %v5240 = vunpack.c.l.b16 %v4881
      %v5241 = vunpack.c.h.b16 %v4881
      %v5242 = vunpack.c.l.b16 %v4882
      %v5243 = vunpack.c.h.b16 %v4882
      %v5244 = vunpack.c.l.b16 %v4883
      %v5245 = vunpack.c.h.b16 %v4883
      %v5246 = vunpack.c.l.b16 %v4884
      %v5247 = vunpack.c.h.b16 %v4884
      %v5248 = vunpack.c.l.b16 %v4885
      %v5249 = vunpack.c.h.b16 %v4885
      %v5250 = vpack.c.b16 %v5212, %v5210
      %v5251 = vpack.c.b16 %v5213, %v5211
      %v5252 = vpack.c.b16 %v5216, %v5214
      %v5253 = vpack.c.b16 %v5217, %v5215
      %v5254 = vpack.c.b16 %v5220, %v5218
      %v5255 = vpack.c.b16 %v5221, %v5219
      %v5256 = vpack.c.b16 %v5224, %v5222
      %v5257 = vpack.c.b16 %v5225, %v5223
      %v5258 = vpack.c.b16 %v5228, %v5226
      %v5259 = vpack.c.b16 %v5229, %v5227
      %v5260 = vpack.c.b16 %v5232, %v5230
      %v5261 = vpack.c.b16 %v5233, %v5231
      %v5262 = vpack.c.b16 %v5236, %v5234
      %v5263 = vpack.c.b16 %v5237, %v5235
      %v5264 = vpack.c.b16 %v5240, %v5238
      %v5265 = vpack.c.b16 %v5241, %v5239
      %v5266 = vpack.c.b16 %v5244, %v5242
      %v5267 = vpack.c.b16 %v5245, %v5243
      %v5268 = vpack.c.b16 %v5248, %v5246
      %v5269 = vpack.c.b16 %v5249, %v5247
      %v5290 = vsel %vm5091, %v4853, 0
      %v5292 = vsel %vm5091, %v4855, 0
      %v5294 = vsel %vm5091, %v4857, 0
      %v5296 = vsel %vm5091, %v4859, 0
      %v5298 = vsel %vm5091, %v4861, 0
      %5300 = vmatprep.subr.bf16.mxu0 %v5251
      %5301 = vmatpush1.bf16.msra.mxu0 %v5250
      %5302 = vmatprep.subr.bf16.mxu0 %v5253
      %5303 = vmatpush1.bf16.msra.mxu0 %v5252
      %5304 = vmatprep.subr.bf16.mxu0 %v5255
      %5305 = vmatpush1.bf16.msra.mxu0 %v5254
      %5306 = vmatprep.subr.bf16.mxu0 %v5257
      %5307 = vmatpush1.bf16.msra.mxu0 %v5256
      %5308 = vmatprep.subr.bf16.mxu0 %v5259
      %5309 = vmatpush1.bf16.msra.mxu0 %v5258
      %5310 = vmatprep.subr.bf16.mxu0 %v5261
      %5311 = vmatpush1.bf16.msra.mxu0 %v5260
      %5312 = vmatprep.subr.bf16.mxu0 %v5263
      %5313 = vmatpush1.bf16.msra.mxu0 %v5262
      %5314 = vmatprep.subr.bf16.mxu0 %v5265
      %5315 = vmatpush1.bf16.msra.mxu0 %v5264
      %5316 = vmatprep.subr.bf16.mxu0 %v5267
      %5317 = vmatpush1.bf16.msra.mxu0 %v5266
      %5318 = vmatprep.subr.bf16.mxu0 %v5269
      %5319 = vmatpush1.bf16.msra.mxu0 %v5268
      %5320 = vmatprep.subr.bf16.mxu0 0
      %5321 = vmatpush1.bf16.msra.mxu0 0
      %5322 = vmatprep.subr.bf16.mxu0 0
      %5323 = vmatpush1.bf16.msra.mxu0 0
      %5324 = vmatprep.subr.bf16.mxu0 0
      %5325 = vmatpush1.bf16.msra.mxu0 0
      %5326 = vmatprep.subr.bf16.mxu0 0
      %5327 = vmatpush1.bf16.msra.mxu0 0
      %5328 = vmatprep.subr.bf16.mxu0 0
      %5329 = vmatpush1.bf16.msra.mxu0 0
      %5330 = vmatprep.subr.bf16.mxu0 0
      %5331 = vmatpush1.bf16.msra.mxu0 0
      %5332 = vmatprep.mubr.bf16.mxu0 %v5290
      %5333 = vmatmul.mubr.bf16.gmra.mrb[0].mxu0 %v4852
      %v5334 = vpop.f32.mrb[0].mxu0
      %v5335 = vadd.f32 %v5142, %v5334
      %v5336 = vpop.f32.mrb[0].mxu0
      %v5337 = vadd.f32 %v5144, %v5336
      %v5338 = vpop.f32.mrb[0].mxu0
      %v5339 = vadd.f32 %v5146, %v5338
      %v5340 = vpop.f32.mrb[0].mxu0
      %v5341 = vadd.f32 %v5148, %v5340
      %5342 = vmatprep.mubr.bf16.mxu0 %v5292
      %5343 = vmatmul.mubr.bf16.gmra.mrb[0].mxu0 %v4854
      %v5344 = vpop.f32.mrb[0].mxu0
      %v5345 = vadd.f32 %v5152, %v5344
      %v5346 = vpop.f32.mrb[0].mxu0
      %v5347 = vadd.f32 %v5154, %v5346
      %v5348 = vpop.f32.mrb[0].mxu0
      %v5349 = vadd.f32 %v5156, %v5348
      %v5350 = vpop.f32.mrb[0].mxu0
      %v5351 = vadd.f32 %v5158, %v5350
      %5352 = vmatprep.mubr.bf16.mxu0 %v5294
      %5353 = vmatmul.mubr.bf16.gmra.mrb[0].mxu0 %v4856
      %v5354 = vpop.f32.mrb[0].mxu0
      %v5355 = vadd.f32 %v5162, %v5354
      %v5356 = vpop.f32.mrb[0].mxu0
      %v5357 = vadd.f32 %v5164, %v5356
      %v5358 = vpop.f32.mrb[0].mxu0
      %v5359 = vadd.f32 %v5166, %v5358
      %v5360 = vpop.f32.mrb[0].mxu0
      %v5361 = vadd.f32 %v5168, %v5360
      %5362 = vmatprep.mubr.bf16.mxu0 %v5296
      %5363 = vmatmul.mubr.bf16.gmra.mrb[0].mxu0 %v4858
      %v5364 = vpop.f32.mrb[0].mxu0
      %v5365 = vadd.f32 %v5172, %v5364
      %v5366 = vpop.f32.mrb[0].mxu0
      %v5367 = vadd.f32 %v5174, %v5366
      %v5368 = vpop.f32.mrb[0].mxu0
      %v5369 = vadd.f32 %v5176, %v5368
      %v5370 = vpop.f32.mrb[0].mxu0
      %v5371 = vadd.f32 %v5178, %v5370
      %5372 = vmatprep.mubr.bf16.mxu0 %v5298
      %5373 = vmatmul.mubr.bf16.gmra.mrb[0].mxu0 %v4860
      %v5374 = vpop.f32.mrb[0].mxu0
      %v5375 = vadd.f32 %v5182, %v5374
      %v5376 = vpop.f32.mrb[0].mxu0
      %v5377 = vadd.f32 %v5184, %v5376
      %v5378 = vpop.f32.mrb[0].mxu0
      %v5379 = vadd.f32 %v5186, %v5378
      %v5380 = vpop.f32.mrb[0].mxu0
      %v5381 = vadd.f32 %v5188, %v5380
      %5382 = vdwg.mxu0
      %s5383 = scalar_lea.vmem %s7, 320
      %v5384 = vld [vmem:[%s5383] sm:$0xff]
      %v5385 = vld [vmem:[%s5383 + $0x8] sm:$0xff]
      %v5386 = vld [vmem:[%s5383 + $0x10] sm:$0xff]
      %v5387 = vld [vmem:[%s5383 + $0x18] sm:$0xff]
      %v5388 = vld [vmem:[%s5383 + $0x20] sm:$0xff]
      %v5389 = vld [vmem:[%s5383 + $0x28] sm:$0xff]
      %v5390 = vld [vmem:[%s5383 + $0x30] sm:$0xff]
      %v5391 = vld [vmem:[%s5383 + $0x38] sm:$0xff]
      %v5392 = vld [vmem:[%s5383 + $0x40] sm:$0xff]
      %v5393 = vld [vmem:[%s5383 + $0x48] sm:$0xff]
      %v5394 = vld [vmem:[%s5383 + $0x50] sm:$0xff]
      %v5395 = vld [vmem:[%s5383 + $0x58] sm:$0xff]
      %v5396 = vld [vmem:[%s5383 + $0x60] sm:$0xff]
      %v5397 = vld [vmem:[%s5383 + $0x68] sm:$0xff]
      %v5398 = vld [vmem:[%s5383 + $0x70] sm:$0xff]
      %v5399 = vld [vmem:[%s5383 + $0x78] sm:$0xff]
      %v5400 = vld [vmem:[%s5383 + $0x80] sm:$0xff]
      %v5401 = vld [vmem:[%s5383 + $0x88] sm:$0xff]
      %v5402 = vld [vmem:[%s5383 + $0x90] sm:$0xff]
      %v5403 = vld [vmem:[%s5383 + $0x98] sm:$0xff]
      %vm5414 = vcmask 1046528
      %v5415 = vrot.slane %v4852, 1
      %v5416 = vrot.slane %v4854, 1
      %v5417 = vsel %vm5414, %v5415, %v5416
      %v5418 = vrot.slane %v4853, 1
      %v5419 = vrot.slane %v4855, 1
      %v5420 = vsel %vm5414, %v5418, %v5419
      %v5421 = vrot.slane %v4856, 1
      %v5422 = vsel %vm5414, %v5416, %v5421
      %v5423 = vrot.slane %v4857, 1
      %v5424 = vsel %vm5414, %v5419, %v5423
      %v5425 = vrot.slane %v4858, 1
      %v5426 = vsel %vm5414, %v5421, %v5425
      %v5427 = vrot.slane %v4859, 1
      %v5428 = vsel %vm5414, %v5423, %v5427
      %v5429 = vrot.slane %v4860, 1
      %v5430 = vsel %vm5414, %v5425, %v5429
      %v5431 = vrot.slane %v4861, 1
      %v5432 = vsel %vm5414, %v5427, %v5431
      %v5458 = vunpack.c.l.b16 %v5384
      %v5459 = vunpack.c.h.b16 %v5384
      %v5460 = vunpack.c.l.b16 %v5385
      %v5461 = vunpack.c.h.b16 %v5385
      %v5462 = vunpack.c.l.b16 %v5386
      %v5463 = vunpack.c.h.b16 %v5386
      %v5464 = vunpack.c.l.b16 %v5387
      %v5465 = vunpack.c.h.b16 %v5387
      %v5466 = vunpack.c.l.b16 %v5388
      %v5467 = vunpack.c.h.b16 %v5388
      %v5468 = vunpack.c.l.b16 %v5389
      %v5469 = vunpack.c.h.b16 %v5389
      %v5470 = vunpack.c.l.b16 %v5390
      %v5471 = vunpack.c.h.b16 %v5390
      %v5472 = vunpack.c.l.b16 %v5391
      %v5473 = vunpack.c.h.b16 %v5391
      %v5474 = vunpack.c.l.b16 %v5392
      %v5475 = vunpack.c.h.b16 %v5392
      %v5476 = vunpack.c.l.b16 %v5393
      %v5477 = vunpack.c.h.b16 %v5393
      %v5478 = vunpack.c.l.b16 %v5394
      %v5479 = vunpack.c.h.b16 %v5394
      %v5480 = vunpack.c.l.b16 %v5395
      %v5481 = vunpack.c.h.b16 %v5395
      %v5482 = vunpack.c.l.b16 %v5396
      %v5483 = vunpack.c.h.b16 %v5396
      %v5484 = vunpack.c.l.b16 %v5397
      %v5485 = vunpack.c.h.b16 %v5397
      %v5486 = vunpack.c.l.b16 %v5398
      %v5487 = vunpack.c.h.b16 %v5398
      %v5488 = vunpack.c.l.b16 %v5399
      %v5489 = vunpack.c.h.b16 %v5399
      %v5490 = vunpack.c.l.b16 %v5400
      %v5491 = vunpack.c.h.b16 %v5400
      %v5492 = vunpack.c.l.b16 %v5401
      %v5493 = vunpack.c.h.b16 %v5401
      %v5494 = vunpack.c.l.b16 %v5402
      %v5495 = vunpack.c.h.b16 %v5402
      %v5496 = vunpack.c.l.b16 %v5403
      %v5497 = vunpack.c.h.b16 %v5403
      %v5498 = vpack.c.b16 %v5460, %v5458
      %v5499 = vpack.c.b16 %v5461, %v5459
      %v5500 = vpack.c.b16 %v5464, %v5462
      %v5501 = vpack.c.b16 %v5465, %v5463
      %v5502 = vpack.c.b16 %v5468, %v5466
      %v5503 = vpack.c.b16 %v5469, %v5467
      %v5504 = vpack.c.b16 %v5472, %v5470
      %v5505 = vpack.c.b16 %v5473, %v5471
      %v5506 = vpack.c.b16 %v5476, %v5474
      %v5507 = vpack.c.b16 %v5477, %v5475
      %v5508 = vpack.c.b16 %v5480, %v5478
      %v5509 = vpack.c.b16 %v5481, %v5479
      %v5510 = vpack.c.b16 %v5484, %v5482
      %v5511 = vpack.c.b16 %v5485, %v5483
      %v5512 = vpack.c.b16 %v5488, %v5486
      %v5513 = vpack.c.b16 %v5489, %v5487
      %v5514 = vpack.c.b16 %v5492, %v5490
      %v5515 = vpack.c.b16 %v5493, %v5491
      %v5516 = vpack.c.b16 %v5496, %v5494
      %v5517 = vpack.c.b16 %v5497, %v5495
      %v5539 = vsel %vm5091, %v5420, 0
      %v5542 = vsel %vm5091, %v5424, 0
      %v5545 = vsel %vm5091, %v5428, 0
      %v5548 = vsel %vm5091, %v5432, 0
      %v5551 = vsel %vm5091, %v5431, 0
      %5553 = vmatprep.subr.bf16.mxu0 %v5499
      %5554 = vmatpush1.bf16.msra.mxu0 %v5498
      %5555 = vmatprep.subr.bf16.mxu0 %v5501
      %5556 = vmatpush1.bf16.msra.mxu0 %v5500
      %5557 = vmatprep.subr.bf16.mxu0 %v5503
      %5558 = vmatpush1.bf16.msra.mxu0 %v5502
      %5559 = vmatprep.subr.bf16.mxu0 %v5505
      %5560 = vmatpush1.bf16.msra.mxu0 %v5504
      %5561 = vmatprep.subr.bf16.mxu0 %v5507
      %5562 = vmatpush1.bf16.msra.mxu0 %v5506
      %5563 = vmatprep.subr.bf16.mxu0 %v5509
      %5564 = vmatpush1.bf16.msra.mxu0 %v5508
      %5565 = vmatprep.subr.bf16.mxu0 %v5511
      %5566 = vmatpush1.bf16.msra.mxu0 %v5510
      %5567 = vmatprep.subr.bf16.mxu0 %v5513
      %5568 = vmatpush1.bf16.msra.mxu0 %v5512
      %5569 = vmatprep.subr.bf16.mxu0 %v5515
      %5570 = vmatpush1.bf16.msra.mxu0 %v5514
      %5571 = vmatprep.subr.bf16.mxu0 %v5517
      %5572 = vmatpush1.bf16.msra.mxu0 %v5516
      %5573 = vmatprep.subr.bf16.mxu0 0
      %5574 = vmatpush1.bf16.msra.mxu0 0
      %5575 = vmatprep.subr.bf16.mxu0 0
      %5576 = vmatpush1.bf16.msra.mxu0 0
      %5577 = vmatprep.subr.bf16.mxu0 0
      %5578 = vmatpush1.bf16.msra.mxu0 0
      %5579 = vmatprep.subr.bf16.mxu0 0
      %5580 = vmatpush1.bf16.msra.mxu0 0
      %5581 = vmatprep.subr.bf16.mxu0 0
      %5582 = vmatpush1.bf16.msra.mxu0 0
      %5583 = vmatprep.subr.bf16.mxu0 0
      %5584 = vmatpush1.bf16.msra.mxu0 0
      %5585 = vmatprep.mubr.bf16.mxu0 %v5539
      %5586 = vmatmul.mubr.bf16.gmra.mrb[0].mxu0 %v5417
      %v5587 = vpop.f32.mrb[0].mxu0
      %v5588 = vadd.f32 0.0, %v5587
      %v5589 = vpop.f32.mrb[0].mxu0
      %v5590 = vadd.f32 0.0, %v5589
      %v5591 = vpop.f32.mrb[0].mxu0
      %v5592 = vadd.f32 0.0, %v5591
      %v5593 = vpop.f32.mrb[0].mxu0
      %v5594 = vadd.f32 0.0, %v5593
      %5595 = vmatprep.mubr.bf16.mxu0 %v5542
      %5596 = vmatmul.mubr.bf16.gmra.mrb[0].mxu0 %v5422
      %v5597 = vpop.f32.mrb[0].mxu0
      %v5598 = vadd.f32 0.0, %v5597
      %v5599 = vpop.f32.mrb[0].mxu0
      %v5600 = vadd.f32 0.0, %v5599
      %v5601 = vpop.f32.mrb[0].mxu0
      %v5602 = vadd.f32 0.0, %v5601
      %v5603 = vpop.f32.mrb[0].mxu0
      %v5604 = vadd.f32 0.0, %v5603
      %5605 = vmatprep.mubr.bf16.mxu0 %v5545
      %5606 = vmatmul.mubr.bf16.gmra.mrb[0].mxu0 %v5426
      %v5607 = vpop.f32.mrb[0].mxu0
      %v5608 = vadd.f32 0.0, %v5607
      %v5609 = vpop.f32.mrb[0].mxu0
      %v5610 = vadd.f32 0.0, %v5609
      %v5611 = vpop.f32.mrb[0].mxu0
      %v5612 = vadd.f32 0.0, %v5611
      %v5613 = vpop.f32.mrb[0].mxu0
      %v5614 = vadd.f32 0.0, %v5613
      %5615 = vmatprep.mubr.bf16.mxu0 %v5548
      %5616 = vmatmul.mubr.bf16.gmra.mrb[0].mxu0 %v5430
      %v5617 = vpop.f32.mrb[0].mxu0
      %v5618 = vadd.f32 0.0, %v5617
      %v5619 = vpop.f32.mrb[0].mxu0
      %v5620 = vadd.f32 0.0, %v5619
      %v5621 = vpop.f32.mrb[0].mxu0
      %v5622 = vadd.f32 0.0, %v5621
      %v5623 = vpop.f32.mrb[0].mxu0
      %v5624 = vadd.f32 0.0, %v5623
      %5625 = vmatprep.mubr.bf16.mxu0 %v5551
      %5626 = vmatmul.mubr.bf16.gmra.mrb[0].mxu0 %v5429
      %v5627 = vpop.f32.mrb[0].mxu0
      %v5628 = vadd.f32 0.0, %v5627
      %v5629 = vpop.f32.mrb[0].mxu0
      %v5630 = vadd.f32 0.0, %v5629
      %v5631 = vpop.f32.mrb[0].mxu0
      %v5632 = vadd.f32 0.0, %v5631
      %v5633 = vpop.f32.mrb[0].mxu0
      %v5634 = vadd.f32 0.0, %v5633
      %5635 = vdwg.mxu0
      %v5636 = vadd.f32 %v5335, %v5588
      %v5637 = vadd.f32 %v5337, %v5590
      %v5638 = vadd.f32 %v5339, %v5592
      %v5639 = vadd.f32 %v5341, %v5594
      %v5640 = vadd.f32 %v5345, %v5598
      %v5641 = vadd.f32 %v5347, %v5600
      %v5642 = vadd.f32 %v5349, %v5602
      %v5643 = vadd.f32 %v5351, %v5604
      %v5644 = vadd.f32 %v5355, %v5608
      %v5645 = vadd.f32 %v5357, %v5610
      %v5646 = vadd.f32 %v5359, %v5612
      %v5647 = vadd.f32 %v5361, %v5614
      %v5648 = vadd.f32 %v5365, %v5618
      %v5649 = vadd.f32 %v5367, %v5620
      %v5650 = vadd.f32 %v5369, %v5622
      %v5651 = vadd.f32 %v5371, %v5624
      %v5652 = vadd.f32 %v5375, %v5628
      %v5653 = vadd.f32 %v5377, %v5630
      %v5654 = vadd.f32 %v5379, %v5632
      %v5655 = vadd.f32 %v5381, %v5634
      %s5656 = scalar_lea.vmem %s7, 480
      %v5657 = vld [vmem:[%s5656] sm:$0xff]
      %v5658 = vld [vmem:[%s5656 + $0x8] sm:$0xff]
      %v5659 = vld [vmem:[%s5656 + $0x10] sm:$0xff]
      %v5660 = vld [vmem:[%s5656 + $0x18] sm:$0xff]
      %v5661 = vld [vmem:[%s5656 + $0x20] sm:$0xff]
      %v5662 = vld [vmem:[%s5656 + $0x28] sm:$0xff]
      %v5663 = vld [vmem:[%s5656 + $0x30] sm:$0xff]
      %v5664 = vld [vmem:[%s5656 + $0x38] sm:$0xff]
      %v5665 = vld [vmem:[%s5656 + $0x40] sm:$0xff]
      %v5666 = vld [vmem:[%s5656 + $0x48] sm:$0xff]
      %v5667 = vld [vmem:[%s5656 + $0x50] sm:$0xff]
      %v5668 = vld [vmem:[%s5656 + $0x58] sm:$0xff]
      %v5669 = vld [vmem:[%s5656 + $0x60] sm:$0xff]
      %v5670 = vld [vmem:[%s5656 + $0x68] sm:$0xff]
      %v5671 = vld [vmem:[%s5656 + $0x70] sm:$0xff]
      %v5672 = vld [vmem:[%s5656 + $0x78] sm:$0xff]
      %v5673 = vld [vmem:[%s5656 + $0x80] sm:$0xff]
      %v5674 = vld [vmem:[%s5656 + $0x88] sm:$0xff]
      %v5675 = vld [vmem:[%s5656 + $0x90] sm:$0xff]
      %v5676 = vld [vmem:[%s5656 + $0x98] sm:$0xff]
      %vm5679 = vcmask 1042432
      %v5680 = vrot.slane %v4852, 5
      %v5681 = vrot.slane %v4854, 5
      %v5682 = vsel %vm5679, %v5680, %v5681
      %v5683 = vrot.slane %v4853, 5
      %v5684 = vrot.slane %v4855, 5
      %v5685 = vsel %vm5679, %v5683, %v5684
      %v5686 = vrot.slane %v4856, 5
      %v5687 = vsel %vm5679, %v5681, %v5686
      %v5688 = vrot.slane %v4857, 5
      %v5689 = vsel %vm5679, %v5684, %v5688
      %v5690 = vrot.slane %v4858, 5
      %v5691 = vsel %vm5679, %v5686, %v5690
      %v5692 = vrot.slane %v4859, 5
      %v5693 = vsel %vm5679, %v5688, %v5692
      %v5694 = vrot.slane %v4860, 5
      %v5695 = vsel %vm5679, %v5690, %v5694
      %v5696 = vrot.slane %v4861, 5
      %v5697 = vsel %vm5679, %v5692, %v5696
      %v5698 = vrot.slane %v4862, 5
      %v5699 = vsel %vm5679, %v5694, %v5698
      %v5700 = vrot.slane %v4863, 5
      %v5701 = vsel %vm5679, %v5696, %v5700
      %v5727 = vunpack.c.l.b16 %v5657
      %v5728 = vunpack.c.h.b16 %v5657
      %v5729 = vunpack.c.l.b16 %v5658
      %v5730 = vunpack.c.h.b16 %v5658
      %v5731 = vunpack.c.l.b16 %v5659
      %v5732 = vunpack.c.h.b16 %v5659
      %v5733 = vunpack.c.l.b16 %v5660
      %v5734 = vunpack.c.h.b16 %v5660
      %v5735 = vunpack.c.l.b16 %v5661
      %v5736 = vunpack.c.h.b16 %v5661
      %v5737 = vunpack.c.l.b16 %v5662
      %v5738 = vunpack.c.h.b16 %v5662
      %v5739 = vunpack.c.l.b16 %v5663
      %v5740 = vunpack.c.h.b16 %v5663
      %v5741 = vunpack.c.l.b16 %v5664
      %v5742 = vunpack.c.h.b16 %v5664
      %v5743 = vunpack.c.l.b16 %v5665
      %v5744 = vunpack.c.h.b16 %v5665
      %v5745 = vunpack.c.l.b16 %v5666
      %v5746 = vunpack.c.h.b16 %v5666
      %v5747 = vunpack.c.l.b16 %v5667
      %v5748 = vunpack.c.h.b16 %v5667
      %v5749 = vunpack.c.l.b16 %v5668
      %v5750 = vunpack.c.h.b16 %v5668
      %v5751 = vunpack.c.l.b16 %v5669
      %v5752 = vunpack.c.h.b16 %v5669
      %v5753 = vunpack.c.l.b16 %v5670
      %v5754 = vunpack.c.h.b16 %v5670
      %v5755 = vunpack.c.l.b16 %v5671
      %v5756 = vunpack.c.h.b16 %v5671
      %v5757 = vunpack.c.l.b16 %v5672
      %v5758 = vunpack.c.h.b16 %v5672
      %v5759 = vunpack.c.l.b16 %v5673
      %v5760 = vunpack.c.h.b16 %v5673
      %v5761 = vunpack.c.l.b16 %v5674
      %v5762 = vunpack.c.h.b16 %v5674
      %v5763 = vunpack.c.l.b16 %v5675
      %v5764 = vunpack.c.h.b16 %v5675
      %v5765 = vunpack.c.l.b16 %v5676
      %v5766 = vunpack.c.h.b16 %v5676
      %v5767 = vpack.c.b16 %v5729, %v5727
      %v5768 = vpack.c.b16 %v5730, %v5728
      %v5769 = vpack.c.b16 %v5733, %v5731
      %v5770 = vpack.c.b16 %v5734, %v5732
      %v5771 = vpack.c.b16 %v5737, %v5735
      %v5772 = vpack.c.b16 %v5738, %v5736
      %v5773 = vpack.c.b16 %v5741, %v5739
      %v5774 = vpack.c.b16 %v5742, %v5740
      %v5775 = vpack.c.b16 %v5745, %v5743
      %v5776 = vpack.c.b16 %v5746, %v5744
      %v5777 = vpack.c.b16 %v5749, %v5747
      %v5778 = vpack.c.b16 %v5750, %v5748
      %v5779 = vpack.c.b16 %v5753, %v5751
      %v5780 = vpack.c.b16 %v5754, %v5752
      %v5781 = vpack.c.b16 %v5757, %v5755
      %v5782 = vpack.c.b16 %v5758, %v5756
      %v5783 = vpack.c.b16 %v5761, %v5759
      %v5784 = vpack.c.b16 %v5762, %v5760
      %v5785 = vpack.c.b16 %v5765, %v5763
      %v5786 = vpack.c.b16 %v5766, %v5764
      %v5808 = vsel %vm5091, %v5685, 0
      %v5811 = vsel %vm5091, %v5689, 0
      %v5814 = vsel %vm5091, %v5693, 0
      %v5817 = vsel %vm5091, %v5697, 0
      %v5820 = vsel %vm5091, %v5701, 0
      %5822 = vmatprep.subr.bf16.mxu0 %v5768
      %5823 = vmatpush1.bf16.msra.mxu0 %v5767
      %5824 = vmatprep.subr.bf16.mxu0 %v5770
      %5825 = vmatpush1.bf16.msra.mxu0 %v5769
      %5826 = vmatprep.subr.bf16.mxu0 %v5772
      %5827 = vmatpush1.bf16.msra.mxu0 %v5771
      %5828 = vmatprep.subr.bf16.mxu0 %v5774
      %5829 = vmatpush1.bf16.msra.mxu0 %v5773
      %5830 = vmatprep.subr.bf16.mxu0 %v5776
      %5831 = vmatpush1.bf16.msra.mxu0 %v5775
      %5832 = vmatprep.subr.bf16.mxu0 %v5778
      %5833 = vmatpush1.bf16.msra.mxu0 %v5777
      %5834 = vmatprep.subr.bf16.mxu0 %v5780
      %5835 = vmatpush1.bf16.msra.mxu0 %v5779
      %5836 = vmatprep.subr.bf16.mxu0 %v5782
      %5837 = vmatpush1.bf16.msra.mxu0 %v5781
      %5838 = vmatprep.subr.bf16.mxu0 %v5784
      %5839 = vmatpush1.bf16.msra.mxu0 %v5783
      %5840 = vmatprep.subr.bf16.mxu0 %v5786
      %5841 = vmatpush1.bf16.msra.mxu0 %v5785
      %5842 = vmatprep.subr.bf16.mxu0 0
      %5843 = vmatpush1.bf16.msra.mxu0 0
      %5844 = vmatprep.subr.bf16.mxu0 0
      %5845 = vmatpush1.bf16.msra.mxu0 0
      %5846 = vmatprep.subr.bf16.mxu0 0
      %5847 = vmatpush1.bf16.msra.mxu0 0
      %5848 = vmatprep.subr.bf16.mxu0 0
      %5849 = vmatpush1.bf16.msra.mxu0 0
      %5850 = vmatprep.subr.bf16.mxu0 0
      %5851 = vmatpush1.bf16.msra.mxu0 0
      %5852 = vmatprep.subr.bf16.mxu0 0
      %5853 = vmatpush1.bf16.msra.mxu0 0
      %5854 = vmatprep.mubr.bf16.mxu0 %v5808
      %5855 = vmatmul.mubr.bf16.gmra.mrb[0].mxu0 %v5682
      %v5856 = vpop.f32.mrb[0].mxu0
      %v5857 = vadd.f32 0.0, %v5856
      %v5858 = vpop.f32.mrb[0].mxu0
      %v5859 = vadd.f32 0.0, %v5858
      %v5860 = vpop.f32.mrb[0].mxu0
      %v5861 = vadd.f32 0.0, %v5860
      %v5862 = vpop.f32.mrb[0].mxu0
      %v5863 = vadd.f32 0.0, %v5862
      %5864 = vmatprep.mubr.bf16.mxu0 %v5811
      %5865 = vmatmul.mubr.bf16.gmra.mrb[0].mxu0 %v5687
      %v5866 = vpop.f32.mrb[0].mxu0
      %v5867 = vadd.f32 0.0, %v5866
      %v5868 = vpop.f32.mrb[0].mxu0
      %v5869 = vadd.f32 0.0, %v5868
      %v5870 = vpop.f32.mrb[0].mxu0
      %v5871 = vadd.f32 0.0, %v5870
      %v5872 = vpop.f32.mrb[0].mxu0
      %v5873 = vadd.f32 0.0, %v5872
      %5874 = vmatprep.mubr.bf16.mxu0 %v5814
      %5875 = vmatmul.mubr.bf16.gmra.mrb[0].mxu0 %v5691
      %v5876 = vpop.f32.mrb[0].mxu0
      %v5877 = vadd.f32 0.0, %v5876
      %v5878 = vpop.f32.mrb[0].mxu0
      %v5879 = vadd.f32 0.0, %v5878
      %v5880 = vpop.f32.mrb[0].mxu0
      %v5881 = vadd.f32 0.0, %v5880
      %v5882 = vpop.f32.mrb[0].mxu0
      %v5883 = vadd.f32 0.0, %v5882
      %5884 = vmatprep.mubr.bf16.mxu0 %v5817
      %5885 = vmatmul.mubr.bf16.gmra.mrb[0].mxu0 %v5695
      %v5886 = vpop.f32.mrb[0].mxu0
      %v5887 = vadd.f32 0.0, %v5886
      %v5888 = vpop.f32.mrb[0].mxu0
      %v5889 = vadd.f32 0.0, %v5888
      %v5890 = vpop.f32.mrb[0].mxu0
      %v5891 = vadd.f32 0.0, %v5890
      %v5892 = vpop.f32.mrb[0].mxu0
      %v5893 = vadd.f32 0.0, %v5892
      %5894 = vmatprep.mubr.bf16.mxu0 %v5820
      %5895 = vmatmul.mubr.bf16.gmra.mrb[0].mxu0 %v5699
      %v5896 = vpop.f32.mrb[0].mxu0
      %v5897 = vadd.f32 0.0, %v5896
      %v5898 = vpop.f32.mrb[0].mxu0
      %v5899 = vadd.f32 0.0, %v5898
      %v5900 = vpop.f32.mrb[0].mxu0
      %v5901 = vadd.f32 0.0, %v5900
      %v5902 = vpop.f32.mrb[0].mxu0
      %v5903 = vadd.f32 0.0, %v5902
      %5904 = vdwg.mxu0
      %v5905 = vadd.f32 %v5636, %v5857
      %v5906 = vadd.f32 %v5637, %v5859
      %v5907 = vadd.f32 %v5638, %v5861
      %v5908 = vadd.f32 %v5639, %v5863
      %v5909 = vadd.f32 %v5640, %v5867
      %v5910 = vadd.f32 %v5641, %v5869
      %v5911 = vadd.f32 %v5642, %v5871
      %v5912 = vadd.f32 %v5643, %v5873
      %v5913 = vadd.f32 %v5644, %v5877
      %v5914 = vadd.f32 %v5645, %v5879
      %v5915 = vadd.f32 %v5646, %v5881
      %v5916 = vadd.f32 %v5647, %v5883
      %v5917 = vadd.f32 %v5648, %v5887
      %v5918 = vadd.f32 %v5649, %v5889
      %v5919 = vadd.f32 %v5650, %v5891
      %v5920 = vadd.f32 %v5651, %v5893
      %v5921 = vadd.f32 %v5652, %v5897
      %v5922 = vadd.f32 %v5653, %v5899
      %v5923 = vadd.f32 %v5654, %v5901
      %v5924 = vadd.f32 %v5655, %v5903
      %s5925 = scalar_lea.vmem %s7, 640
      %v5926 = vld [vmem:[%s5925] sm:$0xff]
      %v5927 = vld [vmem:[%s5925 + $0x8] sm:$0xff]
      %v5928 = vld [vmem:[%s5925 + $0x10] sm:$0xff]
      %v5929 = vld [vmem:[%s5925 + $0x18] sm:$0xff]
      %v5930 = vld [vmem:[%s5925 + $0x20] sm:$0xff]
      %v5931 = vld [vmem:[%s5925 + $0x28] sm:$0xff]
      %v5932 = vld [vmem:[%s5925 + $0x30] sm:$0xff]
      %v5933 = vld [vmem:[%s5925 + $0x38] sm:$0xff]
      %v5934 = vld [vmem:[%s5925 + $0x40] sm:$0xff]
      %v5935 = vld [vmem:[%s5925 + $0x48] sm:$0xff]
      %v5936 = vld [vmem:[%s5925 + $0x50] sm:$0xff]
      %v5937 = vld [vmem:[%s5925 + $0x58] sm:$0xff]
      %v5938 = vld [vmem:[%s5925 + $0x60] sm:$0xff]
      %v5939 = vld [vmem:[%s5925 + $0x68] sm:$0xff]
      %v5940 = vld [vmem:[%s5925 + $0x70] sm:$0xff]
      %v5941 = vld [vmem:[%s5925 + $0x78] sm:$0xff]
      %v5942 = vld [vmem:[%s5925 + $0x80] sm:$0xff]
      %v5943 = vld [vmem:[%s5925 + $0x88] sm:$0xff]
      %v5944 = vld [vmem:[%s5925 + $0x90] sm:$0xff]
      %v5945 = vld [vmem:[%s5925 + $0x98] sm:$0xff]
      %vm5946 = vsmask.f32 2304
      %v5947 = vrot.slane %v4909, 5
      %v5948 = vrot.slane %v4911, 6
      %v5949 = vor.u32 %v5947, %v5948
      %v5950 = vrot.slane %v4932, 5
      %v5951 = vrot.slane %v4916, 6
      %v5952 = vor.u32 %v5950, %v5951
      %v5953 = vsel %vm5946, %v5949, %v5952
      %v5954 = vrot.slane %v4921, 5
      %v5955 = vrot.slane %v4923, 6
      %v5956 = vor.u32 %v5954, %v5955
      %v5957 = vrot.slane %v4940, 5
      %v5958 = vrot.slane %v4928, 6
      %v5959 = vor.u32 %v5957, %v5958
      %v5960 = vsel %vm5946, %v5956, %v5959
      %v5961 = vrot.slane %v4948, 5
      %v5962 = vrot.slane %v4936, 6
      %v5963 = vor.u32 %v5961, %v5962
      %v5964 = vsel %vm5946, %v5952, %v5963
      %v5965 = vrot.slane %v4956, 5
      %v5966 = vrot.slane %v4944, 6
      %v5967 = vor.u32 %v5965, %v5966
      %v5968 = vsel %vm5946, %v5959, %v5967
      %v5969 = vrot.slane %v4964, 5
      %v5970 = vrot.slane %v4952, 6
      %v5971 = vor.u32 %v5969, %v5970
      %v5972 = vsel %vm5946, %v5963, %v5971
      %v5973 = vrot.slane %v4972, 5
      %v5974 = vrot.slane %v4960, 6
      %v5975 = vor.u32 %v5973, %v5974
      %v5976 = vsel %vm5946, %v5967, %v5975
      %v5977 = vrot.slane %v4980, 5
      %v5978 = vrot.slane %v4968, 6
      %v5979 = vor.u32 %v5977, %v5978
      %v5980 = vsel %vm5946, %v5971, %v5979
      %v5981 = vrot.slane %v4983, 5
      %v5982 = vrot.slane %v4976, 6
      %v5983 = vor.u32 %v5981, %v5982
      %v5984 = vsel %vm5946, %v5975, %v5983
      %v5986 = vshrl.u32 %v4862, 16
      %v5988 = vrot.slane %v5986, 5
      %v5989 = vshll.u32 %v4862, 16
      %v5991 = vrot.slane %v5989, 6
      %v5992 = vor.u32 %v5988, %v5991
      %v5993 = vsel %vm5946, %v5979, %v5992
      %v5995 = vshrl.u32 %v4863, 16
      %v5997 = vrot.slane %v5995, 5
      %v5998 = vshll.u32 %v4863, 16
      %v6000 = vrot.slane %v5998, 6
      %v6001 = vor.u32 %v5997, %v6000
      %v6002 = vsel %vm5946, %v5983, %v6001
      %v6028 = vunpack.c.l.b16 %v5926
      %v6029 = vunpack.c.h.b16 %v5926
      %v6030 = vunpack.c.l.b16 %v5927
      %v6031 = vunpack.c.h.b16 %v5927
      %v6032 = vunpack.c.l.b16 %v5928
      %v6033 = vunpack.c.h.b16 %v5928
      %v6034 = vunpack.c.l.b16 %v5929
      %v6035 = vunpack.c.h.b16 %v5929
      %v6036 = vunpack.c.l.b16 %v5930
      %v6037 = vunpack.c.h.b16 %v5930
      %v6038 = vunpack.c.l.b16 %v5931
      %v6039 = vunpack.c.h.b16 %v5931
      %v6040 = vunpack.c.l.b16 %v5932
      %v6041 = vunpack.c.h.b16 %v5932
      %v6042 = vunpack.c.l.b16 %v5933
      %v6043 = vunpack.c.h.b16 %v5933
      %v6044 = vunpack.c.l.b16 %v5934
      %v6045 = vunpack.c.h.b16 %v5934
      %v6046 = vunpack.c.l.b16 %v5935
      %v6047 = vunpack.c.h.b16 %v5935
      %v6048 = vunpack.c.l.b16 %v5936
      %v6049 = vunpack.c.h.b16 %v5936
      %v6050 = vunpack.c.l.b16 %v5937
      %v6051 = vunpack.c.h.b16 %v5937
      %v6052 = vunpack.c.l.b16 %v5938
      %v6053 = vunpack.c.h.b16 %v5938
      %v6054 = vunpack.c.l.b16 %v5939
      %v6055 = vunpack.c.h.b16 %v5939
      %v6056 = vunpack.c.l.b16 %v5940
      %v6057 = vunpack.c.h.b16 %v5940
      %v6058 = vunpack.c.l.b16 %v5941
      %v6059 = vunpack.c.h.b16 %v5941
      %v6060 = vunpack.c.l.b16 %v5942
      %v6061 = vunpack.c.h.b16 %v5942
      %v6062 = vunpack.c.l.b16 %v5943
      %v6063 = vunpack.c.h.b16 %v5943
      %v6064 = vunpack.c.l.b16 %v5944
      %v6065 = vunpack.c.h.b16 %v5944
      %v6066 = vunpack.c.l.b16 %v5945
      %v6067 = vunpack.c.h.b16 %v5945
      %v6068 = vpack.c.b16 %v6030, %v6028
      %v6069 = vpack.c.b16 %v6031, %v6029
      %v6070 = vpack.c.b16 %v6034, %v6032
      %v6071 = vpack.c.b16 %v6035, %v6033
      %v6072 = vpack.c.b16 %v6038, %v6036
      %v6073 = vpack.c.b16 %v6039, %v6037
      %v6074 = vpack.c.b16 %v6042, %v6040
      %v6075 = vpack.c.b16 %v6043, %v6041
      %v6076 = vpack.c.b16 %v6046, %v6044
      %v6077 = vpack.c.b16 %v6047, %v6045
      %v6078 = vpack.c.b16 %v6050, %v6048
      %v6079 = vpack.c.b16 %v6051, %v6049
      %v6080 = vpack.c.b16 %v6054, %v6052
      %v6081 = vpack.c.b16 %v6055, %v6053
      %v6082 = vpack.c.b16 %v6058, %v6056
      %v6083 = vpack.c.b16 %v6059, %v6057
      %v6084 = vpack.c.b16 %v6062, %v6060
      %v6085 = vpack.c.b16 %v6063, %v6061
      %v6086 = vpack.c.b16 %v6066, %v6064
      %v6087 = vpack.c.b16 %v6067, %v6065
      %v6109 = vsel %vm5091, %v5960, 0
      %v6112 = vsel %vm5091, %v5968, 0
      %v6115 = vsel %vm5091, %v5976, 0
      %v6118 = vsel %vm5091, %v5984, 0
      %v6121 = vsel %vm5091, %v6002, 0
      %6123 = vmatprep.subr.bf16.mxu0 %v6069
      %6124 = vmatpush1.bf16.msra.mxu0 %v6068
      %6125 = vmatprep.subr.bf16.mxu0 %v6071
      %6126 = vmatpush1.bf16.msra.mxu0 %v6070
      %6127 = vmatprep.subr.bf16.mxu0 %v6073
      %6128 = vmatpush1.bf16.msra.mxu0 %v6072
      %6129 = vmatprep.subr.bf16.mxu0 %v6075
      %6130 = vmatpush1.bf16.msra.mxu0 %v6074
      %6131 = vmatprep.subr.bf16.mxu0 %v6077
      %6132 = vmatpush1.bf16.msra.mxu0 %v6076
      %6133 = vmatprep.subr.bf16.mxu0 %v6079
      %6134 = vmatpush1.bf16.msra.mxu0 %v6078
      %6135 = vmatprep.subr.bf16.mxu0 %v6081
      %6136 = vmatpush1.bf16.msra.mxu0 %v6080
      %6137 = vmatprep.subr.bf16.mxu0 %v6083
      %6138 = vmatpush1.bf16.msra.mxu0 %v6082
      %6139 = vmatprep.subr.bf16.mxu0 %v6085
      %6140 = vmatpush1.bf16.msra.mxu0 %v6084
      %6141 = vmatprep.subr.bf16.mxu0 %v6087
      %6142 = vmatpush1.bf16.msra.mxu0 %v6086
      %6143 = vmatprep.subr.bf16.mxu0 0
      %6144 = vmatpush1.bf16.msra.mxu0 0
      %6145 = vmatprep.subr.bf16.mxu0 0
      %6146 = vmatpush1.bf16.msra.mxu0 0
      %6147 = vmatprep.subr.bf16.mxu0 0
      %6148 = vmatpush1.bf16.msra.mxu0 0
      %6149 = vmatprep.subr.bf16.mxu0 0
      %6150 = vmatpush1.bf16.msra.mxu0 0
      %6151 = vmatprep.subr.bf16.mxu0 0
      %6152 = vmatpush1.bf16.msra.mxu0 0
      %6153 = vmatprep.subr.bf16.mxu0 0
      %6154 = vmatpush1.bf16.msra.mxu0 0
      %6155 = vmatprep.mubr.bf16.mxu0 %v6109
      %6156 = vmatmul.mubr.bf16.gmra.mrb[0].mxu0 %v5953
      %v6157 = vpop.f32.mrb[0].mxu0
      %v6158 = vadd.f32 0.0, %v6157
      %v6159 = vpop.f32.mrb[0].mxu0
      %v6160 = vadd.f32 0.0, %v6159
      %v6161 = vpop.f32.mrb[0].mxu0
      %v6162 = vadd.f32 0.0, %v6161
      %v6163 = vpop.f32.mrb[0].mxu0
      %v6164 = vadd.f32 0.0, %v6163
      %6165 = vmatprep.mubr.bf16.mxu0 %v6112
      %6166 = vmatmul.mubr.bf16.gmra.mrb[0].mxu0 %v5964
      %v6167 = vpop.f32.mrb[0].mxu0
      %v6168 = vadd.f32 0.0, %v6167
      %v6169 = vpop.f32.mrb[0].mxu0
      %v6170 = vadd.f32 0.0, %v6169
      %v6171 = vpop.f32.mrb[0].mxu0
      %v6172 = vadd.f32 0.0, %v6171
      %v6173 = vpop.f32.mrb[0].mxu0
      %v6174 = vadd.f32 0.0, %v6173
      %6175 = vmatprep.mubr.bf16.mxu0 %v6115
      %6176 = vmatmul.mubr.bf16.gmra.mrb[0].mxu0 %v5972
      %v6177 = vpop.f32.mrb[0].mxu0
      %v6178 = vadd.f32 0.0, %v6177
      %v6179 = vpop.f32.mrb[0].mxu0
      %v6180 = vadd.f32 0.0, %v6179
      %v6181 = vpop.f32.mrb[0].mxu0
      %v6182 = vadd.f32 0.0, %v6181
      %v6183 = vpop.f32.mrb[0].mxu0
      %v6184 = vadd.f32 0.0, %v6183
      %6185 = vmatprep.mubr.bf16.mxu0 %v6118
      %6186 = vmatmul.mubr.bf16.gmra.mrb[0].mxu0 %v5980
      %v6187 = vpop.f32.mrb[0].mxu0
      %v6188 = vadd.f32 0.0, %v6187
      %v6189 = vpop.f32.mrb[0].mxu0
      %v6190 = vadd.f32 0.0, %v6189
      %v6191 = vpop.f32.mrb[0].mxu0
      %v6192 = vadd.f32 0.0, %v6191
      %v6193 = vpop.f32.mrb[0].mxu0
      %v6194 = vadd.f32 0.0, %v6193
      %6195 = vmatprep.mubr.bf16.mxu0 %v6121
      %6196 = vmatmul.mubr.bf16.gmra.mrb[0].mxu0 %v5993
      %v6197 = vpop.f32.mrb[0].mxu0
      %v6198 = vadd.f32 0.0, %v6197
      %v6199 = vpop.f32.mrb[0].mxu0
      %v6200 = vadd.f32 0.0, %v6199
      %v6201 = vpop.f32.mrb[0].mxu0
      %v6202 = vadd.f32 0.0, %v6201
      %v6203 = vpop.f32.mrb[0].mxu0
      %v6204 = vadd.f32 0.0, %v6203
      %6205 = vdwg.mxu0
      %v6206 = vadd.f32 %v5905, %v6158
      %v6207 = vadd.f32 %v5906, %v6160
      %v6208 = vadd.f32 %v5907, %v6162
      %v6209 = vadd.f32 %v5908, %v6164
      %v6210 = vadd.f32 %v5909, %v6168
      %v6211 = vadd.f32 %v5910, %v6170
      %v6212 = vadd.f32 %v5911, %v6172
      %v6213 = vadd.f32 %v5912, %v6174
      %v6214 = vadd.f32 %v5913, %v6178
      %v6215 = vadd.f32 %v5914, %v6180
      %v6216 = vadd.f32 %v5915, %v6182
      %v6217 = vadd.f32 %v5916, %v6184
      %v6218 = vadd.f32 %v5917, %v6188
      %v6219 = vadd.f32 %v5918, %v6190
      %v6220 = vadd.f32 %v5919, %v6192
      %v6221 = vadd.f32 %v5920, %v6194
      %v6222 = vadd.f32 %v5921, %v6198
      %v6223 = vadd.f32 %v5922, %v6200
      %v6224 = vadd.f32 %v5923, %v6202
      %v6225 = vadd.f32 %v5924, %v6204
      %s6226 = scalar_lea.vmem %s7, 800
      %v6227 = vld [vmem:[%s6226] sm:$0xff]
      %v6228 = vld [vmem:[%s6226 + $0x8] sm:$0xff]
      %v6229 = vld [vmem:[%s6226 + $0x10] sm:$0xff]
      %v6230 = vld [vmem:[%s6226 + $0x18] sm:$0xff]
      %v6231 = vld [vmem:[%s6226 + $0x20] sm:$0xff]
      %v6232 = vld [vmem:[%s6226 + $0x28] sm:$0xff]
      %v6233 = vld [vmem:[%s6226 + $0x30] sm:$0xff]
      %v6234 = vld [vmem:[%s6226 + $0x38] sm:$0xff]
      %v6235 = vld [vmem:[%s6226 + $0x40] sm:$0xff]
      %v6236 = vld [vmem:[%s6226 + $0x48] sm:$0xff]
      %v6237 = vld [vmem:[%s6226 + $0x50] sm:$0xff]
      %v6238 = vld [vmem:[%s6226 + $0x58] sm:$0xff]
      %v6239 = vld [vmem:[%s6226 + $0x60] sm:$0xff]
      %v6240 = vld [vmem:[%s6226 + $0x68] sm:$0xff]
      %v6241 = vld [vmem:[%s6226 + $0x70] sm:$0xff]
      %v6242 = vld [vmem:[%s6226 + $0x78] sm:$0xff]
      %v6243 = vld [vmem:[%s6226 + $0x80] sm:$0xff]
      %v6244 = vld [vmem:[%s6226 + $0x88] sm:$0xff]
      %v6245 = vld [vmem:[%s6226 + $0x90] sm:$0xff]
      %v6246 = vld [vmem:[%s6226 + $0x98] sm:$0xff]
      %vm6247 = vcmask 1041408
      %v6248 = vrot.slane %v4852, 6
      %v6249 = vrot.slane %v4854, 6
      %v6250 = vsel %vm6247, %v6248, %v6249
      %v6251 = vrot.slane %v4853, 6
      %v6252 = vrot.slane %v4855, 6
      %v6253 = vsel %vm6247, %v6251, %v6252
      %v6254 = vrot.slane %v4856, 6
      %v6255 = vsel %vm6247, %v6249, %v6254
      %v6256 = vrot.slane %v4857, 6
      %v6257 = vsel %vm6247, %v6252, %v6256
      %v6258 = vrot.slane %v4858, 6
      %v6259 = vsel %vm6247, %v6254, %v6258
      %v6260 = vrot.slane %v4859, 6
      %v6261 = vsel %vm6247, %v6256, %v6260
      %v6262 = vrot.slane %v4860, 6
      %v6263 = vsel %vm6247, %v6258, %v6262
      %v6264 = vrot.slane %v4861, 6
      %v6265 = vsel %vm6247, %v6260, %v6264
      %v6266 = vrot.slane %v4862, 6
      %v6267 = vsel %vm6247, %v6262, %v6266
      %v6268 = vrot.slane %v4863, 6
      %v6269 = vsel %vm6247, %v6264, %v6268
      %v6295 = vunpack.c.l.b16 %v6227
      %v6296 = vunpack.c.h.b16 %v6227
      %v6297 = vunpack.c.l.b16 %v6228
      %v6298 = vunpack.c.h.b16 %v6228
      %v6299 = vunpack.c.l.b16 %v6229
      %v6300 = vunpack.c.h.b16 %v6229
      %v6301 = vunpack.c.l.b16 %v6230
      %v6302 = vunpack.c.h.b16 %v6230
      %v6303 = vunpack.c.l.b16 %v6231
      %v6304 = vunpack.c.h.b16 %v6231
      %v6305 = vunpack.c.l.b16 %v6232
      %v6306 = vunpack.c.h.b16 %v6232
      %v6307 = vunpack.c.l.b16 %v6233
      %v6308 = vunpack.c.h.b16 %v6233
      %v6309 = vunpack.c.l.b16 %v6234
      %v6310 = vunpack.c.h.b16 %v6234
      %v6311 = vunpack.c.l.b16 %v6235
      %v6312 = vunpack.c.h.b16 %v6235
      %v6313 = vunpack.c.l.b16 %v6236
      %v6314 = vunpack.c.h.b16 %v6236
      %v6315 = vunpack.c.l.b16 %v6237
      %v6316 = vunpack.c.h.b16 %v6237
      %v6317 = vunpack.c.l.b16 %v6238
      %v6318 = vunpack.c.h.b16 %v6238
      %v6319 = vunpack.c.l.b16 %v6239
      %v6320 = vunpack.c.h.b16 %v6239
      %v6321 = vunpack.c.l.b16 %v6240
      %v6322 = vunpack.c.h.b16 %v6240
      %v6323 = vunpack.c.l.b16 %v6241
      %v6324 = vunpack.c.h.b16 %v6241
      %v6325 = vunpack.c.l.b16 %v6242
      %v6326 = vunpack.c.h.b16 %v6242
      %v6327 = vunpack.c.l.b16 %v6243
      %v6328 = vunpack.c.h.b16 %v6243
      %v6329 = vunpack.c.l.b16 %v6244
      %v6330 = vunpack.c.h.b16 %v6244
      %v6331 = vunpack.c.l.b16 %v6245
      %v6332 = vunpack.c.h.b16 %v6245
      %v6333 = vunpack.c.l.b16 %v6246
      %v6334 = vunpack.c.h.b16 %v6246
      %v6335 = vpack.c.b16 %v6297, %v6295
      %v6336 = vpack.c.b16 %v6298, %v6296
      %v6337 = vpack.c.b16 %v6301, %v6299
      %v6338 = vpack.c.b16 %v6302, %v6300
      %v6339 = vpack.c.b16 %v6305, %v6303
      %v6340 = vpack.c.b16 %v6306, %v6304
      %v6341 = vpack.c.b16 %v6309, %v6307
      %v6342 = vpack.c.b16 %v6310, %v6308
      %v6343 = vpack.c.b16 %v6313, %v6311
      %v6344 = vpack.c.b16 %v6314, %v6312
      %v6345 = vpack.c.b16 %v6317, %v6315
      %v6346 = vpack.c.b16 %v6318, %v6316
      %v6347 = vpack.c.b16 %v6321, %v6319
      %v6348 = vpack.c.b16 %v6322, %v6320
      %v6349 = vpack.c.b16 %v6325, %v6323
      %v6350 = vpack.c.b16 %v6326, %v6324
      %v6351 = vpack.c.b16 %v6329, %v6327
      %v6352 = vpack.c.b16 %v6330, %v6328
      %v6353 = vpack.c.b16 %v6333, %v6331
      %v6354 = vpack.c.b16 %v6334, %v6332
      %v6376 = vsel %vm5091, %v6253, 0
      %v6379 = vsel %vm5091, %v6257, 0
      %v6382 = vsel %vm5091, %v6261, 0
      %v6385 = vsel %vm5091, %v6265, 0
      %v6388 = vsel %vm5091, %v6269, 0
      %6390 = vmatprep.subr.bf16.mxu0 %v6336
      %6391 = vmatpush1.bf16.msra.mxu0 %v6335
      %6392 = vmatprep.subr.bf16.mxu0 %v6338
      %6393 = vmatpush1.bf16.msra.mxu0 %v6337
      %6394 = vmatprep.subr.bf16.mxu0 %v6340
      %6395 = vmatpush1.bf16.msra.mxu0 %v6339
      %6396 = vmatprep.subr.bf16.mxu0 %v6342
      %6397 = vmatpush1.bf16.msra.mxu0 %v6341
      %6398 = vmatprep.subr.bf16.mxu0 %v6344
      %6399 = vmatpush1.bf16.msra.mxu0 %v6343
      %6400 = vmatprep.subr.bf16.mxu0 %v6346
      %6401 = vmatpush1.bf16.msra.mxu0 %v6345
      %6402 = vmatprep.subr.bf16.mxu0 %v6348
      %6403 = vmatpush1.bf16.msra.mxu0 %v6347
      %6404 = vmatprep.subr.bf16.mxu0 %v6350
      %6405 = vmatpush1.bf16.msra.mxu0 %v6349
      %6406 = vmatprep.subr.bf16.mxu0 %v6352
      %6407 = vmatpush1.bf16.msra.mxu0 %v6351
      %6408 = vmatprep.subr.bf16.mxu0 %v6354
      %6409 = vmatpush1.bf16.msra.mxu0 %v6353
      %6410 = vmatprep.subr.bf16.mxu0 0
      %6411 = vmatpush1.bf16.msra.mxu0 0
      %6412 = vmatprep.subr.bf16.mxu0 0
      %6413 = vmatpush1.bf16.msra.mxu0 0
      %6414 = vmatprep.subr.bf16.mxu0 0
      %6415 = vmatpush1.bf16.msra.mxu0 0
      %6416 = vmatprep.subr.bf16.mxu0 0
      %6417 = vmatpush1.bf16.msra.mxu0 0
      %6418 = vmatprep.subr.bf16.mxu0 0
      %6419 = vmatpush1.bf16.msra.mxu0 0
      %6420 = vmatprep.subr.bf16.mxu0 0
      %6421 = vmatpush1.bf16.msra.mxu0 0
      %6422 = vmatprep.mubr.bf16.mxu0 %v6376
      %6423 = vmatmul.mubr.bf16.gmra.mrb[0].mxu0 %v6250
      %v6424 = vpop.f32.mrb[0].mxu0
      %v6425 = vadd.f32 0.0, %v6424
      %v6426 = vpop.f32.mrb[0].mxu0
      %v6427 = vadd.f32 0.0, %v6426
      %v6428 = vpop.f32.mrb[0].mxu0
      %v6429 = vadd.f32 0.0, %v6428
      %v6430 = vpop.f32.mrb[0].mxu0
      %v6431 = vadd.f32 0.0, %v6430
      %6432 = vmatprep.mubr.bf16.mxu0 %v6379
      %6433 = vmatmul.mubr.bf16.gmra.mrb[0].mxu0 %v6255
      %v6434 = vpop.f32.mrb[0].mxu0
      %v6435 = vadd.f32 0.0, %v6434
      %v6436 = vpop.f32.mrb[0].mxu0
      %v6437 = vadd.f32 0.0, %v6436
      %v6438 = vpop.f32.mrb[0].mxu0
      %v6439 = vadd.f32 0.0, %v6438
      %v6440 = vpop.f32.mrb[0].mxu0
      %v6441 = vadd.f32 0.0, %v6440
      %6442 = vmatprep.mubr.bf16.mxu0 %v6382
      %6443 = vmatmul.mubr.bf16.gmra.mrb[0].mxu0 %v6259
      %v6444 = vpop.f32.mrb[0].mxu0
      %v6445 = vadd.f32 0.0, %v6444
      %v6446 = vpop.f32.mrb[0].mxu0
      %v6447 = vadd.f32 0.0, %v6446
      %v6448 = vpop.f32.mrb[0].mxu0
      %v6449 = vadd.f32 0.0, %v6448
      %v6450 = vpop.f32.mrb[0].mxu0
      %v6451 = vadd.f32 0.0, %v6450
      %6452 = vmatprep.mubr.bf16.mxu0 %v6385
      %6453 = vmatmul.mubr.bf16.gmra.mrb[0].mxu0 %v6263
      %v6454 = vpop.f32.mrb[0].mxu0
      %v6455 = vadd.f32 0.0, %v6454
      %v6456 = vpop.f32.mrb[0].mxu0
      %v6457 = vadd.f32 0.0, %v6456
      %v6458 = vpop.f32.mrb[0].mxu0
      %v6459 = vadd.f32 0.0, %v6458
      %v6460 = vpop.f32.mrb[0].mxu0
      %v6461 = vadd.f32 0.0, %v6460
      %6462 = vmatprep.mubr.bf16.mxu0 %v6388
      %6463 = vmatmul.mubr.bf16.gmra.mrb[0].mxu0 %v6267
      %v6464 = vpop.f32.mrb[0].mxu0
      %v6465 = vadd.f32 0.0, %v6464
      %v6466 = vpop.f32.mrb[0].mxu0
      %v6467 = vadd.f32 0.0, %v6466
      %v6468 = vpop.f32.mrb[0].mxu0
      %v6469 = vadd.f32 0.0, %v6468
      %v6470 = vpop.f32.mrb[0].mxu0
      %v6471 = vadd.f32 0.0, %v6470
      %6472 = vdwg.mxu0
      %v6473 = vadd.f32 %v6206, %v6425
      %v6474 = vadd.f32 %v6207, %v6427
      %v6475 = vadd.f32 %v6208, %v6429
      %v6476 = vadd.f32 %v6209, %v6431
      %v6477 = vadd.f32 %v6210, %v6435
      %v6478 = vadd.f32 %v6211, %v6437
      %v6479 = vadd.f32 %v6212, %v6439
      %v6480 = vadd.f32 %v6213, %v6441
      %v6481 = vadd.f32 %v6214, %v6445
      %v6482 = vadd.f32 %v6215, %v6447
      %v6483 = vadd.f32 %v6216, %v6449
      %v6484 = vadd.f32 %v6217, %v6451
      %v6485 = vadd.f32 %v6218, %v6455
      %v6486 = vadd.f32 %v6219, %v6457
      %v6487 = vadd.f32 %v6220, %v6459
      %v6488 = vadd.f32 %v6221, %v6461
      %v6489 = vadd.f32 %v6222, %v6465
      %v6490 = vadd.f32 %v6223, %v6467
      %v6491 = vadd.f32 %v6224, %v6469
      %v6492 = vadd.f32 %v6225, %v6471
      %s6493 = scalar_lea.vmem %s7, 960
      %v6494 = vld [vmem:[%s6493] sm:$0xff]
      %v6495 = vld [vmem:[%s6493 + $0x8] sm:$0xff]
      %v6496 = vld [vmem:[%s6493 + $0x10] sm:$0xff]
      %v6497 = vld [vmem:[%s6493 + $0x18] sm:$0xff]
      %v6498 = vld [vmem:[%s6493 + $0x20] sm:$0xff]
      %v6499 = vld [vmem:[%s6493 + $0x28] sm:$0xff]
      %v6500 = vld [vmem:[%s6493 + $0x30] sm:$0xff]
      %v6501 = vld [vmem:[%s6493 + $0x38] sm:$0xff]
      %v6502 = vld [vmem:[%s6493 + $0x40] sm:$0xff]
      %v6503 = vld [vmem:[%s6493 + $0x48] sm:$0xff]
      %v6504 = vld [vmem:[%s6493 + $0x50] sm:$0xff]
      %v6505 = vld [vmem:[%s6493 + $0x58] sm:$0xff]
      %v6506 = vld [vmem:[%s6493 + $0x60] sm:$0xff]
      %v6507 = vld [vmem:[%s6493 + $0x68] sm:$0xff]
      %v6508 = vld [vmem:[%s6493 + $0x70] sm:$0xff]
      %v6509 = vld [vmem:[%s6493 + $0x78] sm:$0xff]
      %v6510 = vld [vmem:[%s6493 + $0x80] sm:$0xff]
      %v6511 = vld [vmem:[%s6493 + $0x88] sm:$0xff]
      %v6512 = vld [vmem:[%s6493 + $0x90] sm:$0xff]
      %v6513 = vld [vmem:[%s6493 + $0x98] sm:$0xff]
      %vm6516 = vcmask 1045504
      %v6517 = vrot.slane %v4854, 2
      %v6518 = vrot.slane %v4856, 2
      %v6519 = vsel %vm6516, %v6517, %v6518
      %v6520 = vrot.slane %v4855, 2
      %v6521 = vrot.slane %v4857, 2
      %v6522 = vsel %vm6516, %v6520, %v6521
      %v6523 = vrot.slane %v4858, 2
      %v6524 = vsel %vm6516, %v6518, %v6523
      %v6525 = vrot.slane %v4859, 2
      %v6526 = vsel %vm6516, %v6521, %v6525
      %v6527 = vrot.slane %v4860, 2
      %v6528 = vsel %vm6516, %v6523, %v6527
      %v6529 = vrot.slane %v4861, 2
      %v6530 = vsel %vm6516, %v6525, %v6529
      %v6531 = vrot.slane %v4862, 2
      %v6532 = vsel %vm6516, %v6527, %v6531
      %v6533 = vrot.slane %v4863, 2
      %v6534 = vsel %vm6516, %v6529, %v6533
      %v6535 = vrot.slane %v4864, 2
      %v6536 = vsel %vm6516, %v6531, %v6535
      %v6537 = vrot.slane %v4865, 2
      %v6538 = vsel %vm6516, %v6533, %v6537
      %v6564 = vunpack.c.l.b16 %v6494
      %v6565 = vunpack.c.h.b16 %v6494
      %v6566 = vunpack.c.l.b16 %v6495
      %v6567 = vunpack.c.h.b16 %v6495
      %v6568 = vunpack.c.l.b16 %v6496
      %v6569 = vunpack.c.h.b16 %v6496
      %v6570 = vunpack.c.l.b16 %v6497
      %v6571 = vunpack.c.h.b16 %v6497
      %v6572 = vunpack.c.l.b16 %v6498
      %v6573 = vunpack.c.h.b16 %v6498
      %v6574 = vunpack.c.l.b16 %v6499
      %v6575 = vunpack.c.h.b16 %v6499
      %v6576 = vunpack.c.l.b16 %v6500
      %v6577 = vunpack.c.h.b16 %v6500
      %v6578 = vunpack.c.l.b16 %v6501
      %v6579 = vunpack.c.h.b16 %v6501
      %v6580 = vunpack.c.l.b16 %v6502
      %v6581 = vunpack.c.h.b16 %v6502
      %v6582 = vunpack.c.l.b16 %v6503
      %v6583 = vunpack.c.h.b16 %v6503
      %v6584 = vunpack.c.l.b16 %v6504
      %v6585 = vunpack.c.h.b16 %v6504
      %v6586 = vunpack.c.l.b16 %v6505
      %v6587 = vunpack.c.h.b16 %v6505
      %v6588 = vunpack.c.l.b16 %v6506
      %v6589 = vunpack.c.h.b16 %v6506
      %v6590 = vunpack.c.l.b16 %v6507
      %v6591 = vunpack.c.h.b16 %v6507
      %v6592 = vunpack.c.l.b16 %v6508
      %v6593 = vunpack.c.h.b16 %v6508
      %v6594 = vunpack.c.l.b16 %v6509
      %v6595 = vunpack.c.h.b16 %v6509
      %v6596 = vunpack.c.l.b16 %v6510
      %v6597 = vunpack.c.h.b16 %v6510
      %v6598 = vunpack.c.l.b16 %v6511
      %v6599 = vunpack.c.h.b16 %v6511
      %v6600 = vunpack.c.l.b16 %v6512
      %v6601 = vunpack.c.h.b16 %v6512
      %v6602 = vunpack.c.l.b16 %v6513
      %v6603 = vunpack.c.h.b16 %v6513
      %v6604 = vpack.c.b16 %v6566, %v6564
      %v6605 = vpack.c.b16 %v6567, %v6565
      %v6606 = vpack.c.b16 %v6570, %v6568
      %v6607 = vpack.c.b16 %v6571, %v6569
      %v6608 = vpack.c.b16 %v6574, %v6572
      %v6609 = vpack.c.b16 %v6575, %v6573
      %v6610 = vpack.c.b16 %v6578, %v6576
      %v6611 = vpack.c.b16 %v6579, %v6577
      %v6612 = vpack.c.b16 %v6582, %v6580
      %v6613 = vpack.c.b16 %v6583, %v6581
      %v6614 = vpack.c.b16 %v6586, %v6584
      %v6615 = vpack.c.b16 %v6587, %v6585
      %v6616 = vpack.c.b16 %v6590, %v6588
      %v6617 = vpack.c.b16 %v6591, %v6589
      %v6618 = vpack.c.b16 %v6594, %v6592
      %v6619 = vpack.c.b16 %v6595, %v6593
      %v6620 = vpack.c.b16 %v6598, %v6596
      %v6621 = vpack.c.b16 %v6599, %v6597
      %v6622 = vpack.c.b16 %v6602, %v6600
      %v6623 = vpack.c.b16 %v6603, %v6601
      %v6645 = vsel %vm5091, %v6522, 0
      %v6648 = vsel %vm5091, %v6526, 0
      %v6651 = vsel %vm5091, %v6530, 0
      %v6654 = vsel %vm5091, %v6534, 0
      %v6657 = vsel %vm5091, %v6538, 0
      %6659 = vmatprep.subr.bf16.mxu0 %v6605
      %6660 = vmatpush1.bf16.msra.mxu0 %v6604
      %6661 = vmatprep.subr.bf16.mxu0 %v6607
      %6662 = vmatpush1.bf16.msra.mxu0 %v6606
      %6663 = vmatprep.subr.bf16.mxu0 %v6609
      %6664 = vmatpush1.bf16.msra.mxu0 %v6608
      %6665 = vmatprep.subr.bf16.mxu0 %v6611
      %6666 = vmatpush1.bf16.msra.mxu0 %v6610
      %6667 = vmatprep.subr.bf16.mxu0 %v6613
      %6668 = vmatpush1.bf16.msra.mxu0 %v6612
      %6669 = vmatprep.subr.bf16.mxu0 %v6615
      %6670 = vmatpush1.bf16.msra.mxu0 %v6614
      %6671 = vmatprep.subr.bf16.mxu0 %v6617
      %6672 = vmatpush1.bf16.msra.mxu0 %v6616
      %6673 = vmatprep.subr.bf16.mxu0 %v6619
      %6674 = vmatpush1.bf16.msra.mxu0 %v6618
      %6675 = vmatprep.subr.bf16.mxu0 %v6621
      %6676 = vmatpush1.bf16.msra.mxu0 %v6620
      %6677 = vmatprep.subr.bf16.mxu0 %v6623
      %6678 = vmatpush1.bf16.msra.mxu0 %v6622
      %6679 = vmatprep.subr.bf16.mxu0 0
      %6680 = vmatpush1.bf16.msra.mxu0 0
      %6681 = vmatprep.subr.bf16.mxu0 0
      %6682 = vmatpush1.bf16.msra.mxu0 0
      %6683 = vmatprep.subr.bf16.mxu0 0
      %6684 = vmatpush1.bf16.msra.mxu0 0
      %6685 = vmatprep.subr.bf16.mxu0 0
      %6686 = vmatpush1.bf16.msra.mxu0 0
      %6687 = vmatprep.subr.bf16.mxu0 0
      %6688 = vmatpush1.bf16.msra.mxu0 0
      %6689 = vmatprep.subr.bf16.mxu0 0
      %6690 = vmatpush1.bf16.msra.mxu0 0
      %6691 = vmatprep.mubr.bf16.mxu0 %v6645
      %6692 = vmatmul.mubr.bf16.gmra.mrb[0].mxu0 %v6519
      %v6693 = vpop.f32.mrb[0].mxu0
      %v6694 = vadd.f32 0.0, %v6693
      %v6695 = vpop.f32.mrb[0].mxu0
      %v6696 = vadd.f32 0.0, %v6695
      %v6697 = vpop.f32.mrb[0].mxu0
      %v6698 = vadd.f32 0.0, %v6697
      %v6699 = vpop.f32.mrb[0].mxu0
      %v6700 = vadd.f32 0.0, %v6699
      %6701 = vmatprep.mubr.bf16.mxu0 %v6648
      %6702 = vmatmul.mubr.bf16.gmra.mrb[0].mxu0 %v6524
      %v6703 = vpop.f32.mrb[0].mxu0
      %v6704 = vadd.f32 0.0, %v6703
      %v6705 = vpop.f32.mrb[0].mxu0
      %v6706 = vadd.f32 0.0, %v6705
      %v6707 = vpop.f32.mrb[0].mxu0
      %v6708 = vadd.f32 0.0, %v6707
      %v6709 = vpop.f32.mrb[0].mxu0
      %v6710 = vadd.f32 0.0, %v6709
      %6711 = vmatprep.mubr.bf16.mxu0 %v6651
      %6712 = vmatmul.mubr.bf16.gmra.mrb[0].mxu0 %v6528
      %v6713 = vpop.f32.mrb[0].mxu0
      %v6714 = vadd.f32 0.0, %v6713
      %v6715 = vpop.f32.mrb[0].mxu0
      %v6716 = vadd.f32 0.0, %v6715
      %v6717 = vpop.f32.mrb[0].mxu0
      %v6718 = vadd.f32 0.0, %v6717
      %v6719 = vpop.f32.mrb[0].mxu0
      %v6720 = vadd.f32 0.0, %v6719
      %6721 = vmatprep.mubr.bf16.mxu0 %v6654
      %6722 = vmatmul.mubr.bf16.gmra.mrb[0].mxu0 %v6532
      %v6723 = vpop.f32.mrb[0].mxu0
      %v6724 = vadd.f32 0.0, %v6723
      %v6725 = vpop.f32.mrb[0].mxu0
      %v6726 = vadd.f32 0.0, %v6725
      %v6727 = vpop.f32.mrb[0].mxu0
      %v6728 = vadd.f32 0.0, %v6727
      %v6729 = vpop.f32.mrb[0].mxu0
      %v6730 = vadd.f32 0.0, %v6729
      %6731 = vmatprep.mubr.bf16.mxu0 %v6657
      %6732 = vmatmul.mubr.bf16.gmra.mrb[0].mxu0 %v6536
      %v6733 = vpop.f32.mrb[0].mxu0
      %v6734 = vadd.f32 0.0, %v6733
      %v6735 = vpop.f32.mrb[0].mxu0
      %v6736 = vadd.f32 0.0, %v6735
      %v6737 = vpop.f32.mrb[0].mxu0
      %v6738 = vadd.f32 0.0, %v6737
      %v6739 = vpop.f32.mrb[0].mxu0
      %v6740 = vadd.f32 0.0, %v6739
      %6741 = vdwg.mxu0
      %v6742 = vadd.f32 %v6473, %v6694
      %v6743 = vadd.f32 %v6474, %v6696
      %v6744 = vadd.f32 %v6475, %v6698
      %v6745 = vadd.f32 %v6476, %v6700
      %v6746 = vadd.f32 %v6477, %v6704
      %v6747 = vadd.f32 %v6478, %v6706
      %v6748 = vadd.f32 %v6479, %v6708
      %v6749 = vadd.f32 %v6480, %v6710
      %v6750 = vadd.f32 %v6481, %v6714
      %v6751 = vadd.f32 %v6482, %v6716
      %v6752 = vadd.f32 %v6483, %v6718
      %v6753 = vadd.f32 %v6484, %v6720
      %v6754 = vadd.f32 %v6485, %v6724
      %v6755 = vadd.f32 %v6486, %v6726
      %v6756 = vadd.f32 %v6487, %v6728
      %v6757 = vadd.f32 %v6488, %v6730
      %v6758 = vadd.f32 %v6489, %v6734
      %v6759 = vadd.f32 %v6490, %v6736
      %v6760 = vadd.f32 %v6491, %v6738
      %v6761 = vadd.f32 %v6492, %v6740
      %s6762 = scalar_lea.vmem %s7, 1120
      %v6763 = vld [vmem:[%s6762] sm:$0xff]
      %v6764 = vld [vmem:[%s6762 + $0x8] sm:$0xff]
      %v6765 = vld [vmem:[%s6762 + $0x10] sm:$0xff]
      %v6766 = vld [vmem:[%s6762 + $0x18] sm:$0xff]
      %v6767 = vld [vmem:[%s6762 + $0x20] sm:$0xff]
      %v6768 = vld [vmem:[%s6762 + $0x28] sm:$0xff]
      %v6769 = vld [vmem:[%s6762 + $0x30] sm:$0xff]
      %v6770 = vld [vmem:[%s6762 + $0x38] sm:$0xff]
      %v6771 = vld [vmem:[%s6762 + $0x40] sm:$0xff]
      %v6772 = vld [vmem:[%s6762 + $0x48] sm:$0xff]
      %v6773 = vld [vmem:[%s6762 + $0x50] sm:$0xff]
      %v6774 = vld [vmem:[%s6762 + $0x58] sm:$0xff]
      %v6775 = vld [vmem:[%s6762 + $0x60] sm:$0xff]
      %v6776 = vld [vmem:[%s6762 + $0x68] sm:$0xff]
      %v6777 = vld [vmem:[%s6762 + $0x70] sm:$0xff]
      %v6778 = vld [vmem:[%s6762 + $0x78] sm:$0xff]
      %v6779 = vld [vmem:[%s6762 + $0x80] sm:$0xff]
      %v6780 = vld [vmem:[%s6762 + $0x88] sm:$0xff]
      %v6781 = vld [vmem:[%s6762 + $0x90] sm:$0xff]
      %v6782 = vld [vmem:[%s6762 + $0x98] sm:$0xff]
      %vm6783 = vsmask.f32 5376
      %v6784 = vrot.slane %v4932, 2
      %v6785 = vrot.slane %v4916, 3
      %v6786 = vor.u32 %v6784, %v6785
      %v6787 = vrot.slane %v4948, 2
      %v6788 = vrot.slane %v4936, 3
      %v6789 = vor.u32 %v6787, %v6788
      %v6790 = vsel %vm6783, %v6786, %v6789
      %v6791 = vrot.slane %v4940, 2
      %v6792 = vrot.slane %v4928, 3
      %v6793 = vor.u32 %v6791, %v6792
      %v6794 = vrot.slane %v4956, 2
      %v6795 = vrot.slane %v4944, 3
      %v6796 = vor.u32 %v6794, %v6795
      %v6797 = vsel %vm6783, %v6793, %v6796
      %v6798 = vrot.slane %v4964, 2
      %v6799 = vrot.slane %v4952, 3
      %v6800 = vor.u32 %v6798, %v6799
      %v6801 = vsel %vm6783, %v6789, %v6800
      %v6802 = vrot.slane %v4972, 2
      %v6803 = vrot.slane %v4960, 3
      %v6804 = vor.u32 %v6802, %v6803
      %v6805 = vsel %vm6783, %v6796, %v6804
      %v6806 = vrot.slane %v4980, 2
      %v6807 = vrot.slane %v4968, 3
      %v6808 = vor.u32 %v6806, %v6807
      %v6809 = vsel %vm6783, %v6800, %v6808
      %v6810 = vrot.slane %v4983, 2
      %v6811 = vrot.slane %v4976, 3
      %v6812 = vor.u32 %v6810, %v6811
      %v6813 = vsel %vm6783, %v6804, %v6812
      %v6814 = vrot.slane %v5986, 2
      %v6815 = vrot.slane %v5989, 3
      %v6816 = vor.u32 %v6814, %v6815
      %v6817 = vsel %vm6783, %v6808, %v6816
      %v6818 = vrot.slane %v5995, 2
      %v6819 = vrot.slane %v5998, 3
      %v6820 = vor.u32 %v6818, %v6819
      %v6821 = vsel %vm6783, %v6812, %v6820
      %v6823 = vshrl.u32 %v4864, 16
      %v6825 = vrot.slane %v6823, 2
      %v6826 = vshll.u32 %v4864, 16
      %v6828 = vrot.slane %v6826, 3
      %v6829 = vor.u32 %v6825, %v6828
      %v6830 = vsel %vm6783, %v6816, %v6829
      %v6832 = vshrl.u32 %v4865, 16
      %v6834 = vrot.slane %v6832, 2
      %v6835 = vshll.u32 %v4865, 16
      %v6837 = vrot.slane %v6835, 3
      %v6838 = vor.u32 %v6834, %v6837
      %v6839 = vsel %vm6783, %v6820, %v6838
      %v6865 = vunpack.c.l.b16 %v6763
      %v6866 = vunpack.c.h.b16 %v6763
      %v6867 = vunpack.c.l.b16 %v6764
      %v6868 = vunpack.c.h.b16 %v6764
      %v6869 = vunpack.c.l.b16 %v6765
      %v6870 = vunpack.c.h.b16 %v6765
      %v6871 = vunpack.c.l.b16 %v6766
      %v6872 = vunpack.c.h.b16 %v6766
      %v6873 = vunpack.c.l.b16 %v6767
      %v6874 = vunpack.c.h.b16 %v6767
      %v6875 = vunpack.c.l.b16 %v6768
      %v6876 = vunpack.c.h.b16 %v6768
      %v6877 = vunpack.c.l.b16 %v6769
      %v6878 = vunpack.c.h.b16 %v6769
      %v6879 = vunpack.c.l.b16 %v6770
      %v6880 = vunpack.c.h.b16 %v6770
      %v6881 = vunpack.c.l.b16 %v6771
      %v6882 = vunpack.c.h.b16 %v6771
      %v6883 = vunpack.c.l.b16 %v6772
      %v6884 = vunpack.c.h.b16 %v6772
      %v6885 = vunpack.c.l.b16 %v6773
      %v6886 = vunpack.c.h.b16 %v6773
      %v6887 = vunpack.c.l.b16 %v6774
      %v6888 = vunpack.c.h.b16 %v6774
      %v6889 = vunpack.c.l.b16 %v6775
      %v6890 = vunpack.c.h.b16 %v6775
      %v6891 = vunpack.c.l.b16 %v6776
      %v6892 = vunpack.c.h.b16 %v6776
      %v6893 = vunpack.c.l.b16 %v6777
      %v6894 = vunpack.c.h.b16 %v6777
      %v6895 = vunpack.c.l.b16 %v6778
      %v6896 = vunpack.c.h.b16 %v6778
      %v6897 = vunpack.c.l.b16 %v6779
      %v6898 = vunpack.c.h.b16 %v6779
      %v6899 = vunpack.c.l.b16 %v6780
      %v6900 = vunpack.c.h.b16 %v6780
      %v6901 = vunpack.c.l.b16 %v6781
      %v6902 = vunpack.c.h.b16 %v6781
      %v6903 = vunpack.c.l.b16 %v6782
      %v6904 = vunpack.c.h.b16 %v6782
      %v6905 = vpack.c.b16 %v6867, %v6865
      %v6906 = vpack.c.b16 %v6868, %v6866
      %v6907 = vpack.c.b16 %v6871, %v6869
      %v6908 = vpack.c.b16 %v6872, %v6870
      %v6909 = vpack.c.b16 %v6875, %v6873
      %v6910 = vpack.c.b16 %v6876, %v6874
      %v6911 = vpack.c.b16 %v6879, %v6877
      %v6912 = vpack.c.b16 %v6880, %v6878
      %v6913 = vpack.c.b16 %v6883, %v6881
      %v6914 = vpack.c.b16 %v6884, %v6882
      %v6915 = vpack.c.b16 %v6887, %v6885
      %v6916 = vpack.c.b16 %v6888, %v6886
      %v6917 = vpack.c.b16 %v6891, %v6889
      %v6918 = vpack.c.b16 %v6892, %v6890
      %v6919 = vpack.c.b16 %v6895, %v6893
      %v6920 = vpack.c.b16 %v6896, %v6894
      %v6921 = vpack.c.b16 %v6899, %v6897
      %v6922 = vpack.c.b16 %v6900, %v6898
      %v6923 = vpack.c.b16 %v6903, %v6901
      %v6924 = vpack.c.b16 %v6904, %v6902
      %v6946 = vsel %vm5091, %v6797, 0
      %v6949 = vsel %vm5091, %v6805, 0
      %v6952 = vsel %vm5091, %v6813, 0
      %v6955 = vsel %vm5091, %v6821, 0
      %v6958 = vsel %vm5091, %v6839, 0
      %6960 = vmatprep.subr.bf16.mxu0 %v6906
      %6961 = vmatpush1.bf16.msra.mxu0 %v6905
      %6962 = vmatprep.subr.bf16.mxu0 %v6908
      %6963 = vmatpush1.bf16.msra.mxu0 %v6907
      %6964 = vmatprep.subr.bf16.mxu0 %v6910
      %6965 = vmatpush1.bf16.msra.mxu0 %v6909
      %6966 = vmatprep.subr.bf16.mxu0 %v6912
      %6967 = vmatpush1.bf16.msra.mxu0 %v6911
      %6968 = vmatprep.subr.bf16.mxu0 %v6914
      %6969 = vmatpush1.bf16.msra.mxu0 %v6913
      %6970 = vmatprep.subr.bf16.mxu0 %v6916
      %6971 = vmatpush1.bf16.msra.mxu0 %v6915
      %6972 = vmatprep.subr.bf16.mxu0 %v6918
      %6973 = vmatpush1.bf16.msra.mxu0 %v6917
      %6974 = vmatprep.subr.bf16.mxu0 %v6920
      %6975 = vmatpush1.bf16.msra.mxu0 %v6919
      %6976 = vmatprep.subr.bf16.mxu0 %v6922
      %6977 = vmatpush1.bf16.msra.mxu0 %v6921
      %6978 = vmatprep.subr.bf16.mxu0 %v6924
      %6979 = vmatpush1.bf16.msra.mxu0 %v6923
      %6980 = vmatprep.subr.bf16.mxu0 0
      %6981 = vmatpush1.bf16.msra.mxu0 0
      %6982 = vmatprep.subr.bf16.mxu0 0
      %6983 = vmatpush1.bf16.msra.mxu0 0
      %6984 = vmatprep.subr.bf16.mxu0 0
      %6985 = vmatpush1.bf16.msra.mxu0 0
      %6986 = vmatprep.subr.bf16.mxu0 0
      %6987 = vmatpush1.bf16.msra.mxu0 0
      %6988 = vmatprep.subr.bf16.mxu0 0
      %6989 = vmatpush1.bf16.msra.mxu0 0
      %6990 = vmatprep.subr.bf16.mxu0 0
      %6991 = vmatpush1.bf16.msra.mxu0 0
      %6992 = vmatprep.mubr.bf16.mxu0 %v6946
      %6993 = vmatmul.mubr.bf16.gmra.mrb[0].mxu0 %v6790
      %v6994 = vpop.f32.mrb[0].mxu0
      %v6995 = vadd.f32 0.0, %v6994
      %v6996 = vpop.f32.mrb[0].mxu0
      %v6997 = vadd.f32 0.0, %v6996
      %v6998 = vpop.f32.mrb[0].mxu0
      %v6999 = vadd.f32 0.0, %v6998
      %v7000 = vpop.f32.mrb[0].mxu0
      %v7001 = vadd.f32 0.0, %v7000
      %7002 = vmatprep.mubr.bf16.mxu0 %v6949
      %7003 = vmatmul.mubr.bf16.gmra.mrb[0].mxu0 %v6801
      %v7004 = vpop.f32.mrb[0].mxu0
      %v7005 = vadd.f32 0.0, %v7004
      %v7006 = vpop.f32.mrb[0].mxu0
      %v7007 = vadd.f32 0.0, %v7006
      %v7008 = vpop.f32.mrb[0].mxu0
      %v7009 = vadd.f32 0.0, %v7008
      %v7010 = vpop.f32.mrb[0].mxu0
      %v7011 = vadd.f32 0.0, %v7010
      %7012 = vmatprep.mubr.bf16.mxu0 %v6952
      %7013 = vmatmul.mubr.bf16.gmra.mrb[0].mxu0 %v6809
      %v7014 = vpop.f32.mrb[0].mxu0
      %v7015 = vadd.f32 0.0, %v7014
      %v7016 = vpop.f32.mrb[0].mxu0
      %v7017 = vadd.f32 0.0, %v7016
      %v7018 = vpop.f32.mrb[0].mxu0
      %v7019 = vadd.f32 0.0, %v7018
      %v7020 = vpop.f32.mrb[0].mxu0
      %v7021 = vadd.f32 0.0, %v7020
      %7022 = vmatprep.mubr.bf16.mxu0 %v6955
      %7023 = vmatmul.mubr.bf16.gmra.mrb[0].mxu0 %v6817
      %v7024 = vpop.f32.mrb[0].mxu0
      %v7025 = vadd.f32 0.0, %v7024
      %v7026 = vpop.f32.mrb[0].mxu0
      %v7027 = vadd.f32 0.0, %v7026
      %v7028 = vpop.f32.mrb[0].mxu0
      %v7029 = vadd.f32 0.0, %v7028
      %v7030 = vpop.f32.mrb[0].mxu0
      %v7031 = vadd.f32 0.0, %v7030
      %7032 = vmatprep.mubr.bf16.mxu0 %v6958
      %7033 = vmatmul.mubr.bf16.gmra.mrb[0].mxu0 %v6830
      %v7034 = vpop.f32.mrb[0].mxu0
      %v7035 = vadd.f32 0.0, %v7034
      %v7036 = vpop.f32.mrb[0].mxu0
      %v7037 = vadd.f32 0.0, %v7036
      %v7038 = vpop.f32.mrb[0].mxu0
      %v7039 = vadd.f32 0.0, %v7038
      %v7040 = vpop.f32.mrb[0].mxu0
      %v7041 = vadd.f32 0.0, %v7040
      %7042 = vdwg.mxu0
      %v7043 = vadd.f32 %v6742, %v6995
      %v7044 = vadd.f32 %v6743, %v6997
      %v7045 = vadd.f32 %v6744, %v6999
      %v7046 = vadd.f32 %v6745, %v7001
      %v7047 = vadd.f32 %v6746, %v7005
      %v7048 = vadd.f32 %v6747, %v7007
      %v7049 = vadd.f32 %v6748, %v7009
      %v7050 = vadd.f32 %v6749, %v7011
      %v7051 = vadd.f32 %v6750, %v7015
      %v7052 = vadd.f32 %v6751, %v7017
      %v7053 = vadd.f32 %v6752, %v7019
      %v7054 = vadd.f32 %v6753, %v7021
      %v7055 = vadd.f32 %v6754, %v7025
      %v7056 = vadd.f32 %v6755, %v7027
      %v7057 = vadd.f32 %v6756, %v7029
      %v7058 = vadd.f32 %v6757, %v7031
      %v7059 = vadd.f32 %v6758, %v7035
      %v7060 = vadd.f32 %v6759, %v7037
      %v7061 = vadd.f32 %v6760, %v7039
      %v7062 = vadd.f32 %v6761, %v7041
      %s7063 = scalar_lea.vmem %s7, 1280
      %v7064 = vld [vmem:[%s7063] sm:$0xff]
      %v7065 = vld [vmem:[%s7063 + $0x8] sm:$0xff]
      %v7066 = vld [vmem:[%s7063 + $0x10] sm:$0xff]
      %v7067 = vld [vmem:[%s7063 + $0x18] sm:$0xff]
      %v7068 = vld [vmem:[%s7063 + $0x20] sm:$0xff]
      %v7069 = vld [vmem:[%s7063 + $0x28] sm:$0xff]
      %v7070 = vld [vmem:[%s7063 + $0x30] sm:$0xff]
      %v7071 = vld [vmem:[%s7063 + $0x38] sm:$0xff]
      %v7072 = vld [vmem:[%s7063 + $0x40] sm:$0xff]
      %v7073 = vld [vmem:[%s7063 + $0x48] sm:$0xff]
      %v7074 = vld [vmem:[%s7063 + $0x50] sm:$0xff]
      %v7075 = vld [vmem:[%s7063 + $0x58] sm:$0xff]
      %v7076 = vld [vmem:[%s7063 + $0x60] sm:$0xff]
      %v7077 = vld [vmem:[%s7063 + $0x68] sm:$0xff]
      %v7078 = vld [vmem:[%s7063 + $0x70] sm:$0xff]
      %v7079 = vld [vmem:[%s7063 + $0x78] sm:$0xff]
      %v7080 = vld [vmem:[%s7063 + $0x80] sm:$0xff]
      %v7081 = vld [vmem:[%s7063 + $0x88] sm:$0xff]
      %v7082 = vld [vmem:[%s7063 + $0x90] sm:$0xff]
      %v7083 = vld [vmem:[%s7063 + $0x98] sm:$0xff]
      %vm7084 = vcmask 1044480
      %v7085 = vrot.slane %v4854, 3
      %v7086 = vrot.slane %v4856, 3
      %v7087 = vsel %vm7084, %v7085, %v7086
      %v7088 = vrot.slane %v4855, 3
      %v7089 = vrot.slane %v4857, 3
      %v7090 = vsel %vm7084, %v7088, %v7089
      %v7091 = vrot.slane %v4858, 3
      %v7092 = vsel %vm7084, %v7086, %v7091
      %v7093 = vrot.slane %v4859, 3
      %v7094 = vsel %vm7084, %v7089, %v7093
      %v7095 = vrot.slane %v4860, 3
      %v7096 = vsel %vm7084, %v7091, %v7095
      %v7097 = vrot.slane %v4861, 3
      %v7098 = vsel %vm7084, %v7093, %v7097
      %v7099 = vrot.slane %v4862, 3
      %v7100 = vsel %vm7084, %v7095, %v7099
      %v7101 = vrot.slane %v4863, 3
      %v7102 = vsel %vm7084, %v7097, %v7101
      %v7103 = vrot.slane %v4864, 3
      %v7104 = vsel %vm7084, %v7099, %v7103
      %v7105 = vrot.slane %v4865, 3
      %v7106 = vsel %vm7084, %v7101, %v7105
      %v7132 = vunpack.c.l.b16 %v7064
      %v7133 = vunpack.c.h.b16 %v7064
      %v7134 = vunpack.c.l.b16 %v7065
      %v7135 = vunpack.c.h.b16 %v7065
      %v7136 = vunpack.c.l.b16 %v7066
      %v7137 = vunpack.c.h.b16 %v7066
      %v7138 = vunpack.c.l.b16 %v7067
      %v7139 = vunpack.c.h.b16 %v7067
      %v7140 = vunpack.c.l.b16 %v7068
      %v7141 = vunpack.c.h.b16 %v7068
      %v7142 = vunpack.c.l.b16 %v7069
      %v7143 = vunpack.c.h.b16 %v7069
      %v7144 = vunpack.c.l.b16 %v7070
      %v7145 = vunpack.c.h.b16 %v7070
      %v7146 = vunpack.c.l.b16 %v7071
      %v7147 = vunpack.c.h.b16 %v7071
      %v7148 = vunpack.c.l.b16 %v7072
      %v7149 = vunpack.c.h.b16 %v7072
      %v7150 = vunpack.c.l.b16 %v7073
      %v7151 = vunpack.c.h.b16 %v7073
      %v7152 = vunpack.c.l.b16 %v7074
      %v7153 = vunpack.c.h.b16 %v7074
      %v7154 = vunpack.c.l.b16 %v7075
      %v7155 = vunpack.c.h.b16 %v7075
      %v7156 = vunpack.c.l.b16 %v7076
      %v7157 = vunpack.c.h.b16 %v7076
      %v7158 = vunpack.c.l.b16 %v7077
      %v7159 = vunpack.c.h.b16 %v7077
      %v7160 = vunpack.c.l.b16 %v7078
      %v7161 = vunpack.c.h.b16 %v7078
      %v7162 = vunpack.c.l.b16 %v7079
      %v7163 = vunpack.c.h.b16 %v7079
      %v7164 = vunpack.c.l.b16 %v7080
      %v7165 = vunpack.c.h.b16 %v7080
      %v7166 = vunpack.c.l.b16 %v7081
      %v7167 = vunpack.c.h.b16 %v7081
      %v7168 = vunpack.c.l.b16 %v7082
      %v7169 = vunpack.c.h.b16 %v7082
      %v7170 = vunpack.c.l.b16 %v7083
      %v7171 = vunpack.c.h.b16 %v7083
      %v7172 = vpack.c.b16 %v7134, %v7132
      %v7173 = vpack.c.b16 %v7135, %v7133
      %v7174 = vpack.c.b16 %v7138, %v7136
      %v7175 = vpack.c.b16 %v7139, %v7137
      %v7176 = vpack.c.b16 %v7142, %v7140
      %v7177 = vpack.c.b16 %v7143, %v7141
      %v7178 = vpack.c.b16 %v7146, %v7144
      %v7179 = vpack.c.b16 %v7147, %v7145
      %v7180 = vpack.c.b16 %v7150, %v7148
      %v7181 = vpack.c.b16 %v7151, %v7149
      %v7182 = vpack.c.b16 %v7154, %v7152
      %v7183 = vpack.c.b16 %v7155, %v7153
      %v7184 = vpack.c.b16 %v7158, %v7156
      %v7185 = vpack.c.b16 %v7159, %v7157
      %v7186 = vpack.c.b16 %v7162, %v7160
      %v7187 = vpack.c.b16 %v7163, %v7161
      %v7188 = vpack.c.b16 %v7166, %v7164
      %v7189 = vpack.c.b16 %v7167, %v7165
      %v7190 = vpack.c.b16 %v7170, %v7168
      %v7191 = vpack.c.b16 %v7171, %v7169
      %v7213 = vsel %vm5091, %v7090, 0
      %v7216 = vsel %vm5091, %v7094, 0
      %v7219 = vsel %vm5091, %v7098, 0
      %v7222 = vsel %vm5091, %v7102, 0
      %v7225 = vsel %vm5091, %v7106, 0
      %7227 = vmatprep.subr.bf16.mxu0 %v7173
      %7228 = vmatpush1.bf16.msra.mxu0 %v7172
      %7229 = vmatprep.subr.bf16.mxu0 %v7175
      %7230 = vmatpush1.bf16.msra.mxu0 %v7174
      %7231 = vmatprep.subr.bf16.mxu0 %v7177
      %7232 = vmatpush1.bf16.msra.mxu0 %v7176
      %7233 = vmatprep.subr.bf16.mxu0 %v7179
      %7234 = vmatpush1.bf16.msra.mxu0 %v7178
      %7235 = vmatprep.subr.bf16.mxu0 %v7181
      %7236 = vmatpush1.bf16.msra.mxu0 %v7180
      %7237 = vmatprep.subr.bf16.mxu0 %v7183
      %7238 = vmatpush1.bf16.msra.mxu0 %v7182
      %7239 = vmatprep.subr.bf16.mxu0 %v7185
      %7240 = vmatpush1.bf16.msra.mxu0 %v7184
      %7241 = vmatprep.subr.bf16.mxu0 %v7187
      %7242 = vmatpush1.bf16.msra.mxu0 %v7186
      %7243 = vmatprep.subr.bf16.mxu0 %v7189
      %7244 = vmatpush1.bf16.msra.mxu0 %v7188
      %7245 = vmatprep.subr.bf16.mxu0 %v7191
      %7246 = vmatpush1.bf16.msra.mxu0 %v7190
      %7247 = vmatprep.subr.bf16.mxu0 0
      %7248 = vmatpush1.bf16.msra.mxu0 0
      %7249 = vmatprep.subr.bf16.mxu0 0
      %7250 = vmatpush1.bf16.msra.mxu0 0
      %7251 = vmatprep.subr.bf16.mxu0 0
      %7252 = vmatpush1.bf16.msra.mxu0 0
      %7253 = vmatprep.subr.bf16.mxu0 0
      %7254 = vmatpush1.bf16.msra.mxu0 0
      %7255 = vmatprep.subr.bf16.mxu0 0
      %7256 = vmatpush1.bf16.msra.mxu0 0
      %7257 = vmatprep.subr.bf16.mxu0 0
      %7258 = vmatpush1.bf16.msra.mxu0 0
      %7259 = vmatprep.mubr.bf16.mxu0 %v7213
      %7260 = vmatmul.mubr.bf16.gmra.mrb[0].mxu0 %v7087
      %v7261 = vpop.f32.mrb[0].mxu0
      %v7262 = vadd.f32 0.0, %v7261
      %v7263 = vpop.f32.mrb[0].mxu0
      %v7264 = vadd.f32 0.0, %v7263
      %v7265 = vpop.f32.mrb[0].mxu0
      %v7266 = vadd.f32 0.0, %v7265
      %v7267 = vpop.f32.mrb[0].mxu0
      %v7268 = vadd.f32 0.0, %v7267
      %7269 = vmatprep.mubr.bf16.mxu0 %v7216
      %7270 = vmatmul.mubr.bf16.gmra.mrb[0].mxu0 %v7092
      %v7271 = vpop.f32.mrb[0].mxu0
      %v7272 = vadd.f32 0.0, %v7271
      %v7273 = vpop.f32.mrb[0].mxu0
      %v7274 = vadd.f32 0.0, %v7273
      %v7275 = vpop.f32.mrb[0].mxu0
      %v7276 = vadd.f32 0.0, %v7275
      %v7277 = vpop.f32.mrb[0].mxu0
      %v7278 = vadd.f32 0.0, %v7277
      %7279 = vmatprep.mubr.bf16.mxu0 %v7219
      %7280 = vmatmul.mubr.bf16.gmra.mrb[0].mxu0 %v7096
      %v7281 = vpop.f32.mrb[0].mxu0
      %v7282 = vadd.f32 0.0, %v7281
      %v7283 = vpop.f32.mrb[0].mxu0
      %v7284 = vadd.f32 0.0, %v7283
      %v7285 = vpop.f32.mrb[0].mxu0
      %v7286 = vadd.f32 0.0, %v7285
      %v7287 = vpop.f32.mrb[0].mxu0
      %v7288 = vadd.f32 0.0, %v7287
      %7289 = vmatprep.mubr.bf16.mxu0 %v7222
      %7290 = vmatmul.mubr.bf16.gmra.mrb[0].mxu0 %v7100
      %v7291 = vpop.f32.mrb[0].mxu0
      %v7292 = vadd.f32 0.0, %v7291
      %v7293 = vpop.f32.mrb[0].mxu0
      %v7294 = vadd.f32 0.0, %v7293
      %v7295 = vpop.f32.mrb[0].mxu0
      %v7296 = vadd.f32 0.0, %v7295
      %v7297 = vpop.f32.mrb[0].mxu0
      %v7298 = vadd.f32 0.0, %v7297
      %7299 = vmatprep.mubr.bf16.mxu0 %v7225
      %7300 = vmatmul.mubr.bf16.gmra.mrb[0].mxu0 %v7104
      %v7301 = vpop.f32.mrb[0].mxu0
      %v7302 = vadd.f32 0.0, %v7301
      %v7303 = vpop.f32.mrb[0].mxu0
      %v7304 = vadd.f32 0.0, %v7303
      %v7305 = vpop.f32.mrb[0].mxu0
      %v7306 = vadd.f32 0.0, %v7305
      %v7307 = vpop.f32.mrb[0].mxu0
      %v7308 = vadd.f32 0.0, %v7307
      %7309 = vdwg.mxu0
      %v7310 = vadd.f32 %v7043, %v7262
      %v7311 = vadd.f32 %v7044, %v7264
      %v7312 = vadd.f32 %v7045, %v7266
      %v7313 = vadd.f32 %v7046, %v7268
      %v7314 = vadd.f32 %v7047, %v7272
      %v7315 = vadd.f32 %v7048, %v7274
      %v7316 = vadd.f32 %v7049, %v7276
      %v7317 = vadd.f32 %v7050, %v7278
      %v7318 = vadd.f32 %v7051, %v7282
      %v7319 = vadd.f32 %v7052, %v7284
      %v7320 = vadd.f32 %v7053, %v7286
      %v7321 = vadd.f32 %v7054, %v7288
      %v7322 = vadd.f32 %v7055, %v7292
      %v7323 = vadd.f32 %v7056, %v7294
      %v7324 = vadd.f32 %v7057, %v7296
      %v7325 = vadd.f32 %v7058, %v7298
      %v7326 = vadd.f32 %v7059, %v7302
      %v7327 = vadd.f32 %v7060, %v7304
      %v7328 = vadd.f32 %v7061, %v7306
      %v7329 = vadd.f32 %v7062, %v7308
      %v7330 = vld [vmem:[%s25] sm:$0x1]
      %v7331 = vld [vmem:[%s27] sm:$0xff]
      %v7332 = vld [vmem:[%s27 + $0x8] sm:$0xff]
      %v7333 = vld [vmem:[%s27 + $0x10] sm:$0xff]
      %v7334 = vld [vmem:[%s27 + $0x18] sm:$0xff]
      %v7335 = vld [vmem:[%s27 + $0x20] sm:$0xff]
      %v7336 = vld [vmem:[%s27 + $0x28] sm:$0xff]
      %v7337 = vld [vmem:[%s27 + $0x30] sm:$0xff]
      %v7338 = vld [vmem:[%s27 + $0x38] sm:$0xff]
      %v7339 = vld [vmem:[%s27 + $0x40] sm:$0xff]
      %v7340 = vld [vmem:[%s27 + $0x48] sm:$0xff]
      %v7341 = vld [vmem:[%s27 + $0x50] sm:$0xff]
      %v7342 = vld [vmem:[%s27 + $0x58] sm:$0xff]
      %v7343 = vld [vmem:[%s27 + $0x60] sm:$0xff]
      %v7344 = vld [vmem:[%s27 + $0x68] sm:$0xff]
      %v7345 = vld [vmem:[%s27 + $0x70] sm:$0xff]
      %v7346 = vld [vmem:[%s27 + $0x78] sm:$0xff]
      %v7347 = vld [vmem:[%s27 + $0x80] sm:$0xff]
      %v7348 = vld [vmem:[%s27 + $0x88] sm:$0xff]
      %v7349 = vld [vmem:[%s27 + $0x90] sm:$0xff]
      %v7350 = vld [vmem:[%s27 + $0x98] sm:$0xff]
      %v7351 = vld [vmem:[%s27 + $0xa0] sm:$0xff]
      %v7352 = vld [vmem:[%s27 + $0xa8] sm:$0xff]
      %v7353 = vld [vmem:[%s27 + $0xb0] sm:$0xff]
      %v7354 = vld [vmem:[%s27 + $0xb8] sm:$0xff]
      %v7355 = vld [vmem:[%s27 + $0xc0] sm:$0xff]
      %v7356 = vld [vmem:[%s27 + $0xc8] sm:$0xff]
      %v7357 = vld [vmem:[%s27 + $0xd0] sm:$0xff]
      %v7358 = vld [vmem:[%s27 + $0xd8] sm:$0xff]
      %v7359 = vld [vmem:[%s27 + $0xe0] sm:$0xff]
      %v7360 = vld [vmem:[%s27 + $0xe8] sm:$0xff]
      %v7361 = vld [vmem:[%s27 + $0xf0] sm:$0xff]
      %v7362 = vld [vmem:[%s27 + $0xf8] sm:$0xff]
      %v7363 = vld [vmem:[%s29] sm:$0xf]
      %v7364 = vld [vmem:[%s29 + $0x4] sm:$0xf]
      %v7365 = vld [vmem:[%s29 + $0x8] sm:$0xf]
      %v7366 = vld [vmem:[%s29 + $0xc] sm:$0xf]
      %v7367 = vld [vmem:[%s29 + $0x10] sm:$0x3]
      %v7368 = vld [vmem:[%s31] sm:$0xff]
      %v7369 = vld [vmem:[%s31 + $0x8] sm:$0xff]
      %v7370 = vld [vmem:[%s31 + $0x10] sm:$0xff]
      %v7371 = vld [vmem:[%s31 + $0x18] sm:$0xff]
      %v7372 = vld [vmem:[%s31 + $0x20] sm:$0xff]
      %v7373 = vld [vmem:[%s31 + $0x28] sm:$0xff]
      %v7374 = vld [vmem:[%s31 + $0x30] sm:$0xff]
      %v7375 = vld [vmem:[%s31 + $0x38] sm:$0xff]
      %v7376 = vld [vmem:[%s31 + $0x40] sm:$0xff]
      %v7377 = vld [vmem:[%s31 + $0x48] sm:$0xff]
      %v7378 = vld [vmem:[%s31 + $0x50] sm:$0xff]
      %v7379 = vld [vmem:[%s31 + $0x58] sm:$0xff]
      %v7380 = vld [vmem:[%s31 + $0x60] sm:$0xff]
      %v7381 = vld [vmem:[%s31 + $0x68] sm:$0xff]
      %v7382 = vld [vmem:[%s31 + $0x70] sm:$0xff]
      %v7383 = vld [vmem:[%s31 + $0x78] sm:$0xff]
      %v7384 = vld [vmem:[%s31 + $0x80] sm:$0xff]
      %v7385 = vld [vmem:[%s31 + $0x88] sm:$0xff]
      %v7386 = vld [vmem:[%s31 + $0x90] sm:$0xff]
      %v7387 = vld [vmem:[%s31 + $0x98] sm:$0xff]
      %v7388 = vld [vmem:[%s31 + $0xa0] sm:$0xff]
      %v7389 = vld [vmem:[%s31 + $0xa8] sm:$0xff]
      %v7390 = vld [vmem:[%s31 + $0xb0] sm:$0xff]
      %v7391 = vld [vmem:[%s31 + $0xb8] sm:$0xff]
      %v7392 = vld [vmem:[%s31 + $0xc0] sm:$0xff]
      %v7393 = vld [vmem:[%s31 + $0xc8] sm:$0xff]
      %v7394 = vld [vmem:[%s31 + $0xd0] sm:$0xff]
      %v7395 = vld [vmem:[%s31 + $0xd8] sm:$0xff]
      %v7396 = vld [vmem:[%s31 + $0xe0] sm:$0xff]
      %v7397 = vld [vmem:[%s31 + $0xe8] sm:$0xff]
      %v7398 = vld [vmem:[%s31 + $0xf0] sm:$0xff]
      %v7399 = vld [vmem:[%s31 + $0xf8] sm:$0xff]
      %v7400 = vld [vmem:[%s33] sm:$0xff]
      %v7401 = vld [vmem:[%s33 + $0x8] sm:$0xff]
      %v7402 = vld [vmem:[%s33 + $0x10] sm:$0xff]
      %v7403 = vld [vmem:[%s33 + $0x18] sm:$0xff]
      %v7404 = vld [vmem:[%s33 + $0x20] sm:$0xff]
      %v7405 = vld [vmem:[%s33 + $0x28] sm:$0xff]
      %v7406 = vld [vmem:[%s33 + $0x30] sm:$0xff]
      %v7407 = vld [vmem:[%s33 + $0x38] sm:$0xff]
      %v7408 = vld [vmem:[%s33 + $0x40] sm:$0xff]
      %v7409 = vld [vmem:[%s33 + $0x48] sm:$0xff]
      %v7410 = vld [vmem:[%s33 + $0x50] sm:$0xff]
      %v7411 = vld [vmem:[%s33 + $0x58] sm:$0xff]
      %v7412 = vld [vmem:[%s33 + $0x60] sm:$0xff]
      %v7413 = vld [vmem:[%s33 + $0x68] sm:$0xff]
      %v7414 = vld [vmem:[%s33 + $0x70] sm:$0xff]
      %v7415 = vld [vmem:[%s33 + $0x78] sm:$0xff]
      %v7416 = vld [vmem:[%s33 + $0x80] sm:$0xff]
      %v7417 = vld [vmem:[%s33 + $0x88] sm:$0xff]
      %v7418 = vld [vmem:[%s33 + $0x90] sm:$0xff]
      %v7419 = vld [vmem:[%s33 + $0x98] sm:$0xff]
      %v7420 = vld [vmem:[%s33 + $0xa0] sm:$0xff]
      %v7421 = vld [vmem:[%s33 + $0xa8] sm:$0xff]
      %v7422 = vld [vmem:[%s33 + $0xb0] sm:$0xff]
      %v7423 = vld [vmem:[%s33 + $0xb8] sm:$0xff]
      %v7424 = vld [vmem:[%s33 + $0xc0] sm:$0xff]
      %v7425 = vld [vmem:[%s33 + $0xc8] sm:$0xff]
      %v7426 = vld [vmem:[%s33 + $0xd0] sm:$0xff]
      %v7427 = vld [vmem:[%s33 + $0xd8] sm:$0xff]
      %v7428 = vld [vmem:[%s33 + $0xe0] sm:$0xff]
      %v7429 = vld [vmem:[%s33 + $0xe8] sm:$0xff]
      %v7430 = vld [vmem:[%s33 + $0xf0] sm:$0xff]
      %v7431 = vld [vmem:[%s33 + $0xf8] sm:$0xff]
      %v7432 = vld [vmem:[%s35] sm:$0xff]
      %v7433 = vld [vmem:[%s35 + $0x8] sm:$0xff]
      %v7434 = vld [vmem:[%s35 + $0x10] sm:$0xff]
      %v7435 = vld [vmem:[%s35 + $0x18] sm:$0xff]
      %v7436 = vld [vmem:[%s35 + $0x20] sm:$0xff]
      %v7437 = vld [vmem:[%s35 + $0x28] sm:$0xff]
      %v7438 = vld [vmem:[%s35 + $0x30] sm:$0xff]
      %v7439 = vld [vmem:[%s35 + $0x38] sm:$0xff]
      %v7440 = vld [vmem:[%s37] sm:$0xff]
      %v7441 = vld [vmem:[%s37 + $0x8] sm:$0xff]
      %v7442 = vld [vmem:[%s37 + $0x10] sm:$0xff]
      %v7443 = vld [vmem:[%s37 + $0x18] sm:$0xff]
      %v7444 = vld [vmem:[%s37 + $0x20] sm:$0xf]
      %vm7445 = vcmask 637952
      %v7447 = vsel %vm7445, %v7330, 0
      %v7450 = vsel %vm2318, %v7328, 0
      %v7453 = vsel %vm2318, %v7329, 0
      %7455 = vmatprep.subr.mxu0 %v7311
      %7456 = vmatpush1.msra.mxu0 %v7310
      %7457 = vmatprep.subr.mxu0 %v7313
      %7458 = vmatpush1.msra.mxu0 %v7312
      %7459 = vmatprep.subr.mxu0 %v7315
      %7460 = vmatpush1.msra.mxu0 %v7314
      %7461 = vmatprep.subr.mxu0 %v7317
      %7462 = vmatpush1.msra.mxu0 %v7316
      %7463 = vmatprep.subr.mxu0 %v7319
      %7464 = vmatpush1.msra.mxu0 %v7318
      %7465 = vmatprep.subr.mxu0 %v7321
      %7466 = vmatpush1.msra.mxu0 %v7320
      %7467 = vmatprep.subr.mxu0 %v7323
      %7468 = vmatpush1.msra.mxu0 %v7322
      %7469 = vmatprep.subr.mxu0 %v7325
      %7470 = vmatpush1.msra.mxu0 %v7324
      %7471 = vmatprep.subr.mxu0 %v7327
      %7472 = vmatpush1.msra.mxu0 %v7326
      %7473 = vmatprep.subr.mxu0 %v7453
      %7474 = vmatpush1.msra.mxu0 %v7450
      %7475 = vmatprep.subr.mxu0 0.0
      %7476 = vmatpush1.msra.mxu0 0.0
      %7477 = vmatprep.subr.mxu0 0.0
      %7478 = vmatpush1.msra.mxu0 0.0
      %7479 = vmatprep.subr.mxu0 0.0
      %7480 = vmatpush1.msra.mxu0 0.0
      %7481 = vmatprep.subr.mxu0 0.0
      %7482 = vmatpush1.msra.mxu0 0.0
      %7483 = vmatprep.subr.mxu0 0.0
      %7484 = vmatpush1.msra.mxu0 0.0
      %7485 = vmatprep.subr.mxu0 0.0
      %7486 = vmatpush1.msra.mxu0 0.0
      %7487 = vmatprep.subr.mxu0 0.0
      %7488 = vmatpush1.msra.mxu0 0.0
      %7489 = vmatprep.subr.mxu0 0.0
      %7490 = vmatpush1.msra.mxu0 0.0
      %7491 = vmatprep.subr.mxu0 0.0
      %7492 = vmatpush1.msra.mxu0 0.0
      %7493 = vmatprep.subr.mxu0 0.0
      %7494 = vmatpush1.msra.mxu0 0.0
      %7495 = vmatprep.subr.mxu0 0.0
      %7496 = vmatpush1.msra.mxu0 0.0
      %7497 = vmatprep.subr.mxu0 0.0
      %7498 = vmatpush1.msra.mxu0 0.0
      %7499 = vmatprep.subr.mxu0 0.0
      %7500 = vmatpush1.msra.mxu0 0.0
      %7501 = vmatprep.subr.mxu0 0.0
      %7502 = vmatpush1.msra.mxu0 0.0
      %7503 = vmatprep.subr.mxu0 0.0
      %7504 = vmatpush1.msra.mxu0 0.0
      %7505 = vmatprep.subr.mxu0 0.0
      %7506 = vmatpush1.msra.mxu0 0.0
      %7507 = vmatprep.subr.mxu0 0.0
      %7508 = vmatpush1.msra.mxu0 0.0
      %7509 = vmatprep.subr.mxu0 0.0
      %7510 = vmatpush1.msra.mxu0 0.0
      %7511 = vmatprep.subr.mxu0 0.0
      %7512 = vmatpush1.msra.mxu0 0.0
      %7513 = vmatprep.subr.mxu0 0.0
      %7514 = vmatpush1.msra.mxu0 0.0
      %7515 = vmatprep.subr.mxu0 0.0
      %7516 = vmatpush1.msra.mxu0 0.0
      %7517 = vmatprep.subr.mxu0 0.0
      %7518 = vmatpush1.msra.mxu0 0.0
      %7519 = vmatprep.mubr.f32.mxu0 0.0
      %7520 = vmatmul.mubr.f32.gmra.mrb[0].mxu0 %v7447
      %v7521 = vpop.f32.mrb[0].mxu0
      %v7522 = vadd.f32 0.0, %v7521
      %v7523 = vpop.f32.mrb[0].mxu0
      %v7524 = vadd.f32 0.0, %v7523
      %7525 = vdwg.mxu0
      %v7526 = vmul.f32 %v7310, %v7310
      %v7527 = vmul.f32 %v7311, %v7311
      %v7528 = vmul.f32 %v7312, %v7312
      %v7529 = vmul.f32 %v7313, %v7313
      %v7530 = vmul.f32 %v7314, %v7314
      %v7531 = vmul.f32 %v7315, %v7315
      %v7532 = vmul.f32 %v7316, %v7316
      %v7533 = vmul.f32 %v7317, %v7317
      %v7534 = vmul.f32 %v7318, %v7318
      %v7535 = vmul.f32 %v7319, %v7319
      %v7536 = vmul.f32 %v7320, %v7320
      %v7537 = vmul.f32 %v7321, %v7321
      %v7538 = vmul.f32 %v7322, %v7322
      %v7539 = vmul.f32 %v7323, %v7323
      %v7540 = vmul.f32 %v7324, %v7324
      %v7541 = vmul.f32 %v7325, %v7325
      %v7542 = vmul.f32 %v7326, %v7326
      %v7543 = vmul.f32 %v7327, %v7327
      %v7544 = vmul.f32 %v7328, %v7328
      %v7545 = vmul.f32 %v7329, %v7329
      %v7547 = vsel %vm2318, %v7544, 0
      %v7550 = vsel %vm2318, %v7545, 0
      %7552 = vmatprep.subr.mxu0 %v7527
      %7553 = vmatpush1.msra.mxu0 %v7526
      %7554 = vmatprep.subr.mxu0 %v7529
      %7555 = vmatpush1.msra.mxu0 %v7528
      %7556 = vmatprep.subr.mxu0 %v7531
      %7557 = vmatpush1.msra.mxu0 %v7530
      %7558 = vmatprep.subr.mxu0 %v7533
      %7559 = vmatpush1.msra.mxu0 %v7532
      %7560 = vmatprep.subr.mxu0 %v7535
      %7561 = vmatpush1.msra.mxu0 %v7534
      %7562 = vmatprep.subr.mxu0 %v7537
      %7563 = vmatpush1.msra.mxu0 %v7536
      %7564 = vmatprep.subr.mxu0 %v7539
      %7565 = vmatpush1.msra.mxu0 %v7538
      %7566 = vmatprep.subr.mxu0 %v7541
      %7567 = vmatpush1.msra.mxu0 %v7540
      %7568 = vmatprep.subr.mxu0 %v7543
      %7569 = vmatpush1.msra.mxu0 %v7542
      %7570 = vmatprep.subr.mxu0 %v7550
      %7571 = vmatpush1.msra.mxu0 %v7547
      %7572 = vmatprep.subr.mxu0 0.0
      %7573 = vmatpush1.msra.mxu0 0.0
      %7574 = vmatprep.subr.mxu0 0.0
      %7575 = vmatpush1.msra.mxu0 0.0
      %7576 = vmatprep.subr.mxu0 0.0
      %7577 = vmatpush1.msra.mxu0 0.0
      %7578 = vmatprep.subr.mxu0 0.0
      %7579 = vmatpush1.msra.mxu0 0.0
      %7580 = vmatprep.subr.mxu0 0.0
      %7581 = vmatpush1.msra.mxu0 0.0
      %7582 = vmatprep.subr.mxu0 0.0
      %7583 = vmatpush1.msra.mxu0 0.0
      %7584 = vmatprep.subr.mxu0 0.0
      %7585 = vmatpush1.msra.mxu0 0.0
      %7586 = vmatprep.subr.mxu0 0.0
      %7587 = vmatpush1.msra.mxu0 0.0
      %7588 = vmatprep.subr.mxu0 0.0
      %7589 = vmatpush1.msra.mxu0 0.0
      %7590 = vmatprep.subr.mxu0 0.0
      %7591 = vmatpush1.msra.mxu0 0.0
      %7592 = vmatprep.subr.mxu0 0.0
      %7593 = vmatpush1.msra.mxu0 0.0
      %7594 = vmatprep.subr.mxu0 0.0
      %7595 = vmatpush1.msra.mxu0 0.0
      %7596 = vmatprep.subr.mxu0 0.0
      %7597 = vmatpush1.msra.mxu0 0.0
      %7598 = vmatprep.subr.mxu0 0.0
      %7599 = vmatpush1.msra.mxu0 0.0
      %7600 = vmatprep.subr.mxu0 0.0
      %7601 = vmatpush1.msra.mxu0 0.0
      %7602 = vmatprep.subr.mxu0 0.0
      %7603 = vmatpush1.msra.mxu0 0.0
      %7604 = vmatprep.subr.mxu0 0.0
      %7605 = vmatpush1.msra.mxu0 0.0
      %7606 = vmatprep.subr.mxu0 0.0
      %7607 = vmatpush1.msra.mxu0 0.0
      %7608 = vmatprep.subr.mxu0 0.0
      %7609 = vmatpush1.msra.mxu0 0.0
      %7610 = vmatprep.subr.mxu0 0.0
      %7611 = vmatpush1.msra.mxu0 0.0
      %7612 = vmatprep.subr.mxu0 0.0
      %7613 = vmatpush1.msra.mxu0 0.0
      %7614 = vmatprep.subr.mxu0 0.0
      %7615 = vmatpush1.msra.mxu0 0.0
      %7616 = vmatprep.mubr.f32.mxu0 0.0
      %7617 = vmatmul.mubr.f32.gmra.mrb[0].mxu0 %v7447
      %v7618 = vpop.f32.mrb[0].mxu0
      %v7619 = vadd.f32 0.0, %v7618
      %v7620 = vpop.f32.mrb[0].mxu0
      %v7621 = vadd.f32 0.0, %v7620
      %7622 = vdwg.mxu0
      %7623 = vmatprep.subr.mxu0 0.0
      %7624 = vmatpush1.msra.mxu0 %v7331
      %7625 = vmatprep.subr.mxu0 0.0
      %7626 = vmatpush1.msra.mxu0 %v7332
      %7627 = vmatprep.subr.mxu0 0.0
      %7628 = vmatpush1.msra.mxu0 %v7333
      %7629 = vmatprep.subr.mxu0 0.0
      %7630 = vmatpush1.msra.mxu0 %v7334
      %7631 = vmatprep.subr.mxu0 0.0
      %7632 = vmatpush1.msra.mxu0 %v7335
      %7633 = vmatprep.subr.mxu0 0.0
      %7634 = vmatpush1.msra.mxu0 %v7336
      %7635 = vmatprep.subr.mxu0 0.0
      %7636 = vmatpush1.msra.mxu0 %v7337
      %7637 = vmatprep.subr.mxu0 0.0
      %7638 = vmatpush1.msra.mxu0 %v7338
      %7639 = vmatprep.subr.mxu0 0.0
      %7640 = vmatpush1.msra.mxu0 %v7339
      %7641 = vmatprep.subr.mxu0 0.0
      %7642 = vmatpush1.msra.mxu0 %v7340
      %7643 = vmatprep.subr.mxu0 0.0
      %7644 = vmatpush1.msra.mxu0 %v7341
      %7645 = vmatprep.subr.mxu0 0.0
      %7646 = vmatpush1.msra.mxu0 %v7342
      %7647 = vmatprep.subr.mxu0 0.0
      %7648 = vmatpush1.msra.mxu0 %v7343
      %7649 = vmatprep.subr.mxu0 0.0
      %7650 = vmatpush1.msra.mxu0 %v7344
      %7651 = vmatprep.subr.mxu0 0.0
      %7652 = vmatpush1.msra.mxu0 %v7345
      %7653 = vmatprep.subr.mxu0 0.0
      %7654 = vmatpush1.msra.mxu0 %v7346
      %7655 = vmatprep.subr.mxu0 0.0
      %7656 = vmatpush1.msra.mxu0 %v7347
      %7657 = vmatprep.subr.mxu0 0.0
      %7658 = vmatpush1.msra.mxu0 %v7348
      %7659 = vmatprep.subr.mxu0 0.0
      %7660 = vmatpush1.msra.mxu0 %v7349
      %7661 = vmatprep.subr.mxu0 0.0
      %7662 = vmatpush1.msra.mxu0 %v7350
      %7663 = vmatprep.subr.mxu0 0.0
      %7664 = vmatpush1.msra.mxu0 %v7351
      %7665 = vmatprep.subr.mxu0 0.0
      %7666 = vmatpush1.msra.mxu0 %v7352
      %7667 = vmatprep.subr.mxu0 0.0
      %7668 = vmatpush1.msra.mxu0 %v7353
      %7669 = vmatprep.subr.mxu0 0.0
      %7670 = vmatpush1.msra.mxu0 %v7354
      %7671 = vmatprep.subr.mxu0 0.0
      %7672 = vmatpush1.msra.mxu0 %v7355
      %7673 = vmatprep.subr.mxu0 0.0
      %7674 = vmatpush1.msra.mxu0 %v7356
      %7675 = vmatprep.subr.mxu0 0.0
      %7676 = vmatpush1.msra.mxu0 %v7357
      %7677 = vmatprep.subr.mxu0 0.0
      %7678 = vmatpush1.msra.mxu0 %v7358
      %7679 = vmatprep.subr.mxu0 0.0
      %7680 = vmatpush1.msra.mxu0 %v7359
      %7681 = vmatprep.subr.mxu0 0.0
      %7682 = vmatpush1.msra.mxu0 %v7360
      %7683 = vmatprep.subr.mxu0 0.0
      %7684 = vmatpush1.msra.mxu0 %v7361
      %7685 = vmatprep.subr.mxu0 0.0
      %7686 = vmatpush1.msra.mxu0 %v7362
      %7687 = vmatprep.mubr.f32.mxu0 %v7524
      %7688 = vmatmul.mubr.f32.gmra.mrb[0].mxu0 %v7522
      %v7689 = vpop.f32.mrb[0].mxu0
      %v7690 = vadd.f32 0.0, %v7689
      %v7691 = vpop.f32.mrb[0].mxu0
      %7692 = vdwg.mxu0
      %v7693 = vmul.f32 %v7690, 0.001953125
      %7694 = vmatprep.subr.mxu0 0.0
      %7695 = vmatpush1.msra.mxu0 %v7331
      %7696 = vmatprep.subr.mxu0 0.0
      %7697 = vmatpush1.msra.mxu0 %v7332
      %7698 = vmatprep.subr.mxu0 0.0
      %7699 = vmatpush1.msra.mxu0 %v7333
      %7700 = vmatprep.subr.mxu0 0.0
      %7701 = vmatpush1.msra.mxu0 %v7334
      %7702 = vmatprep.subr.mxu0 0.0
      %7703 = vmatpush1.msra.mxu0 %v7335
      %7704 = vmatprep.subr.mxu0 0.0
      %7705 = vmatpush1.msra.mxu0 %v7336
      %7706 = vmatprep.subr.mxu0 0.0
      %7707 = vmatpush1.msra.mxu0 %v7337
      %7708 = vmatprep.subr.mxu0 0.0
      %7709 = vmatpush1.msra.mxu0 %v7338
      %7710 = vmatprep.subr.mxu0 0.0
      %7711 = vmatpush1.msra.mxu0 %v7339
      %7712 = vmatprep.subr.mxu0 0.0
      %7713 = vmatpush1.msra.mxu0 %v7340
      %7714 = vmatprep.subr.mxu0 0.0
      %7715 = vmatpush1.msra.mxu0 %v7341
      %7716 = vmatprep.subr.mxu0 0.0
      %7717 = vmatpush1.msra.mxu0 %v7342
      %7718 = vmatprep.subr.mxu0 0.0
      %7719 = vmatpush1.msra.mxu0 %v7343
      %7720 = vmatprep.subr.mxu0 0.0
      %7721 = vmatpush1.msra.mxu0 %v7344
      %7722 = vmatprep.subr.mxu0 0.0
      %7723 = vmatpush1.msra.mxu0 %v7345
      %7724 = vmatprep.subr.mxu0 0.0
      %7725 = vmatpush1.msra.mxu0 %v7346
      %7726 = vmatprep.subr.mxu0 0.0
      %7727 = vmatpush1.msra.mxu0 %v7347
      %7728 = vmatprep.subr.mxu0 0.0
      %7729 = vmatpush1.msra.mxu0 %v7348
      %7730 = vmatprep.subr.mxu0 0.0
      %7731 = vmatpush1.msra.mxu0 %v7349
      %7732 = vmatprep.subr.mxu0 0.0
      %7733 = vmatpush1.msra.mxu0 %v7350
      %7734 = vmatprep.subr.mxu0 0.0
      %7735 = vmatpush1.msra.mxu0 %v7351
      %7736 = vmatprep.subr.mxu0 0.0
      %7737 = vmatpush1.msra.mxu0 %v7352
      %7738 = vmatprep.subr.mxu0 0.0
      %7739 = vmatpush1.msra.mxu0 %v7353
      %7740 = vmatprep.subr.mxu0 0.0
      %7741 = vmatpush1.msra.mxu0 %v7354
      %7742 = vmatprep.subr.mxu0 0.0
      %7743 = vmatpush1.msra.mxu0 %v7355
      %7744 = vmatprep.subr.mxu0 0.0
      %7745 = vmatpush1.msra.mxu0 %v7356
      %7746 = vmatprep.subr.mxu0 0.0
      %7747 = vmatpush1.msra.mxu0 %v7357
      %7748 = vmatprep.subr.mxu0 0.0
      %7749 = vmatpush1.msra.mxu0 %v7358
      %7750 = vmatprep.subr.mxu0 0.0
      %7751 = vmatpush1.msra.mxu0 %v7359
      %7752 = vmatprep.subr.mxu0 0.0
      %7753 = vmatpush1.msra.mxu0 %v7360
      %7754 = vmatprep.subr.mxu0 0.0
      %7755 = vmatpush1.msra.mxu0 %v7361
      %7756 = vmatprep.subr.mxu0 0.0
      %7757 = vmatpush1.msra.mxu0 %v7362
      %7758 = vmatprep.mubr.f32.mxu0 %v7621
      %7759 = vmatmul.mubr.f32.gmra.mrb[0].mxu0 %v7619
      %v7760 = vpop.f32.mrb[0].mxu0
      %v7761 = vadd.f32 0.0, %v7760
      %v7762 = vpop.f32.mrb[0].mxu0
      %7763 = vdwg.mxu0
      %v7764 = vmul.f32 %v7761, 0.001953125
      %v7765 = vmul.f32 %v7693, %v7693
      %v7766 = vsub.f32 %v7764, %v7765
      %v7767 = vmax.f32 %v7766, 0.0
      %v7768 = vadd.f32 %v7767, 1e-05
      %v7769 = vrsqrt.pop %v7768
      %v7771 = vsel %vm5091, %v7769, 0
      %7773 = vmatprep.subr.mxu0 %v7433
      %7774 = vmatpush1.msra.mxu0 %v7432
      %7775 = vmatprep.subr.mxu0 %v7435
      %7776 = vmatpush1.msra.mxu0 %v7434
      %7777 = vmatprep.subr.mxu0 %v7437
      %7778 = vmatpush1.msra.mxu0 %v7436
      %7779 = vmatprep.subr.mxu0 %v7439
      %7780 = vmatpush1.msra.mxu0 %v7438
      %7781 = vmatprep.subr.mxu0 0.0
      %7782 = vmatpush1.msra.mxu0 0.0
      %7783 = vmatprep.subr.mxu0 0.0
      %7784 = vmatpush1.msra.mxu0 0.0
      %7785 = vmatprep.subr.mxu0 0.0
      %7786 = vmatpush1.msra.mxu0 0.0
      %7787 = vmatprep.subr.mxu0 0.0
      %7788 = vmatpush1.msra.mxu0 0.0
      %7789 = vmatprep.subr.mxu0 0.0
      %7790 = vmatpush1.msra.mxu0 0.0
      %7791 = vmatprep.subr.mxu0 0.0
      %7792 = vmatpush1.msra.mxu0 0.0
      %7793 = vmatprep.subr.mxu0 0.0
      %7794 = vmatpush1.msra.mxu0 0.0
      %7795 = vmatprep.subr.mxu0 0.0
      %7796 = vmatpush1.msra.mxu0 0.0
      %7797 = vmatprep.subr.mxu0 0.0
      %7798 = vmatpush1.msra.mxu0 0.0
      %7799 = vmatprep.subr.mxu0 0.0
      %7800 = vmatpush1.msra.mxu0 0.0
      %7801 = vmatprep.subr.mxu0 0.0
      %7802 = vmatpush1.msra.mxu0 0.0
      %7803 = vmatprep.subr.mxu0 0.0
      %7804 = vmatpush1.msra.mxu0 0.0
      %7805 = vmatprep.subr.mxu0 0.0
      %7806 = vmatpush1.msra.mxu0 0.0
      %7807 = vmatprep.subr.mxu0 0.0
      %7808 = vmatpush1.msra.mxu0 0.0
      %7809 = vmatprep.subr.mxu0 0.0
      %7810 = vmatpush1.msra.mxu0 0.0
      %7811 = vmatprep.subr.mxu0 0.0
      %7812 = vmatpush1.msra.mxu0 0.0
      %7813 = vmatprep.subr.mxu0 0.0
      %7814 = vmatpush1.msra.mxu0 0.0
      %7815 = vmatprep.subr.mxu0 0.0
      %7816 = vmatpush1.msra.mxu0 0.0
      %7817 = vmatprep.subr.mxu0 0.0
      %7818 = vmatpush1.msra.mxu0 0.0
      %7819 = vmatprep.subr.mxu0 0.0
      %7820 = vmatpush1.msra.mxu0 0.0
      %7821 = vmatprep.subr.mxu0 0.0
      %7822 = vmatpush1.msra.mxu0 0.0
      %7823 = vmatprep.subr.mxu0 0.0
      %7824 = vmatpush1.msra.mxu0 0.0
      %7825 = vmatprep.subr.mxu0 0.0
      %7826 = vmatpush1.msra.mxu0 0.0
      %7827 = vmatprep.subr.mxu0 0.0
      %7828 = vmatpush1.msra.mxu0 0.0
      %7829 = vmatprep.subr.mxu0 0.0
      %7830 = vmatpush1.msra.mxu0 0.0
      %7831 = vmatprep.subr.mxu0 0.0
      %7832 = vmatpush1.msra.mxu0 0.0
      %7833 = vmatprep.subr.mxu0 0.0
      %7834 = vmatpush1.msra.mxu0 0.0
      %7835 = vmatprep.subr.mxu0 0.0
      %7836 = vmatpush1.msra.mxu0 0.0
      %7837 = vmatprep.mubr.f32.mxu0 0.0
      %7838 = vmatmul.mubr.f32.gmra.mrb[0].mxu0 %v7771
      %v7839 = vpop.f32.mrb[0].mxu0
      %v7840 = vadd.f32 0.0, %v7839
      %v7841 = vpop.f32.mrb[0].mxu0
      %v7842 = vadd.f32 0.0, %v7841
      %7843 = vdwg.mxu0
      %v7844 = vmul.f32 %v7693, %v7769
      %v7845 = vsub.f32 0.0, %v7844
      %v7847 = vsel %vm5091, %v7845, 0
      %7849 = vmatprep.subr.mxu0 %v7433
      %7850 = vmatpush1.msra.mxu0 %v7432
      %7851 = vmatprep.subr.mxu0 %v7435
      %7852 = vmatpush1.msra.mxu0 %v7434
      %7853 = vmatprep.subr.mxu0 %v7437
      %7854 = vmatpush1.msra.mxu0 %v7436
      %7855 = vmatprep.subr.mxu0 %v7439
      %7856 = vmatpush1.msra.mxu0 %v7438
      %7857 = vmatprep.subr.mxu0 0.0
      %7858 = vmatpush1.msra.mxu0 0.0
      %7859 = vmatprep.subr.mxu0 0.0
      %7860 = vmatpush1.msra.mxu0 0.0
      %7861 = vmatprep.subr.mxu0 0.0
      %7862 = vmatpush1.msra.mxu0 0.0
      %7863 = vmatprep.subr.mxu0 0.0
      %7864 = vmatpush1.msra.mxu0 0.0
      %7865 = vmatprep.subr.mxu0 0.0
      %7866 = vmatpush1.msra.mxu0 0.0
      %7867 = vmatprep.subr.mxu0 0.0
      %7868 = vmatpush1.msra.mxu0 0.0
      %7869 = vmatprep.subr.mxu0 0.0
      %7870 = vmatpush1.msra.mxu0 0.0
      %7871 = vmatprep.subr.mxu0 0.0
      %7872 = vmatpush1.msra.mxu0 0.0
      %7873 = vmatprep.subr.mxu0 0.0
      %7874 = vmatpush1.msra.mxu0 0.0
      %7875 = vmatprep.subr.mxu0 0.0
      %7876 = vmatpush1.msra.mxu0 0.0
      %7877 = vmatprep.subr.mxu0 0.0
      %7878 = vmatpush1.msra.mxu0 0.0
      %7879 = vmatprep.subr.mxu0 0.0
      %7880 = vmatpush1.msra.mxu0 0.0
      %7881 = vmatprep.subr.mxu0 0.0
      %7882 = vmatpush1.msra.mxu0 0.0
      %7883 = vmatprep.subr.mxu0 0.0
      %7884 = vmatpush1.msra.mxu0 0.0
      %7885 = vmatprep.subr.mxu0 0.0
      %7886 = vmatpush1.msra.mxu0 0.0
      %7887 = vmatprep.subr.mxu0 0.0
      %7888 = vmatpush1.msra.mxu0 0.0
      %7889 = vmatprep.subr.mxu0 0.0
      %7890 = vmatpush1.msra.mxu0 0.0
      %7891 = vmatprep.subr.mxu0 0.0
      %7892 = vmatpush1.msra.mxu0 0.0
      %7893 = vmatprep.subr.mxu0 0.0
      %7894 = vmatpush1.msra.mxu0 0.0
      %7895 = vmatprep.subr.mxu0 0.0
      %7896 = vmatpush1.msra.mxu0 0.0
      %7897 = vmatprep.subr.mxu0 0.0
      %7898 = vmatpush1.msra.mxu0 0.0
      %7899 = vmatprep.subr.mxu0 0.0
      %7900 = vmatpush1.msra.mxu0 0.0
      %7901 = vmatprep.subr.mxu0 0.0
      %7902 = vmatpush1.msra.mxu0 0.0
      %7903 = vmatprep.subr.mxu0 0.0
      %7904 = vmatpush1.msra.mxu0 0.0
      %7905 = vmatprep.subr.mxu0 0.0
      %7906 = vmatpush1.msra.mxu0 0.0
      %7907 = vmatprep.subr.mxu0 0.0
      %7908 = vmatpush1.msra.mxu0 0.0
      %7909 = vmatprep.subr.mxu0 0.0
      %7910 = vmatpush1.msra.mxu0 0.0
      %7911 = vmatprep.subr.mxu0 0.0
      %7912 = vmatpush1.msra.mxu0 0.0
      %7913 = vmatprep.mubr.f32.mxu0 0.0
      %7914 = vmatmul.mubr.f32.gmra.mrb[0].mxu0 %v7847
      %v7915 = vpop.f32.mrb[0].mxu0
      %v7916 = vadd.f32 0.0, %v7915
      %v7917 = vpop.f32.mrb[0].mxu0
      %v7918 = vadd.f32 0.0, %v7917
      %7919 = vdwg.mxu0
      %v7938 = vrot.slane %v7310, 1
      %v7939 = vrot.slane %v7312, 1
      %v7940 = vsel %vm3055, %v7938, %v7939
      %v7941 = vrot.slane %v7311, 1
      %v7942 = vrot.slane %v7313, 1
      %v7943 = vsel %vm3055, %v7941, %v7942
      %v7944 = vrot.slane %v7314, 1
      %v7945 = vsel %vm3055, %v7939, %v7944
      %v7946 = vrot.slane %v7315, 1
      %v7947 = vsel %vm3055, %v7942, %v7946
      %v7948 = vrot.slane %v7316, 1
      %v7949 = vsel %vm3055, %v7944, %v7948
      %v7950 = vrot.slane %v7317, 1
      %v7951 = vsel %vm3055, %v7946, %v7950
      %v7952 = vrot.slane %v7318, 1
      %v7953 = vsel %vm3055, %v7948, %v7952
      %v7954 = vrot.slane %v7319, 1
      %v7955 = vsel %vm3055, %v7950, %v7954
      %v7956 = vrot.slane %v7320, 1
      %v7957 = vsel %vm3055, %v7952, %v7956
      %v7958 = vrot.slane %v7321, 1
      %v7959 = vsel %vm3055, %v7954, %v7958
      %v7960 = vrot.slane %v7322, 1
      %v7961 = vsel %vm3055, %v7956, %v7960
      %v7962 = vrot.slane %v7323, 1
      %v7963 = vsel %vm3055, %v7958, %v7962
      %v7964 = vrot.slane %v7324, 1
      %v7965 = vsel %vm3055, %v7960, %v7964
      %v7966 = vrot.slane %v7325, 1
      %v7967 = vsel %vm3055, %v7962, %v7966
      %v7968 = vrot.slane %v7326, 1
      %v7969 = vsel %vm3055, %v7964, %v7968
      %v7970 = vrot.slane %v7327, 1
      %v7971 = vsel %vm3055, %v7966, %v7970
      %v7972 = vrot.slane %v7328, 1
      %v7973 = vsel %vm3055, %v7968, %v7972
      %v7974 = vrot.slane %v7329, 1
      %v7975 = vsel %vm3055, %v7970, %v7974
      %v7996 = vrot.slane %v7310, 3
      %v7997 = vrot.slane %v7311, 3
      %v8000 = vsel %vm3274, %v7972, %v7996
      %v8001 = vsel %vm3274, %v7974, %v7997
      %v8002 = vmax.f32 %v7310, %v7940
      %v8003 = vmax.f32 %v7311, %v7943
      %v8004 = vmax.f32 %v7312, %v7945
      %v8005 = vmax.f32 %v7313, %v7947
      %v8006 = vmax.f32 %v7314, %v7949
      %v8007 = vmax.f32 %v7315, %v7951
      %v8008 = vmax.f32 %v7316, %v7953
      %v8009 = vmax.f32 %v7317, %v7955
      %v8010 = vmax.f32 %v7318, %v7957
      %v8011 = vmax.f32 %v7319, %v7959
      %v8012 = vmax.f32 %v7320, %v7961
      %v8013 = vmax.f32 %v7321, %v7963
      %v8014 = vmax.f32 %v7322, %v7965
      %v8015 = vmax.f32 %v7323, %v7967
      %v8016 = vmax.f32 %v7324, %v7969
      %v8017 = vmax.f32 %v7325, %v7971
      %v8018 = vmax.f32 %v7326, %v7973
      %v8019 = vmax.f32 %v7327, %v7975
      %v8020 = vmax.f32 %v7328, %v8000
      %v8021 = vmax.f32 %v7329, %v8001
      %v8040 = vrot.slane %v8004, 2
      %v8041 = vrot.slane %v8006, 2
      %v8042 = vsel %vm2318, %v8040, %v8041
      %v8043 = vrot.slane %v8005, 2
      %v8044 = vrot.slane %v8007, 2
      %v8045 = vsel %vm2318, %v8043, %v8044
      %v8046 = vrot.slane %v8008, 2
      %v8047 = vsel %vm2318, %v8041, %v8046
      %v8048 = vrot.slane %v8009, 2
      %v8049 = vsel %vm2318, %v8044, %v8048
      %v8050 = vrot.slane %v8010, 2
      %v8051 = vsel %vm2318, %v8046, %v8050
      %v8052 = vrot.slane %v8011, 2
      %v8053 = vsel %vm2318, %v8048, %v8052
      %v8054 = vrot.slane %v8012, 2
      %v8055 = vsel %vm2318, %v8050, %v8054
      %v8056 = vrot.slane %v8013, 2
      %v8057 = vsel %vm2318, %v8052, %v8056
      %v8058 = vrot.slane %v8014, 2
      %v8059 = vsel %vm2318, %v8054, %v8058
      %v8060 = vrot.slane %v8015, 2
      %v8061 = vsel %vm2318, %v8056, %v8060
      %v8062 = vrot.slane %v8016, 2
      %v8063 = vsel %vm2318, %v8058, %v8062
      %v8064 = vrot.slane %v8017, 2
      %v8065 = vsel %vm2318, %v8060, %v8064
      %v8066 = vrot.slane %v8018, 2
      %v8067 = vsel %vm2318, %v8062, %v8066
      %v8068 = vrot.slane %v8019, 2
      %v8069 = vsel %vm2318, %v8064, %v8068
      %v8070 = vrot.slane %v8020, 2
      %v8071 = vsel %vm2318, %v8066, %v8070
      %v8072 = vrot.slane %v8021, 2
      %v8073 = vsel %vm2318, %v8068, %v8072
      %v8094 = vrot.slane %v8002, 4
      %v8095 = vrot.slane %v8003, 4
      %v8096 = vrot.slane %v8004, 4
      %v8097 = vsel %vm3623, %v8094, %v8096
      %v8098 = vrot.slane %v8005, 4
      %v8099 = vsel %vm3623, %v8095, %v8098
      %v8104 = vsel %vm3623, %v8070, %v8094
      %v8105 = vsel %vm3623, %v8072, %v8095
      %v8106 = vmax.f32 %v8002, %v8042
      %v8107 = vmax.f32 %v8003, %v8045
      %v8108 = vmax.f32 %v8004, %v8047
      %v8109 = vmax.f32 %v8005, %v8049
      %v8110 = vmax.f32 %v8006, %v8051
      %v8111 = vmax.f32 %v8007, %v8053
      %v8112 = vmax.f32 %v8008, %v8055
      %v8113 = vmax.f32 %v8009, %v8057
      %v8114 = vmax.f32 %v8010, %v8059
      %v8115 = vmax.f32 %v8011, %v8061
      %v8116 = vmax.f32 %v8012, %v8063
      %v8117 = vmax.f32 %v8013, %v8065
      %v8118 = vmax.f32 %v8014, %v8067
      %v8119 = vmax.f32 %v8015, %v8069
      %v8120 = vmax.f32 %v8016, %v8071
      %v8121 = vmax.f32 %v8017, %v8073
      %v8122 = vmax.f32 %v8018, %v8104
      %v8123 = vmax.f32 %v8019, %v8105
      %v8124 = vmax.f32 %v8020, %v8097
      %v8125 = vmax.f32 %v8021, %v8099
      %v8126 = vpack.c.bf16 %v8108, %v8106
      %v8127 = vpack.c.bf16 %v8109, %v8107
      %v8128 = vpack.c.bf16 %v8112, %v8110
      %v8129 = vpack.c.bf16 %v8113, %v8111
      %v8130 = vpack.c.bf16 %v8116, %v8114
      %v8131 = vpack.c.bf16 %v8117, %v8115
      %v8132 = vpack.c.bf16 %v8120, %v8118
      %v8133 = vpack.c.bf16 %v8121, %v8119
      %v8134 = vpack.c.bf16 %v8124, %v8122
      %v8135 = vpack.c.bf16 %v8125, %v8123
      %v8141 = vunpack.c.l.b16 %v7363
      %v8142 = vunpack.c.l.b16 %v7364
      %v8143 = vunpack.c.l.b16 %v7365
      %v8144 = vunpack.c.l.b16 %v7366
      %v8145 = vunpack.c.l.b16 %v7367
      %v8146 = vpack.c.b16 %v8142, %v8141
      %v8147 = vpack.c.b16 %v8144, %v8143
      %v8148 = vpack.c.b16 %v8145, %v8145
      %v8150 = vsel %vm7445, %v8146, 0
      %v8153 = vsel %vm7445, %v8147, 0
      %v8156 = vsel %vm7445, %v8148, 0
      %v8159 = vsel %vm3055, %v8134, 0
      %v8162 = vsel %vm3055, %v8135, 0
      %8164 = vmatprep.subr.bf16.mxu0 %v8127
      %8165 = vmatpush1.bf16.msra.mxu0 %v8126
      %8166 = vmatprep.subr.bf16.mxu0 %v8129
      %8167 = vmatpush1.bf16.msra.mxu0 %v8128
      %8168 = vmatprep.subr.bf16.mxu0 %v8131
      %8169 = vmatpush1.bf16.msra.mxu0 %v8130
      %8170 = vmatprep.subr.bf16.mxu0 %v8133
      %8171 = vmatpush1.bf16.msra.mxu0 %v8132
      %8172 = vmatprep.subr.bf16.mxu0 %v8162
      %8173 = vmatpush1.bf16.msra.mxu0 %v8159
      %8174 = vmatprep.subr.bf16.mxu0 0
      %8175 = vmatpush1.bf16.msra.mxu0 0
      %8176 = vmatprep.subr.bf16.mxu0 0
      %8177 = vmatpush1.bf16.msra.mxu0 0
      %8178 = vmatprep.subr.bf16.mxu0 0
      %8179 = vmatpush1.bf16.msra.mxu0 0
      %8180 = vmatprep.subr.bf16.mxu0 0
      %8181 = vmatpush1.bf16.msra.mxu0 0
      %8182 = vmatprep.subr.bf16.mxu0 0
      %8183 = vmatpush1.bf16.msra.mxu0 0
      %8184 = vmatprep.subr.bf16.mxu0 0
      %8185 = vmatpush1.bf16.msra.mxu0 0
      %8186 = vmatprep.subr.bf16.mxu0 0
      %8187 = vmatpush1.bf16.msra.mxu0 0
      %8188 = vmatprep.subr.bf16.mxu0 0
      %8189 = vmatpush1.bf16.msra.mxu0 0
      %8190 = vmatprep.subr.bf16.mxu0 0
      %8191 = vmatpush1.bf16.msra.mxu0 0
      %8192 = vmatprep.subr.bf16.mxu0 0
      %8193 = vmatpush1.bf16.msra.mxu0 0
      %8194 = vmatprep.subr.bf16.mxu0 0
      %8195 = vmatpush1.bf16.msra.mxu0 0
      %8196 = vmatprep.mubr.bf16.mxu0 0
      %8197 = vmatmul.mubr.bf16.gmra.mrb[0].mxu0 %v8150
      %v8198 = vpop.f32.mrb[0].mxu0
      %v8199 = vadd.f32 0.0, %v8198
      %v8200 = vpop.f32.mrb[0].mxu0
      %v8201 = vadd.f32 0.0, %v8200
      %v8202 = vpop.f32.mrb[0].mxu0
      %v8203 = vadd.f32 0.0, %v8202
      %v8204 = vpop.f32.mrb[0].mxu0
      %v8205 = vadd.f32 0.0, %v8204
      %8206 = vmatprep.mubr.bf16.mxu0 0
      %8207 = vmatmul.mubr.bf16.gmra.mrb[0].mxu0 %v8153
      %v8208 = vpop.f32.mrb[0].mxu0
      %v8209 = vadd.f32 0.0, %v8208
      %v8210 = vpop.f32.mrb[0].mxu0
      %v8211 = vadd.f32 0.0, %v8210
      %v8212 = vpop.f32.mrb[0].mxu0
      %v8213 = vadd.f32 0.0, %v8212
      %v8214 = vpop.f32.mrb[0].mxu0
      %v8215 = vadd.f32 0.0, %v8214
      %8216 = vmatprep.mubr.bf16.mxu0 0
      %8217 = vmatmul.mubr.bf16.gmra.mrb[0].mxu0 %v8156
      %v8218 = vpop.f32.mrb[0].mxu0
      %v8219 = vadd.f32 0.0, %v8218
      %v8220 = vpop.f32.mrb[0].mxu0
      %v8221 = vadd.f32 0.0, %v8220
      %v8222 = vpop.f32.mrb[0].mxu0
      %v8223 = vpop.f32.mrb[0].mxu0
      %8224 = vdwg.mxu0
      %v8225 = vpack.c.bf16 %v8203, %v8199
      %v8226 = vpack.c.bf16 %v8205, %v8201
      %v8227 = vpack.c.bf16 %v8213, %v8209
      %v8228 = vpack.c.bf16 %v8215, %v8211
      %v8229 = vpack.c.bf16 %v8219, %v8219
      %v8230 = vpack.c.bf16 %v8221, %v8221
      %v8263 = vunpack.c.l.b16 %v7368
      %v8264 = vunpack.c.h.b16 %v7368
      %v8265 = vunpack.c.l.b16 %v7369
      %v8266 = vunpack.c.h.b16 %v7369
      %v8267 = vunpack.c.l.b16 %v7370
      %v8268 = vunpack.c.h.b16 %v7370
      %v8269 = vunpack.c.l.b16 %v7371
      %v8270 = vunpack.c.h.b16 %v7371
      %v8271 = vunpack.c.l.b16 %v7372
      %v8272 = vunpack.c.h.b16 %v7372
      %v8273 = vunpack.c.l.b16 %v7373
      %v8274 = vunpack.c.h.b16 %v7373
      %v8275 = vunpack.c.l.b16 %v7374
      %v8276 = vunpack.c.h.b16 %v7374
      %v8277 = vunpack.c.l.b16 %v7375
      %v8278 = vunpack.c.h.b16 %v7375
      %v8279 = vunpack.c.l.b16 %v7376
      %v8280 = vunpack.c.h.b16 %v7376
      %v8281 = vunpack.c.l.b16 %v7377
      %v8282 = vunpack.c.h.b16 %v7377
      %v8283 = vunpack.c.l.b16 %v7378
      %v8284 = vunpack.c.h.b16 %v7378
      %v8285 = vunpack.c.l.b16 %v7379
      %v8286 = vunpack.c.h.b16 %v7379
      %v8287 = vunpack.c.l.b16 %v7380
      %v8288 = vunpack.c.h.b16 %v7380
      %v8289 = vunpack.c.l.b16 %v7381
      %v8290 = vunpack.c.h.b16 %v7381
      %v8291 = vunpack.c.l.b16 %v7382
      %v8292 = vunpack.c.h.b16 %v7382
      %v8293 = vunpack.c.l.b16 %v7383
      %v8294 = vunpack.c.h.b16 %v7383
      %v8295 = vunpack.c.l.b16 %v7384
      %v8296 = vunpack.c.h.b16 %v7384
      %v8297 = vunpack.c.l.b16 %v7385
      %v8298 = vunpack.c.h.b16 %v7385
      %v8299 = vunpack.c.l.b16 %v7386
      %v8300 = vunpack.c.h.b16 %v7386
      %v8301 = vunpack.c.l.b16 %v7387
      %v8302 = vunpack.c.h.b16 %v7387
      %v8303 = vunpack.c.l.b16 %v7388
      %v8304 = vunpack.c.h.b16 %v7388
      %v8305 = vunpack.c.l.b16 %v7389
      %v8306 = vunpack.c.h.b16 %v7389
      %v8307 = vunpack.c.l.b16 %v7390
      %v8308 = vunpack.c.h.b16 %v7390
      %v8309 = vunpack.c.l.b16 %v7391
      %v8310 = vunpack.c.h.b16 %v7391
      %v8311 = vunpack.c.l.b16 %v7392
      %v8312 = vunpack.c.h.b16 %v7392
      %v8313 = vunpack.c.l.b16 %v7393
      %v8314 = vunpack.c.h.b16 %v7393
      %v8315 = vunpack.c.l.b16 %v7394
      %v8316 = vunpack.c.h.b16 %v7394
      %v8317 = vunpack.c.l.b16 %v7395
      %v8318 = vunpack.c.h.b16 %v7395
      %v8319 = vunpack.c.l.b16 %v7396
      %v8320 = vunpack.c.h.b16 %v7396
      %v8321 = vunpack.c.l.b16 %v7397
      %v8322 = vunpack.c.h.b16 %v7397
      %v8323 = vunpack.c.l.b16 %v7398
      %v8324 = vunpack.c.h.b16 %v7398
      %v8325 = vunpack.c.l.b16 %v7399
      %v8326 = vunpack.c.h.b16 %v7399
      %v8327 = vpack.c.b16 %v8265, %v8263
      %v8328 = vpack.c.b16 %v8266, %v8264
      %v8329 = vpack.c.b16 %v8269, %v8267
      %v8330 = vpack.c.b16 %v8270, %v8268
      %v8331 = vpack.c.b16 %v8273, %v8271
      %v8332 = vpack.c.b16 %v8274, %v8272
      %v8333 = vpack.c.b16 %v8277, %v8275
      %v8334 = vpack.c.b16 %v8278, %v8276
      %v8335 = vpack.c.b16 %v8281, %v8279
      %v8336 = vpack.c.b16 %v8282, %v8280
      %v8337 = vpack.c.b16 %v8285, %v8283
      %v8338 = vpack.c.b16 %v8286, %v8284
      %v8339 = vpack.c.b16 %v8289, %v8287
      %v8340 = vpack.c.b16 %v8290, %v8288
      %v8341 = vpack.c.b16 %v8293, %v8291
      %v8342 = vpack.c.b16 %v8294, %v8292
      %v8343 = vpack.c.b16 %v8297, %v8295
      %v8344 = vpack.c.b16 %v8298, %v8296
      %v8345 = vpack.c.b16 %v8301, %v8299
      %v8346 = vpack.c.b16 %v8302, %v8300
      %v8347 = vpack.c.b16 %v8305, %v8303
      %v8348 = vpack.c.b16 %v8306, %v8304
      %v8349 = vpack.c.b16 %v8309, %v8307
      %v8350 = vpack.c.b16 %v8310, %v8308
      %v8351 = vpack.c.b16 %v8313, %v8311
      %v8352 = vpack.c.b16 %v8314, %v8312
      %v8353 = vpack.c.b16 %v8317, %v8315
      %v8354 = vpack.c.b16 %v8318, %v8316
      %v8355 = vpack.c.b16 %v8321, %v8319
      %v8356 = vpack.c.b16 %v8322, %v8320
      %v8357 = vpack.c.b16 %v8325, %v8323
      %v8358 = vpack.c.b16 %v8326, %v8324
      %8391 = vmatprep.subr.bf16.mxu0 %v8328
      %8392 = vmatpush1.bf16.msra.mxu0 %v8327
      %8393 = vmatprep.subr.bf16.mxu0 %v8330
      %8394 = vmatpush1.bf16.msra.mxu0 %v8329
      %8395 = vmatprep.subr.bf16.mxu0 %v8332
      %8396 = vmatpush1.bf16.msra.mxu0 %v8331
      %8397 = vmatprep.subr.bf16.mxu0 %v8334
      %8398 = vmatpush1.bf16.msra.mxu0 %v8333
      %8399 = vmatprep.subr.bf16.mxu0 %v8336
      %8400 = vmatpush1.bf16.msra.mxu0 %v8335
      %8401 = vmatprep.subr.bf16.mxu0 %v8338
      %8402 = vmatpush1.bf16.msra.mxu0 %v8337
      %8403 = vmatprep.subr.bf16.mxu0 %v8340
      %8404 = vmatpush1.bf16.msra.mxu0 %v8339
      %8405 = vmatprep.subr.bf16.mxu0 %v8342
      %8406 = vmatpush1.bf16.msra.mxu0 %v8341
      %8407 = vmatprep.subr.bf16.mxu0 %v8344
      %8408 = vmatpush1.bf16.msra.mxu0 %v8343
      %8409 = vmatprep.subr.bf16.mxu0 %v8346
      %8410 = vmatpush1.bf16.msra.mxu0 %v8345
      %8411 = vmatprep.subr.bf16.mxu0 %v8348
      %8412 = vmatpush1.bf16.msra.mxu0 %v8347
      %8413 = vmatprep.subr.bf16.mxu0 %v8350
      %8414 = vmatpush1.bf16.msra.mxu0 %v8349
      %8415 = vmatprep.subr.bf16.mxu0 %v8352
      %8416 = vmatpush1.bf16.msra.mxu0 %v8351
      %8417 = vmatprep.subr.bf16.mxu0 %v8354
      %8418 = vmatpush1.bf16.msra.mxu0 %v8353
      %8419 = vmatprep.subr.bf16.mxu0 %v8356
      %8420 = vmatpush1.bf16.msra.mxu0 %v8355
      %8421 = vmatprep.subr.bf16.mxu0 %v8358
      %8422 = vmatpush1.bf16.msra.mxu0 %v8357
      %8423 = vmatprep.mubr.bf16.mxu0 %v8226
      %8424 = vmatmul.mubr.bf16.gmra.mrb[0].mxu0 %v8225
      %v8425 = vpop.f32.mrb[0].mxu0
      %v8426 = vadd.f32 0.0, %v8425
      %v8427 = vpop.f32.mrb[0].mxu0
      %v8428 = vadd.f32 0.0, %v8427
      %v8429 = vpop.f32.mrb[0].mxu0
      %v8430 = vadd.f32 0.0, %v8429
      %v8431 = vpop.f32.mrb[0].mxu0
      %v8432 = vadd.f32 0.0, %v8431
      %8433 = vmatprep.mubr.bf16.mxu0 %v8228
      %8434 = vmatmul.mubr.bf16.gmra.mrb[0].mxu0 %v8227
      %v8435 = vpop.f32.mrb[0].mxu0
      %v8436 = vadd.f32 0.0, %v8435
      %v8437 = vpop.f32.mrb[0].mxu0
      %v8438 = vadd.f32 0.0, %v8437
      %v8439 = vpop.f32.mrb[0].mxu0
      %v8440 = vadd.f32 0.0, %v8439
      %v8441 = vpop.f32.mrb[0].mxu0
      %v8442 = vadd.f32 0.0, %v8441
      %8443 = vmatprep.mubr.bf16.mxu0 %v8230
      %8444 = vmatmul.mubr.bf16.gmra.mrb[0].mxu0 %v8229
      %v8445 = vpop.f32.mrb[0].mxu0
      %v8446 = vadd.f32 0.0, %v8445
      %v8447 = vpop.f32.mrb[0].mxu0
      %v8448 = vadd.f32 0.0, %v8447
      %v8449 = vpop.f32.mrb[0].mxu0
      %v8450 = vpop.f32.mrb[0].mxu0
      %8451 = vdwg.mxu0
      %v8484 = vunpack.c.l.b16 %v7400
      %v8485 = vunpack.c.h.b16 %v7400
      %v8486 = vunpack.c.l.b16 %v7401
      %v8487 = vunpack.c.h.b16 %v7401
      %v8488 = vunpack.c.l.b16 %v7402
      %v8489 = vunpack.c.h.b16 %v7402
      %v8490 = vunpack.c.l.b16 %v7403
      %v8491 = vunpack.c.h.b16 %v7403
      %v8492 = vunpack.c.l.b16 %v7404
      %v8493 = vunpack.c.h.b16 %v7404
      %v8494 = vunpack.c.l.b16 %v7405
      %v8495 = vunpack.c.h.b16 %v7405
      %v8496 = vunpack.c.l.b16 %v7406
      %v8497 = vunpack.c.h.b16 %v7406
      %v8498 = vunpack.c.l.b16 %v7407
      %v8499 = vunpack.c.h.b16 %v7407
      %v8500 = vunpack.c.l.b16 %v7408
      %v8501 = vunpack.c.h.b16 %v7408
      %v8502 = vunpack.c.l.b16 %v7409
      %v8503 = vunpack.c.h.b16 %v7409
      %v8504 = vunpack.c.l.b16 %v7410
      %v8505 = vunpack.c.h.b16 %v7410
      %v8506 = vunpack.c.l.b16 %v7411
      %v8507 = vunpack.c.h.b16 %v7411
      %v8508 = vunpack.c.l.b16 %v7412
      %v8509 = vunpack.c.h.b16 %v7412
      %v8510 = vunpack.c.l.b16 %v7413
      %v8511 = vunpack.c.h.b16 %v7413
      %v8512 = vunpack.c.l.b16 %v7414
      %v8513 = vunpack.c.h.b16 %v7414
      %v8514 = vunpack.c.l.b16 %v7415
      %v8515 = vunpack.c.h.b16 %v7415
      %v8516 = vunpack.c.l.b16 %v7416
      %v8517 = vunpack.c.h.b16 %v7416
      %v8518 = vunpack.c.l.b16 %v7417
      %v8519 = vunpack.c.h.b16 %v7417
      %v8520 = vunpack.c.l.b16 %v7418
      %v8521 = vunpack.c.h.b16 %v7418
      %v8522 = vunpack.c.l.b16 %v7419
      %v8523 = vunpack.c.h.b16 %v7419
      %v8524 = vunpack.c.l.b16 %v7420
      %v8525 = vunpack.c.h.b16 %v7420
      %v8526 = vunpack.c.l.b16 %v7421
      %v8527 = vunpack.c.h.b16 %v7421
      %v8528 = vunpack.c.l.b16 %v7422
      %v8529 = vunpack.c.h.b16 %v7422
      %v8530 = vunpack.c.l.b16 %v7423
      %v8531 = vunpack.c.h.b16 %v7423
      %v8532 = vunpack.c.l.b16 %v7424
      %v8533 = vunpack.c.h.b16 %v7424
      %v8534 = vunpack.c.l.b16 %v7425
      %v8535 = vunpack.c.h.b16 %v7425
      %v8536 = vunpack.c.l.b16 %v7426
      %v8537 = vunpack.c.h.b16 %v7426
      %v8538 = vunpack.c.l.b16 %v7427
      %v8539 = vunpack.c.h.b16 %v7427
      %v8540 = vunpack.c.l.b16 %v7428
      %v8541 = vunpack.c.h.b16 %v7428
      %v8542 = vunpack.c.l.b16 %v7429
      %v8543 = vunpack.c.h.b16 %v7429
      %v8544 = vunpack.c.l.b16 %v7430
      %v8545 = vunpack.c.h.b16 %v7430
      %v8546 = vunpack.c.l.b16 %v7431
      %v8547 = vunpack.c.h.b16 %v7431
      %v8548 = vpack.c.b16 %v8486, %v8484
      %v8549 = vpack.c.b16 %v8487, %v8485
      %v8550 = vpack.c.b16 %v8490, %v8488
      %v8551 = vpack.c.b16 %v8491, %v8489
      %v8552 = vpack.c.b16 %v8494, %v8492
      %v8553 = vpack.c.b16 %v8495, %v8493
      %v8554 = vpack.c.b16 %v8498, %v8496
      %v8555 = vpack.c.b16 %v8499, %v8497
      %v8556 = vpack.c.b16 %v8502, %v8500
      %v8557 = vpack.c.b16 %v8503, %v8501
      %v8558 = vpack.c.b16 %v8506, %v8504
      %v8559 = vpack.c.b16 %v8507, %v8505
      %v8560 = vpack.c.b16 %v8510, %v8508
      %v8561 = vpack.c.b16 %v8511, %v8509
      %v8562 = vpack.c.b16 %v8514, %v8512
      %v8563 = vpack.c.b16 %v8515, %v8513
      %v8564 = vpack.c.b16 %v8518, %v8516
      %v8565 = vpack.c.b16 %v8519, %v8517
      %v8566 = vpack.c.b16 %v8522, %v8520
      %v8567 = vpack.c.b16 %v8523, %v8521
      %v8568 = vpack.c.b16 %v8526, %v8524
      %v8569 = vpack.c.b16 %v8527, %v8525
      %v8570 = vpack.c.b16 %v8530, %v8528
      %v8571 = vpack.c.b16 %v8531, %v8529
      %v8572 = vpack.c.b16 %v8534, %v8532
      %v8573 = vpack.c.b16 %v8535, %v8533
      %v8574 = vpack.c.b16 %v8538, %v8536
      %v8575 = vpack.c.b16 %v8539, %v8537
      %v8576 = vpack.c.b16 %v8542, %v8540
      %v8577 = vpack.c.b16 %v8543, %v8541
      %v8578 = vpack.c.b16 %v8546, %v8544
      %v8579 = vpack.c.b16 %v8547, %v8545
      %8612 = vmatprep.subr.bf16.mxu0 %v8549
      %8613 = vmatpush1.bf16.msra.mxu0 %v8548
      %8614 = vmatprep.subr.bf16.mxu0 %v8551
      %8615 = vmatpush1.bf16.msra.mxu0 %v8550
      %8616 = vmatprep.subr.bf16.mxu0 %v8553
      %8617 = vmatpush1.bf16.msra.mxu0 %v8552
      %8618 = vmatprep.subr.bf16.mxu0 %v8555
      %8619 = vmatpush1.bf16.msra.mxu0 %v8554
      %8620 = vmatprep.subr.bf16.mxu0 %v8557
      %8621 = vmatpush1.bf16.msra.mxu0 %v8556
      %8622 = vmatprep.subr.bf16.mxu0 %v8559
      %8623 = vmatpush1.bf16.msra.mxu0 %v8558
      %8624 = vmatprep.subr.bf16.mxu0 %v8561
      %8625 = vmatpush1.bf16.msra.mxu0 %v8560
      %8626 = vmatprep.subr.bf16.mxu0 %v8563
      %8627 = vmatpush1.bf16.msra.mxu0 %v8562
      %8628 = vmatprep.subr.bf16.mxu0 %v8565
      %8629 = vmatpush1.bf16.msra.mxu0 %v8564
      %8630 = vmatprep.subr.bf16.mxu0 %v8567
      %8631 = vmatpush1.bf16.msra.mxu0 %v8566
      %8632 = vmatprep.subr.bf16.mxu0 %v8569
      %8633 = vmatpush1.bf16.msra.mxu0 %v8568
      %8634 = vmatprep.subr.bf16.mxu0 %v8571
      %8635 = vmatpush1.bf16.msra.mxu0 %v8570
      %8636 = vmatprep.subr.bf16.mxu0 %v8573
      %8637 = vmatpush1.bf16.msra.mxu0 %v8572
      %8638 = vmatprep.subr.bf16.mxu0 %v8575
      %8639 = vmatpush1.bf16.msra.mxu0 %v8574
      %8640 = vmatprep.subr.bf16.mxu0 %v8577
      %8641 = vmatpush1.bf16.msra.mxu0 %v8576
      %8642 = vmatprep.subr.bf16.mxu0 %v8579
      %8643 = vmatpush1.bf16.msra.mxu0 %v8578
      %8644 = vmatprep.mubr.bf16.mxu0 %v8226
      %8645 = vmatmul.mubr.bf16.gmra.mrb[0].mxu0 %v8225
      %v8646 = vpop.f32.mrb[0].mxu0
      %v8647 = vadd.f32 0.0, %v8646
      %v8648 = vpop.f32.mrb[0].mxu0
      %v8649 = vadd.f32 0.0, %v8648
      %v8650 = vpop.f32.mrb[0].mxu0
      %v8651 = vadd.f32 0.0, %v8650
      %v8652 = vpop.f32.mrb[0].mxu0
      %v8653 = vadd.f32 0.0, %v8652
      %8654 = vmatprep.mubr.bf16.mxu0 %v8228
      %8655 = vmatmul.mubr.bf16.gmra.mrb[0].mxu0 %v8227
      %v8656 = vpop.f32.mrb[0].mxu0
      %v8657 = vadd.f32 0.0, %v8656
      %v8658 = vpop.f32.mrb[0].mxu0
      %v8659 = vadd.f32 0.0, %v8658
      %v8660 = vpop.f32.mrb[0].mxu0
      %v8661 = vadd.f32 0.0, %v8660
      %v8662 = vpop.f32.mrb[0].mxu0
      %v8663 = vadd.f32 0.0, %v8662
      %8664 = vmatprep.mubr.bf16.mxu0 %v8230
      %8665 = vmatmul.mubr.bf16.gmra.mrb[0].mxu0 %v8229
      %v8666 = vpop.f32.mrb[0].mxu0
      %v8667 = vadd.f32 0.0, %v8666
      %v8668 = vpop.f32.mrb[0].mxu0
      %v8669 = vadd.f32 0.0, %v8668
      %v8670 = vpop.f32.mrb[0].mxu0
      %v8671 = vpop.f32.mrb[0].mxu0
      %8672 = vdwg.mxu0
      %v8673 = vmax.f32 %v8426, %v8647
      %v8674 = vmax.f32 %v8428, %v8649
      %v8675 = vmax.f32 %v8430, %v8651
      %v8676 = vmax.f32 %v8432, %v8653
      %v8677 = vmax.f32 %v8436, %v8657
      %v8678 = vmax.f32 %v8438, %v8659
      %v8679 = vmax.f32 %v8440, %v8661
      %v8680 = vmax.f32 %v8442, %v8663
      %v8681 = vmax.f32 %v8446, %v8667
      %v8682 = vmax.f32 %v8448, %v8669
      %v8683 = vlaneseq
      %v8684 = vshrl.u32 %v8683, 7
      %v8685 = vsub.s32 0, %v8684
      %v8686 = vrot.slane %v7840, %v8685
      %v8687 = vlaneseq
      %v8688 = vshrl.u32 %v8687, 7
      %v8689 = vsub.s32 0, %v8688
      %v8690 = vrot.slane %v7842, %v8689
      %v8691 = vmul.f32 %v8673, %v8686
      %v8692 = vmul.f32 %v8674, %v8690
      %v8693 = vmul.f32 %v8675, %v8686
      %v8694 = vmul.f32 %v8676, %v8690
      %v8695 = vmul.f32 %v8677, %v8686
      %v8696 = vmul.f32 %v8678, %v8690
      %v8697 = vmul.f32 %v8679, %v8686
      %v8698 = vmul.f32 %v8680, %v8690
      %v8699 = vmul.f32 %v8681, %v8686
      %v8700 = vmul.f32 %v8682, %v8690
      %v8701 = vlaneseq
      %v8702 = vshrl.u32 %v8701, 7
      %v8703 = vsub.s32 0, %v8702
      %v8704 = vrot.slane %v7916, %v8703
      %v8705 = vlaneseq
      %v8706 = vshrl.u32 %v8705, 7
      %v8707 = vsub.s32 0, %v8706
      %v8708 = vrot.slane %v7918, %v8707
      %v8709 = vadd.f32 %v8691, %v8704
      %v8710 = vadd.f32 %v8692, %v8708
      %v8711 = vadd.f32 %v8693, %v8704
      %v8712 = vadd.f32 %v8694, %v8708
      %v8713 = vadd.f32 %v8695, %v8704
      %v8714 = vadd.f32 %v8696, %v8708
      %v8715 = vadd.f32 %v8697, %v8704
      %v8716 = vadd.f32 %v8698, %v8708
      %v8717 = vadd.f32 %v8699, %v8704
      %v8718 = vadd.f32 %v8700, %v8708
      %v8719 = vmul.f32 %v8709, 0.01
      %v8720 = vmul.f32 %v8710, 0.01
      %v8721 = vmul.f32 %v8711, 0.01
      %v8722 = vmul.f32 %v8712, 0.01
      %v8723 = vmul.f32 %v8713, 0.01
      %v8724 = vmul.f32 %v8714, 0.01
      %v8725 = vmul.f32 %v8715, 0.01
      %v8726 = vmul.f32 %v8716, 0.01
      %v8727 = vmul.f32 %v8717, 0.01
      %v8728 = vmul.f32 %v8718, 0.01
      %v8729 = vmax.f32 %v8709, %v8719
      %v8730 = vmax.f32 %v8710, %v8720
      %v8731 = vmax.f32 %v8711, %v8721
      %v8732 = vmax.f32 %v8712, %v8722
      %v8733 = vmax.f32 %v8713, %v8723
      %v8734 = vmax.f32 %v8714, %v8724
      %v8735 = vmax.f32 %v8715, %v8725
      %v8736 = vmax.f32 %v8716, %v8726
      %v8737 = vmax.f32 %v8717, %v8727
      %v8738 = vmax.f32 %v8718, %v8728
      %8740 = vset.pattern.permute.xlu0 0
      %8741 = vperm.xlu0 %8740, %v7440
      %v8742 = vpop.permute.xlu0 %8741
      %8745 = vset.pattern.permute.xlu0 0
      %8746 = vperm.xlu0 %8745, %v7441
      %v8747 = vpop.permute.xlu0 %8746
      %8750 = vset.pattern.permute.xlu0 0
      %8751 = vperm.xlu0 %8750, %v7442
      %v8752 = vpop.permute.xlu0 %8751
      %8755 = vset.pattern.permute.xlu0 0
      %8756 = vperm.xlu0 %8755, %v7443
      %v8757 = vpop.permute.xlu0 %8756
      %8760 = vset.pattern.permute.xlu0 0
      %8761 = vperm.xlu0 %8760, %v7444
      %v8762 = vpop.permute.xlu0 %8761
      %v8764 = vmul.f32 %v8729, %v8742
      %v8765 = vmul.f32 %v8730, %v8742
      %v8766 = vmul.f32 %v8731, %v8747
      %v8767 = vmul.f32 %v8732, %v8747
      %v8768 = vmul.f32 %v8733, %v8752
      %v8769 = vmul.f32 %v8734, %v8752
      %v8770 = vmul.f32 %v8735, %v8757
      %v8771 = vmul.f32 %v8736, %v8757
      %v8772 = vmul.f32 %v8737, %v8762
      %v8773 = vmul.f32 %v8738, %v8762
      %v8774 = vpack.c.bf16 %v8766, %v8764
      %v8775 = vpack.c.bf16 %v8767, %v8765
      %v8776 = vpack.c.bf16 %v8770, %v8768
      %v8777 = vpack.c.bf16 %v8771, %v8769
      %v8778 = vpack.c.bf16 %v8772, %v8772
      %v8779 = vpack.c.bf16 %v8773, %v8773
      %v8780 = vld [vmem:[%s9] sm:$0xff]
      %v8781 = vld [vmem:[%s9 + $0x8] sm:$0xff]
      %v8782 = vld [vmem:[%s9 + $0x10] sm:$0xff]
      %v8783 = vld [vmem:[%s9 + $0x18] sm:$0xff]
      %v8784 = vld [vmem:[%s9 + $0x20] sm:$0xff]
      %v8785 = vld [vmem:[%s9 + $0x28] sm:$0xff]
      %v8786 = vld [vmem:[%s9 + $0x30] sm:$0xff]
      %v8787 = vld [vmem:[%s9 + $0x38] sm:$0xff]
      %v8788 = vld [vmem:[%s9 + $0x40] sm:$0xff]
      %v8789 = vld [vmem:[%s9 + $0x48] sm:$0xff]
      %v8790 = vld [vmem:[%s9 + $0x50] sm:$0xff]
      %v8791 = vld [vmem:[%s9 + $0x58] sm:$0xff]
      %v8792 = vld [vmem:[%s9 + $0x60] sm:$0xff]
      %v8793 = vld [vmem:[%s9 + $0x68] sm:$0xff]
      %v8794 = vld [vmem:[%s9 + $0x70] sm:$0xff]
      %v8795 = vld [vmem:[%s9 + $0x78] sm:$0xff]
      %v8796 = vld [vmem:[%s9 + $0x80] sm:$0xff]
      %v8797 = vld [vmem:[%s9 + $0x88] sm:$0xff]
      %v8798 = vld [vmem:[%s9 + $0x90] sm:$0xff]
      %v8799 = vld [vmem:[%s9 + $0x98] sm:$0xff]
      %v8800 = vld [vmem:[%s9 + $0xa0] sm:$0xff]
      %v8801 = vld [vmem:[%s9 + $0xa8] sm:$0xff]
      %v8802 = vld [vmem:[%s9 + $0xb0] sm:$0xff]
      %v8803 = vld [vmem:[%s9 + $0xb8] sm:$0xff]
      %s8804 = scalar_lea.vmem %s9, 192
      %v8805 = vld [vmem:[%s8804] sm:$0xff]
      %v8806 = vld [vmem:[%s8804 + $0x8] sm:$0xff]
      %v8807 = vld [vmem:[%s8804 + $0x10] sm:$0xff]
      %v8808 = vld [vmem:[%s8804 + $0x18] sm:$0xff]
      %v8809 = vld [vmem:[%s8804 + $0x20] sm:$0xff]
      %v8810 = vld [vmem:[%s8804 + $0x28] sm:$0xff]
      %v8811 = vld [vmem:[%s8804 + $0x30] sm:$0xff]
      %v8812 = vld [vmem:[%s8804 + $0x38] sm:$0xff]
      %v8813 = vld [vmem:[%s8804 + $0x40] sm:$0xff]
      %v8814 = vld [vmem:[%s8804 + $0x48] sm:$0xff]
      %v8815 = vld [vmem:[%s8804 + $0x50] sm:$0xff]
      %v8816 = vld [vmem:[%s8804 + $0x58] sm:$0xff]
      %v8817 = vld [vmem:[%s8804 + $0x60] sm:$0xff]
      %v8818 = vld [vmem:[%s8804 + $0x68] sm:$0xff]
      %v8819 = vld [vmem:[%s8804 + $0x70] sm:$0xff]
      %v8820 = vld [vmem:[%s8804 + $0x78] sm:$0xff]
      %v8821 = vld [vmem:[%s8804 + $0x80] sm:$0xff]
      %v8822 = vld [vmem:[%s8804 + $0x88] sm:$0xff]
      %v8823 = vld [vmem:[%s8804 + $0x90] sm:$0xff]
      %v8824 = vld [vmem:[%s8804 + $0x98] sm:$0xff]
      %v8825 = vld [vmem:[%s8804 + $0xa0] sm:$0xff]
      %v8826 = vld [vmem:[%s8804 + $0xa8] sm:$0xff]
      %v8827 = vld [vmem:[%s8804 + $0xb0] sm:$0xff]
      %v8828 = vld [vmem:[%s8804 + $0xb8] sm:$0xff]
      %v8830 = vshrl.u32 %v8774, 16
      %v8832 = vshll.u32 %v8774, 16
      %v8834 = vrot.slane %v8832, 1
      %v8835 = vor.u32 %v8830, %v8834
      %v8837 = vshll.u32 %v8776, 16
      %v8839 = vrot.slane %v8837, 1
      %v8840 = vsel %vm4907, %v8835, %v8839
      %v8842 = vshrl.u32 %v8775, 16
      %v8844 = vshll.u32 %v8775, 16
      %v8846 = vrot.slane %v8844, 1
      %v8847 = vor.u32 %v8842, %v8846
      %v8849 = vshll.u32 %v8777, 16
      %v8851 = vrot.slane %v8849, 1
      %v8852 = vsel %vm4907, %v8847, %v8851
      %v8853 = vshrl.u32 %v8776, 16
      %v8855 = vor.u32 %v8853, %v8839
      %v8856 = vshrl.u32 %v8777, 16
      %v8858 = vor.u32 %v8856, %v8851
      %v8885 = vunpack.c.l.b16 %v8805
      %v8886 = vunpack.c.h.b16 %v8805
      %v8887 = vunpack.c.l.b16 %v8806
      %v8888 = vunpack.c.h.b16 %v8806
      %v8889 = vunpack.c.l.b16 %v8807
      %v8890 = vunpack.c.h.b16 %v8807
      %v8891 = vunpack.c.l.b16 %v8808
      %v8892 = vunpack.c.h.b16 %v8808
      %v8893 = vunpack.c.l.b16 %v8809
      %v8894 = vunpack.c.h.b16 %v8809
      %v8895 = vunpack.c.l.b16 %v8810
      %v8896 = vunpack.c.h.b16 %v8810
      %v8897 = vunpack.c.l.b16 %v8811
      %v8898 = vunpack.c.h.b16 %v8811
      %v8899 = vunpack.c.l.b16 %v8812
      %v8900 = vunpack.c.h.b16 %v8812
      %v8901 = vunpack.c.l.b16 %v8813
      %v8902 = vunpack.c.h.b16 %v8813
      %v8903 = vunpack.c.l.b16 %v8814
      %v8904 = vunpack.c.h.b16 %v8814
      %v8905 = vunpack.c.l.b16 %v8815
      %v8906 = vunpack.c.h.b16 %v8815
      %v8907 = vunpack.c.l.b16 %v8816
      %v8908 = vunpack.c.h.b16 %v8816
      %v8909 = vunpack.c.l.b16 %v8817
      %v8910 = vunpack.c.h.b16 %v8817
      %v8911 = vunpack.c.l.b16 %v8818
      %v8912 = vunpack.c.h.b16 %v8818
      %v8913 = vunpack.c.l.b16 %v8819
      %v8914 = vunpack.c.h.b16 %v8819
      %v8915 = vunpack.c.l.b16 %v8820
      %v8916 = vunpack.c.h.b16 %v8820
      %v8917 = vunpack.c.l.b16 %v8821
      %v8918 = vunpack.c.h.b16 %v8821
      %v8919 = vunpack.c.l.b16 %v8822
      %v8920 = vunpack.c.h.b16 %v8822
      %v8921 = vunpack.c.l.b16 %v8823
      %v8922 = vunpack.c.h.b16 %v8823
      %v8923 = vunpack.c.l.b16 %v8824
      %v8924 = vunpack.c.h.b16 %v8824
      %v8925 = vunpack.c.l.b16 %v8825
      %v8926 = vunpack.c.h.b16 %v8825
      %v8927 = vunpack.c.l.b16 %v8826
      %v8928 = vunpack.c.h.b16 %v8826
      %v8929 = vunpack.c.l.b16 %v8827
      %v8930 = vunpack.c.h.b16 %v8827
      %v8931 = vunpack.c.l.b16 %v8828
      %v8932 = vunpack.c.h.b16 %v8828
      %v8933 = vpack.c.b16 %v8887, %v8885
      %v8934 = vpack.c.b16 %v8888, %v8886
      %v8935 = vpack.c.b16 %v8891, %v8889
      %v8936 = vpack.c.b16 %v8892, %v8890
      %v8937 = vpack.c.b16 %v8895, %v8893
      %v8938 = vpack.c.b16 %v8896, %v8894
      %v8939 = vpack.c.b16 %v8899, %v8897
      %v8940 = vpack.c.b16 %v8900, %v8898
      %v8941 = vpack.c.b16 %v8903, %v8901
      %v8942 = vpack.c.b16 %v8904, %v8902
      %v8943 = vpack.c.b16 %v8907, %v8905
      %v8944 = vpack.c.b16 %v8908, %v8906
      %v8945 = vpack.c.b16 %v8911, %v8909
      %v8946 = vpack.c.b16 %v8912, %v8910
      %v8947 = vpack.c.b16 %v8915, %v8913
      %v8948 = vpack.c.b16 %v8916, %v8914
      %v8949 = vpack.c.b16 %v8919, %v8917
      %v8950 = vpack.c.b16 %v8920, %v8918
      %v8951 = vpack.c.b16 %v8923, %v8921
      %v8952 = vpack.c.b16 %v8924, %v8922
      %v8953 = vpack.c.b16 %v8927, %v8925
      %v8954 = vpack.c.b16 %v8928, %v8926
      %v8955 = vpack.c.b16 %v8931, %v8929
      %v8956 = vpack.c.b16 %v8932, %v8930
      %vm8981 = vcmask 523264
      %v8983 = vsel %vm8981, %v8852, 0
      %v8986 = vsel %vm8981, %v8858, 0
      %8988 = vmatprep.subr.bf16.mxu0 %v8934
      %8989 = vmatpush1.bf16.msra.mxu0 %v8933
      %8990 = vmatprep.subr.bf16.mxu0 %v8936
      %8991 = vmatpush1.bf16.msra.mxu0 %v8935
      %8992 = vmatprep.subr.bf16.mxu0 %v8938
      %8993 = vmatpush1.bf16.msra.mxu0 %v8937
      %8994 = vmatprep.subr.bf16.mxu0 %v8940
      %8995 = vmatpush1.bf16.msra.mxu0 %v8939
      %8996 = vmatprep.subr.bf16.mxu0 %v8942
      %8997 = vmatpush1.bf16.msra.mxu0 %v8941
      %8998 = vmatprep.subr.bf16.mxu0 %v8944
      %8999 = vmatpush1.bf16.msra.mxu0 %v8943
      %9000 = vmatprep.subr.bf16.mxu0 %v8946
      %9001 = vmatpush1.bf16.msra.mxu0 %v8945
      %9002 = vmatprep.subr.bf16.mxu0 %v8948
      %9003 = vmatpush1.bf16.msra.mxu0 %v8947
      %9004 = vmatprep.subr.bf16.mxu0 %v8950
      %9005 = vmatpush1.bf16.msra.mxu0 %v8949
      %9006 = vmatprep.subr.bf16.mxu0 %v8952
      %9007 = vmatpush1.bf16.msra.mxu0 %v8951
      %9008 = vmatprep.subr.bf16.mxu0 %v8954
      %9009 = vmatpush1.bf16.msra.mxu0 %v8953
      %9010 = vmatprep.subr.bf16.mxu0 %v8956
      %9011 = vmatpush1.bf16.msra.mxu0 %v8955
      %9012 = vmatprep.subr.bf16.mxu0 0
      %9013 = vmatpush1.bf16.msra.mxu0 0
      %9014 = vmatprep.subr.bf16.mxu0 0
      %9015 = vmatpush1.bf16.msra.mxu0 0
      %9016 = vmatprep.subr.bf16.mxu0 0
      %9017 = vmatpush1.bf16.msra.mxu0 0
      %9018 = vmatprep.subr.bf16.mxu0 0
      %9019 = vmatpush1.bf16.msra.mxu0 0
      %9020 = vmatprep.mubr.bf16.mxu0 %v8983
      %9021 = vmatmul.mubr.bf16.gmra.mrb[0].mxu0 %v8840
      %v9022 = vpop.f32.mrb[0].mxu0
      %v9023 = vadd.f32 0.0, %v9022
      %v9024 = vpop.f32.mrb[0].mxu0
      %v9025 = vadd.f32 0.0, %v9024
      %v9026 = vpop.f32.mrb[0].mxu0
      %v9027 = vadd.f32 0.0, %v9026
      %v9028 = vpop.f32.mrb[0].mxu0
      %v9029 = vadd.f32 0.0, %v9028
      %9030 = vmatprep.mubr.bf16.mxu0 %v8986
      %9031 = vmatmul.mubr.bf16.gmra.mrb[0].mxu0 %v8855
      %v9032 = vpop.f32.mrb[0].mxu0
      %v9033 = vadd.f32 0.0, %v9032
      %v9034 = vpop.f32.mrb[0].mxu0
      %v9035 = vadd.f32 0.0, %v9034
      %v9036 = vpop.f32.mrb[0].mxu0
      %v9037 = vpop.f32.mrb[0].mxu0
      %9038 = vdwg.mxu0
      %v9063 = vunpack.c.l.b16 %v8780
      %v9064 = vunpack.c.h.b16 %v8780
      %v9065 = vunpack.c.l.b16 %v8781
      %v9066 = vunpack.c.h.b16 %v8781
      %v9067 = vunpack.c.l.b16 %v8782
      %v9068 = vunpack.c.h.b16 %v8782
      %v9069 = vunpack.c.l.b16 %v8783
      %v9070 = vunpack.c.h.b16 %v8783
      %v9071 = vunpack.c.l.b16 %v8784
      %v9072 = vunpack.c.h.b16 %v8784
      %v9073 = vunpack.c.l.b16 %v8785
      %v9074 = vunpack.c.h.b16 %v8785
      %v9075 = vunpack.c.l.b16 %v8786
      %v9076 = vunpack.c.h.b16 %v8786
      %v9077 = vunpack.c.l.b16 %v8787
      %v9078 = vunpack.c.h.b16 %v8787
      %v9079 = vunpack.c.l.b16 %v8788
      %v9080 = vunpack.c.h.b16 %v8788
      %v9081 = vunpack.c.l.b16 %v8789
      %v9082 = vunpack.c.h.b16 %v8789
      %v9083 = vunpack.c.l.b16 %v8790
      %v9084 = vunpack.c.h.b16 %v8790
      %v9085 = vunpack.c.l.b16 %v8791
      %v9086 = vunpack.c.h.b16 %v8791
      %v9087 = vunpack.c.l.b16 %v8792
      %v9088 = vunpack.c.h.b16 %v8792
      %v9089 = vunpack.c.l.b16 %v8793
      %v9090 = vunpack.c.h.b16 %v8793
      %v9091 = vunpack.c.l.b16 %v8794
      %v9092 = vunpack.c.h.b16 %v8794
      %v9093 = vunpack.c.l.b16 %v8795
      %v9094 = vunpack.c.h.b16 %v8795
      %v9095 = vunpack.c.l.b16 %v8796
      %v9096 = vunpack.c.h.b16 %v8796
      %v9097 = vunpack.c.l.b16 %v8797
      %v9098 = vunpack.c.h.b16 %v8797
      %v9099 = vunpack.c.l.b16 %v8798
      %v9100 = vunpack.c.h.b16 %v8798
      %v9101 = vunpack.c.l.b16 %v8799
      %v9102 = vunpack.c.h.b16 %v8799
      %v9103 = vunpack.c.l.b16 %v8800
      %v9104 = vunpack.c.h.b16 %v8800
      %v9105 = vunpack.c.l.b16 %v8801
      %v9106 = vunpack.c.h.b16 %v8801
      %v9107 = vunpack.c.l.b16 %v8802
      %v9108 = vunpack.c.h.b16 %v8802
      %v9109 = vunpack.c.l.b16 %v8803
      %v9110 = vunpack.c.h.b16 %v8803
      %v9111 = vpack.c.b16 %v9065, %v9063
      %v9112 = vpack.c.b16 %v9066, %v9064
      %v9113 = vpack.c.b16 %v9069, %v9067
      %v9114 = vpack.c.b16 %v9070, %v9068
      %v9115 = vpack.c.b16 %v9073, %v9071
      %v9116 = vpack.c.b16 %v9074, %v9072
      %v9117 = vpack.c.b16 %v9077, %v9075
      %v9118 = vpack.c.b16 %v9078, %v9076
      %v9119 = vpack.c.b16 %v9081, %v9079
      %v9120 = vpack.c.b16 %v9082, %v9080
      %v9121 = vpack.c.b16 %v9085, %v9083
      %v9122 = vpack.c.b16 %v9086, %v9084
      %v9123 = vpack.c.b16 %v9089, %v9087
      %v9124 = vpack.c.b16 %v9090, %v9088
      %v9125 = vpack.c.b16 %v9093, %v9091
      %v9126 = vpack.c.b16 %v9094, %v9092
      %v9127 = vpack.c.b16 %v9097, %v9095
      %v9128 = vpack.c.b16 %v9098, %v9096
      %v9129 = vpack.c.b16 %v9101, %v9099
      %v9130 = vpack.c.b16 %v9102, %v9100
      %v9131 = vpack.c.b16 %v9105, %v9103
      %v9132 = vpack.c.b16 %v9106, %v9104
      %v9133 = vpack.c.b16 %v9109, %v9107
      %v9134 = vpack.c.b16 %v9110, %v9108
      %v9159 = vsel %vm8981, %v8775, 0
      %v9161 = vsel %vm8981, %v8777, 0
      %9163 = vmatprep.subr.bf16.mxu0 %v9112
      %9164 = vmatpush1.bf16.msra.mxu0 %v9111
      %9165 = vmatprep.subr.bf16.mxu0 %v9114
      %9166 = vmatpush1.bf16.msra.mxu0 %v9113
      %9167 = vmatprep.subr.bf16.mxu0 %v9116
      %9168 = vmatpush1.bf16.msra.mxu0 %v9115
      %9169 = vmatprep.subr.bf16.mxu0 %v9118
      %9170 = vmatpush1.bf16.msra.mxu0 %v9117
      %9171 = vmatprep.subr.bf16.mxu0 %v9120
      %9172 = vmatpush1.bf16.msra.mxu0 %v9119
      %9173 = vmatprep.subr.bf16.mxu0 %v9122
      %9174 = vmatpush1.bf16.msra.mxu0 %v9121
      %9175 = vmatprep.subr.bf16.mxu0 %v9124
      %9176 = vmatpush1.bf16.msra.mxu0 %v9123
      %9177 = vmatprep.subr.bf16.mxu0 %v9126
      %9178 = vmatpush1.bf16.msra.mxu0 %v9125
      %9179 = vmatprep.subr.bf16.mxu0 %v9128
      %9180 = vmatpush1.bf16.msra.mxu0 %v9127
      %9181 = vmatprep.subr.bf16.mxu0 %v9130
      %9182 = vmatpush1.bf16.msra.mxu0 %v9129
      %9183 = vmatprep.subr.bf16.mxu0 %v9132
      %9184 = vmatpush1.bf16.msra.mxu0 %v9131
      %9185 = vmatprep.subr.bf16.mxu0 %v9134
      %9186 = vmatpush1.bf16.msra.mxu0 %v9133
      %9187 = vmatprep.subr.bf16.mxu0 0
      %9188 = vmatpush1.bf16.msra.mxu0 0
      %9189 = vmatprep.subr.bf16.mxu0 0
      %9190 = vmatpush1.bf16.msra.mxu0 0
      %9191 = vmatprep.subr.bf16.mxu0 0
      %9192 = vmatpush1.bf16.msra.mxu0 0
      %9193 = vmatprep.subr.bf16.mxu0 0
      %9194 = vmatpush1.bf16.msra.mxu0 0
      %9195 = vmatprep.mubr.bf16.mxu0 %v9159
      %9196 = vmatmul.mubr.bf16.gmra.mrb[0].mxu0 %v8774
      %v9197 = vpop.f32.mrb[0].mxu0
      %v9198 = vadd.f32 %v9023, %v9197
      %v9199 = vpop.f32.mrb[0].mxu0
      %v9200 = vadd.f32 %v9025, %v9199
      %v9201 = vpop.f32.mrb[0].mxu0
      %v9202 = vadd.f32 %v9027, %v9201
      %v9203 = vpop.f32.mrb[0].mxu0
      %v9204 = vadd.f32 %v9029, %v9203
      %9205 = vmatprep.mubr.bf16.mxu0 %v9161
      %9206 = vmatmul.mubr.bf16.gmra.mrb[0].mxu0 %v8776
      %v9207 = vpop.f32.mrb[0].mxu0
      %v9208 = vadd.f32 %v9033, %v9207
      %v9209 = vpop.f32.mrb[0].mxu0
      %v9210 = vadd.f32 %v9035, %v9209
      %v9211 = vpop.f32.mrb[0].mxu0
      %v9212 = vpop.f32.mrb[0].mxu0
      %9213 = vdwg.mxu0
      %s9214 = scalar_lea.vmem %s9, 384
      %v9215 = vld [vmem:[%s9214] sm:$0xff]
      %v9216 = vld [vmem:[%s9214 + $0x8] sm:$0xff]
      %v9217 = vld [vmem:[%s9214 + $0x10] sm:$0xff]
      %v9218 = vld [vmem:[%s9214 + $0x18] sm:$0xff]
      %v9219 = vld [vmem:[%s9214 + $0x20] sm:$0xff]
      %v9220 = vld [vmem:[%s9214 + $0x28] sm:$0xff]
      %v9221 = vld [vmem:[%s9214 + $0x30] sm:$0xff]
      %v9222 = vld [vmem:[%s9214 + $0x38] sm:$0xff]
      %v9223 = vld [vmem:[%s9214 + $0x40] sm:$0xff]
      %v9224 = vld [vmem:[%s9214 + $0x48] sm:$0xff]
      %v9225 = vld [vmem:[%s9214 + $0x50] sm:$0xff]
      %v9226 = vld [vmem:[%s9214 + $0x58] sm:$0xff]
      %v9227 = vld [vmem:[%s9214 + $0x60] sm:$0xff]
      %v9228 = vld [vmem:[%s9214 + $0x68] sm:$0xff]
      %v9229 = vld [vmem:[%s9214 + $0x70] sm:$0xff]
      %v9230 = vld [vmem:[%s9214 + $0x78] sm:$0xff]
      %v9231 = vld [vmem:[%s9214 + $0x80] sm:$0xff]
      %v9232 = vld [vmem:[%s9214 + $0x88] sm:$0xff]
      %v9233 = vld [vmem:[%s9214 + $0x90] sm:$0xff]
      %v9234 = vld [vmem:[%s9214 + $0x98] sm:$0xff]
      %v9235 = vld [vmem:[%s9214 + $0xa0] sm:$0xff]
      %v9236 = vld [vmem:[%s9214 + $0xa8] sm:$0xff]
      %v9237 = vld [vmem:[%s9214 + $0xb0] sm:$0xff]
      %v9238 = vld [vmem:[%s9214 + $0xb8] sm:$0xff]
      %v9243 = vrot.slane %v8774, 1
      %v9244 = vrot.slane %v8776, 1
      %v9245 = vsel %vm5414, %v9243, %v9244
      %v9246 = vrot.slane %v8775, 1
      %v9247 = vrot.slane %v8777, 1
      %v9248 = vsel %vm5414, %v9246, %v9247
      %v9275 = vunpack.c.l.b16 %v9215
      %v9276 = vunpack.c.h.b16 %v9215
      %v9277 = vunpack.c.l.b16 %v9216
      %v9278 = vunpack.c.h.b16 %v9216
      %v9279 = vunpack.c.l.b16 %v9217
      %v9280 = vunpack.c.h.b16 %v9217
      %v9281 = vunpack.c.l.b16 %v9218
      %v9282 = vunpack.c.h.b16 %v9218
      %v9283 = vunpack.c.l.b16 %v9219
      %v9284 = vunpack.c.h.b16 %v9219
      %v9285 = vunpack.c.l.b16 %v9220
      %v9286 = vunpack.c.h.b16 %v9220
      %v9287 = vunpack.c.l.b16 %v9221
      %v9288 = vunpack.c.h.b16 %v9221
      %v9289 = vunpack.c.l.b16 %v9222
      %v9290 = vunpack.c.h.b16 %v9222
      %v9291 = vunpack.c.l.b16 %v9223
      %v9292 = vunpack.c.h.b16 %v9223
      %v9293 = vunpack.c.l.b16 %v9224
      %v9294 = vunpack.c.h.b16 %v9224
      %v9295 = vunpack.c.l.b16 %v9225
      %v9296 = vunpack.c.h.b16 %v9225
      %v9297 = vunpack.c.l.b16 %v9226
      %v9298 = vunpack.c.h.b16 %v9226
      %v9299 = vunpack.c.l.b16 %v9227
      %v9300 = vunpack.c.h.b16 %v9227
      %v9301 = vunpack.c.l.b16 %v9228
      %v9302 = vunpack.c.h.b16 %v9228
      %v9303 = vunpack.c.l.b16 %v9229
      %v9304 = vunpack.c.h.b16 %v9229
      %v9305 = vunpack.c.l.b16 %v9230
      %v9306 = vunpack.c.h.b16 %v9230
      %v9307 = vunpack.c.l.b16 %v9231
      %v9308 = vunpack.c.h.b16 %v9231
      %v9309 = vunpack.c.l.b16 %v9232
      %v9310 = vunpack.c.h.b16 %v9232
      %v9311 = vunpack.c.l.b16 %v9233
      %v9312 = vunpack.c.h.b16 %v9233
      %v9313 = vunpack.c.l.b16 %v9234
      %v9314 = vunpack.c.h.b16 %v9234
      %v9315 = vunpack.c.l.b16 %v9235
      %v9316 = vunpack.c.h.b16 %v9235
      %v9317 = vunpack.c.l.b16 %v9236
      %v9318 = vunpack.c.h.b16 %v9236
      %v9319 = vunpack.c.l.b16 %v9237
      %v9320 = vunpack.c.h.b16 %v9237
      %v9321 = vunpack.c.l.b16 %v9238
      %v9322 = vunpack.c.h.b16 %v9238
      %v9323 = vpack.c.b16 %v9277, %v9275
      %v9324 = vpack.c.b16 %v9278, %v9276
      %v9325 = vpack.c.b16 %v9281, %v9279
      %v9326 = vpack.c.b16 %v9282, %v9280
      %v9327 = vpack.c.b16 %v9285, %v9283
      %v9328 = vpack.c.b16 %v9286, %v9284
      %v9329 = vpack.c.b16 %v9289, %v9287
      %v9330 = vpack.c.b16 %v9290, %v9288
      %v9331 = vpack.c.b16 %v9293, %v9291
      %v9332 = vpack.c.b16 %v9294, %v9292
      %v9333 = vpack.c.b16 %v9297, %v9295
      %v9334 = vpack.c.b16 %v9298, %v9296
      %v9335 = vpack.c.b16 %v9301, %v9299
      %v9336 = vpack.c.b16 %v9302, %v9300
      %v9337 = vpack.c.b16 %v9305, %v9303
      %v9338 = vpack.c.b16 %v9306, %v9304
      %v9339 = vpack.c.b16 %v9309, %v9307
      %v9340 = vpack.c.b16 %v9310, %v9308
      %v9341 = vpack.c.b16 %v9313, %v9311
      %v9342 = vpack.c.b16 %v9314, %v9312
      %v9343 = vpack.c.b16 %v9317, %v9315
      %v9344 = vpack.c.b16 %v9318, %v9316
      %v9345 = vpack.c.b16 %v9321, %v9319
      %v9346 = vpack.c.b16 %v9322, %v9320
      %v9372 = vsel %vm8981, %v9248, 0
      %v9375 = vsel %vm8981, %v9247, 0
      %9377 = vmatprep.subr.bf16.mxu0 %v9324
      %9378 = vmatpush1.bf16.msra.mxu0 %v9323
      %9379 = vmatprep.subr.bf16.mxu0 %v9326
      %9380 = vmatpush1.bf16.msra.mxu0 %v9325
      %9381 = vmatprep.subr.bf16.mxu0 %v9328
      %9382 = vmatpush1.bf16.msra.mxu0 %v9327
      %9383 = vmatprep.subr.bf16.mxu0 %v9330
      %9384 = vmatpush1.bf16.msra.mxu0 %v9329
      %9385 = vmatprep.subr.bf16.mxu0 %v9332
      %9386 = vmatpush1.bf16.msra.mxu0 %v9331
      %9387 = vmatprep.subr.bf16.mxu0 %v9334
      %9388 = vmatpush1.bf16.msra.mxu0 %v9333
      %9389 = vmatprep.subr.bf16.mxu0 %v9336
      %9390 = vmatpush1.bf16.msra.mxu0 %v9335
      %9391 = vmatprep.subr.bf16.mxu0 %v9338
      %9392 = vmatpush1.bf16.msra.mxu0 %v9337
      %9393 = vmatprep.subr.bf16.mxu0 %v9340
      %9394 = vmatpush1.bf16.msra.mxu0 %v9339
      %9395 = vmatprep.subr.bf16.mxu0 %v9342
      %9396 = vmatpush1.bf16.msra.mxu0 %v9341
      %9397 = vmatprep.subr.bf16.mxu0 %v9344
      %9398 = vmatpush1.bf16.msra.mxu0 %v9343
      %9399 = vmatprep.subr.bf16.mxu0 %v9346
      %9400 = vmatpush1.bf16.msra.mxu0 %v9345
      %9401 = vmatprep.subr.bf16.mxu0 0
      %9402 = vmatpush1.bf16.msra.mxu0 0
      %9403 = vmatprep.subr.bf16.mxu0 0
      %9404 = vmatpush1.bf16.msra.mxu0 0
      %9405 = vmatprep.subr.bf16.mxu0 0
      %9406 = vmatpush1.bf16.msra.mxu0 0
      %9407 = vmatprep.subr.bf16.mxu0 0
      %9408 = vmatpush1.bf16.msra.mxu0 0
      %9409 = vmatprep.mubr.bf16.mxu0 %v9372
      %9410 = vmatmul.mubr.bf16.gmra.mrb[0].mxu0 %v9245
      %v9411 = vpop.f32.mrb[0].mxu0
      %v9412 = vadd.f32 0.0, %v9411
      %v9413 = vpop.f32.mrb[0].mxu0
      %v9414 = vadd.f32 0.0, %v9413
      %v9415 = vpop.f32.mrb[0].mxu0
      %v9416 = vadd.f32 0.0, %v9415
      %v9417 = vpop.f32.mrb[0].mxu0
      %v9418 = vadd.f32 0.0, %v9417
      %9419 = vmatprep.mubr.bf16.mxu0 %v9375
      %9420 = vmatmul.mubr.bf16.gmra.mrb[0].mxu0 %v9244
      %v9421 = vpop.f32.mrb[0].mxu0
      %v9422 = vadd.f32 0.0, %v9421
      %v9423 = vpop.f32.mrb[0].mxu0
      %v9424 = vadd.f32 0.0, %v9423
      %v9425 = vpop.f32.mrb[0].mxu0
      %v9426 = vpop.f32.mrb[0].mxu0
      %9427 = vdwg.mxu0
      %v9428 = vadd.f32 %v9198, %v9412
      %v9429 = vadd.f32 %v9200, %v9414
      %v9430 = vadd.f32 %v9202, %v9416
      %v9431 = vadd.f32 %v9204, %v9418
      %v9432 = vadd.f32 %v9208, %v9422
      %v9433 = vadd.f32 %v9210, %v9424
      %s9434 = scalar_lea.vmem %s9, 576
      %v9435 = vld [vmem:[%s9434] sm:$0xff]
      %v9436 = vld [vmem:[%s9434 + $0x8] sm:$0xff]
      %v9437 = vld [vmem:[%s9434 + $0x10] sm:$0xff]
      %v9438 = vld [vmem:[%s9434 + $0x18] sm:$0xff]
      %v9439 = vld [vmem:[%s9434 + $0x20] sm:$0xff]
      %v9440 = vld [vmem:[%s9434 + $0x28] sm:$0xff]
      %v9441 = vld [vmem:[%s9434 + $0x30] sm:$0xff]
      %v9442 = vld [vmem:[%s9434 + $0x38] sm:$0xff]
      %v9443 = vld [vmem:[%s9434 + $0x40] sm:$0xff]
      %v9444 = vld [vmem:[%s9434 + $0x48] sm:$0xff]
      %v9445 = vld [vmem:[%s9434 + $0x50] sm:$0xff]
      %v9446 = vld [vmem:[%s9434 + $0x58] sm:$0xff]
      %v9447 = vld [vmem:[%s9434 + $0x60] sm:$0xff]
      %v9448 = vld [vmem:[%s9434 + $0x68] sm:$0xff]
      %v9449 = vld [vmem:[%s9434 + $0x70] sm:$0xff]
      %v9450 = vld [vmem:[%s9434 + $0x78] sm:$0xff]
      %v9451 = vld [vmem:[%s9434 + $0x80] sm:$0xff]
      %v9452 = vld [vmem:[%s9434 + $0x88] sm:$0xff]
      %v9453 = vld [vmem:[%s9434 + $0x90] sm:$0xff]
      %v9454 = vld [vmem:[%s9434 + $0x98] sm:$0xff]
      %v9455 = vld [vmem:[%s9434 + $0xa0] sm:$0xff]
      %v9456 = vld [vmem:[%s9434 + $0xa8] sm:$0xff]
      %v9457 = vld [vmem:[%s9434 + $0xb0] sm:$0xff]
      %v9458 = vld [vmem:[%s9434 + $0xb8] sm:$0xff]
      %v9459 = vrot.slane %v8774, 3
      %v9460 = vrot.slane %v8776, 3
      %v9461 = vsel %vm7084, %v9459, %v9460
      %v9462 = vrot.slane %v8775, 3
      %v9463 = vrot.slane %v8777, 3
      %v9464 = vsel %vm7084, %v9462, %v9463
      %v9491 = vunpack.c.l.b16 %v9435
      %v9492 = vunpack.c.h.b16 %v9435
      %v9493 = vunpack.c.l.b16 %v9436
      %v9494 = vunpack.c.h.b16 %v9436
      %v9495 = vunpack.c.l.b16 %v9437
      %v9496 = vunpack.c.h.b16 %v9437
      %v9497 = vunpack.c.l.b16 %v9438
      %v9498 = vunpack.c.h.b16 %v9438
      %v9499 = vunpack.c.l.b16 %v9439
      %v9500 = vunpack.c.h.b16 %v9439
      %v9501 = vunpack.c.l.b16 %v9440
      %v9502 = vunpack.c.h.b16 %v9440
      %v9503 = vunpack.c.l.b16 %v9441
      %v9504 = vunpack.c.h.b16 %v9441
      %v9505 = vunpack.c.l.b16 %v9442
      %v9506 = vunpack.c.h.b16 %v9442
      %v9507 = vunpack.c.l.b16 %v9443
      %v9508 = vunpack.c.h.b16 %v9443
      %v9509 = vunpack.c.l.b16 %v9444
      %v9510 = vunpack.c.h.b16 %v9444
      %v9511 = vunpack.c.l.b16 %v9445
      %v9512 = vunpack.c.h.b16 %v9445
      %v9513 = vunpack.c.l.b16 %v9446
      %v9514 = vunpack.c.h.b16 %v9446
      %v9515 = vunpack.c.l.b16 %v9447
      %v9516 = vunpack.c.h.b16 %v9447
      %v9517 = vunpack.c.l.b16 %v9448
      %v9518 = vunpack.c.h.b16 %v9448
      %v9519 = vunpack.c.l.b16 %v9449
      %v9520 = vunpack.c.h.b16 %v9449
      %v9521 = vunpack.c.l.b16 %v9450
      %v9522 = vunpack.c.h.b16 %v9450
      %v9523 = vunpack.c.l.b16 %v9451
      %v9524 = vunpack.c.h.b16 %v9451
      %v9525 = vunpack.c.l.b16 %v9452
      %v9526 = vunpack.c.h.b16 %v9452
      %v9527 = vunpack.c.l.b16 %v9453
      %v9528 = vunpack.c.h.b16 %v9453
      %v9529 = vunpack.c.l.b16 %v9454
      %v9530 = vunpack.c.h.b16 %v9454
      %v9531 = vunpack.c.l.b16 %v9455
      %v9532 = vunpack.c.h.b16 %v9455
      %v9533 = vunpack.c.l.b16 %v9456
      %v9534 = vunpack.c.h.b16 %v9456
      %v9535 = vunpack.c.l.b16 %v9457
      %v9536 = vunpack.c.h.b16 %v9457
      %v9537 = vunpack.c.l.b16 %v9458
      %v9538 = vunpack.c.h.b16 %v9458
      %v9539 = vpack.c.b16 %v9493, %v9491
      %v9540 = vpack.c.b16 %v9494, %v9492
      %v9541 = vpack.c.b16 %v9497, %v9495
      %v9542 = vpack.c.b16 %v9498, %v9496
      %v9543 = vpack.c.b16 %v9501, %v9499
      %v9544 = vpack.c.b16 %v9502, %v9500
      %v9545 = vpack.c.b16 %v9505, %v9503
      %v9546 = vpack.c.b16 %v9506, %v9504
      %v9547 = vpack.c.b16 %v9509, %v9507
      %v9548 = vpack.c.b16 %v9510, %v9508
      %v9549 = vpack.c.b16 %v9513, %v9511
      %v9550 = vpack.c.b16 %v9514, %v9512
      %v9551 = vpack.c.b16 %v9517, %v9515
      %v9552 = vpack.c.b16 %v9518, %v9516
      %v9553 = vpack.c.b16 %v9521, %v9519
      %v9554 = vpack.c.b16 %v9522, %v9520
      %v9555 = vpack.c.b16 %v9525, %v9523
      %v9556 = vpack.c.b16 %v9526, %v9524
      %v9557 = vpack.c.b16 %v9529, %v9527
      %v9558 = vpack.c.b16 %v9530, %v9528
      %v9559 = vpack.c.b16 %v9533, %v9531
      %v9560 = vpack.c.b16 %v9534, %v9532
      %v9561 = vpack.c.b16 %v9537, %v9535
      %v9562 = vpack.c.b16 %v9538, %v9536
      %v9588 = vsel %vm8981, %v9464, 0
      %v9591 = vsel %vm8981, %v9463, 0
      %9593 = vmatprep.subr.bf16.mxu0 %v9540
      %9594 = vmatpush1.bf16.msra.mxu0 %v9539
      %9595 = vmatprep.subr.bf16.mxu0 %v9542
      %9596 = vmatpush1.bf16.msra.mxu0 %v9541
      %9597 = vmatprep.subr.bf16.mxu0 %v9544
      %9598 = vmatpush1.bf16.msra.mxu0 %v9543
      %9599 = vmatprep.subr.bf16.mxu0 %v9546
      %9600 = vmatpush1.bf16.msra.mxu0 %v9545
      %9601 = vmatprep.subr.bf16.mxu0 %v9548
      %9602 = vmatpush1.bf16.msra.mxu0 %v9547
      %9603 = vmatprep.subr.bf16.mxu0 %v9550
      %9604 = vmatpush1.bf16.msra.mxu0 %v9549
      %9605 = vmatprep.subr.bf16.mxu0 %v9552
      %9606 = vmatpush1.bf16.msra.mxu0 %v9551
      %9607 = vmatprep.subr.bf16.mxu0 %v9554
      %9608 = vmatpush1.bf16.msra.mxu0 %v9553
      %9609 = vmatprep.subr.bf16.mxu0 %v9556
      %9610 = vmatpush1.bf16.msra.mxu0 %v9555
      %9611 = vmatprep.subr.bf16.mxu0 %v9558
      %9612 = vmatpush1.bf16.msra.mxu0 %v9557
      %9613 = vmatprep.subr.bf16.mxu0 %v9560
      %9614 = vmatpush1.bf16.msra.mxu0 %v9559
      %9615 = vmatprep.subr.bf16.mxu0 %v9562
      %9616 = vmatpush1.bf16.msra.mxu0 %v9561
      %9617 = vmatprep.subr.bf16.mxu0 0
      %9618 = vmatpush1.bf16.msra.mxu0 0
      %9619 = vmatprep.subr.bf16.mxu0 0
      %9620 = vmatpush1.bf16.msra.mxu0 0
      %9621 = vmatprep.subr.bf16.mxu0 0
      %9622 = vmatpush1.bf16.msra.mxu0 0
      %9623 = vmatprep.subr.bf16.mxu0 0
      %9624 = vmatpush1.bf16.msra.mxu0 0
      %9625 = vmatprep.mubr.bf16.mxu0 %v9588
      %9626 = vmatmul.mubr.bf16.gmra.mrb[0].mxu0 %v9461
      %v9627 = vpop.f32.mrb[0].mxu0
      %v9628 = vadd.f32 0.0, %v9627
      %v9629 = vpop.f32.mrb[0].mxu0
      %v9630 = vadd.f32 0.0, %v9629
      %v9631 = vpop.f32.mrb[0].mxu0
      %v9632 = vadd.f32 0.0, %v9631
      %v9633 = vpop.f32.mrb[0].mxu0
      %v9634 = vadd.f32 0.0, %v9633
      %9635 = vmatprep.mubr.bf16.mxu0 %v9591
      %9636 = vmatmul.mubr.bf16.gmra.mrb[0].mxu0 %v9460
      %v9637 = vpop.f32.mrb[0].mxu0
      %v9638 = vadd.f32 0.0, %v9637
      %v9639 = vpop.f32.mrb[0].mxu0
      %v9640 = vadd.f32 0.0, %v9639
      %v9641 = vpop.f32.mrb[0].mxu0
      %v9642 = vpop.f32.mrb[0].mxu0
      %9643 = vdwg.mxu0
      %v9644 = vadd.f32 %v9428, %v9628
      %v9645 = vadd.f32 %v9429, %v9630
      %v9646 = vadd.f32 %v9430, %v9632
      %v9647 = vadd.f32 %v9431, %v9634
      %v9648 = vadd.f32 %v9432, %v9638
      %v9649 = vadd.f32 %v9433, %v9640
      %s9650 = scalar_lea.vmem %s9, 768
      %v9651 = vld [vmem:[%s9650] sm:$0xff]
      %v9652 = vld [vmem:[%s9650 + $0x8] sm:$0xff]
      %v9653 = vld [vmem:[%s9650 + $0x10] sm:$0xff]
      %v9654 = vld [vmem:[%s9650 + $0x18] sm:$0xff]
      %v9655 = vld [vmem:[%s9650 + $0x20] sm:$0xff]
      %v9656 = vld [vmem:[%s9650 + $0x28] sm:$0xff]
      %v9657 = vld [vmem:[%s9650 + $0x30] sm:$0xff]
      %v9658 = vld [vmem:[%s9650 + $0x38] sm:$0xff]
      %v9659 = vld [vmem:[%s9650 + $0x40] sm:$0xff]
      %v9660 = vld [vmem:[%s9650 + $0x48] sm:$0xff]
      %v9661 = vld [vmem:[%s9650 + $0x50] sm:$0xff]
      %v9662 = vld [vmem:[%s9650 + $0x58] sm:$0xff]
      %v9663 = vld [vmem:[%s9650 + $0x60] sm:$0xff]
      %v9664 = vld [vmem:[%s9650 + $0x68] sm:$0xff]
      %v9665 = vld [vmem:[%s9650 + $0x70] sm:$0xff]
      %v9666 = vld [vmem:[%s9650 + $0x78] sm:$0xff]
      %v9667 = vld [vmem:[%s9650 + $0x80] sm:$0xff]
      %v9668 = vld [vmem:[%s9650 + $0x88] sm:$0xff]
      %v9669 = vld [vmem:[%s9650 + $0x90] sm:$0xff]
      %v9670 = vld [vmem:[%s9650 + $0x98] sm:$0xff]
      %v9671 = vld [vmem:[%s9650 + $0xa0] sm:$0xff]
      %v9672 = vld [vmem:[%s9650 + $0xa8] sm:$0xff]
      %v9673 = vld [vmem:[%s9650 + $0xb0] sm:$0xff]
      %v9674 = vld [vmem:[%s9650 + $0xb8] sm:$0xff]
      %vm9675 = vsmask.f32 4352
      %v9676 = vrot.slane %v8830, 3
      %v9677 = vrot.slane %v8832, 4
      %v9678 = vor.u32 %v9676, %v9677
      %v9679 = vrot.slane %v8853, 3
      %v9680 = vrot.slane %v8837, 4
      %v9681 = vor.u32 %v9679, %v9680
      %v9682 = vsel %vm9675, %v9678, %v9681
      %v9683 = vrot.slane %v8842, 3
      %v9684 = vrot.slane %v8844, 4
      %v9685 = vor.u32 %v9683, %v9684
      %v9686 = vrot.slane %v8856, 3
      %v9687 = vrot.slane %v8849, 4
      %v9688 = vor.u32 %v9686, %v9687
      %v9689 = vsel %vm9675, %v9685, %v9688
      %v9716 = vunpack.c.l.b16 %v9651
      %v9717 = vunpack.c.h.b16 %v9651
      %v9718 = vunpack.c.l.b16 %v9652
      %v9719 = vunpack.c.h.b16 %v9652
      %v9720 = vunpack.c.l.b16 %v9653
      %v9721 = vunpack.c.h.b16 %v9653
      %v9722 = vunpack.c.l.b16 %v9654
      %v9723 = vunpack.c.h.b16 %v9654
      %v9724 = vunpack.c.l.b16 %v9655
      %v9725 = vunpack.c.h.b16 %v9655
      %v9726 = vunpack.c.l.b16 %v9656
      %v9727 = vunpack.c.h.b16 %v9656
      %v9728 = vunpack.c.l.b16 %v9657
      %v9729 = vunpack.c.h.b16 %v9657
      %v9730 = vunpack.c.l.b16 %v9658
      %v9731 = vunpack.c.h.b16 %v9658
      %v9732 = vunpack.c.l.b16 %v9659
      %v9733 = vunpack.c.h.b16 %v9659
      %v9734 = vunpack.c.l.b16 %v9660
      %v9735 = vunpack.c.h.b16 %v9660
      %v9736 = vunpack.c.l.b16 %v9661
      %v9737 = vunpack.c.h.b16 %v9661
      %v9738 = vunpack.c.l.b16 %v9662
      %v9739 = vunpack.c.h.b16 %v9662
      %v9740 = vunpack.c.l.b16 %v9663
      %v9741 = vunpack.c.h.b16 %v9663
      %v9742 = vunpack.c.l.b16 %v9664
      %v9743 = vunpack.c.h.b16 %v9664
      %v9744 = vunpack.c.l.b16 %v9665
      %v9745 = vunpack.c.h.b16 %v9665
      %v9746 = vunpack.c.l.b16 %v9666
      %v9747 = vunpack.c.h.b16 %v9666
      %v9748 = vunpack.c.l.b16 %v9667
      %v9749 = vunpack.c.h.b16 %v9667
      %v9750 = vunpack.c.l.b16 %v9668
      %v9751 = vunpack.c.h.b16 %v9668
      %v9752 = vunpack.c.l.b16 %v9669
      %v9753 = vunpack.c.h.b16 %v9669
      %v9754 = vunpack.c.l.b16 %v9670
      %v9755 = vunpack.c.h.b16 %v9670
      %v9756 = vunpack.c.l.b16 %v9671
      %v9757 = vunpack.c.h.b16 %v9671
      %v9758 = vunpack.c.l.b16 %v9672
      %v9759 = vunpack.c.h.b16 %v9672
      %v9760 = vunpack.c.l.b16 %v9673
      %v9761 = vunpack.c.h.b16 %v9673
      %v9762 = vunpack.c.l.b16 %v9674
      %v9763 = vunpack.c.h.b16 %v9674
      %v9764 = vpack.c.b16 %v9718, %v9716
      %v9765 = vpack.c.b16 %v9719, %v9717
      %v9766 = vpack.c.b16 %v9722, %v9720
      %v9767 = vpack.c.b16 %v9723, %v9721
      %v9768 = vpack.c.b16 %v9726, %v9724
      %v9769 = vpack.c.b16 %v9727, %v9725
      %v9770 = vpack.c.b16 %v9730, %v9728
      %v9771 = vpack.c.b16 %v9731, %v9729
      %v9772 = vpack.c.b16 %v9734, %v9732
      %v9773 = vpack.c.b16 %v9735, %v9733
      %v9774 = vpack.c.b16 %v9738, %v9736
      %v9775 = vpack.c.b16 %v9739, %v9737
      %v9776 = vpack.c.b16 %v9742, %v9740
      %v9777 = vpack.c.b16 %v9743, %v9741
      %v9778 = vpack.c.b16 %v9746, %v9744
      %v9779 = vpack.c.b16 %v9747, %v9745
      %v9780 = vpack.c.b16 %v9750, %v9748
      %v9781 = vpack.c.b16 %v9751, %v9749
      %v9782 = vpack.c.b16 %v9754, %v9752
      %v9783 = vpack.c.b16 %v9755, %v9753
      %v9784 = vpack.c.b16 %v9758, %v9756
      %v9785 = vpack.c.b16 %v9759, %v9757
      %v9786 = vpack.c.b16 %v9762, %v9760
      %v9787 = vpack.c.b16 %v9763, %v9761
      %v9813 = vsel %vm8981, %v9689, 0
      %v9816 = vsel %vm8981, %v9688, 0
      %9818 = vmatprep.subr.bf16.mxu0 %v9765
      %9819 = vmatpush1.bf16.msra.mxu0 %v9764
      %9820 = vmatprep.subr.bf16.mxu0 %v9767
      %9821 = vmatpush1.bf16.msra.mxu0 %v9766
      %9822 = vmatprep.subr.bf16.mxu0 %v9769
      %9823 = vmatpush1.bf16.msra.mxu0 %v9768
      %9824 = vmatprep.subr.bf16.mxu0 %v9771
      %9825 = vmatpush1.bf16.msra.mxu0 %v9770
      %9826 = vmatprep.subr.bf16.mxu0 %v9773
      %9827 = vmatpush1.bf16.msra.mxu0 %v9772
      %9828 = vmatprep.subr.bf16.mxu0 %v9775
      %9829 = vmatpush1.bf16.msra.mxu0 %v9774
      %9830 = vmatprep.subr.bf16.mxu0 %v9777
      %9831 = vmatpush1.bf16.msra.mxu0 %v9776
      %9832 = vmatprep.subr.bf16.mxu0 %v9779
      %9833 = vmatpush1.bf16.msra.mxu0 %v9778
      %9834 = vmatprep.subr.bf16.mxu0 %v9781
      %9835 = vmatpush1.bf16.msra.mxu0 %v9780
      %9836 = vmatprep.subr.bf16.mxu0 %v9783
      %9837 = vmatpush1.bf16.msra.mxu0 %v9782
      %9838 = vmatprep.subr.bf16.mxu0 %v9785
      %9839 = vmatpush1.bf16.msra.mxu0 %v9784
      %9840 = vmatprep.subr.bf16.mxu0 %v9787
      %9841 = vmatpush1.bf16.msra.mxu0 %v9786
      %9842 = vmatprep.subr.bf16.mxu0 0
      %9843 = vmatpush1.bf16.msra.mxu0 0
      %9844 = vmatprep.subr.bf16.mxu0 0
      %9845 = vmatpush1.bf16.msra.mxu0 0
      %9846 = vmatprep.subr.bf16.mxu0 0
      %9847 = vmatpush1.bf16.msra.mxu0 0
      %9848 = vmatprep.subr.bf16.mxu0 0
      %9849 = vmatpush1.bf16.msra.mxu0 0
      %9850 = vmatprep.mubr.bf16.mxu0 %v9813
      %9851 = vmatmul.mubr.bf16.gmra.mrb[0].mxu0 %v9682
      %v9852 = vpop.f32.mrb[0].mxu0
      %v9853 = vadd.f32 0.0, %v9852
      %v9854 = vpop.f32.mrb[0].mxu0
      %v9855 = vadd.f32 0.0, %v9854
      %v9856 = vpop.f32.mrb[0].mxu0
      %v9857 = vadd.f32 0.0, %v9856
      %v9858 = vpop.f32.mrb[0].mxu0
      %v9859 = vadd.f32 0.0, %v9858
      %9860 = vmatprep.mubr.bf16.mxu0 %v9816
      %9861 = vmatmul.mubr.bf16.gmra.mrb[0].mxu0 %v9681
      %v9862 = vpop.f32.mrb[0].mxu0
      %v9863 = vadd.f32 0.0, %v9862
      %v9864 = vpop.f32.mrb[0].mxu0
      %v9865 = vadd.f32 0.0, %v9864
      %v9866 = vpop.f32.mrb[0].mxu0
      %v9867 = vpop.f32.mrb[0].mxu0
      %9868 = vdwg.mxu0
      %v9869 = vadd.f32 %v9644, %v9853
      %v9870 = vadd.f32 %v9645, %v9855
      %v9871 = vadd.f32 %v9646, %v9857
      %v9872 = vadd.f32 %v9647, %v9859
      %v9873 = vadd.f32 %v9648, %v9863
      %v9874 = vadd.f32 %v9649, %v9865
      %s9875 = scalar_lea.vmem %s9, 960
      %v9876 = vld [vmem:[%s9875] sm:$0xff]
      %v9877 = vld [vmem:[%s9875 + $0x8] sm:$0xff]
      %v9878 = vld [vmem:[%s9875 + $0x10] sm:$0xff]
      %v9879 = vld [vmem:[%s9875 + $0x18] sm:$0xff]
      %v9880 = vld [vmem:[%s9875 + $0x20] sm:$0xff]
      %v9881 = vld [vmem:[%s9875 + $0x28] sm:$0xff]
      %v9882 = vld [vmem:[%s9875 + $0x30] sm:$0xff]
      %v9883 = vld [vmem:[%s9875 + $0x38] sm:$0xff]
      %v9884 = vld [vmem:[%s9875 + $0x40] sm:$0xff]
      %v9885 = vld [vmem:[%s9875 + $0x48] sm:$0xff]
      %v9886 = vld [vmem:[%s9875 + $0x50] sm:$0xff]
      %v9887 = vld [vmem:[%s9875 + $0x58] sm:$0xff]
      %v9888 = vld [vmem:[%s9875 + $0x60] sm:$0xff]
      %v9889 = vld [vmem:[%s9875 + $0x68] sm:$0xff]
      %v9890 = vld [vmem:[%s9875 + $0x70] sm:$0xff]
      %v9891 = vld [vmem:[%s9875 + $0x78] sm:$0xff]
      %v9892 = vld [vmem:[%s9875 + $0x80] sm:$0xff]
      %v9893 = vld [vmem:[%s9875 + $0x88] sm:$0xff]
      %v9894 = vld [vmem:[%s9875 + $0x90] sm:$0xff]
      %v9895 = vld [vmem:[%s9875 + $0x98] sm:$0xff]
      %v9896 = vld [vmem:[%s9875 + $0xa0] sm:$0xff]
      %v9897 = vld [vmem:[%s9875 + $0xa8] sm:$0xff]
      %v9898 = vld [vmem:[%s9875 + $0xb0] sm:$0xff]
      %v9899 = vld [vmem:[%s9875 + $0xb8] sm:$0xff]
      %vm9900 = vcmask 1043456
      %v9901 = vrot.slane %v8774, 4
      %v9902 = vrot.slane %v8776, 4
      %v9903 = vsel %vm9900, %v9901, %v9902
      %v9904 = vrot.slane %v8775, 4
      %v9905 = vrot.slane %v8777, 4
      %v9906 = vsel %vm9900, %v9904, %v9905
      %v9933 = vunpack.c.l.b16 %v9876
      %v9934 = vunpack.c.h.b16 %v9876
      %v9935 = vunpack.c.l.b16 %v9877
      %v9936 = vunpack.c.h.b16 %v9877
      %v9937 = vunpack.c.l.b16 %v9878
      %v9938 = vunpack.c.h.b16 %v9878
      %v9939 = vunpack.c.l.b16 %v9879
      %v9940 = vunpack.c.h.b16 %v9879
      %v9941 = vunpack.c.l.b16 %v9880
      %v9942 = vunpack.c.h.b16 %v9880
      %v9943 = vunpack.c.l.b16 %v9881
      %v9944 = vunpack.c.h.b16 %v9881
      %v9945 = vunpack.c.l.b16 %v9882
      %v9946 = vunpack.c.h.b16 %v9882
      %v9947 = vunpack.c.l.b16 %v9883
      %v9948 = vunpack.c.h.b16 %v9883
      %v9949 = vunpack.c.l.b16 %v9884
      %v9950 = vunpack.c.h.b16 %v9884
      %v9951 = vunpack.c.l.b16 %v9885
      %v9952 = vunpack.c.h.b16 %v9885
      %v9953 = vunpack.c.l.b16 %v9886
      %v9954 = vunpack.c.h.b16 %v9886
      %v9955 = vunpack.c.l.b16 %v9887
      %v9956 = vunpack.c.h.b16 %v9887
      %v9957 = vunpack.c.l.b16 %v9888
      %v9958 = vunpack.c.h.b16 %v9888
      %v9959 = vunpack.c.l.b16 %v9889
      %v9960 = vunpack.c.h.b16 %v9889
      %v9961 = vunpack.c.l.b16 %v9890
      %v9962 = vunpack.c.h.b16 %v9890
      %v9963 = vunpack.c.l.b16 %v9891
      %v9964 = vunpack.c.h.b16 %v9891
      %v9965 = vunpack.c.l.b16 %v9892
      %v9966 = vunpack.c.h.b16 %v9892
      %v9967 = vunpack.c.l.b16 %v9893
      %v9968 = vunpack.c.h.b16 %v9893
      %v9969 = vunpack.c.l.b16 %v9894
      %v9970 = vunpack.c.h.b16 %v9894
      %v9971 = vunpack.c.l.b16 %v9895
      %v9972 = vunpack.c.h.b16 %v9895
      %v9973 = vunpack.c.l.b16 %v9896
      %v9974 = vunpack.c.h.b16 %v9896
      %v9975 = vunpack.c.l.b16 %v9897
      %v9976 = vunpack.c.h.b16 %v9897
      %v9977 = vunpack.c.l.b16 %v9898
      %v9978 = vunpack.c.h.b16 %v9898
      %v9979 = vunpack.c.l.b16 %v9899
      %v9980 = vunpack.c.h.b16 %v9899
      %v9981 = vpack.c.b16 %v9935, %v9933
      %v9982 = vpack.c.b16 %v9936, %v9934
      %v9983 = vpack.c.b16 %v9939, %v9937
      %v9984 = vpack.c.b16 %v9940, %v9938
      %v9985 = vpack.c.b16 %v9943, %v9941
      %v9986 = vpack.c.b16 %v9944, %v9942
      %v9987 = vpack.c.b16 %v9947, %v9945
      %v9988 = vpack.c.b16 %v9948, %v9946
      %v9989 = vpack.c.b16 %v9951, %v9949
      %v9990 = vpack.c.b16 %v9952, %v9950
      %v9991 = vpack.c.b16 %v9955, %v9953
      %v9992 = vpack.c.b16 %v9956, %v9954
      %v9993 = vpack.c.b16 %v9959, %v9957
      %v9994 = vpack.c.b16 %v9960, %v9958
      %v9995 = vpack.c.b16 %v9963, %v9961
      %v9996 = vpack.c.b16 %v9964, %v9962
      %v9997 = vpack.c.b16 %v9967, %v9965
      %v9998 = vpack.c.b16 %v9968, %v9966
      %v9999 = vpack.c.b16 %v9971, %v9969
      %v10000 = vpack.c.b16 %v9972, %v9970
      %v10001 = vpack.c.b16 %v9975, %v9973
      %v10002 = vpack.c.b16 %v9976, %v9974
      %v10003 = vpack.c.b16 %v9979, %v9977
      %v10004 = vpack.c.b16 %v9980, %v9978
      %v10030 = vsel %vm8981, %v9906, 0
      %v10033 = vsel %vm8981, %v9905, 0
      %10035 = vmatprep.subr.bf16.mxu0 %v9982
      %10036 = vmatpush1.bf16.msra.mxu0 %v9981
      %10037 = vmatprep.subr.bf16.mxu0 %v9984
      %10038 = vmatpush1.bf16.msra.mxu0 %v9983
      %10039 = vmatprep.subr.bf16.mxu0 %v9986
      %10040 = vmatpush1.bf16.msra.mxu0 %v9985
      %10041 = vmatprep.subr.bf16.mxu0 %v9988
      %10042 = vmatpush1.bf16.msra.mxu0 %v9987
      %10043 = vmatprep.subr.bf16.mxu0 %v9990
      %10044 = vmatpush1.bf16.msra.mxu0 %v9989
      %10045 = vmatprep.subr.bf16.mxu0 %v9992
      %10046 = vmatpush1.bf16.msra.mxu0 %v9991
      %10047 = vmatprep.subr.bf16.mxu0 %v9994
      %10048 = vmatpush1.bf16.msra.mxu0 %v9993
      %10049 = vmatprep.subr.bf16.mxu0 %v9996
      %10050 = vmatpush1.bf16.msra.mxu0 %v9995
      %10051 = vmatprep.subr.bf16.mxu0 %v9998
      %10052 = vmatpush1.bf16.msra.mxu0 %v9997
      %10053 = vmatprep.subr.bf16.mxu0 %v10000
      %10054 = vmatpush1.bf16.msra.mxu0 %v9999
      %10055 = vmatprep.subr.bf16.mxu0 %v10002
      %10056 = vmatpush1.bf16.msra.mxu0 %v10001
      %10057 = vmatprep.subr.bf16.mxu0 %v10004
      %10058 = vmatpush1.bf16.msra.mxu0 %v10003
      %10059 = vmatprep.subr.bf16.mxu0 0
      %10060 = vmatpush1.bf16.msra.mxu0 0
      %10061 = vmatprep.subr.bf16.mxu0 0
      %10062 = vmatpush1.bf16.msra.mxu0 0
      %10063 = vmatprep.subr.bf16.mxu0 0
      %10064 = vmatpush1.bf16.msra.mxu0 0
      %10065 = vmatprep.subr.bf16.mxu0 0
      %10066 = vmatpush1.bf16.msra.mxu0 0
      %10067 = vmatprep.mubr.bf16.mxu0 %v10030
      %10068 = vmatmul.mubr.bf16.gmra.mrb[0].mxu0 %v9903
      %v10069 = vpop.f32.mrb[0].mxu0
      %v10070 = vadd.f32 0.0, %v10069
      %v10071 = vpop.f32.mrb[0].mxu0
      %v10072 = vadd.f32 0.0, %v10071
      %v10073 = vpop.f32.mrb[0].mxu0
      %v10074 = vadd.f32 0.0, %v10073
      %v10075 = vpop.f32.mrb[0].mxu0
      %v10076 = vadd.f32 0.0, %v10075
      %10077 = vmatprep.mubr.bf16.mxu0 %v10033
      %10078 = vmatmul.mubr.bf16.gmra.mrb[0].mxu0 %v9902
      %v10079 = vpop.f32.mrb[0].mxu0
      %v10080 = vadd.f32 0.0, %v10079
      %v10081 = vpop.f32.mrb[0].mxu0
      %v10082 = vadd.f32 0.0, %v10081
      %v10083 = vpop.f32.mrb[0].mxu0
      %v10084 = vpop.f32.mrb[0].mxu0
      %10085 = vdwg.mxu0
      %v10086 = vadd.f32 %v9869, %v10070
      %v10087 = vadd.f32 %v9870, %v10072
      %v10088 = vadd.f32 %v9871, %v10074
      %v10089 = vadd.f32 %v9872, %v10076
      %v10090 = vadd.f32 %v9873, %v10080
      %v10091 = vadd.f32 %v9874, %v10082
      %s10092 = scalar_lea.vmem %s9, 1152
      %v10093 = vld [vmem:[%s10092] sm:$0xff]
      %v10094 = vld [vmem:[%s10092 + $0x8] sm:$0xff]
      %v10095 = vld [vmem:[%s10092 + $0x10] sm:$0xff]
      %v10096 = vld [vmem:[%s10092 + $0x18] sm:$0xff]
      %v10097 = vld [vmem:[%s10092 + $0x20] sm:$0xff]
      %v10098 = vld [vmem:[%s10092 + $0x28] sm:$0xff]
      %v10099 = vld [vmem:[%s10092 + $0x30] sm:$0xff]
      %v10100 = vld [vmem:[%s10092 + $0x38] sm:$0xff]
      %v10101 = vld [vmem:[%s10092 + $0x40] sm:$0xff]
      %v10102 = vld [vmem:[%s10092 + $0x48] sm:$0xff]
      %v10103 = vld [vmem:[%s10092 + $0x50] sm:$0xff]
      %v10104 = vld [vmem:[%s10092 + $0x58] sm:$0xff]
      %v10105 = vld [vmem:[%s10092 + $0x60] sm:$0xff]
      %v10106 = vld [vmem:[%s10092 + $0x68] sm:$0xff]
      %v10107 = vld [vmem:[%s10092 + $0x70] sm:$0xff]
      %v10108 = vld [vmem:[%s10092 + $0x78] sm:$0xff]
      %v10109 = vld [vmem:[%s10092 + $0x80] sm:$0xff]
      %v10110 = vld [vmem:[%s10092 + $0x88] sm:$0xff]
      %v10111 = vld [vmem:[%s10092 + $0x90] sm:$0xff]
      %v10112 = vld [vmem:[%s10092 + $0x98] sm:$0xff]
      %v10113 = vld [vmem:[%s10092 + $0xa0] sm:$0xff]
      %v10114 = vld [vmem:[%s10092 + $0xa8] sm:$0xff]
      %v10115 = vld [vmem:[%s10092 + $0xb0] sm:$0xff]
      %v10116 = vld [vmem:[%s10092 + $0xb8] sm:$0xff]
      %v10119 = vrot.slane %v8774, 6
      %v10120 = vrot.slane %v8776, 6
      %v10121 = vsel %vm6247, %v10119, %v10120
      %v10122 = vrot.slane %v8775, 6
      %v10123 = vrot.slane %v8777, 6
      %v10124 = vsel %vm6247, %v10122, %v10123
      %v10125 = vrot.slane %v8778, 6
      %v10126 = vsel %vm6247, %v10120, %v10125
      %v10127 = vrot.slane %v8779, 6
      %v10128 = vsel %vm6247, %v10123, %v10127
      %v10155 = vunpack.c.l.b16 %v10093
      %v10156 = vunpack.c.h.b16 %v10093
      %v10157 = vunpack.c.l.b16 %v10094
      %v10158 = vunpack.c.h.b16 %v10094
      %v10159 = vunpack.c.l.b16 %v10095
      %v10160 = vunpack.c.h.b16 %v10095
      %v10161 = vunpack.c.l.b16 %v10096
      %v10162 = vunpack.c.h.b16 %v10096
      %v10163 = vunpack.c.l.b16 %v10097
      %v10164 = vunpack.c.h.b16 %v10097
      %v10165 = vunpack.c.l.b16 %v10098
      %v10166 = vunpack.c.h.b16 %v10098
      %v10167 = vunpack.c.l.b16 %v10099
      %v10168 = vunpack.c.h.b16 %v10099
      %v10169 = vunpack.c.l.b16 %v10100
      %v10170 = vunpack.c.h.b16 %v10100
      %v10171 = vunpack.c.l.b16 %v10101
      %v10172 = vunpack.c.h.b16 %v10101
      %v10173 = vunpack.c.l.b16 %v10102
      %v10174 = vunpack.c.h.b16 %v10102
      %v10175 = vunpack.c.l.b16 %v10103
      %v10176 = vunpack.c.h.b16 %v10103
      %v10177 = vunpack.c.l.b16 %v10104
      %v10178 = vunpack.c.h.b16 %v10104
      %v10179 = vunpack.c.l.b16 %v10105
      %v10180 = vunpack.c.h.b16 %v10105
      %v10181 = vunpack.c.l.b16 %v10106
      %v10182 = vunpack.c.h.b16 %v10106
      %v10183 = vunpack.c.l.b16 %v10107
      %v10184 = vunpack.c.h.b16 %v10107
      %v10185 = vunpack.c.l.b16 %v10108
      %v10186 = vunpack.c.h.b16 %v10108
      %v10187 = vunpack.c.l.b16 %v10109
      %v10188 = vunpack.c.h.b16 %v10109
      %v10189 = vunpack.c.l.b16 %v10110
      %v10190 = vunpack.c.h.b16 %v10110
      %v10191 = vunpack.c.l.b16 %v10111
      %v10192 = vunpack.c.h.b16 %v10111
      %v10193 = vunpack.c.l.b16 %v10112
      %v10194 = vunpack.c.h.b16 %v10112
      %v10195 = vunpack.c.l.b16 %v10113
      %v10196 = vunpack.c.h.b16 %v10113
      %v10197 = vunpack.c.l.b16 %v10114
      %v10198 = vunpack.c.h.b16 %v10114
      %v10199 = vunpack.c.l.b16 %v10115
      %v10200 = vunpack.c.h.b16 %v10115
      %v10201 = vunpack.c.l.b16 %v10116
      %v10202 = vunpack.c.h.b16 %v10116
      %v10203 = vpack.c.b16 %v10157, %v10155
      %v10204 = vpack.c.b16 %v10158, %v10156
      %v10205 = vpack.c.b16 %v10161, %v10159
      %v10206 = vpack.c.b16 %v10162, %v10160
      %v10207 = vpack.c.b16 %v10165, %v10163
      %v10208 = vpack.c.b16 %v10166, %v10164
      %v10209 = vpack.c.b16 %v10169, %v10167
      %v10210 = vpack.c.b16 %v10170, %v10168
      %v10211 = vpack.c.b16 %v10173, %v10171
      %v10212 = vpack.c.b16 %v10174, %v10172
      %v10213 = vpack.c.b16 %v10177, %v10175
      %v10214 = vpack.c.b16 %v10178, %v10176
      %v10215 = vpack.c.b16 %v10181, %v10179
      %v10216 = vpack.c.b16 %v10182, %v10180
      %v10217 = vpack.c.b16 %v10185, %v10183
      %v10218 = vpack.c.b16 %v10186, %v10184
      %v10219 = vpack.c.b16 %v10189, %v10187
      %v10220 = vpack.c.b16 %v10190, %v10188
      %v10221 = vpack.c.b16 %v10193, %v10191
      %v10222 = vpack.c.b16 %v10194, %v10192
      %v10223 = vpack.c.b16 %v10197, %v10195
      %v10224 = vpack.c.b16 %v10198, %v10196
      %v10225 = vpack.c.b16 %v10201, %v10199
      %v10226 = vpack.c.b16 %v10202, %v10200
      %v10252 = vsel %vm8981, %v10124, 0
      %v10255 = vsel %vm8981, %v10128, 0
      %10257 = vmatprep.subr.bf16.mxu0 %v10204
      %10258 = vmatpush1.bf16.msra.mxu0 %v10203
      %10259 = vmatprep.subr.bf16.mxu0 %v10206
      %10260 = vmatpush1.bf16.msra.mxu0 %v10205
      %10261 = vmatprep.subr.bf16.mxu0 %v10208
      %10262 = vmatpush1.bf16.msra.mxu0 %v10207
      %10263 = vmatprep.subr.bf16.mxu0 %v10210
      %10264 = vmatpush1.bf16.msra.mxu0 %v10209
      %10265 = vmatprep.subr.bf16.mxu0 %v10212
      %10266 = vmatpush1.bf16.msra.mxu0 %v10211
      %10267 = vmatprep.subr.bf16.mxu0 %v10214
      %10268 = vmatpush1.bf16.msra.mxu0 %v10213
      %10269 = vmatprep.subr.bf16.mxu0 %v10216
      %10270 = vmatpush1.bf16.msra.mxu0 %v10215
      %10271 = vmatprep.subr.bf16.mxu0 %v10218
      %10272 = vmatpush1.bf16.msra.mxu0 %v10217
      %10273 = vmatprep.subr.bf16.mxu0 %v10220
      %10274 = vmatpush1.bf16.msra.mxu0 %v10219
      %10275 = vmatprep.subr.bf16.mxu0 %v10222
      %10276 = vmatpush1.bf16.msra.mxu0 %v10221
      %10277 = vmatprep.subr.bf16.mxu0 %v10224
      %10278 = vmatpush1.bf16.msra.mxu0 %v10223
      %10279 = vmatprep.subr.bf16.mxu0 %v10226
      %10280 = vmatpush1.bf16.msra.mxu0 %v10225
      %10281 = vmatprep.subr.bf16.mxu0 0
      %10282 = vmatpush1.bf16.msra.mxu0 0
      %10283 = vmatprep.subr.bf16.mxu0 0
      %10284 = vmatpush1.bf16.msra.mxu0 0
      %10285 = vmatprep.subr.bf16.mxu0 0
      %10286 = vmatpush1.bf16.msra.mxu0 0
      %10287 = vmatprep.subr.bf16.mxu0 0
      %10288 = vmatpush1.bf16.msra.mxu0 0
      %10289 = vmatprep.mubr.bf16.mxu0 %v10252
      %10290 = vmatmul.mubr.bf16.gmra.mrb[0].mxu0 %v10121
      %v10291 = vpop.f32.mrb[0].mxu0
      %v10292 = vadd.f32 0.0, %v10291
      %v10293 = vpop.f32.mrb[0].mxu0
      %v10294 = vadd.f32 0.0, %v10293
      %v10295 = vpop.f32.mrb[0].mxu0
      %v10296 = vadd.f32 0.0, %v10295
      %v10297 = vpop.f32.mrb[0].mxu0
      %v10298 = vadd.f32 0.0, %v10297
      %10299 = vmatprep.mubr.bf16.mxu0 %v10255
      %10300 = vmatmul.mubr.bf16.gmra.mrb[0].mxu0 %v10126
      %v10301 = vpop.f32.mrb[0].mxu0
      %v10302 = vadd.f32 0.0, %v10301
      %v10303 = vpop.f32.mrb[0].mxu0
      %v10304 = vadd.f32 0.0, %v10303
      %v10305 = vpop.f32.mrb[0].mxu0
      %v10306 = vpop.f32.mrb[0].mxu0
      %10307 = vdwg.mxu0
      %v10308 = vadd.f32 %v10086, %v10292
      %v10309 = vadd.f32 %v10087, %v10294
      %v10310 = vadd.f32 %v10088, %v10296
      %v10311 = vadd.f32 %v10089, %v10298
      %v10312 = vadd.f32 %v10090, %v10302
      %v10313 = vadd.f32 %v10091, %v10304
      %s10314 = scalar_lea.vmem %s9, 1344
      %v10315 = vld [vmem:[%s10314] sm:$0xff]
      %v10316 = vld [vmem:[%s10314 + $0x8] sm:$0xff]
      %v10317 = vld [vmem:[%s10314 + $0x10] sm:$0xff]
      %v10318 = vld [vmem:[%s10314 + $0x18] sm:$0xff]
      %v10319 = vld [vmem:[%s10314 + $0x20] sm:$0xff]
      %v10320 = vld [vmem:[%s10314 + $0x28] sm:$0xff]
      %v10321 = vld [vmem:[%s10314 + $0x30] sm:$0xff]
      %v10322 = vld [vmem:[%s10314 + $0x38] sm:$0xff]
      %v10323 = vld [vmem:[%s10314 + $0x40] sm:$0xff]
      %v10324 = vld [vmem:[%s10314 + $0x48] sm:$0xff]
      %v10325 = vld [vmem:[%s10314 + $0x50] sm:$0xff]
      %v10326 = vld [vmem:[%s10314 + $0x58] sm:$0xff]
      %v10327 = vld [vmem:[%s10314 + $0x60] sm:$0xff]
      %v10328 = vld [vmem:[%s10314 + $0x68] sm:$0xff]
      %v10329 = vld [vmem:[%s10314 + $0x70] sm:$0xff]
      %v10330 = vld [vmem:[%s10314 + $0x78] sm:$0xff]
      %v10331 = vld [vmem:[%s10314 + $0x80] sm:$0xff]
      %v10332 = vld [vmem:[%s10314 + $0x88] sm:$0xff]
      %v10333 = vld [vmem:[%s10314 + $0x90] sm:$0xff]
      %v10334 = vld [vmem:[%s10314 + $0x98] sm:$0xff]
      %v10335 = vld [vmem:[%s10314 + $0xa0] sm:$0xff]
      %v10336 = vld [vmem:[%s10314 + $0xa8] sm:$0xff]
      %v10337 = vld [vmem:[%s10314 + $0xb0] sm:$0xff]
      %v10338 = vld [vmem:[%s10314 + $0xb8] sm:$0xff]
      %vm10339 = vsmask.f32 1280
      %v10340 = vrot.slane %v8830, 6
      %v10341 = vrot.slane %v8832, 7
      %v10342 = vor.u32 %v10340, %v10341
      %v10343 = vrot.slane %v8853, 6
      %v10344 = vrot.slane %v8837, 7
      %v10345 = vor.u32 %v10343, %v10344
      %v10346 = vsel %vm10339, %v10342, %v10345
      %v10347 = vrot.slane %v8842, 6
      %v10348 = vrot.slane %v8844, 7
      %v10349 = vor.u32 %v10347, %v10348
      %v10350 = vrot.slane %v8856, 6
      %v10351 = vrot.slane %v8849, 7
      %v10352 = vor.u32 %v10350, %v10351
      %v10353 = vsel %vm10339, %v10349, %v10352
      %v10355 = vshrl.u32 %v8778, 16
      %v10357 = vrot.slane %v10355, 6
      %v10358 = vshll.u32 %v8778, 16
      %v10360 = vrot.slane %v10358, 7
      %v10361 = vor.u32 %v10357, %v10360
      %v10362 = vsel %vm10339, %v10345, %v10361
      %v10364 = vshrl.u32 %v8779, 16
      %v10366 = vrot.slane %v10364, 6
      %v10367 = vshll.u32 %v8779, 16
      %v10369 = vrot.slane %v10367, 7
      %v10370 = vor.u32 %v10366, %v10369
      %v10371 = vsel %vm10339, %v10352, %v10370
      %v10398 = vunpack.c.l.b16 %v10315
      %v10399 = vunpack.c.h.b16 %v10315
      %v10400 = vunpack.c.l.b16 %v10316
      %v10401 = vunpack.c.h.b16 %v10316
      %v10402 = vunpack.c.l.b16 %v10317
      %v10403 = vunpack.c.h.b16 %v10317
      %v10404 = vunpack.c.l.b16 %v10318
      %v10405 = vunpack.c.h.b16 %v10318
      %v10406 = vunpack.c.l.b16 %v10319
      %v10407 = vunpack.c.h.b16 %v10319
      %v10408 = vunpack.c.l.b16 %v10320
      %v10409 = vunpack.c.h.b16 %v10320
      %v10410 = vunpack.c.l.b16 %v10321
      %v10411 = vunpack.c.h.b16 %v10321
      %v10412 = vunpack.c.l.b16 %v10322
      %v10413 = vunpack.c.h.b16 %v10322
      %v10414 = vunpack.c.l.b16 %v10323
      %v10415 = vunpack.c.h.b16 %v10323
      %v10416 = vunpack.c.l.b16 %v10324
      %v10417 = vunpack.c.h.b16 %v10324
      %v10418 = vunpack.c.l.b16 %v10325
      %v10419 = vunpack.c.h.b16 %v10325
      %v10420 = vunpack.c.l.b16 %v10326
      %v10421 = vunpack.c.h.b16 %v10326
      %v10422 = vunpack.c.l.b16 %v10327
      %v10423 = vunpack.c.h.b16 %v10327
      %v10424 = vunpack.c.l.b16 %v10328
      %v10425 = vunpack.c.h.b16 %v10328
      %v10426 = vunpack.c.l.b16 %v10329
      %v10427 = vunpack.c.h.b16 %v10329
      %v10428 = vunpack.c.l.b16 %v10330
      %v10429 = vunpack.c.h.b16 %v10330
      %v10430 = vunpack.c.l.b16 %v10331
      %v10431 = vunpack.c.h.b16 %v10331
      %v10432 = vunpack.c.l.b16 %v10332
      %v10433 = vunpack.c.h.b16 %v10332
      %v10434 = vunpack.c.l.b16 %v10333
      %v10435 = vunpack.c.h.b16 %v10333
      %v10436 = vunpack.c.l.b16 %v10334
      %v10437 = vunpack.c.h.b16 %v10334
      %v10438 = vunpack.c.l.b16 %v10335
      %v10439 = vunpack.c.h.b16 %v10335
      %v10440 = vunpack.c.l.b16 %v10336
      %v10441 = vunpack.c.h.b16 %v10336
      %v10442 = vunpack.c.l.b16 %v10337
      %v10443 = vunpack.c.h.b16 %v10337
      %v10444 = vunpack.c.l.b16 %v10338
      %v10445 = vunpack.c.h.b16 %v10338
      %v10446 = vpack.c.b16 %v10400, %v10398
      %v10447 = vpack.c.b16 %v10401, %v10399
      %v10448 = vpack.c.b16 %v10404, %v10402
      %v10449 = vpack.c.b16 %v10405, %v10403
      %v10450 = vpack.c.b16 %v10408, %v10406
      %v10451 = vpack.c.b16 %v10409, %v10407
      %v10452 = vpack.c.b16 %v10412, %v10410
      %v10453 = vpack.c.b16 %v10413, %v10411
      %v10454 = vpack.c.b16 %v10416, %v10414
      %v10455 = vpack.c.b16 %v10417, %v10415
      %v10456 = vpack.c.b16 %v10420, %v10418
      %v10457 = vpack.c.b16 %v10421, %v10419
      %v10458 = vpack.c.b16 %v10424, %v10422
      %v10459 = vpack.c.b16 %v10425, %v10423
      %v10460 = vpack.c.b16 %v10428, %v10426
      %v10461 = vpack.c.b16 %v10429, %v10427
      %v10462 = vpack.c.b16 %v10432, %v10430
      %v10463 = vpack.c.b16 %v10433, %v10431
      %v10464 = vpack.c.b16 %v10436, %v10434
      %v10465 = vpack.c.b16 %v10437, %v10435
      %v10466 = vpack.c.b16 %v10440, %v10438
      %v10467 = vpack.c.b16 %v10441, %v10439
      %v10468 = vpack.c.b16 %v10444, %v10442
      %v10469 = vpack.c.b16 %v10445, %v10443
      %v10495 = vsel %vm8981, %v10353, 0
      %v10498 = vsel %vm8981, %v10371, 0
      %10500 = vmatprep.subr.bf16.mxu0 %v10447
      %10501 = vmatpush1.bf16.msra.mxu0 %v10446
      %10502 = vmatprep.subr.bf16.mxu0 %v10449
      %10503 = vmatpush1.bf16.msra.mxu0 %v10448
      %10504 = vmatprep.subr.bf16.mxu0 %v10451
      %10505 = vmatpush1.bf16.msra.mxu0 %v10450
      %10506 = vmatprep.subr.bf16.mxu0 %v10453
      %10507 = vmatpush1.bf16.msra.mxu0 %v10452
      %10508 = vmatprep.subr.bf16.mxu0 %v10455
      %10509 = vmatpush1.bf16.msra.mxu0 %v10454
      %10510 = vmatprep.subr.bf16.mxu0 %v10457
      %10511 = vmatpush1.bf16.msra.mxu0 %v10456
      %10512 = vmatprep.subr.bf16.mxu0 %v10459
      %10513 = vmatpush1.bf16.msra.mxu0 %v10458
      %10514 = vmatprep.subr.bf16.mxu0 %v10461
      %10515 = vmatpush1.bf16.msra.mxu0 %v10460
      %10516 = vmatprep.subr.bf16.mxu0 %v10463
      %10517 = vmatpush1.bf16.msra.mxu0 %v10462
      %10518 = vmatprep.subr.bf16.mxu0 %v10465
      %10519 = vmatpush1.bf16.msra.mxu0 %v10464
      %10520 = vmatprep.subr.bf16.mxu0 %v10467
      %10521 = vmatpush1.bf16.msra.mxu0 %v10466
      %10522 = vmatprep.subr.bf16.mxu0 %v10469
      %10523 = vmatpush1.bf16.msra.mxu0 %v10468
      %10524 = vmatprep.subr.bf16.mxu0 0
      %10525 = vmatpush1.bf16.msra.mxu0 0
      %10526 = vmatprep.subr.bf16.mxu0 0
      %10527 = vmatpush1.bf16.msra.mxu0 0
      %10528 = vmatprep.subr.bf16.mxu0 0
      %10529 = vmatpush1.bf16.msra.mxu0 0
      %10530 = vmatprep.subr.bf16.mxu0 0
      %10531 = vmatpush1.bf16.msra.mxu0 0
      %10532 = vmatprep.mubr.bf16.mxu0 %v10495
      %10533 = vmatmul.mubr.bf16.gmra.mrb[0].mxu0 %v10346
      %v10534 = vpop.f32.mrb[0].mxu0
      %v10535 = vadd.f32 0.0, %v10534
      %v10536 = vpop.f32.mrb[0].mxu0
      %v10537 = vadd.f32 0.0, %v10536
      %v10538 = vpop.f32.mrb[0].mxu0
      %v10539 = vadd.f32 0.0, %v10538
      %v10540 = vpop.f32.mrb[0].mxu0
      %v10541 = vadd.f32 0.0, %v10540
      %10542 = vmatprep.mubr.bf16.mxu0 %v10498
      %10543 = vmatmul.mubr.bf16.gmra.mrb[0].mxu0 %v10362
      %v10544 = vpop.f32.mrb[0].mxu0
      %v10545 = vadd.f32 0.0, %v10544
      %v10546 = vpop.f32.mrb[0].mxu0
      %v10547 = vadd.f32 0.0, %v10546
      %v10548 = vpop.f32.mrb[0].mxu0
      %v10549 = vpop.f32.mrb[0].mxu0
      %10550 = vdwg.mxu0
      %v10551 = vadd.f32 %v10308, %v10535
      %v10552 = vadd.f32 %v10309, %v10537
      %v10553 = vadd.f32 %v10310, %v10539
      %v10554 = vadd.f32 %v10311, %v10541
      %v10555 = vadd.f32 %v10312, %v10545
      %v10556 = vadd.f32 %v10313, %v10547
      %s10557 = scalar_lea.vmem %s9, 1536
      %v10558 = vld [vmem:[%s10557] sm:$0xff]
      %v10559 = vld [vmem:[%s10557 + $0x8] sm:$0xff]
      %v10560 = vld [vmem:[%s10557 + $0x10] sm:$0xff]
      %v10561 = vld [vmem:[%s10557 + $0x18] sm:$0xff]
      %v10562 = vld [vmem:[%s10557 + $0x20] sm:$0xff]
      %v10563 = vld [vmem:[%s10557 + $0x28] sm:$0xff]
      %v10564 = vld [vmem:[%s10557 + $0x30] sm:$0xff]
      %v10565 = vld [vmem:[%s10557 + $0x38] sm:$0xff]
      %v10566 = vld [vmem:[%s10557 + $0x40] sm:$0xff]
      %v10567 = vld [vmem:[%s10557 + $0x48] sm:$0xff]
      %v10568 = vld [vmem:[%s10557 + $0x50] sm:$0xff]
      %v10569 = vld [vmem:[%s10557 + $0x58] sm:$0xff]
      %v10570 = vld [vmem:[%s10557 + $0x60] sm:$0xff]
      %v10571 = vld [vmem:[%s10557 + $0x68] sm:$0xff]
      %v10572 = vld [vmem:[%s10557 + $0x70] sm:$0xff]
      %v10573 = vld [vmem:[%s10557 + $0x78] sm:$0xff]
      %v10574 = vld [vmem:[%s10557 + $0x80] sm:$0xff]
      %v10575 = vld [vmem:[%s10557 + $0x88] sm:$0xff]
      %v10576 = vld [vmem:[%s10557 + $0x90] sm:$0xff]
      %v10577 = vld [vmem:[%s10557 + $0x98] sm:$0xff]
      %v10578 = vld [vmem:[%s10557 + $0xa0] sm:$0xff]
      %v10579 = vld [vmem:[%s10557 + $0xa8] sm:$0xff]
      %v10580 = vld [vmem:[%s10557 + $0xb0] sm:$0xff]
      %v10581 = vld [vmem:[%s10557 + $0xb8] sm:$0xff]
      %vm10582 = vcmask 1040384
      %v10583 = vrot.slane %v8774, 7
      %v10584 = vrot.slane %v8776, 7
      %v10585 = vsel %vm10582, %v10583, %v10584
      %v10586 = vrot.slane %v8775, 7
      %v10587 = vrot.slane %v8777, 7
      %v10588 = vsel %vm10582, %v10586, %v10587
      %v10589 = vrot.slane %v8778, 7
      %v10590 = vsel %vm10582, %v10584, %v10589
      %v10591 = vrot.slane %v8779, 7
      %v10592 = vsel %vm10582, %v10587, %v10591
      %v10619 = vunpack.c.l.b16 %v10558
      %v10620 = vunpack.c.h.b16 %v10558
      %v10621 = vunpack.c.l.b16 %v10559
      %v10622 = vunpack.c.h.b16 %v10559
      %v10623 = vunpack.c.l.b16 %v10560
      %v10624 = vunpack.c.h.b16 %v10560
      %v10625 = vunpack.c.l.b16 %v10561
      %v10626 = vunpack.c.h.b16 %v10561
      %v10627 = vunpack.c.l.b16 %v10562
      %v10628 = vunpack.c.h.b16 %v10562
      %v10629 = vunpack.c.l.b16 %v10563
      %v10630 = vunpack.c.h.b16 %v10563
      %v10631 = vunpack.c.l.b16 %v10564
      %v10632 = vunpack.c.h.b16 %v10564
      %v10633 = vunpack.c.l.b16 %v10565
      %v10634 = vunpack.c.h.b16 %v10565
      %v10635 = vunpack.c.l.b16 %v10566
      %v10636 = vunpack.c.h.b16 %v10566
      %v10637 = vunpack.c.l.b16 %v10567
      %v10638 = vunpack.c.h.b16 %v10567
      %v10639 = vunpack.c.l.b16 %v10568
      %v10640 = vunpack.c.h.b16 %v10568
      %v10641 = vunpack.c.l.b16 %v10569
      %v10642 = vunpack.c.h.b16 %v10569
      %v10643 = vunpack.c.l.b16 %v10570
      %v10644 = vunpack.c.h.b16 %v10570
      %v10645 = vunpack.c.l.b16 %v10571
      %v10646 = vunpack.c.h.b16 %v10571
      %v10647 = vunpack.c.l.b16 %v10572
      %v10648 = vunpack.c.h.b16 %v10572
      %v10649 = vunpack.c.l.b16 %v10573
      %v10650 = vunpack.c.h.b16 %v10573
      %v10651 = vunpack.c.l.b16 %v10574
      %v10652 = vunpack.c.h.b16 %v10574
      %v10653 = vunpack.c.l.b16 %v10575
      %v10654 = vunpack.c.h.b16 %v10575
      %v10655 = vunpack.c.l.b16 %v10576
      %v10656 = vunpack.c.h.b16 %v10576
      %v10657 = vunpack.c.l.b16 %v10577
      %v10658 = vunpack.c.h.b16 %v10577
      %v10659 = vunpack.c.l.b16 %v10578
      %v10660 = vunpack.c.h.b16 %v10578
      %v10661 = vunpack.c.l.b16 %v10579
      %v10662 = vunpack.c.h.b16 %v10579
      %v10663 = vunpack.c.l.b16 %v10580
      %v10664 = vunpack.c.h.b16 %v10580
      %v10665 = vunpack.c.l.b16 %v10581
      %v10666 = vunpack.c.h.b16 %v10581
      %v10667 = vpack.c.b16 %v10621, %v10619
      %v10668 = vpack.c.b16 %v10622, %v10620
      %v10669 = vpack.c.b16 %v10625, %v10623
      %v10670 = vpack.c.b16 %v10626, %v10624
      %v10671 = vpack.c.b16 %v10629, %v10627
      %v10672 = vpack.c.b16 %v10630, %v10628
      %v10673 = vpack.c.b16 %v10633, %v10631
      %v10674 = vpack.c.b16 %v10634, %v10632
      %v10675 = vpack.c.b16 %v10637, %v10635
      %v10676 = vpack.c.b16 %v10638, %v10636
      %v10677 = vpack.c.b16 %v10641, %v10639
      %v10678 = vpack.c.b16 %v10642, %v10640
      %v10679 = vpack.c.b16 %v10645, %v10643
      %v10680 = vpack.c.b16 %v10646, %v10644
      %v10681 = vpack.c.b16 %v10649, %v10647
      %v10682 = vpack.c.b16 %v10650, %v10648
      %v10683 = vpack.c.b16 %v10653, %v10651
      %v10684 = vpack.c.b16 %v10654, %v10652
      %v10685 = vpack.c.b16 %v10657, %v10655
      %v10686 = vpack.c.b16 %v10658, %v10656
      %v10687 = vpack.c.b16 %v10661, %v10659
      %v10688 = vpack.c.b16 %v10662, %v10660
      %v10689 = vpack.c.b16 %v10665, %v10663
      %v10690 = vpack.c.b16 %v10666, %v10664
      %v10716 = vsel %vm8981, %v10588, 0
      %v10719 = vsel %vm8981, %v10592, 0
      %10721 = vmatprep.subr.bf16.mxu0 %v10668
      %10722 = vmatpush1.bf16.msra.mxu0 %v10667
      %10723 = vmatprep.subr.bf16.mxu0 %v10670
      %10724 = vmatpush1.bf16.msra.mxu0 %v10669
      %10725 = vmatprep.subr.bf16.mxu0 %v10672
      %10726 = vmatpush1.bf16.msra.mxu0 %v10671
      %10727 = vmatprep.subr.bf16.mxu0 %v10674
      %10728 = vmatpush1.bf16.msra.mxu0 %v10673
      %10729 = vmatprep.subr.bf16.mxu0 %v10676
      %10730 = vmatpush1.bf16.msra.mxu0 %v10675
      %10731 = vmatprep.subr.bf16.mxu0 %v10678
      %10732 = vmatpush1.bf16.msra.mxu0 %v10677
      %10733 = vmatprep.subr.bf16.mxu0 %v10680
      %10734 = vmatpush1.bf16.msra.mxu0 %v10679
      %10735 = vmatprep.subr.bf16.mxu0 %v10682
      %10736 = vmatpush1.bf16.msra.mxu0 %v10681
      %10737 = vmatprep.subr.bf16.mxu0 %v10684
      %10738 = vmatpush1.bf16.msra.mxu0 %v10683
      %10739 = vmatprep.subr.bf16.mxu0 %v10686
      %10740 = vmatpush1.bf16.msra.mxu0 %v10685
      %10741 = vmatprep.subr.bf16.mxu0 %v10688
      %10742 = vmatpush1.bf16.msra.mxu0 %v10687
      %10743 = vmatprep.subr.bf16.mxu0 %v10690
      %10744 = vmatpush1.bf16.msra.mxu0 %v10689
      %10745 = vmatprep.subr.bf16.mxu0 0
      %10746 = vmatpush1.bf16.msra.mxu0 0
      %10747 = vmatprep.subr.bf16.mxu0 0
      %10748 = vmatpush1.bf16.msra.mxu0 0
      %10749 = vmatprep.subr.bf16.mxu0 0
      %10750 = vmatpush1.bf16.msra.mxu0 0
      %10751 = vmatprep.subr.bf16.mxu0 0
      %10752 = vmatpush1.bf16.msra.mxu0 0
      %10753 = vmatprep.mubr.bf16.mxu0 %v10716
      %10754 = vmatmul.mubr.bf16.gmra.mrb[0].mxu0 %v10585
      %v10755 = vpop.f32.mrb[0].mxu0
      %v10756 = vadd.f32 0.0, %v10755
      %v10757 = vpop.f32.mrb[0].mxu0
      %v10758 = vadd.f32 0.0, %v10757
      %v10759 = vpop.f32.mrb[0].mxu0
      %v10760 = vadd.f32 0.0, %v10759
      %v10761 = vpop.f32.mrb[0].mxu0
      %v10762 = vadd.f32 0.0, %v10761
      %10763 = vmatprep.mubr.bf16.mxu0 %v10719
      %10764 = vmatmul.mubr.bf16.gmra.mrb[0].mxu0 %v10590
      %v10765 = vpop.f32.mrb[0].mxu0
      %v10766 = vadd.f32 0.0, %v10765
      %v10767 = vpop.f32.mrb[0].mxu0
      %v10768 = vadd.f32 0.0, %v10767
      %v10769 = vpop.f32.mrb[0].mxu0
      %v10770 = vpop.f32.mrb[0].mxu0
      %10771 = vdwg.mxu0
      %v10772 = vadd.f32 %v10551, %v10756
      %v10773 = vadd.f32 %v10552, %v10758
      %v10774 = vadd.f32 %v10553, %v10760
      %v10775 = vadd.f32 %v10554, %v10762
      %v10776 = vadd.f32 %v10555, %v10766
      %v10777 = vadd.f32 %v10556, %v10768
      %v10778 = vld [vmem:[%s39] sm:$0x1]
      %v10779 = vld [vmem:[%s41] sm:$0xff]
      %v10780 = vld [vmem:[%s41 + $0x8] sm:$0xff]
      %v10781 = vld [vmem:[%s41 + $0x10] sm:$0xff]
      %v10782 = vld [vmem:[%s41 + $0x18] sm:$0xff]
      %v10783 = vld [vmem:[%s41 + $0x20] sm:$0xff]
      %v10784 = vld [vmem:[%s41 + $0x28] sm:$0xff]
      %v10785 = vld [vmem:[%s41 + $0x30] sm:$0xff]
      %v10786 = vld [vmem:[%s41 + $0x38] sm:$0xff]
      %v10787 = vld [vmem:[%s41 + $0x40] sm:$0xff]
      %v10788 = vld [vmem:[%s41 + $0x48] sm:$0xff]
      %v10789 = vld [vmem:[%s41 + $0x50] sm:$0xff]
      %v10790 = vld [vmem:[%s41 + $0x58] sm:$0xff]
      %v10791 = vld [vmem:[%s41 + $0x60] sm:$0xff]
      %v10792 = vld [vmem:[%s41 + $0x68] sm:$0xff]
      %v10793 = vld [vmem:[%s41 + $0x70] sm:$0xff]
      %v10794 = vld [vmem:[%s41 + $0x78] sm:$0xff]
      %v10795 = vld [vmem:[%s41 + $0x80] sm:$0xff]
      %v10796 = vld [vmem:[%s41 + $0x88] sm:$0xff]
      %v10797 = vld [vmem:[%s41 + $0x90] sm:$0xff]
      %v10798 = vld [vmem:[%s41 + $0x98] sm:$0xff]
      %v10799 = vld [vmem:[%s41 + $0xa0] sm:$0xff]
      %v10800 = vld [vmem:[%s41 + $0xa8] sm:$0xff]
      %v10801 = vld [vmem:[%s41 + $0xb0] sm:$0xff]
      %v10802 = vld [vmem:[%s41 + $0xb8] sm:$0xff]
      %v10803 = vld [vmem:[%s41 + $0xc0] sm:$0xff]
      %v10804 = vld [vmem:[%s41 + $0xc8] sm:$0xff]
      %v10805 = vld [vmem:[%s41 + $0xd0] sm:$0xff]
      %v10806 = vld [vmem:[%s41 + $0xd8] sm:$0xff]
      %v10807 = vld [vmem:[%s41 + $0xe0] sm:$0xff]
      %v10808 = vld [vmem:[%s41 + $0xe8] sm:$0xff]
      %v10809 = vld [vmem:[%s41 + $0xf0] sm:$0xff]
      %v10810 = vld [vmem:[%s41 + $0xf8] sm:$0xff]
      %v10811 = vld [vmem:[%s43] sm:$0x3]
      %v10812 = vld [vmem:[%s45] sm:$0xf]
      %v10813 = vld [vmem:[%s45 + $0x4] sm:$0xf]
      %v10814 = vld [vmem:[%s45 + $0x8] sm:$0xf]
      %v10815 = vld [vmem:[%s45 + $0xc] sm:$0xf]
      %v10816 = vld [vmem:[%s45 + $0x10] sm:$0xf]
      %v10817 = vld [vmem:[%s45 + $0x14] sm:$0xf]
      %v10818 = vld [vmem:[%s45 + $0x18] sm:$0xf]
      %v10819 = vld [vmem:[%s45 + $0x1c] sm:$0xf]
      %v10820 = vld [vmem:[%s45 + $0x20] sm:$0xf]
      %v10821 = vld [vmem:[%s45 + $0x24] sm:$0xf]
      %v10822 = vld [vmem:[%s45 + $0x28] sm:$0xf]
      %v10823 = vld [vmem:[%s45 + $0x2c] sm:$0xf]
      %v10824 = vld [vmem:[%s45 + $0x30] sm:$0xf]
      %v10825 = vld [vmem:[%s45 + $0x34] sm:$0xf]
      %v10826 = vld [vmem:[%s45 + $0x38] sm:$0xf]
      %v10827 = vld [vmem:[%s45 + $0x3c] sm:$0xf]
      %v10828 = vld [vmem:[%s45 + $0x40] sm:$0xf]
      %v10829 = vld [vmem:[%s45 + $0x44] sm:$0xf]
      %v10830 = vld [vmem:[%s45 + $0x48] sm:$0xf]
      %v10831 = vld [vmem:[%s45 + $0x4c] sm:$0xf]
      %v10832 = vld [vmem:[%s45 + $0x50] sm:$0xf]
      %v10833 = vld [vmem:[%s45 + $0x54] sm:$0xf]
      %v10834 = vld [vmem:[%s45 + $0x58] sm:$0xf]
      %v10835 = vld [vmem:[%s45 + $0x5c] sm:$0xf]
      %v10836 = vld [vmem:[%s45 + $0x60] sm:$0xf]
      %v10837 = vld [vmem:[%s45 + $0x64] sm:$0xf]
      %v10838 = vld [vmem:[%s45 + $0x68] sm:$0xf]
      %v10839 = vld [vmem:[%s45 + $0x6c] sm:$0xf]
      %v10840 = vld [vmem:[%s45 + $0x70] sm:$0xf]
      %v10841 = vld [vmem:[%s45 + $0x74] sm:$0xf]
      %v10842 = vld [vmem:[%s45 + $0x78] sm:$0xf]
      %v10843 = vld [vmem:[%s45 + $0x7c] sm:$0xf]
      %v10844 = vld [vmem:[%s47] sm:$0xf]
      %v10845 = vld [vmem:[%s47 + $0x4] sm:$0xf]
      %v10846 = vld [vmem:[%s47 + $0x8] sm:$0xf]
      %v10847 = vld [vmem:[%s47 + $0xc] sm:$0xf]
      %v10848 = vld [vmem:[%s47 + $0x10] sm:$0xf]
      %v10849 = vld [vmem:[%s47 + $0x14] sm:$0xf]
      %v10850 = vld [vmem:[%s47 + $0x18] sm:$0xf]
      %v10851 = vld [vmem:[%s47 + $0x1c] sm:$0xf]
      %v10852 = vld [vmem:[%s47 + $0x20] sm:$0xf]
      %v10853 = vld [vmem:[%s47 + $0x24] sm:$0xf]
      %v10854 = vld [vmem:[%s47 + $0x28] sm:$0xf]
      %v10855 = vld [vmem:[%s47 + $0x2c] sm:$0xf]
      %v10856 = vld [vmem:[%s47 + $0x30] sm:$0xf]
      %v10857 = vld [vmem:[%s47 + $0x34] sm:$0xf]
      %v10858 = vld [vmem:[%s47 + $0x38] sm:$0xf]
      %v10859 = vld [vmem:[%s47 + $0x3c] sm:$0xf]
      %v10860 = vld [vmem:[%s47 + $0x40] sm:$0xf]
      %v10861 = vld [vmem:[%s47 + $0x44] sm:$0xf]
      %v10862 = vld [vmem:[%s47 + $0x48] sm:$0xf]
      %v10863 = vld [vmem:[%s47 + $0x4c] sm:$0xf]
      %v10864 = vld [vmem:[%s47 + $0x50] sm:$0xf]
      %v10865 = vld [vmem:[%s47 + $0x54] sm:$0xf]
      %v10866 = vld [vmem:[%s47 + $0x58] sm:$0xf]
      %v10867 = vld [vmem:[%s47 + $0x5c] sm:$0xf]
      %v10868 = vld [vmem:[%s47 + $0x60] sm:$0xf]
      %v10869 = vld [vmem:[%s47 + $0x64] sm:$0xf]
      %v10870 = vld [vmem:[%s47 + $0x68] sm:$0xf]
      %v10871 = vld [vmem:[%s47 + $0x6c] sm:$0xf]
      %v10872 = vld [vmem:[%s47 + $0x70] sm:$0xf]
      %v10873 = vld [vmem:[%s47 + $0x74] sm:$0xf]
      %v10874 = vld [vmem:[%s47 + $0x78] sm:$0xf]
      %v10875 = vld [vmem:[%s47 + $0x7c] sm:$0xf]
      %v10876 = vld [vmem:[%s49] sm:$0xff]
      %v10877 = vld [vmem:[%s49 + $0x8] sm:$0xff]
      %v10878 = vld [vmem:[%s49 + $0x10] sm:$0xff]
      %v10879 = vld [vmem:[%s49 + $0x18] sm:$0xff]
      %v10880 = vld [vmem:[%s49 + $0x20] sm:$0xff]
      %v10881 = vld [vmem:[%s49 + $0x28] sm:$0xff]
      %v10882 = vld [vmem:[%s49 + $0x30] sm:$0xff]
      %v10883 = vld [vmem:[%s49 + $0x38] sm:$0xff]
      %vm10884 = vcmask 179200
      %v10886 = vsel %vm10884, %v10778, 0
      %v10889 = vsel %vm2318, %v10776, 0
      %v10892 = vsel %vm2318, %v10777, 0
      %10894 = vmatprep.subr.mxu0 %v10773
      %10895 = vmatpush1.msra.mxu0 %v10772
      %10896 = vmatprep.subr.mxu0 %v10775
      %10897 = vmatpush1.msra.mxu0 %v10774
      %10898 = vmatprep.subr.mxu0 %v10892
      %10899 = vmatpush1.msra.mxu0 %v10889
      %10900 = vmatprep.subr.mxu0 0.0
      %10901 = vmatpush1.msra.mxu0 0.0
      %10902 = vmatprep.subr.mxu0 0.0
      %10903 = vmatpush1.msra.mxu0 0.0
      %10904 = vmatprep.subr.mxu0 0.0
      %10905 = vmatpush1.msra.mxu0 0.0
      %10906 = vmatprep.subr.mxu0 0.0
      %10907 = vmatpush1.msra.mxu0 0.0
      %10908 = vmatprep.subr.mxu0 0.0
      %10909 = vmatpush1.msra.mxu0 0.0
      %10910 = vmatprep.subr.mxu0 0.0
      %10911 = vmatpush1.msra.mxu0 0.0
      %10912 = vmatprep.subr.mxu0 0.0
      %10913 = vmatpush1.msra.mxu0 0.0
      %10914 = vmatprep.subr.mxu0 0.0
      %10915 = vmatpush1.msra.mxu0 0.0
      %10916 = vmatprep.subr.mxu0 0.0
      %10917 = vmatpush1.msra.mxu0 0.0
      %10918 = vmatprep.subr.mxu0 0.0
      %10919 = vmatpush1.msra.mxu0 0.0
      %10920 = vmatprep.subr.mxu0 0.0
      %10921 = vmatpush1.msra.mxu0 0.0
      %10922 = vmatprep.subr.mxu0 0.0
      %10923 = vmatpush1.msra.mxu0 0.0
      %10924 = vmatprep.subr.mxu0 0.0
      %10925 = vmatpush1.msra.mxu0 0.0
      %10926 = vmatprep.subr.mxu0 0.0
      %10927 = vmatpush1.msra.mxu0 0.0
      %10928 = vmatprep.subr.mxu0 0.0
      %10929 = vmatpush1.msra.mxu0 0.0
      %10930 = vmatprep.subr.mxu0 0.0
      %10931 = vmatpush1.msra.mxu0 0.0
      %10932 = vmatprep.subr.mxu0 0.0
      %10933 = vmatpush1.msra.mxu0 0.0
      %10934 = vmatprep.subr.mxu0 0.0
      %10935 = vmatpush1.msra.mxu0 0.0
      %10936 = vmatprep.subr.mxu0 0.0
      %10937 = vmatpush1.msra.mxu0 0.0
      %10938 = vmatprep.subr.mxu0 0.0
      %10939 = vmatpush1.msra.mxu0 0.0
      %10940 = vmatprep.subr.mxu0 0.0
      %10941 = vmatpush1.msra.mxu0 0.0
      %10942 = vmatprep.subr.mxu0 0.0
      %10943 = vmatpush1.msra.mxu0 0.0
      %10944 = vmatprep.subr.mxu0 0.0
      %10945 = vmatpush1.msra.mxu0 0.0
      %10946 = vmatprep.subr.mxu0 0.0
      %10947 = vmatpush1.msra.mxu0 0.0
      %10948 = vmatprep.subr.mxu0 0.0
      %10949 = vmatpush1.msra.mxu0 0.0
      %10950 = vmatprep.subr.mxu0 0.0
      %10951 = vmatpush1.msra.mxu0 0.0
      %10952 = vmatprep.subr.mxu0 0.0
      %10953 = vmatpush1.msra.mxu0 0.0
      %10954 = vmatprep.subr.mxu0 0.0
      %10955 = vmatpush1.msra.mxu0 0.0
      %10956 = vmatprep.subr.mxu0 0.0
      %10957 = vmatpush1.msra.mxu0 0.0
      %10958 = vmatprep.mubr.f32.mxu0 0.0
      %10959 = vmatmul.mubr.f32.gmra.mrb[0].mxu0 %v10886
      %v10960 = vpop.f32.mrb[0].mxu0
      %v10961 = vadd.f32 0.0, %v10960
      %v10962 = vpop.f32.mrb[0].mxu0
      %v10963 = vadd.f32 0.0, %v10962
      %10964 = vdwg.mxu0
      %v10965 = vmul.f32 %v10772, %v10772
      %v10966 = vmul.f32 %v10773, %v10773
      %v10967 = vmul.f32 %v10774, %v10774
      %v10968 = vmul.f32 %v10775, %v10775
      %v10969 = vmul.f32 %v10776, %v10776
      %v10970 = vmul.f32 %v10777, %v10777
      %v10972 = vsel %vm2318, %v10969, 0
      %v10975 = vsel %vm2318, %v10970, 0
      %10977 = vmatprep.subr.mxu0 %v10966
      %10978 = vmatpush1.msra.mxu0 %v10965
      %10979 = vmatprep.subr.mxu0 %v10968
      %10980 = vmatpush1.msra.mxu0 %v10967
      %10981 = vmatprep.subr.mxu0 %v10975
      %10982 = vmatpush1.msra.mxu0 %v10972
      %10983 = vmatprep.subr.mxu0 0.0
      %10984 = vmatpush1.msra.mxu0 0.0
      %10985 = vmatprep.subr.mxu0 0.0
      %10986 = vmatpush1.msra.mxu0 0.0
      %10987 = vmatprep.subr.mxu0 0.0
      %10988 = vmatpush1.msra.mxu0 0.0
      %10989 = vmatprep.subr.mxu0 0.0
      %10990 = vmatpush1.msra.mxu0 0.0
      %10991 = vmatprep.subr.mxu0 0.0
      %10992 = vmatpush1.msra.mxu0 0.0
      %10993 = vmatprep.subr.mxu0 0.0
      %10994 = vmatpush1.msra.mxu0 0.0
      %10995 = vmatprep.subr.mxu0 0.0
      %10996 = vmatpush1.msra.mxu0 0.0
      %10997 = vmatprep.subr.mxu0 0.0
      %10998 = vmatpush1.msra.mxu0 0.0
      %10999 = vmatprep.subr.mxu0 0.0
      %11000 = vmatpush1.msra.mxu0 0.0
      %11001 = vmatprep.subr.mxu0 0.0
      %11002 = vmatpush1.msra.mxu0 0.0
      %11003 = vmatprep.subr.mxu0 0.0
      %11004 = vmatpush1.msra.mxu0 0.0
      %11005 = vmatprep.subr.mxu0 0.0
      %11006 = vmatpush1.msra.mxu0 0.0
      %11007 = vmatprep.subr.mxu0 0.0
      %11008 = vmatpush1.msra.mxu0 0.0
      %11009 = vmatprep.subr.mxu0 0.0
      %11010 = vmatpush1.msra.mxu0 0.0
      %11011 = vmatprep.subr.mxu0 0.0
      %11012 = vmatpush1.msra.mxu0 0.0
      %11013 = vmatprep.subr.mxu0 0.0
      %11014 = vmatpush1.msra.mxu0 0.0
      %11015 = vmatprep.subr.mxu0 0.0
      %11016 = vmatpush1.msra.mxu0 0.0
      %11017 = vmatprep.subr.mxu0 0.0
      %11018 = vmatpush1.msra.mxu0 0.0
      %11019 = vmatprep.subr.mxu0 0.0
      %11020 = vmatpush1.msra.mxu0 0.0
      %11021 = vmatprep.subr.mxu0 0.0
      %11022 = vmatpush1.msra.mxu0 0.0
      %11023 = vmatprep.subr.mxu0 0.0
      %11024 = vmatpush1.msra.mxu0 0.0
      %11025 = vmatprep.subr.mxu0 0.0
      %11026 = vmatpush1.msra.mxu0 0.0
      %11027 = vmatprep.subr.mxu0 0.0
      %11028 = vmatpush1.msra.mxu0 0.0
      %11029 = vmatprep.subr.mxu0 0.0
      %11030 = vmatpush1.msra.mxu0 0.0
      %11031 = vmatprep.subr.mxu0 0.0
      %11032 = vmatpush1.msra.mxu0 0.0
      %11033 = vmatprep.subr.mxu0 0.0
      %11034 = vmatpush1.msra.mxu0 0.0
      %11035 = vmatprep.subr.mxu0 0.0
      %11036 = vmatpush1.msra.mxu0 0.0
      %11037 = vmatprep.subr.mxu0 0.0
      %11038 = vmatpush1.msra.mxu0 0.0
      %11039 = vmatprep.subr.mxu0 0.0
      %11040 = vmatpush1.msra.mxu0 0.0
      %11041 = vmatprep.mubr.f32.mxu0 0.0
      %11042 = vmatmul.mubr.f32.gmra.mrb[0].mxu0 %v10886
      %v11043 = vpop.f32.mrb[0].mxu0
      %v11044 = vadd.f32 0.0, %v11043
      %v11045 = vpop.f32.mrb[0].mxu0
      %v11046 = vadd.f32 0.0, %v11045
      %11047 = vdwg.mxu0
      %11048 = vmatprep.subr.mxu0 0.0
      %11049 = vmatpush1.msra.mxu0 %v10779
      %11050 = vmatprep.subr.mxu0 0.0
      %11051 = vmatpush1.msra.mxu0 %v10780
      %11052 = vmatprep.subr.mxu0 0.0
      %11053 = vmatpush1.msra.mxu0 %v10781
      %11054 = vmatprep.subr.mxu0 0.0
      %11055 = vmatpush1.msra.mxu0 %v10782
      %11056 = vmatprep.subr.mxu0 0.0
      %11057 = vmatpush1.msra.mxu0 %v10783
      %11058 = vmatprep.subr.mxu0 0.0
      %11059 = vmatpush1.msra.mxu0 %v10784
      %11060 = vmatprep.subr.mxu0 0.0
      %11061 = vmatpush1.msra.mxu0 %v10785
      %11062 = vmatprep.subr.mxu0 0.0
      %11063 = vmatpush1.msra.mxu0 %v10786
      %11064 = vmatprep.subr.mxu0 0.0
      %11065 = vmatpush1.msra.mxu0 %v10787
      %11066 = vmatprep.subr.mxu0 0.0
      %11067 = vmatpush1.msra.mxu0 %v10788
      %11068 = vmatprep.subr.mxu0 0.0
      %11069 = vmatpush1.msra.mxu0 %v10789
      %11070 = vmatprep.subr.mxu0 0.0
      %11071 = vmatpush1.msra.mxu0 %v10790
      %11072 = vmatprep.subr.mxu0 0.0
      %11073 = vmatpush1.msra.mxu0 %v10791
      %11074 = vmatprep.subr.mxu0 0.0
      %11075 = vmatpush1.msra.mxu0 %v10792
      %11076 = vmatprep.subr.mxu0 0.0
      %11077 = vmatpush1.msra.mxu0 %v10793
      %11078 = vmatprep.subr.mxu0 0.0
      %11079 = vmatpush1.msra.mxu0 %v10794
      %11080 = vmatprep.subr.mxu0 0.0
      %11081 = vmatpush1.msra.mxu0 %v10795
      %11082 = vmatprep.subr.mxu0 0.0
      %11083 = vmatpush1.msra.mxu0 %v10796
      %11084 = vmatprep.subr.mxu0 0.0
      %11085 = vmatpush1.msra.mxu0 %v10797
      %11086 = vmatprep.subr.mxu0 0.0
      %11087 = vmatpush1.msra.mxu0 %v10798
      %11088 = vmatprep.subr.mxu0 0.0
      %11089 = vmatpush1.msra.mxu0 %v10799
      %11090 = vmatprep.subr.mxu0 0.0
      %11091 = vmatpush1.msra.mxu0 %v10800
      %11092 = vmatprep.subr.mxu0 0.0
      %11093 = vmatpush1.msra.mxu0 %v10801
      %11094 = vmatprep.subr.mxu0 0.0
      %11095 = vmatpush1.msra.mxu0 %v10802
      %11096 = vmatprep.subr.mxu0 0.0
      %11097 = vmatpush1.msra.mxu0 %v10803
      %11098 = vmatprep.subr.mxu0 0.0
      %11099 = vmatpush1.msra.mxu0 %v10804
      %11100 = vmatprep.subr.mxu0 0.0
      %11101 = vmatpush1.msra.mxu0 %v10805
      %11102 = vmatprep.subr.mxu0 0.0
      %11103 = vmatpush1.msra.mxu0 %v10806
      %11104 = vmatprep.subr.mxu0 0.0
      %11105 = vmatpush1.msra.mxu0 %v10807
      %11106 = vmatprep.subr.mxu0 0.0
      %11107 = vmatpush1.msra.mxu0 %v10808
      %11108 = vmatprep.subr.mxu0 0.0
      %11109 = vmatpush1.msra.mxu0 %v10809
      %11110 = vmatprep.subr.mxu0 0.0
      %11111 = vmatpush1.msra.mxu0 %v10810
      %11112 = vmatprep.mubr.f32.mxu0 %v10963
      %11113 = vmatmul.mubr.f32.gmra.mrb[0].mxu0 %v10961
      %v11114 = vpop.f32.mrb[0].mxu0
      %v11115 = vadd.f32 0.0, %v11114
      %v11116 = vpop.f32.mrb[0].mxu0
      %11117 = vdwg.mxu0
      %v11118 = vmul.f32 %v11115, 0.015625
      %11119 = vmatprep.subr.mxu0 0.0
      %11120 = vmatpush1.msra.mxu0 %v10779
      %11121 = vmatprep.subr.mxu0 0.0
      %11122 = vmatpush1.msra.mxu0 %v10780
      %11123 = vmatprep.subr.mxu0 0.0
      %11124 = vmatpush1.msra.mxu0 %v10781
      %11125 = vmatprep.subr.mxu0 0.0
      %11126 = vmatpush1.msra.mxu0 %v10782
      %11127 = vmatprep.subr.mxu0 0.0
      %11128 = vmatpush1.msra.mxu0 %v10783
      %11129 = vmatprep.subr.mxu0 0.0
      %11130 = vmatpush1.msra.mxu0 %v10784
      %11131 = vmatprep.subr.mxu0 0.0
      %11132 = vmatpush1.msra.mxu0 %v10785
      %11133 = vmatprep.subr.mxu0 0.0
      %11134 = vmatpush1.msra.mxu0 %v10786
      %11135 = vmatprep.subr.mxu0 0.0
      %11136 = vmatpush1.msra.mxu0 %v10787
      %11137 = vmatprep.subr.mxu0 0.0
      %11138 = vmatpush1.msra.mxu0 %v10788
      %11139 = vmatprep.subr.mxu0 0.0
      %11140 = vmatpush1.msra.mxu0 %v10789
      %11141 = vmatprep.subr.mxu0 0.0
      %11142 = vmatpush1.msra.mxu0 %v10790
      %11143 = vmatprep.subr.mxu0 0.0
      %11144 = vmatpush1.msra.mxu0 %v10791
      %11145 = vmatprep.subr.mxu0 0.0
      %11146 = vmatpush1.msra.mxu0 %v10792
      %11147 = vmatprep.subr.mxu0 0.0
      %11148 = vmatpush1.msra.mxu0 %v10793
      %11149 = vmatprep.subr.mxu0 0.0
      %11150 = vmatpush1.msra.mxu0 %v10794
      %11151 = vmatprep.subr.mxu0 0.0
      %11152 = vmatpush1.msra.mxu0 %v10795
      %11153 = vmatprep.subr.mxu0 0.0
      %11154 = vmatpush1.msra.mxu0 %v10796
      %11155 = vmatprep.subr.mxu0 0.0
      %11156 = vmatpush1.msra.mxu0 %v10797
      %11157 = vmatprep.subr.mxu0 0.0
      %11158 = vmatpush1.msra.mxu0 %v10798
      %11159 = vmatprep.subr.mxu0 0.0
      %11160 = vmatpush1.msra.mxu0 %v10799
      %11161 = vmatprep.subr.mxu0 0.0
      %11162 = vmatpush1.msra.mxu0 %v10800
      %11163 = vmatprep.subr.mxu0 0.0
      %11164 = vmatpush1.msra.mxu0 %v10801
      %11165 = vmatprep.subr.mxu0 0.0
      %11166 = vmatpush1.msra.mxu0 %v10802
      %11167 = vmatprep.subr.mxu0 0.0
      %11168 = vmatpush1.msra.mxu0 %v10803
      %11169 = vmatprep.subr.mxu0 0.0
      %11170 = vmatpush1.msra.mxu0 %v10804
      %11171 = vmatprep.subr.mxu0 0.0
      %11172 = vmatpush1.msra.mxu0 %v10805
      %11173 = vmatprep.subr.mxu0 0.0
      %11174 = vmatpush1.msra.mxu0 %v10806
      %11175 = vmatprep.subr.mxu0 0.0
      %11176 = vmatpush1.msra.mxu0 %v10807
      %11177 = vmatprep.subr.mxu0 0.0
      %11178 = vmatpush1.msra.mxu0 %v10808
      %11179 = vmatprep.subr.mxu0 0.0
      %11180 = vmatpush1.msra.mxu0 %v10809
      %11181 = vmatprep.subr.mxu0 0.0
      %11182 = vmatpush1.msra.mxu0 %v10810
      %11183 = vmatprep.mubr.f32.mxu0 %v11046
      %11184 = vmatmul.mubr.f32.gmra.mrb[0].mxu0 %v11044
      %v11185 = vpop.f32.mrb[0].mxu0
      %v11186 = vadd.f32 0.0, %v11185
      %v11187 = vpop.f32.mrb[0].mxu0
      %11188 = vdwg.mxu0
      %v11189 = vmul.f32 %v11186, 0.015625
      %v11190 = vmul.f32 %v11118, %v11118
      %v11191 = vsub.f32 %v11189, %v11190
      %v11192 = vmax.f32 %v11191, 0.0
      %v11193 = vadd.f32 %v11192, 1e-05
      %v11194 = vrsqrt.pop %v11193
      %v11196 = vsel %vm8981, %v11194, 0
      %11198 = vmatprep.subr.mxu0 0.0
      %11199 = vmatpush1.msra.mxu0 %v10876
      %11200 = vmatprep.subr.mxu0 0.0
      %11201 = vmatpush1.msra.mxu0 %v10877
      %11202 = vmatprep.subr.mxu0 0.0
      %11203 = vmatpush1.msra.mxu0 %v10878
      %11204 = vmatprep.subr.mxu0 0.0
      %11205 = vmatpush1.msra.mxu0 %v10879
      %11206 = vmatprep.subr.mxu0 0.0
      %11207 = vmatpush1.msra.mxu0 %v10880
      %11208 = vmatprep.subr.mxu0 0.0
      %11209 = vmatpush1.msra.mxu0 %v10881
      %11210 = vmatprep.subr.mxu0 0.0
      %11211 = vmatpush1.msra.mxu0 %v10882
      %11212 = vmatprep.subr.mxu0 0.0
      %11213 = vmatpush1.msra.mxu0 %v10883
      %11214 = vmatprep.subr.mxu0 0.0
      %11215 = vmatpush1.msra.mxu0 0.0
      %11216 = vmatprep.subr.mxu0 0.0
      %11217 = vmatpush1.msra.mxu0 0.0
      %11218 = vmatprep.subr.mxu0 0.0
      %11219 = vmatpush1.msra.mxu0 0.0
      %11220 = vmatprep.subr.mxu0 0.0
      %11221 = vmatpush1.msra.mxu0 0.0
      %11222 = vmatprep.subr.mxu0 0.0
      %11223 = vmatpush1.msra.mxu0 0.0
      %11224 = vmatprep.subr.mxu0 0.0
      %11225 = vmatpush1.msra.mxu0 0.0
      %11226 = vmatprep.subr.mxu0 0.0
      %11227 = vmatpush1.msra.mxu0 0.0
      %11228 = vmatprep.subr.mxu0 0.0
      %11229 = vmatpush1.msra.mxu0 0.0
      %11230 = vmatprep.subr.mxu0 0.0
      %11231 = vmatpush1.msra.mxu0 0.0
      %11232 = vmatprep.subr.mxu0 0.0
      %11233 = vmatpush1.msra.mxu0 0.0
      %11234 = vmatprep.subr.mxu0 0.0
      %11235 = vmatpush1.msra.mxu0 0.0
      %11236 = vmatprep.subr.mxu0 0.0
      %11237 = vmatpush1.msra.mxu0 0.0
      %11238 = vmatprep.subr.mxu0 0.0
      %11239 = vmatpush1.msra.mxu0 0.0
      %11240 = vmatprep.subr.mxu0 0.0
      %11241 = vmatpush1.msra.mxu0 0.0
      %11242 = vmatprep.subr.mxu0 0.0
      %11243 = vmatpush1.msra.mxu0 0.0
      %11244 = vmatprep.subr.mxu0 0.0
      %11245 = vmatpush1.msra.mxu0 0.0
      %11246 = vmatprep.subr.mxu0 0.0
      %11247 = vmatpush1.msra.mxu0 0.0
      %11248 = vmatprep.subr.mxu0 0.0
      %11249 = vmatpush1.msra.mxu0 0.0
      %11250 = vmatprep.subr.mxu0 0.0
      %11251 = vmatpush1.msra.mxu0 0.0
      %11252 = vmatprep.subr.mxu0 0.0
      %11253 = vmatpush1.msra.mxu0 0.0
      %11254 = vmatprep.subr.mxu0 0.0
      %11255 = vmatpush1.msra.mxu0 0.0
      %11256 = vmatprep.subr.mxu0 0.0
      %11257 = vmatpush1.msra.mxu0 0.0
      %11258 = vmatprep.subr.mxu0 0.0
      %11259 = vmatpush1.msra.mxu0 0.0
      %11260 = vmatprep.subr.mxu0 0.0
      %11261 = vmatpush1.msra.mxu0 0.0
      %11262 = vmatprep.mubr.f32.mxu0 0.0
      %11263 = vmatmul.mubr.f32.gmra.mrb[0].mxu0 %v11196
      %v11264 = vpop.f32.mrb[0].mxu0
      %v11265 = vadd.f32 0.0, %v11264
      %v11266 = vpop.f32.mrb[0].mxu0
      %11267 = vdwg.mxu0
      %v11268 = vmul.f32 %v11118, %v11194
      %v11269 = vsub.f32 0.0, %v11268
      %v11271 = vsel %vm8981, %v11269, 0
      %11273 = vmatprep.subr.mxu0 0.0
      %11274 = vmatpush1.msra.mxu0 %v10876
      %11275 = vmatprep.subr.mxu0 0.0
      %11276 = vmatpush1.msra.mxu0 %v10877
      %11277 = vmatprep.subr.mxu0 0.0
      %11278 = vmatpush1.msra.mxu0 %v10878
      %11279 = vmatprep.subr.mxu0 0.0
      %11280 = vmatpush1.msra.mxu0 %v10879
      %11281 = vmatprep.subr.mxu0 0.0
      %11282 = vmatpush1.msra.mxu0 %v10880
      %11283 = vmatprep.subr.mxu0 0.0
      %11284 = vmatpush1.msra.mxu0 %v10881
      %11285 = vmatprep.subr.mxu0 0.0
      %11286 = vmatpush1.msra.mxu0 %v10882
      %11287 = vmatprep.subr.mxu0 0.0
      %11288 = vmatpush1.msra.mxu0 %v10883
      %11289 = vmatprep.subr.mxu0 0.0
      %11290 = vmatpush1.msra.mxu0 0.0
      %11291 = vmatprep.subr.mxu0 0.0
      %11292 = vmatpush1.msra.mxu0 0.0
      %11293 = vmatprep.subr.mxu0 0.0
      %11294 = vmatpush1.msra.mxu0 0.0
      %11295 = vmatprep.subr.mxu0 0.0
      %11296 = vmatpush1.msra.mxu0 0.0
      %11297 = vmatprep.subr.mxu0 0.0
      %11298 = vmatpush1.msra.mxu0 0.0
      %11299 = vmatprep.subr.mxu0 0.0
      %11300 = vmatpush1.msra.mxu0 0.0
      %11301 = vmatprep.subr.mxu0 0.0
      %11302 = vmatpush1.msra.mxu0 0.0
      %11303 = vmatprep.subr.mxu0 0.0
      %11304 = vmatpush1.msra.mxu0 0.0
      %11305 = vmatprep.subr.mxu0 0.0
      %11306 = vmatpush1.msra.mxu0 0.0
      %11307 = vmatprep.subr.mxu0 0.0
      %11308 = vmatpush1.msra.mxu0 0.0
      %11309 = vmatprep.subr.mxu0 0.0
      %11310 = vmatpush1.msra.mxu0 0.0
      %11311 = vmatprep.subr.mxu0 0.0
      %11312 = vmatpush1.msra.mxu0 0.0
      %11313 = vmatprep.subr.mxu0 0.0
      %11314 = vmatpush1.msra.mxu0 0.0
      %11315 = vmatprep.subr.mxu0 0.0
      %11316 = vmatpush1.msra.mxu0 0.0
      %11317 = vmatprep.subr.mxu0 0.0
      %11318 = vmatpush1.msra.mxu0 0.0
      %11319 = vmatprep.subr.mxu0 0.0
      %11320 = vmatpush1.msra.mxu0 0.0
      %11321 = vmatprep.subr.mxu0 0.0
      %11322 = vmatpush1.msra.mxu0 0.0
      %11323 = vmatprep.subr.mxu0 0.0
      %11324 = vmatpush1.msra.mxu0 0.0
      %11325 = vmatprep.subr.mxu0 0.0
      %11326 = vmatpush1.msra.mxu0 0.0
      %11327 = vmatprep.subr.mxu0 0.0
      %11328 = vmatpush1.msra.mxu0 0.0
      %11329 = vmatprep.subr.mxu0 0.0
      %11330 = vmatpush1.msra.mxu0 0.0
      %11331 = vmatprep.subr.mxu0 0.0
      %11332 = vmatpush1.msra.mxu0 0.0
      %11333 = vmatprep.subr.mxu0 0.0
      %11334 = vmatpush1.msra.mxu0 0.0
      %11335 = vmatprep.subr.mxu0 0.0
      %11336 = vmatpush1.msra.mxu0 0.0
      %11337 = vmatprep.mubr.f32.mxu0 0.0
      %11338 = vmatmul.mubr.f32.gmra.mrb[0].mxu0 %v11271
      %v11339 = vpop.f32.mrb[0].mxu0
      %v11340 = vadd.f32 0.0, %v11339
      %v11341 = vpop.f32.mrb[0].mxu0
      %11342 = vdwg.mxu0
      %v11347 = vrot.slane %v10772, 1
      %v11348 = vrot.slane %v10774, 1
      %v11349 = vsel %vm3055, %v11347, %v11348
      %v11350 = vrot.slane %v10773, 1
      %v11351 = vrot.slane %v10775, 1
      %v11352 = vsel %vm3055, %v11350, %v11351
      %v11353 = vrot.slane %v10776, 1
      %v11354 = vsel %vm3055, %v11348, %v11353
      %v11355 = vrot.slane %v10777, 1
      %v11356 = vsel %vm3055, %v11351, %v11355
      %v11363 = vrot.slane %v10772, 3
      %v11364 = vrot.slane %v10773, 3
      %v11367 = vsel %vm3274, %v11353, %v11363
      %v11368 = vsel %vm3274, %v11355, %v11364
      %v11369 = vmax.f32 %v10772, %v11349
      %v11370 = vmax.f32 %v10773, %v11352
      %v11371 = vmax.f32 %v10774, %v11354
      %v11372 = vmax.f32 %v10775, %v11356
      %v11373 = vmax.f32 %v10776, %v11367
      %v11374 = vmax.f32 %v10777, %v11368
      %v11381 = vrot.slane %v11369, 6
      %v11382 = vrot.slane %v11371, 6
      %v11383 = vsel %vm1727, %v11381, %v11382
      %v11384 = vrot.slane %v11370, 6
      %v11385 = vrot.slane %v11372, 6
      %v11386 = vsel %vm1727, %v11384, %v11385
      %v11387 = vrot.slane %v11373, 6
      %v11388 = vsel %vm1727, %v11382, %v11387
      %v11389 = vrot.slane %v11374, 6
      %v11390 = vsel %vm1727, %v11385, %v11389
      %v11395 = vmax.f32 %v11369, %v11383
      %v11396 = vmax.f32 %v11370, %v11386
      %v11397 = vmax.f32 %v11371, %v11388
      %v11398 = vmax.f32 %v11372, %v11390
      %v11399 = vmax.f32 %v11373, %v11369
      %v11400 = vmax.f32 %v11374, %v11370
      %v11401 = vpack.c.bf16 %v11397, %v11395
      %v11402 = vpack.c.bf16 %v11398, %v11396
      %v11403 = vpack.c.bf16 %v11399, %v11399
      %v11404 = vpack.c.bf16 %v11400, %v11400
      %v11406 = vsel %vm10884, %v10811, 0
      %vm11408 = vcmask 1042432
      %v11410 = vsel %vm11408, %v11403, 0
      %v11413 = vsel %vm11408, %v11404, 0
      %11415 = vmatprep.subr.bf16.mxu0 %v11402
      %11416 = vmatpush1.bf16.msra.mxu0 %v11401
      %11417 = vmatprep.subr.bf16.mxu0 %v11413
      %11418 = vmatpush1.bf16.msra.mxu0 %v11410
      %11419 = vmatprep.subr.bf16.mxu0 0
      %11420 = vmatpush1.bf16.msra.mxu0 0
      %11421 = vmatprep.subr.bf16.mxu0 0
      %11422 = vmatpush1.bf16.msra.mxu0 0
      %11423 = vmatprep.subr.bf16.mxu0 0
      %11424 = vmatpush1.bf16.msra.mxu0 0
      %11425 = vmatprep.subr.bf16.mxu0 0
      %11426 = vmatpush1.bf16.msra.mxu0 0
      %11427 = vmatprep.subr.bf16.mxu0 0
      %11428 = vmatpush1.bf16.msra.mxu0 0
      %11429 = vmatprep.subr.bf16.mxu0 0
      %11430 = vmatpush1.bf16.msra.mxu0 0
      %11431 = vmatprep.subr.bf16.mxu0 0
      %11432 = vmatpush1.bf16.msra.mxu0 0
      %11433 = vmatprep.subr.bf16.mxu0 0
      %11434 = vmatpush1.bf16.msra.mxu0 0
      %11435 = vmatprep.subr.bf16.mxu0 0
      %11436 = vmatpush1.bf16.msra.mxu0 0
      %11437 = vmatprep.subr.bf16.mxu0 0
      %11438 = vmatpush1.bf16.msra.mxu0 0
      %11439 = vmatprep.subr.bf16.mxu0 0
      %11440 = vmatpush1.bf16.msra.mxu0 0
      %11441 = vmatprep.subr.bf16.mxu0 0
      %11442 = vmatpush1.bf16.msra.mxu0 0
      %11443 = vmatprep.subr.bf16.mxu0 0
      %11444 = vmatpush1.bf16.msra.mxu0 0
      %11445 = vmatprep.subr.bf16.mxu0 0
      %11446 = vmatpush1.bf16.msra.mxu0 0
      %11447 = vmatprep.mubr.bf16.mxu0 0
      %11448 = vmatmul.mubr.bf16.gmra.mrb[0].mxu0 %v11406
      %v11449 = vpop.f32.mrb[0].mxu0
      %v11450 = vadd.f32 0.0, %v11449
      %v11451 = vpop.f32.mrb[0].mxu0
      %v11452 = vadd.f32 0.0, %v11451
      %v11453 = vpop.f32.mrb[0].mxu0
      %v11454 = vpop.f32.mrb[0].mxu0
      %11455 = vdwg.mxu0
      %v11456 = vpack.c.bf16 %v11450, %v11450
      %v11457 = vpack.c.bf16 %v11452, %v11452
      %v11490 = vunpack.c.l.b16 %v10812
      %v11491 = vunpack.c.l.b16 %v10813
      %v11492 = vunpack.c.l.b16 %v10814
      %v11493 = vunpack.c.l.b16 %v10815
      %v11494 = vunpack.c.l.b16 %v10816
      %v11495 = vunpack.c.l.b16 %v10817
      %v11496 = vunpack.c.l.b16 %v10818
      %v11497 = vunpack.c.l.b16 %v10819
      %v11498 = vunpack.c.l.b16 %v10820
      %v11499 = vunpack.c.l.b16 %v10821
      %v11500 = vunpack.c.l.b16 %v10822
      %v11501 = vunpack.c.l.b16 %v10823
      %v11502 = vunpack.c.l.b16 %v10824
      %v11503 = vunpack.c.l.b16 %v10825
      %v11504 = vunpack.c.l.b16 %v10826
      %v11505 = vunpack.c.l.b16 %v10827
      %v11506 = vunpack.c.l.b16 %v10828
      %v11507 = vunpack.c.l.b16 %v10829
      %v11508 = vunpack.c.l.b16 %v10830
      %v11509 = vunpack.c.l.b16 %v10831
      %v11510 = vunpack.c.l.b16 %v10832
      %v11511 = vunpack.c.l.b16 %v10833
      %v11512 = vunpack.c.l.b16 %v10834
      %v11513 = vunpack.c.l.b16 %v10835
      %v11514 = vunpack.c.l.b16 %v10836
      %v11515 = vunpack.c.l.b16 %v10837
      %v11516 = vunpack.c.l.b16 %v10838
      %v11517 = vunpack.c.l.b16 %v10839
      %v11518 = vunpack.c.l.b16 %v10840
      %v11519 = vunpack.c.l.b16 %v10841
      %v11520 = vunpack.c.l.b16 %v10842
      %v11521 = vunpack.c.l.b16 %v10843
      %v11522 = vpack.c.b16 %v11491, %v11490
      %v11523 = vpack.c.b16 %v11493, %v11492
      %v11524 = vpack.c.b16 %v11495, %v11494
      %v11525 = vpack.c.b16 %v11497, %v11496
      %v11526 = vpack.c.b16 %v11499, %v11498
      %v11527 = vpack.c.b16 %v11501, %v11500
      %v11528 = vpack.c.b16 %v11503, %v11502
      %v11529 = vpack.c.b16 %v11505, %v11504
      %v11530 = vpack.c.b16 %v11507, %v11506
      %v11531 = vpack.c.b16 %v11509, %v11508
      %v11532 = vpack.c.b16 %v11511, %v11510
      %v11533 = vpack.c.b16 %v11513, %v11512
      %v11534 = vpack.c.b16 %v11515, %v11514
      %v11535 = vpack.c.b16 %v11517, %v11516
      %v11536 = vpack.c.b16 %v11519, %v11518
      %v11537 = vpack.c.b16 %v11521, %v11520
      %11554 = vmatprep.subr.bf16.mxu0 0
      %11555 = vmatpush1.bf16.msra.mxu0 %v11522
      %11556 = vmatprep.subr.bf16.mxu0 0
      %11557 = vmatpush1.bf16.msra.mxu0 %v11523
      %11558 = vmatprep.subr.bf16.mxu0 0
      %11559 = vmatpush1.bf16.msra.mxu0 %v11524
      %11560 = vmatprep.subr.bf16.mxu0 0
      %11561 = vmatpush1.bf16.msra.mxu0 %v11525
      %11562 = vmatprep.subr.bf16.mxu0 0
      %11563 = vmatpush1.bf16.msra.mxu0 %v11526
      %11564 = vmatprep.subr.bf16.mxu0 0
      %11565 = vmatpush1.bf16.msra.mxu0 %v11527
      %11566 = vmatprep.subr.bf16.mxu0 0
      %11567 = vmatpush1.bf16.msra.mxu0 %v11528
      %11568 = vmatprep.subr.bf16.mxu0 0
      %11569 = vmatpush1.bf16.msra.mxu0 %v11529
      %11570 = vmatprep.subr.bf16.mxu0 0
      %11571 = vmatpush1.bf16.msra.mxu0 %v11530
      %11572 = vmatprep.subr.bf16.mxu0 0
      %11573 = vmatpush1.bf16.msra.mxu0 %v11531
      %11574 = vmatprep.subr.bf16.mxu0 0
      %11575 = vmatpush1.bf16.msra.mxu0 %v11532
      %11576 = vmatprep.subr.bf16.mxu0 0
      %11577 = vmatpush1.bf16.msra.mxu0 %v11533
      %11578 = vmatprep.subr.bf16.mxu0 0
      %11579 = vmatpush1.bf16.msra.mxu0 %v11534
      %11580 = vmatprep.subr.bf16.mxu0 0
      %11581 = vmatpush1.bf16.msra.mxu0 %v11535
      %11582 = vmatprep.subr.bf16.mxu0 0
      %11583 = vmatpush1.bf16.msra.mxu0 %v11536
      %11584 = vmatprep.subr.bf16.mxu0 0
      %11585 = vmatpush1.bf16.msra.mxu0 %v11537
      %11586 = vmatprep.mubr.bf16.mxu0 %v11457
      %11587 = vmatmul.mubr.bf16.gmra.mrb[0].mxu0 %v11456
      %v11588 = vpop.f32.mrb[0].mxu0
      %v11589 = vadd.f32 0.0, %v11588
      %v11590 = vpop.f32.mrb[0].mxu0
      %v11591 = vpop.f32.mrb[0].mxu0
      %v11592 = vpop.f32.mrb[0].mxu0
      %11593 = vdwg.mxu0
      %v11626 = vunpack.c.l.b16 %v10844
      %v11627 = vunpack.c.l.b16 %v10845
      %v11628 = vunpack.c.l.b16 %v10846
      %v11629 = vunpack.c.l.b16 %v10847
      %v11630 = vunpack.c.l.b16 %v10848
      %v11631 = vunpack.c.l.b16 %v10849
      %v11632 = vunpack.c.l.b16 %v10850
      %v11633 = vunpack.c.l.b16 %v10851
      %v11634 = vunpack.c.l.b16 %v10852
      %v11635 = vunpack.c.l.b16 %v10853
      %v11636 = vunpack.c.l.b16 %v10854
      %v11637 = vunpack.c.l.b16 %v10855
      %v11638 = vunpack.c.l.b16 %v10856
      %v11639 = vunpack.c.l.b16 %v10857
      %v11640 = vunpack.c.l.b16 %v10858
      %v11641 = vunpack.c.l.b16 %v10859
      %v11642 = vunpack.c.l.b16 %v10860
      %v11643 = vunpack.c.l.b16 %v10861
      %v11644 = vunpack.c.l.b16 %v10862
      %v11645 = vunpack.c.l.b16 %v10863
      %v11646 = vunpack.c.l.b16 %v10864
      %v11647 = vunpack.c.l.b16 %v10865
      %v11648 = vunpack.c.l.b16 %v10866
      %v11649 = vunpack.c.l.b16 %v10867
      %v11650 = vunpack.c.l.b16 %v10868
      %v11651 = vunpack.c.l.b16 %v10869
      %v11652 = vunpack.c.l.b16 %v10870
      %v11653 = vunpack.c.l.b16 %v10871
      %v11654 = vunpack.c.l.b16 %v10872
      %v11655 = vunpack.c.l.b16 %v10873
      %v11656 = vunpack.c.l.b16 %v10874
      %v11657 = vunpack.c.l.b16 %v10875
      %v11658 = vpack.c.b16 %v11627, %v11626
      %v11659 = vpack.c.b16 %v11629, %v11628
      %v11660 = vpack.c.b16 %v11631, %v11630
      %v11661 = vpack.c.b16 %v11633, %v11632
      %v11662 = vpack.c.b16 %v11635, %v11634
      %v11663 = vpack.c.b16 %v11637, %v11636
      %v11664 = vpack.c.b16 %v11639, %v11638
      %v11665 = vpack.c.b16 %v11641, %v11640
      %v11666 = vpack.c.b16 %v11643, %v11642
      %v11667 = vpack.c.b16 %v11645, %v11644
      %v11668 = vpack.c.b16 %v11647, %v11646
      %v11669 = vpack.c.b16 %v11649, %v11648
      %v11670 = vpack.c.b16 %v11651, %v11650
      %v11671 = vpack.c.b16 %v11653, %v11652
      %v11672 = vpack.c.b16 %v11655, %v11654
      %v11673 = vpack.c.b16 %v11657, %v11656
      %11690 = vmatprep.subr.bf16.mxu0 0
      %11691 = vmatpush1.bf16.msra.mxu0 %v11658
      %11692 = vmatprep.subr.bf16.mxu0 0
      %11693 = vmatpush1.bf16.msra.mxu0 %v11659
      %11694 = vmatprep.subr.bf16.mxu0 0
      %11695 = vmatpush1.bf16.msra.mxu0 %v11660
      %11696 = vmatprep.subr.bf16.mxu0 0
      %11697 = vmatpush1.bf16.msra.mxu0 %v11661
      %11698 = vmatprep.subr.bf16.mxu0 0
      %11699 = vmatpush1.bf16.msra.mxu0 %v11662
      %11700 = vmatprep.subr.bf16.mxu0 0
      %11701 = vmatpush1.bf16.msra.mxu0 %v11663
      %11702 = vmatprep.subr.bf16.mxu0 0
      %11703 = vmatpush1.bf16.msra.mxu0 %v11664
      %11704 = vmatprep.subr.bf16.mxu0 0
      %11705 = vmatpush1.bf16.msra.mxu0 %v11665
      %11706 = vmatprep.subr.bf16.mxu0 0
      %11707 = vmatpush1.bf16.msra.mxu0 %v11666
      %11708 = vmatprep.subr.bf16.mxu0 0
      %11709 = vmatpush1.bf16.msra.mxu0 %v11667
      %11710 = vmatprep.subr.bf16.mxu0 0
      %11711 = vmatpush1.bf16.msra.mxu0 %v11668
      %11712 = vmatprep.subr.bf16.mxu0 0
      %11713 = vmatpush1.bf16.msra.mxu0 %v11669
      %11714 = vmatprep.subr.bf16.mxu0 0
      %11715 = vmatpush1.bf16.msra.mxu0 %v11670
      %11716 = vmatprep.subr.bf16.mxu0 0
      %11717 = vmatpush1.bf16.msra.mxu0 %v11671
      %11718 = vmatprep.subr.bf16.mxu0 0
      %11719 = vmatpush1.bf16.msra.mxu0 %v11672
      %11720 = vmatprep.subr.bf16.mxu0 0
      %11721 = vmatpush1.bf16.msra.mxu0 %v11673
      %11722 = vmatprep.mubr.bf16.mxu0 %v11457
      %11723 = vmatmul.mubr.bf16.gmra.mrb[0].mxu0 %v11456
      %v11724 = vpop.f32.mrb[0].mxu0
      %v11725 = vadd.f32 0.0, %v11724
      %v11726 = vpop.f32.mrb[0].mxu0
      %v11727 = vpop.f32.mrb[0].mxu0
      %v11728 = vpop.f32.mrb[0].mxu0
      %11729 = vdwg.mxu0
      %v11730 = vmax.f32 %v11589, %v11725
      %v11731 = vlaneseq
      %v11732 = vshrl.u32 %v11731, 7
      %v11733 = vsub.s32 0, %v11732
      %v11734 = vrot.slane %v11265, %v11733
      %v11735 = vmul.f32 %v11730, %v11734
      %v11736 = vlaneseq
      %v11737 = vshrl.u32 %v11736, 7
      %v11738 = vsub.s32 0, %v11737
      %v11739 = vrot.slane %v11340, %v11738
      %v11740 = vadd.f32 %v11735, %v11739
      %v11741 = vmul.f32 %v11740, 0.01
      %v11742 = vmax.f32 %v11740, %v11741
      %v11743 = vsel %vm3623, %v11742, 0.0
      %v11744 = vrot.slane %v11743, 4
      %v11745 = vadd.f32 %v11743, %v11744
      %v11746 = vrot.slane %v11745, 2
      %v11747 = vadd.f32 %v11745, %v11746
      %v11748 = vrot.slane %v11747, 1
      %v11749 = vadd.f32 %v11747, %v11748
      %v11750 = vld [vmem:[%s51] sm:$0xff]
      %v11751 = vld [vmem:[%s51 + $0x8] sm:$0xff]
      %v11752 = vld [vmem:[%s51 + $0x10] sm:$0xff]
      %v11753 = vld [vmem:[%s51 + $0x18] sm:$0xff]
      %v11754 = vld [vmem:[%s51 + $0x20] sm:$0xff]
      %v11755 = vld [vmem:[%s51 + $0x28] sm:$0xff]
      %v11756 = vld [vmem:[%s51 + $0x30] sm:$0xff]
      %v11757 = vld [vmem:[%s51 + $0x38] sm:$0xff]
      %v11758 = vld [vmem:[%s51 + $0x40] sm:$0xff]
      %v11759 = vld [vmem:[%s51 + $0x48] sm:$0xff]
      %v11760 = vld [vmem:[%s51 + $0x50] sm:$0xff]
      %v11761 = vld [vmem:[%s51 + $0x58] sm:$0xff]
      %v11762 = vld [vmem:[%s51 + $0x60] sm:$0xff]
      %v11763 = vld [vmem:[%s51 + $0x68] sm:$0xff]
      %v11764 = vld [vmem:[%s51 + $0x70] sm:$0xff]
      %v11765 = vld [vmem:[%s51 + $0x78] sm:$0xff]
      %11766 = vmatprep.subr.mxu0 0.0
      %11767 = vmatpush1.msra.mxu0 %v11750
      %11768 = vmatprep.subr.mxu0 0.0
      %11769 = vmatpush1.msra.mxu0 %v11751
      %11770 = vmatprep.subr.mxu0 0.0
      %11771 = vmatpush1.msra.mxu0 %v11752
      %11772 = vmatprep.subr.mxu0 0.0
      %11773 = vmatpush1.msra.mxu0 %v11753
      %11774 = vmatprep.subr.mxu0 0.0
      %11775 = vmatpush1.msra.mxu0 %v11754
      %11776 = vmatprep.subr.mxu0 0.0
      %11777 = vmatpush1.msra.mxu0 %v11755
      %11778 = vmatprep.subr.mxu0 0.0
      %11779 = vmatpush1.msra.mxu0 %v11756
      %11780 = vmatprep.subr.mxu0 0.0
      %11781 = vmatpush1.msra.mxu0 %v11757
      %11782 = vmatprep.subr.mxu0 0.0
      %11783 = vmatpush1.msra.mxu0 %v11758
      %11784 = vmatprep.subr.mxu0 0.0
      %11785 = vmatpush1.msra.mxu0 %v11759
      %11786 = vmatprep.subr.mxu0 0.0
      %11787 = vmatpush1.msra.mxu0 %v11760
      %11788 = vmatprep.subr.mxu0 0.0
      %11789 = vmatpush1.msra.mxu0 %v11761
      %11790 = vmatprep.subr.mxu0 0.0
      %11791 = vmatpush1.msra.mxu0 %v11762
      %11792 = vmatprep.subr.mxu0 0.0
      %11793 = vmatpush1.msra.mxu0 %v11763
      %11794 = vmatprep.subr.mxu0 0.0
      %11795 = vmatpush1.msra.mxu0 %v11764
      %11796 = vmatprep.subr.mxu0 0.0
      %11797 = vmatpush1.msra.mxu0 %v11765
      %11798 = vmatprep.subr.mxu0 0.0
      %11799 = vmatpush1.msra.mxu0 0.0
      %11800 = vmatprep.subr.mxu0 0.0
      %11801 = vmatpush1.msra.mxu0 0.0
      %11802 = vmatprep.subr.mxu0 0.0
      %11803 = vmatpush1.msra.mxu0 0.0
      %11804 = vmatprep.subr.mxu0 0.0
      %11805 = vmatpush1.msra.mxu0 0.0
      %11806 = vmatprep.subr.mxu0 0.0
      %11807 = vmatpush1.msra.mxu0 0.0
      %11808 = vmatprep.subr.mxu0 0.0
      %11809 = vmatpush1.msra.mxu0 0.0
      %11810 = vmatprep.subr.mxu0 0.0
      %11811 = vmatpush1.msra.mxu0 0.0
      %11812 = vmatprep.subr.mxu0 0.0
      %11813 = vmatpush1.msra.mxu0 0.0
      %11814 = vmatprep.subr.mxu0 0.0
      %11815 = vmatpush1.msra.mxu0 0.0
      %11816 = vmatprep.subr.mxu0 0.0
      %11817 = vmatpush1.msra.mxu0 0.0
      %11818 = vmatprep.subr.mxu0 0.0
      %11819 = vmatpush1.msra.mxu0 0.0
      %11820 = vmatprep.subr.mxu0 0.0
      %11821 = vmatpush1.msra.mxu0 0.0
      %11822 = vmatprep.subr.mxu0 0.0
      %11823 = vmatpush1.msra.mxu0 0.0
      %11824 = vmatprep.subr.mxu0 0.0
      %11825 = vmatpush1.msra.mxu0 0.0
      %11826 = vmatprep.subr.mxu0 0.0
      %11827 = vmatpush1.msra.mxu0 0.0
      %11828 = vmatprep.subr.mxu0 0.0
      %11829 = vmatpush1.msra.mxu0 0.0
      %11830 = vmatprep.mubr.f32.mxu0 0.0
      %11831 = vmatmul.mubr.f32.gmra.mrb[0].mxu0 %v11749
      %v11832 = vpop.f32.mrb[0].mxu0
      %v11833 = vadd.f32 0.0, %v11832
      %v11834 = vpop.f32.mrb[0].mxu0
      %11835 = vdwg.mxu0
      %v11836 = vld [vmem:[%s53] sm:$0xff]
      %v11837 = vld [vmem:[%s53 + $0x8] sm:$0xff]
      %v11838 = vld [vmem:[%s53 + $0x10] sm:$0xff]
      %v11839 = vld [vmem:[%s53 + $0x18] sm:$0xff]
      %v11840 = vld [vmem:[%s53 + $0x20] sm:$0xff]
      %v11841 = vld [vmem:[%s53 + $0x28] sm:$0xff]
      %v11842 = vld [vmem:[%s53 + $0x30] sm:$0xff]
      %v11843 = vld [vmem:[%s53 + $0x38] sm:$0xff]
      %v11844 = vld [vmem:[%s55] sm:$0x1]
      %v11846 = vsel %vm8981, %v11833, 0
      %11848 = vmatprep.subr.mxu0 0.0
      %11849 = vmatpush1.msra.mxu0 %v11836
      %11850 = vmatprep.subr.mxu0 0.0
      %11851 = vmatpush1.msra.mxu0 %v11837
      %11852 = vmatprep.subr.mxu0 0.0
      %11853 = vmatpush1.msra.mxu0 %v11838
      %11854 = vmatprep.subr.mxu0 0.0
      %11855 = vmatpush1.msra.mxu0 %v11839
      %11856 = vmatprep.subr.mxu0 0.0
      %11857 = vmatpush1.msra.mxu0 %v11840
      %11858 = vmatprep.subr.mxu0 0.0
      %11859 = vmatpush1.msra.mxu0 %v11841
      %11860 = vmatprep.subr.mxu0 0.0
      %11861 = vmatpush1.msra.mxu0 %v11842
      %11862 = vmatprep.subr.mxu0 0.0
      %11863 = vmatpush1.msra.mxu0 %v11843
      %11864 = vmatprep.subr.mxu0 0.0
      %11865 = vmatpush1.msra.mxu0 0.0
      %11866 = vmatprep.subr.mxu0 0.0
      %11867 = vmatpush1.msra.mxu0 0.0
      %11868 = vmatprep.subr.mxu0 0.0
      %11869 = vmatpush1.msra.mxu0 0.0
      %11870 = vmatprep.subr.mxu0 0.0
      %11871 = vmatpush1.msra.mxu0 0.0
      %11872 = vmatprep.subr.mxu0 0.0
      %11873 = vmatpush1.msra.mxu0 0.0
      %11874 = vmatprep.subr.mxu0 0.0
      %11875 = vmatpush1.msra.mxu0 0.0
      %11876 = vmatprep.subr.mxu0 0.0
      %11877 = vmatpush1.msra.mxu0 0.0
      %11878 = vmatprep.subr.mxu0 0.0
      %11879 = vmatpush1.msra.mxu0 0.0
      %11880 = vmatprep.subr.mxu0 0.0
      %11881 = vmatpush1.msra.mxu0 0.0
      %11882 = vmatprep.subr.mxu0 0.0
      %11883 = vmatpush1.msra.mxu0 0.0
      %11884 = vmatprep.subr.mxu0 0.0
      %11885 = vmatpush1.msra.mxu0 0.0
      %11886 = vmatprep.subr.mxu0 0.0
      %11887 = vmatpush1.msra.mxu0 0.0
      %11888 = vmatprep.subr.mxu0 0.0
      %11889 = vmatpush1.msra.mxu0 0.0
      %11890 = vmatprep.subr.mxu0 0.0
      %11891 = vmatpush1.msra.mxu0 0.0
      %11892 = vmatprep.subr.mxu0 0.0
      %11893 = vmatpush1.msra.mxu0 0.0
      %11894 = vmatprep.subr.mxu0 0.0
      %11895 = vmatpush1.msra.mxu0 0.0
      %11896 = vmatprep.subr.mxu0 0.0
      %11897 = vmatpush1.msra.mxu0 0.0
      %11898 = vmatprep.subr.mxu0 0.0
      %11899 = vmatpush1.msra.mxu0 0.0
      %11900 = vmatprep.subr.mxu0 0.0
      %11901 = vmatpush1.msra.mxu0 0.0
      %11902 = vmatprep.subr.mxu0 0.0
      %11903 = vmatpush1.msra.mxu0 0.0
      %11904 = vmatprep.subr.mxu0 0.0
      %11905 = vmatpush1.msra.mxu0 0.0
      %11906 = vmatprep.subr.mxu0 0.0
      %11907 = vmatpush1.msra.mxu0 0.0
      %11908 = vmatprep.subr.mxu0 0.0
      %11909 = vmatpush1.msra.mxu0 0.0
      %11910 = vmatprep.subr.mxu0 0.0
      %11911 = vmatpush1.msra.mxu0 0.0
      %11912 = vmatprep.mubr.f32.mxu0 0.0
      %11913 = vmatmul.mubr.f32.gmra.mrb[0].mxu0 %v11846
      %v11914 = vpop.f32.mrb[0].mxu0
      %v11915 = vadd.f32 %v11844, %v11914
      %v11916 = vpop.f32.mrb[0].mxu0
      %11917 = vdwg.mxu0
      %v11918 = vxor.u32 %v11915, 2147483648
      %v11919 = vmul.f32 %v11918, 1.442695
      %v11920 = vpow.pop %v11919
      %v11921 = vadd.f32 %v11920, 1.0
      %v11922 = vrcp.pop %v11921
      %v11923 = vmul.f32 1.0, %v11922
      %v11924 = vmul.f32 %v11915, %v11923
      %v11925 = vld [vmem:[%s57] sm:$0xff]
      %v11926 = vld [vmem:[%s57 + $0x8] sm:$0xff]
      %v11927 = vld [vmem:[%s57 + $0x10] sm:$0xff]
      %v11928 = vld [vmem:[%s57 + $0x18] sm:$0xff]
      %v11929 = vld [vmem:[%s57 + $0x20] sm:$0xff]
      %v11930 = vld [vmem:[%s57 + $0x28] sm:$0xff]
      %v11931 = vld [vmem:[%s57 + $0x30] sm:$0xff]
      %v11932 = vld [vmem:[%s57 + $0x38] sm:$0xff]
      %v11933 = vld [vmem:[%s1079] sm:$0x1]
      %v11934 = vld [vmem:[%s59] sm:$0xff]
      %v11935 = vld [vmem:[%s59 + $0x8] sm:$0xff]
      %v11936 = vld [vmem:[%s59 + $0x10] sm:$0x1]
      %vm11937 = vcmask 138240
      %v11939 = vsel %vm11937, %v11933, 0
      %vm11941 = vcmask 1040384
      %v11943 = vsel %vm11941, %v11936, 0
      %11945 = vmatprep.subr.mxu0 0.0
      %11946 = vmatpush1.msra.mxu0 %v11934
      %11947 = vmatprep.subr.mxu0 0.0
      %11948 = vmatpush1.msra.mxu0 %v11935
      %11949 = vmatprep.subr.mxu0 0.0
      %11950 = vmatpush1.msra.mxu0 %v11943
      %11951 = vmatprep.subr.mxu0 0.0
      %11952 = vmatpush1.msra.mxu0 0.0
      %11953 = vmatprep.subr.mxu0 0.0
      %11954 = vmatpush1.msra.mxu0 0.0
      %11955 = vmatprep.subr.mxu0 0.0
      %11956 = vmatpush1.msra.mxu0 0.0
      %11957 = vmatprep.subr.mxu0 0.0
      %11958 = vmatpush1.msra.mxu0 0.0
      %11959 = vmatprep.subr.mxu0 0.0
      %11960 = vmatpush1.msra.mxu0 0.0
      %11961 = vmatprep.subr.mxu0 0.0
      %11962 = vmatpush1.msra.mxu0 0.0
      %11963 = vmatprep.subr.mxu0 0.0
      %11964 = vmatpush1.msra.mxu0 0.0
      %11965 = vmatprep.subr.mxu0 0.0
      %11966 = vmatpush1.msra.mxu0 0.0
      %11967 = vmatprep.subr.mxu0 0.0
      %11968 = vmatpush1.msra.mxu0 0.0
      %11969 = vmatprep.subr.mxu0 0.0
      %11970 = vmatpush1.msra.mxu0 0.0
      %11971 = vmatprep.subr.mxu0 0.0
      %11972 = vmatpush1.msra.mxu0 0.0
      %11973 = vmatprep.subr.mxu0 0.0
      %11974 = vmatpush1.msra.mxu0 0.0
      %11975 = vmatprep.subr.mxu0 0.0
      %11976 = vmatpush1.msra.mxu0 0.0
      %11977 = vmatprep.subr.mxu0 0.0
      %11978 = vmatpush1.msra.mxu0 0.0
      %11979 = vmatprep.subr.mxu0 0.0
      %11980 = vmatpush1.msra.mxu0 0.0
      %11981 = vmatprep.subr.mxu0 0.0
      %11982 = vmatpush1.msra.mxu0 0.0
      %11983 = vmatprep.subr.mxu0 0.0
      %11984 = vmatpush1.msra.mxu0 0.0
      %11985 = vmatprep.subr.mxu0 0.0
      %11986 = vmatpush1.msra.mxu0 0.0
      %11987 = vmatprep.subr.mxu0 0.0
      %11988 = vmatpush1.msra.mxu0 0.0
      %11989 = vmatprep.subr.mxu0 0.0
      %11990 = vmatpush1.msra.mxu0 0.0
      %11991 = vmatprep.subr.mxu0 0.0
      %11992 = vmatpush1.msra.mxu0 0.0
      %11993 = vmatprep.subr.mxu0 0.0
      %11994 = vmatpush1.msra.mxu0 0.0
      %11995 = vmatprep.subr.mxu0 0.0
      %11996 = vmatpush1.msra.mxu0 0.0
      %11997 = vmatprep.subr.mxu0 0.0
      %11998 = vmatpush1.msra.mxu0 0.0
      %11999 = vmatprep.subr.mxu0 0.0
      %12000 = vmatpush1.msra.mxu0 0.0
      %12001 = vmatprep.subr.mxu0 0.0
      %12002 = vmatpush1.msra.mxu0 0.0
      %12003 = vmatprep.subr.mxu0 0.0
      %12004 = vmatpush1.msra.mxu0 0.0
      %12005 = vmatprep.subr.mxu0 0.0
      %12006 = vmatpush1.msra.mxu0 0.0
      %12007 = vmatprep.subr.mxu0 0.0
      %12008 = vmatpush1.msra.mxu0 0.0
      %12009 = vmatprep.mubr.f32.mxu0 0.0
      %12010 = vmatmul.mubr.f32.gmra.mrb[0].mxu0 %v11939
      %v12011 = vpop.f32.mrb[0].mxu0
      %v12012 = vadd.f32 0.0, %v12011
      %v12013 = vpop.f32.mrb[0].mxu0
      %12014 = vdwg.mxu0
      %v12016 = vsel %vm8981, %v11924, 0
      %12018 = vmatprep.subr.mxu0 0.0
      %12019 = vmatpush1.msra.mxu0 %v11925
      %12020 = vmatprep.subr.mxu0 0.0
      %12021 = vmatpush1.msra.mxu0 %v11926
      %12022 = vmatprep.subr.mxu0 0.0
      %12023 = vmatpush1.msra.mxu0 %v11927
      %12024 = vmatprep.subr.mxu0 0.0
      %12025 = vmatpush1.msra.mxu0 %v11928
      %12026 = vmatprep.subr.mxu0 0.0
      %12027 = vmatpush1.msra.mxu0 %v11929
      %12028 = vmatprep.subr.mxu0 0.0
      %12029 = vmatpush1.msra.mxu0 %v11930
      %12030 = vmatprep.subr.mxu0 0.0
      %12031 = vmatpush1.msra.mxu0 %v11931
      %12032 = vmatprep.subr.mxu0 0.0
      %12033 = vmatpush1.msra.mxu0 %v11932
      %12034 = vmatprep.subr.mxu0 0.0
      %12035 = vmatpush1.msra.mxu0 0.0
      %12036 = vmatprep.subr.mxu0 0.0
      %12037 = vmatpush1.msra.mxu0 0.0
      %12038 = vmatprep.subr.mxu0 0.0
      %12039 = vmatpush1.msra.mxu0 0.0
      %12040 = vmatprep.subr.mxu0 0.0
      %12041 = vmatpush1.msra.mxu0 0.0
      %12042 = vmatprep.subr.mxu0 0.0
      %12043 = vmatpush1.msra.mxu0 0.0
      %12044 = vmatprep.subr.mxu0 0.0
      %12045 = vmatpush1.msra.mxu0 0.0
      %12046 = vmatprep.subr.mxu0 0.0
      %12047 = vmatpush1.msra.mxu0 0.0
      %12048 = vmatprep.subr.mxu0 0.0
      %12049 = vmatpush1.msra.mxu0 0.0
      %12050 = vmatprep.subr.mxu0 0.0
      %12051 = vmatpush1.msra.mxu0 0.0
      %12052 = vmatprep.subr.mxu0 0.0
      %12053 = vmatpush1.msra.mxu0 0.0
      %12054 = vmatprep.subr.mxu0 0.0
      %12055 = vmatpush1.msra.mxu0 0.0
      %12056 = vmatprep.subr.mxu0 0.0
      %12057 = vmatpush1.msra.mxu0 0.0
      %12058 = vmatprep.subr.mxu0 0.0
      %12059 = vmatpush1.msra.mxu0 0.0
      %12060 = vmatprep.subr.mxu0 0.0
      %12061 = vmatpush1.msra.mxu0 0.0
      %12062 = vmatprep.subr.mxu0 0.0
      %12063 = vmatpush1.msra.mxu0 0.0
      %12064 = vmatprep.subr.mxu0 0.0
      %12065 = vmatpush1.msra.mxu0 0.0
      %12066 = vmatprep.subr.mxu0 0.0
      %12067 = vmatpush1.msra.mxu0 0.0
      %12068 = vmatprep.subr.mxu0 0.0
      %12069 = vmatpush1.msra.mxu0 0.0
      %12070 = vmatprep.subr.mxu0 0.0
      %12071 = vmatpush1.msra.mxu0 0.0
      %12072 = vmatprep.subr.mxu0 0.0
      %12073 = vmatpush1.msra.mxu0 0.0
      %12074 = vmatprep.subr.mxu0 0.0
      %12075 = vmatpush1.msra.mxu0 0.0
      %12076 = vmatprep.subr.mxu0 0.0
      %12077 = vmatpush1.msra.mxu0 0.0
      %12078 = vmatprep.subr.mxu0 0.0
      %12079 = vmatpush1.msra.mxu0 0.0
      %12080 = vmatprep.subr.mxu0 0.0
      %12081 = vmatpush1.msra.mxu0 0.0
      %12082 = vmatprep.mubr.f32.mxu0 0.0
      %12083 = vmatmul.mubr.f32.gmra.mrb[0].mxu0 %v12016
      %v12084 = vpop.f32.mrb[0].mxu0
      %v12085 = vadd.f32 %v12012, %v12084
      %v12086 = vpop.f32.mrb[0].mxu0
      %12087 = vdwg.mxu0
      %v12088 = vld [vmem:[%s61] sm:$0x1]
      %v12089 = vadd.f32 %v12085, %v12088
      %v12090 = vld [vmem:[%s63] sm:$0x1]
      %v12091 = vmul.f32 %v12089, %v12090
      %v12092 = vld [vmem:[%s65] sm:$0x1]
      %v12093 = vadd.f32 %v12091, %v12092
      %v12094 = vxor.u32 %v12093, 2147483648
      %v12095 = vmul.f32 %v12094, 1.442695
      %v12096 = vpow.pop %v12095
      %v12097 = vadd.f32 %v12096, 1.0
      %v12098 = vrcp.pop %v12097
      %v12099 = vmul.f32 1.0, %v12098
      %v12100 = vmul.f32 %v12093, %v12099
      %v12101 = vld [vmem:[%s67] sm:$0x1]
      %v12102 = vmul.f32 %v12100, %v12101
      %v12103 = vsel %vm11941, %v12102, 0.0
      %12104 = vadd.xlane.f32.xlu0 %v12103
      %v12105 = vpop.xlane.xlu0 %12104
      %v12106 = vld [vmem:[#allocation2] sm:$0x1]
      %v12107 = vadd.f32 %v12105, %v12106
      %vm12108 = vcmask 0
      %12109 = vst.msk [vmem:[%s1082] sm:$0x1] %vm12108, %v12107
      %p12110 = scmp.lt.s32.totalorder %s84, 1
      %s12111 = scalar_select %p12110, %s84, 1
      %s12112 = scalar_lea.vmem %s71, %s12111
      // Predicated region
      $region161: #{deepynet_v2_1_forward.1} parent=159 // pred_check
        %p12113 = pneg %p847
      $region162: #{deepynet_v2_1_forward.1} parent=159 // pred_check_branch
        %12115 = sbr.rel (%p12113) target = $region164
      $region163: #{deepynet_v2_1_forward.1} parent=159 // pred_region
        _
      $region164: #{deepynet_v2_1_forward.1} parent=159 // pred_fallthru
        _
    $region160: #{deepynet_v2_1_forward.1} parent=5 // pred_fallthru
      _
    %p12116 = scmp.le.s32.totalorder 2, %s79
    // Predicated region
    $region165: #{deepynet_v2_1_forward.1} parent=5 // pred_check
      %p12117 = pneg %p12116
    $region166: #{deepynet_v2_1_forward.1} parent=5 // pred_check_branch
      %12119 = sbr.rel (%p12117) target = $region168
    $region167: #{deepynet_v2_1_forward.1} parent=5 // pred_region
      %s12120 = ssub.s32 %s79, 2
      // Predicated region
      $region169: #{deepynet_v2_1_forward.1} parent=167 // pred_check
        %p12121 = pneg %p853
      $region170: #{deepynet_v2_1_forward.1} parent=167 // pred_check_branch
        %12123 = sbr.rel (%p12121) target = $region172
      $region171: #{deepynet_v2_1_forward.1} parent=167 // pred_region
        %p12124 = scmp.lt.s32.totalorder %s85, 1
        %s12125 = scalar_select %p12124, %s85, 1
        %s12126 = scalar_lea.vmem %s71, %s12125
      $region172: #{deepynet_v2_1_forward.1} parent=167 // pred_fallthru
        _
    $region168: #{deepynet_v2_1_forward.1} parent=5 // pred_fallthru
      _
  $region6: #{deepynet_v2_1_forward.1} parent=0 // loop_footer
    %s83 = sadd.s32 1, %s79
  $region7: #{deepynet_v2_1_forward.1} parent=0 // loop_footer_branch
    %78 = sbr.rel target = $region3
  $region8: #{deepynet_v2_1_forward.1} parent=0 // loop_exit
    _

</llo_original>
